<compile_context>
chip_gen: v7x
topology: tpu7x:2x2x1
jax: 0.10.0
libtpu: 0.0.40
codegen_flags: <defaults>
</compile_context>

<pallas_src>
import functools

import jax
import jax.numpy as jnp
from jax.experimental import pallas as pl
from jax.experimental.pallas import tpu as pltpu

BN_EPS = 1e-5
OUT_CHANNELS = 256
FEATURE_CHANNELS = [256, 512, 1024, 1024]
NUM_CLASSES = 14
HEAD_PAD = 128                       # classifier padded to a full 128-lane tile
VMEM_LIMIT = 48 * 1024 * 1024        # <= 64 MiB physical VMEM on v7x


# ----------------------------------------------------------------------------
# Eval-mode BN folding:  y = x*scale + shift
#   scale = gamma / sqrt(running_var + eps),  shift = beta - running_mean*scale
# If real checkpoint weights are ever loaded, pass the actual stats here.
# ----------------------------------------------------------------------------
def fold_bn(gamma, beta, mean, var, eps=BN_EPS):
    scale = gamma / jnp.sqrt(var + eps)
    shift = beta - mean * scale
    return scale, shift


# ----------------------------------------------------------------------------
# Kernel 1: one FPN scale for one branch (all B images at once):
#   depthwise 3x3 conv (+folded BN1) + ReLU, 1x1 conv on MXU (+folded BN2)
#   + ReLU, identity CBAM, global average pool.
# ----------------------------------------------------------------------------
def _fpn_scale_kernel(x_ref, dww_ref, b1_ref, pww_ref, b2_ref, out_ref,
                      xpad_ref, *, B, H, W, Cin, Cout):
    # x_ref    : (B, H, W, Cin)       un-padded NHWC features of one branch
    # dww_ref  : (1, 9, Cin)          depthwise 3x3 weights * BN1 scale
    # b1_ref   : (1, 1, Cin)          folded BN1 shift (conv bias included)
    # pww_ref  : (1, Cin, Cout) bf16  1x1 conv weights * BN2 scale
    # b2_ref   : (1, 1, Cout)         folded BN2 shift (conv bias included)
    # out_ref  : (1, B, Cout)         GAP-pooled output
    # xpad_ref : (B, H+2, W+2, Cin)   VMEM halo scratch

    # Build the zero halo entirely in VMEM (no HBM pad round-trip): zero the
    # four border strips, then drop the input block into the interior.
    xpad_ref[:, 0:1, :, :] = jnp.zeros((B, 1, W + 2, Cin), jnp.float32)
    xpad_ref[:, H + 1:H + 2, :, :] = jnp.zeros((B, 1, W + 2, Cin), jnp.float32)
    xpad_ref[:, :, 0:1, :] = jnp.zeros((B, H + 2, 1, Cin), jnp.float32)
    xpad_ref[:, :, W + 1:W + 2, :] = jnp.zeros((B, H + 2, 1, Cin), jnp.float32)
    xpad_ref[:, 1:H + 1, 1:W + 1, :] = x_ref[...]

    # Depthwise 3x3 conv; BN1 scale is pre-folded into the taps, accumulator is
    # initialized with the first tap instead of zeros+add.
    acc = None
    for k in range(9):
        ky, kx = divmod(k, 3)
        w_k = dww_ref[0:1, k:k + 1, :].reshape(1, 1, 1, Cin)
        tap = xpad_ref[:, ky:ky + H, kx:kx + W, :] * w_k
        acc = tap if acc is None else acc + tap
    y = jnp.maximum(acc + b1_ref[...].reshape(1, 1, 1, Cin), 0.0)

    # 1x1 conv == channel matmul on the MXU, bf16 operands, f32 accumulation.
    y2 = jnp.dot(y.reshape(B * H * W, Cin).astype(jnp.bfloat16), pww_ref[0],
                 preferred_element_type=jnp.float32)            # (B*H*W, Cout)
    y2 = jnp.maximum(y2 + b2_ref[...].reshape(1, Cout), 0.0)

    # TODO(synk): CBAM attention is undefined in the source module; identity.
    pooled = jnp.mean(y2.reshape(B, H * W, Cout), axis=1)       # GAP
    out_ref[...] = pooled.reshape(1, B, Cout)


def fpn_scale_pool(x_stacked, p):
    """x_stacked: (2B, H, W, Cin) = [global batch ; local batch] for one scale.
    p: per-scale params stacked over branches (leading dim 2).
    Returns (2, B, OUT_CHANNELS) pooled features, branch-major."""
    twoB, H, W, Cin = x_stacked.shape
    B = twoB // 2
    Cout = p["pww"].shape[-1]
    kern = functools.partial(_fpn_scale_kernel, B=B, H=H, W=W, Cin=Cin, Cout=Cout)
    return pl.pallas_call(
        kern,
        out_shape=jax.ShapeDtypeStruct((2, B, Cout), jnp.float32),
        grid_spec=pltpu.PrefetchScalarGridSpec(
            num_scalar_prefetch=0,
            grid=(2,),   # one step per branch; the whole batch per step
            in_specs=[
                pl.BlockSpec((B, H, W, Cin), lambda r: (r, 0, 0, 0)),
                pl.BlockSpec((1, 9, Cin), lambda r: (r, 0, 0)),
                pl.BlockSpec((1, 1, Cin), lambda r: (r, 0, 0)),
                pl.BlockSpec((1, Cin, Cout), lambda r: (r, 0, 0)),
                pl.BlockSpec((1, 1, Cout), lambda r: (r, 0, 0)),
            ],
            out_specs=pl.BlockSpec((1, B, Cout), lambda r: (r, 0, 0)),
            scratch_shapes=[pltpu.VMEM((B, H + 2, W + 2, Cin), jnp.float32)],
        ),
        compiler_params=pltpu.CompilerParams(
            dimension_semantics=("parallel",),       # megacore split on v7x
            vmem_limit_bytes=VMEM_LIMIT),
    )(x_stacked, p["dww"], p["b1"], p["pww"], p["b2"])


# ----------------------------------------------------------------------------
# Kernel 2: fusion MLP + classifier.  Eval-mode BN1d layers are folded into the
# following linear weights host-side; Dropout is eval-mode identity.
# ----------------------------------------------------------------------------
def _head_kernel(x_ref, w1_ref, c1_ref, w2_ref, c2_ref, w3_ref, c3_ref, o_ref):
    h = jnp.maximum(jnp.dot(x_ref[...].astype(jnp.bfloat16), w1_ref[...],
                            preferred_element_type=jnp.float32)
                    + c1_ref[...], 0.0)                          # Linear+ReLU
    h = jnp.maximum(jnp.dot(h.astype(jnp.bfloat16), w2_ref[...],
                            preferred_element_type=jnp.float32)
                    + c2_ref[...], 0.0)                          # Linear+ReLU
    o_ref[...] = jnp.dot(h.astype(jnp.bfloat16), w3_ref[...],
                         preferred_element_type=jnp.float32) + c3_ref[...]


def fusion_head(x, hp):
    """x: (B, 2048) -> padded logits (B, HEAD_PAD)."""
    B, _ = x.shape
    args = [x, hp["w1"], hp["c1"], hp["w2"], hp["c2"], hp["w3"], hp["c3"]]
    in_specs = [pl.BlockSpec(a.shape, lambda i: (0, 0)) for a in args]
    return pl.pallas_call(
        _head_kernel,
        out_shape=jax.ShapeDtypeStruct((B, HEAD_PAD), jnp.float32),
        grid_spec=pltpu.PrefetchScalarGridSpec(
            num_scalar_prefetch=0,
            grid=(1,),
            in_specs=in_specs,
            out_specs=pl.BlockSpec((B, HEAD_PAD), lambda i: (0, 0)),
        ),
        compiler_params=pltpu.CompilerParams(
            dimension_semantics=("arbitrary",),
            vmem_limit_bytes=VMEM_LIMIT),
    )(*args)


# ----------------------------------------------------------------------------
# Parameter construction (deterministic, in-script), with BN folded in.
# ----------------------------------------------------------------------------
def make_fpn_params(key, cin, cout=OUT_CHANNELS):
    k1, k2 = jax.random.split(key)
    # kaiming-normal (fan_out, relu) conv weights, zero conv biases
    dww = jax.random.normal(k1, (9, cin), jnp.float32) * jnp.sqrt(2.0 / 9.0)
    dwb = jnp.zeros((cin,), jnp.float32)
    pww = jax.random.normal(k2, (cin, cout), jnp.float32) * jnp.sqrt(2.0 / cout)
    pwb = jnp.zeros((cout,), jnp.float32)
    # BatchNorm2d eval stats: gamma=1, beta=0, running_mean=0, running_var=1
    s1, t1 = fold_bn(jnp.ones((cin,)), jnp.zeros((cin,)),
                     jnp.zeros((cin,)), jnp.ones((cin,)))
    s2, t2 = fold_bn(jnp.ones((cout,)), jnp.zeros((cout,)),
                     jnp.zeros((cout,)), jnp.ones((cout,)))
    return {
        "dww": dww * s1[None, :],                            # BN1 scale folded
        "b1": (dwb * s1 + t1).reshape(1, cin),
        "pww": (pww * s2[None, :]).astype(jnp.bfloat16),     # BN2 scale folded
        "b2": (pwb * s2 + t2).reshape(1, cout),
    }


def stack_branch_params(p_global, p_local):
    return {k: jnp.stack([p_global[k], p_local[k]], axis=0) for k in p_global}


def _xavier_uniform(key, fan_in, fan_out, gain=1.4):
    lim = gain * jnp.sqrt(6.0 / (fan_in + fan_out))
    return jax.random.uniform(key, (fan_in, fan_out), jnp.float32, -lim, lim)


def make_head_params(key):
    k1, k2, k3 = jax.random.split(key, 3)
    d0, d1, d2 = OUT_CHANNELS * 8, 1024, 512
    w1 = _xavier_uniform(k1, d0, d1); lb1 = jnp.zeros((d1,), jnp.float32)
    w2 = _xavier_uniform(k2, d1, d2); lb2 = jnp.zeros((d2,), jnp.float32)
    w3 = _xavier_uniform(k3, d2, NUM_CLASSES)
    lb3 = jnp.zeros((NUM_CLASSES,), jnp.float32)

    def bn(n):  # BN1d eval stats: gamma=1, beta=0, mean=0, var=1
        return fold_bn(jnp.ones((n,)), jnp.zeros((n,)),
                       jnp.zeros((n,)), jnp.ones((n,)))

    s0, t0 = bn(d0)
    s1, t1 = bn(d1)
    s2, t2 = bn(d2)
    # Fold BN(x)=x*s+t into the following Linear:  (x*s+t)@W+b = x@(s*W)+(t@W+b)
    w1f = w1 * s0[:, None]; c1 = lb1 + t0 @ w1
    w2f = w2 * s1[:, None]; c2 = lb2 + t1 @ w2
    w3f = w3 * s2[:, None]; c3 = lb3 + t2 @ w3
    # Pad the classifier to a full 128-lane output; sliced back to 14 outside.
    w3p = jnp.zeros((d2, HEAD_PAD), jnp.float32).at[:, :NUM_CLASSES].set(w3f)
    c3p = jnp.zeros((HEAD_PAD,), jnp.float32).at[:NUM_CLASSES].set(c3)
    return {
        "w1": w1f.astype(jnp.bfloat16), "c1": c1.reshape(1, d1),
        "w2": w2f.astype(jnp.bfloat16), "c2": c2.reshape(1, d2),
        "w3": w3p.astype(jnp.bfloat16), "c3": c3p.reshape(1, HEAD_PAD),
    }


def make_backbone_params(key):
    keys = jax.random.split(key, 4)
    return [jax.random.normal(k, (3, c), jnp.float32) * 0.5
            for k, c in zip(keys, FEATURE_CHANNELS)]


# ----------------------------------------------------------------------------
# Stand-in backbone (plain JAX glue)
# ----------------------------------------------------------------------------
def standin_backbone(x_nchw, proj_list):
    # TODO(synk): pretrained DenseNet121 feature extractor not reproducible
    # in-script; deterministic strided mean-pool + fixed channel projection.
    x = jnp.transpose(x_nchw, (0, 2, 3, 1)).astype(jnp.float32)   # NHWC
    B, H, W, C = x.shape
    feats = []
    for stride, proj in zip((4, 8, 16, 32), proj_list):
        p = x.reshape(B, H // stride, stride, W // stride, stride, C)
        p = p.mean(axis=(2, 4))
        feats.append(jnp.einsum("bhwc,cd->bhwd", p, proj))
    return feats


# ----------------------------------------------------------------------------
# Full forward
# ----------------------------------------------------------------------------
def chest_xray_forward(x_global, x_local, params):
    g_feats = standin_backbone(x_global, params["backbone_global"])
    l_feats = standin_backbone(x_local, params["backbone_local"])

    g_pooled, l_pooled = [], []
    for gf, lf, p_scale in zip(g_feats, l_feats, params["fpn"]):
        x_stacked = jnp.concatenate([gf, lf], axis=0)     # (2B, H, W, Cin)
        pooled = fpn_scale_pool(x_stacked, p_scale)       # (2, B, 256)
        g_pooled.append(pooled[0])
        l_pooled.append(pooled[1])

    multi_scale = jnp.concatenate(g_pooled + l_pooled, axis=1)   # (B, 2048)
    logits_pad = fusion_head(multi_scale, params["head"])        # (B, 128)
    return logits_pad[:, :NUM_CLASSES]                           # (B, 14)


if __name__ == "__main__":
    root = jax.random.PRNGKey(0)
    k_in, k_bg, k_bl, k_fg, k_fl, k_head = jax.random.split(root, 6)

    # Small inputs: batch=2, RGB 64x64 => feature scales 16/8/4/2.
    kx1, kx2 = jax.random.split(k_in)
    x_global = jax.random.normal(kx1, (2, 3, 64, 64), jnp.float32)
    x_local = jax.random.normal(kx2, (2, 3, 64, 64), jnp.float32)

    fpn_global = [make_fpn_params(k, c) for k, c in
                  zip(jax.random.split(k_fg, 4), FEATURE_CHANNELS)]
    fpn_local = [make_fpn_params(k, c) for k, c in
                 zip(jax.random.split(k_fl, 4), FEATURE_CHANNELS)]

    params = {
        "backbone_global": make_backbone_params(k_bg),
        "backbone_local": make_backbone_params(k_bl),
        "fpn": [stack_branch_params(pg, plc)
                for pg, plc in zip(fpn_global, fpn_local)],
        "head": make_head_params(k_head),
    }

    out = chest_xray_forward(x_global, x_local, params)
    out = jax.block_until_ready(out)
    assert out.shape == (2, NUM_CLASSES) and out.dtype == jnp.float32
    print("KERNEL_OK")
</pallas_src>

<mosaic_0001>
module attributes {stable_mosaic.version = 11 : i64} {
  func.func @_fpn_scale_kernel(%arg0: i32, %arg1: memref<2x16x16x256xf32, #tpu.memory_space<vmem>>, %arg2: memref<1x9x256xf32, #tpu.memory_space<vmem>>, %arg3: memref<1x1x256xf32, #tpu.memory_space<vmem>>, %arg4: memref<1x256x256xbf16, #tpu.memory_space<vmem>>, %arg5: memref<1x1x256xf32, #tpu.memory_space<vmem>>, %arg6: memref<1x2x256xf32, #tpu.memory_space<vmem>>, %arg7: memref<2x18x18x256xf32, #tpu.memory_space<vmem>>) attributes {dimension_semantics = [#tpu.dimension_semantics<parallel>], iteration_bounds = array<i64: 2>, scalar_prefetch = 0 : i64, scratch_operands = 1 : i64, tpu.core_type = #tpu.core_type<tc>, window_params = [{transform_indices = @transform_0, window_bounds = array<i64: 2, 16, 16, 256>}, {transform_indices = @transform_1, window_bounds = array<i64: 1, 9, 256>}, {transform_indices = @transform_2, window_bounds = array<i64: 1, 1, 256>}, {transform_indices = @transform_3, window_bounds = array<i64: 1, 256, 256>}, {transform_indices = @transform_4, window_bounds = array<i64: 1, 1, 256>}, {transform_indices = @transform_5, window_bounds = array<i64: 1, 2, 256>}]} {
    %cst = arith.constant 0.000000e+00 : f32
    %0 = vector.broadcast %cst : f32 to vector<2x1x18x256xf32>
    %c0 = arith.constant 0 : index
    %c0_0 = arith.constant 0 : index
    %c0_1 = arith.constant 0 : index
    %c0_2 = arith.constant 0 : index
    %1 = vector.load %arg7[%c0, %c0_0, %c0_1, %c0_2] : memref<2x18x18x256xf32, #tpu.memory_space<vmem>>, vector<2x1x18x256xf32>
    tpu.vector_store %arg7[%c0, %c0_0, %c0_1, %c0_2], %0 {strides = array<i32>} : memref<2x18x18x256xf32, #tpu.memory_space<vmem>>, vector<2x1x18x256xf32>,
    %cst_3 = arith.constant 0.000000e+00 : f32
    %2 = vector.broadcast %cst_3 : f32 to vector<2x1x18x256xf32>
    %c0_4 = arith.constant 0 : index
    %c17 = arith.constant 17 : index
    %c0_5 = arith.constant 0 : index
    %c0_6 = arith.constant 0 : index
    %3 = vector.load %arg7[%c0_4, %c17, %c0_5, %c0_6] : memref<2x18x18x256xf32, #tpu.memory_space<vmem>>, vector<2x1x18x256xf32>
    tpu.vector_store %arg7[%c0_4, %c17, %c0_5, %c0_6], %2 {strides = array<i32>} : memref<2x18x18x256xf32, #tpu.memory_space<vmem>>, vector<2x1x18x256xf32>,
    %cst_7 = arith.constant 0.000000e+00 : f32
    %4 = vector.broadcast %cst_7 : f32 to vector<2x18x1x256xf32>
    %c0_8 = arith.constant 0 : index
    %c0_9 = arith.constant 0 : index
    %c0_10 = arith.constant 0 : index
    %c0_11 = arith.constant 0 : index
    %5 = vector.load %arg7[%c0_8, %c0_9, %c0_10, %c0_11] : memref<2x18x18x256xf32, #tpu.memory_space<vmem>>, vector<2x18x1x256xf32>
    tpu.vector_store %arg7[%c0_8, %c0_9, %c0_10, %c0_11], %4 {strides = array<i32>} : memref<2x18x18x256xf32, #tpu.memory_space<vmem>>, vector<2x18x1x256xf32>,
    %cst_12 = arith.constant 0.000000e+00 : f32
    %6 = vector.broadcast %cst_12 : f32 to vector<2x18x1x256xf32>
    %c0_13 = arith.constant 0 : index
    %c0_14 = arith.constant 0 : index
    %c17_15 = arith.constant 17 : index
    %c0_16 = arith.constant 0 : index
    %7 = vector.load %arg7[%c0_13, %c0_14, %c17_15, %c0_16] : memref<2x18x18x256xf32, #tpu.memory_space<vmem>>, vector<2x18x1x256xf32>
    tpu.vector_store %arg7[%c0_13, %c0_14, %c17_15, %c0_16], %6 {strides = array<i32>} : memref<2x18x18x256xf32, #tpu.memory_space<vmem>>, vector<2x18x1x256xf32>,
    %c0_17 = arith.constant 0 : index
    %c0_18 = arith.constant 0 : index
    %c0_19 = arith.constant 0 : index
    %c0_20 = arith.constant 0 : index
    %8 = vector.load %arg1[%c0_17, %c0_18, %c0_19, %c0_20] : memref<2x16x16x256xf32, #tpu.memory_space<vmem>>, vector<2x16x16x256xf32>
    %c0_21 = arith.constant 0 : index
    %c1 = arith.constant 1 : index
    %c1_22 = arith.constant 1 : index
    %c0_23 = arith.constant 0 : index
    %9 = vector.load %arg7[%c0_21, %c1, %c1_22, %c0_23] : memref<2x18x18x256xf32, #tpu.memory_space<vmem>>, vector<2x16x16x256xf32>
    tpu.vector_store %arg7[%c0_21, %c1, %c1_22, %c0_23], %8 {strides = array<i32>} : memref<2x18x18x256xf32, #tpu.memory_space<vmem>>, vector<2x16x16x256xf32>,
    %c0_24 = arith.constant 0 : index
    %c0_25 = arith.constant 0 : index
    %c0_26 = arith.constant 0 : index
    %10 = vector.load %arg2[%c0_24, %c0_25, %c0_26] : memref<1x9x256xf32, #tpu.memory_space<vmem>>, vector<1x1x256xf32>
    %11 = vector.shape_cast %10 : vector<1x1x256xf32> to vector<1x1x1x256xf32>
    %c0_27 = arith.constant 0 : index
    %c0_28 = arith.constant 0 : index
    %c0_29 = arith.constant 0 : index
    %c0_30 = arith.constant 0 : index
    %12 = vector.load %arg7[%c0_27, %c0_28, %c0_29, %c0_30] : memref<2x18x18x256xf32, #tpu.memory_space<vmem>>, vector<2x16x16x256xf32>
    %13 = vector.broadcast %11 : vector<1x1x1x256xf32> to vector<2x16x16x256xf32>
    %14 = arith.mulf %12, %13 : vector<2x16x16x256xf32>
    %c0_31 = arith.constant 0 : index
    %c1_32 = arith.constant 1 : index
    %c0_33 = arith.constant 0 : index
    %15 = vector.load %arg2[%c0_31, %c1_32, %c0_33] : memref<1x9x256xf32, #tpu.memory_space<vmem>>, vector<1x1x256xf32>
    %16 = vector.shape_cast %15 : vector<1x1x256xf32> to vector<1x1x1x256xf32>
    %c0_34 = arith.constant 0 : index
    %c0_35 = arith.constant 0 : index
    %c1_36 = arith.constant 1 : index
    %c0_37 = arith.constant 0 : index
    %17 = vector.load %arg7[%c0_34, %c0_35, %c1_36, %c0_37] : memref<2x18x18x256xf32, #tpu.memory_space<vmem>>, vector<2x16x16x256xf32>
    %18 = vector.broadcast %16 : vector<1x1x1x256xf32> to vector<2x16x16x256xf32>
    %19 = arith.mulf %17, %18 : vector<2x16x16x256xf32>
    %20 = arith.addf %14, %19 : vector<2x16x16x256xf32>
    %c0_38 = arith.constant 0 : index
    %c2 = arith.constant 2 : index
    %c0_39 = arith.constant 0 : index
    %21 = vector.load %arg2[%c0_38, %c2, %c0_39] : memref<1x9x256xf32, #tpu.memory_space<vmem>>, vector<1x1x256xf32>
    %22 = vector.shape_cast %21 : vector<1x1x256xf32> to vector<1x1x1x256xf32>
    %c0_40 = arith.constant 0 : index
    %c0_41 = arith.constant 0 : index
    %c2_42 = arith.constant 2 : index
    %c0_43 = arith.constant 0 : index
    %23 = vector.load %arg7[%c0_40, %c0_41, %c2_42, %c0_43] : memref<2x18x18x256xf32, #tpu.memory_space<vmem>>, vector<2x16x16x256xf32>
    %24 = vector.broadcast %22 : vector<1x1x1x256xf32> to vector<2x16x16x256xf32>
    %25 = arith.mulf %23, %24 : vector<2x16x16x256xf32>
    %26 = arith.addf %20, %25 : vector<2x16x16x256xf32>
    %c0_44 = arith.constant 0 : index
    %c3 = arith.constant 3 : index
    %c0_45 = arith.constant 0 : index
    %27 = vector.load %arg2[%c0_44, %c3, %c0_45] : memref<1x9x256xf32, #tpu.memory_space<vmem>>, vector<1x1x256xf32>
    %28 = vector.shape_cast %27 : vector<1x1x256xf32> to vector<1x1x1x256xf32>
    %c0_46 = arith.constant 0 : index
    %c1_47 = arith.constant 1 : index
    %c0_48 = arith.constant 0 : index
    %c0_49 = arith.constant 0 : index
    %29 = vector.load %arg7[%c0_46, %c1_47, %c0_48, %c0_49] : memref<2x18x18x256xf32, #tpu.memory_space<vmem>>, vector<2x16x16x256xf32>
    %30 = vector.broadcast %28 : vector<1x1x1x256xf32> to vector<2x16x16x256xf32>
    %31 = arith.mulf %29, %30 : vector<2x16x16x256xf32>
    %32 = arith.addf %26, %31 : vector<2x16x16x256xf32>
    %c0_50 = arith.constant 0 : index
    %c4 = arith.constant 4 : index
    %c0_51 = arith.constant 0 : index
    %33 = vector.load %arg2[%c0_50, %c4, %c0_51] : memref<1x9x256xf32, #tpu.memory_space<vmem>>, vector<1x1x256xf32>
    %34 = vector.shape_cast %33 : vector<1x1x256xf32> to vector<1x1x1x256xf32>
    %c0_52 = arith.constant 0 : index
    %c1_53 = arith.constant 1 : index
    %c1_54 = arith.constant 1 : index
    %c0_55 = arith.constant 0 : index
    %35 = vector.load %arg7[%c0_52, %c1_53, %c1_54, %c0_55] : memref<2x18x18x256xf32, #tpu.memory_space<vmem>>, vector<2x16x16x256xf32>
    %36 = vector.broadcast %34 : vector<1x1x1x256xf32> to vector<2x16x16x256xf32>
    %37 = arith.mulf %35, %36 : vector<2x16x16x256xf32>
    %38 = arith.addf %32, %37 : vector<2x16x16x256xf32>
    %c0_56 = arith.constant 0 : index
    %c5 = arith.constant 5 : index
    %c0_57 = arith.constant 0 : index
    %39 = vector.load %arg2[%c0_56, %c5, %c0_57] : memref<1x9x256xf32, #tpu.memory_space<vmem>>, vector<1x1x256xf32>
    %40 = vector.shape_cast %39 : vector<1x1x256xf32> to vector<1x1x1x256xf32>
    %c0_58 = arith.constant 0 : index
    %c1_59 = arith.constant 1 : index
    %c2_60 = arith.constant 2 : index
    %c0_61 = arith.constant 0 : index
    %41 = vector.load %arg7[%c0_58, %c1_59, %c2_60, %c0_61] : memref<2x18x18x256xf32, #tpu.memory_space<vmem>>, vector<2x16x16x256xf32>
    %42 = vector.broadcast %40 : vector<1x1x1x256xf32> to vector<2x16x16x256xf32>
    %43 = arith.mulf %41, %42 : vector<2x16x16x256xf32>
    %44 = arith.addf %38, %43 : vector<2x16x16x256xf32>
    %c0_62 = arith.constant 0 : index
    %c6 = arith.constant 6 : index
    %c0_63 = arith.constant 0 : index
    %45 = vector.load %arg2[%c0_62, %c6, %c0_63] : memref<1x9x256xf32, #tpu.memory_space<vmem>>, vector<1x1x256xf32>
    %46 = vector.shape_cast %45 : vector<1x1x256xf32> to vector<1x1x1x256xf32>
    %c0_64 = arith.constant 0 : index
    %c2_65 = arith.constant 2 : index
    %c0_66 = arith.constant 0 : index
    %c0_67 = arith.constant 0 : index
    %47 = vector.load %arg7[%c0_64, %c2_65, %c0_66, %c0_67] : memref<2x18x18x256xf32, #tpu.memory_space<vmem>>, vector<2x16x16x256xf32>
    %48 = vector.broadcast %46 : vector<1x1x1x256xf32> to vector<2x16x16x256xf32>
    %49 = arith.mulf %47, %48 : vector<2x16x16x256xf32>
    %50 = arith.addf %44, %49 : vector<2x16x16x256xf32>
    %c0_68 = arith.constant 0 : index
    %c7 = arith.constant 7 : index
    %c0_69 = arith.constant 0 : index
    %51 = vector.load %arg2[%c0_68, %c7, %c0_69] : memref<1x9x256xf32, #tpu.memory_space<vmem>>, vector<1x1x256xf32>
    %52 = vector.shape_cast %51 : vector<1x1x256xf32> to vector<1x1x1x256xf32>
    %c0_70 = arith.constant 0 : index
    %c2_71 = arith.constant 2 : index
    %c1_72 = arith.constant 1 : index
    %c0_73 = arith.constant 0 : index
    %53 = vector.load %arg7[%c0_70, %c2_71, %c1_72, %c0_73] : memref<2x18x18x256xf32, #tpu.memory_space<vmem>>, vector<2x16x16x256xf32>
    %54 = vector.broadcast %52 : vector<1x1x1x256xf32> to vector<2x16x16x256xf32>
    %55 = arith.mulf %53, %54 : vector<2x16x16x256xf32>
    %56 = arith.addf %50, %55 : vector<2x16x16x256xf32>
    %c0_74 = arith.constant 0 : index
    %c8 = arith.constant 8 : index
    %c0_75 = arith.constant 0 : index
    %57 = vector.load %arg2[%c0_74, %c8, %c0_75] : memref<1x9x256xf32, #tpu.memory_space<vmem>>, vector<1x1x256xf32>
    %58 = vector.shape_cast %57 : vector<1x1x256xf32> to vector<1x1x1x256xf32>
    %c0_76 = arith.constant 0 : index
    %c2_77 = arith.constant 2 : index
    %c2_78 = arith.constant 2 : index
    %c0_79 = arith.constant 0 : index
    %59 = vector.load %arg7[%c0_76, %c2_77, %c2_78, %c0_79] : memref<2x18x18x256xf32, #tpu.memory_space<vmem>>, vector<2x16x16x256xf32>
    %60 = vector.broadcast %58 : vector<1x1x1x256xf32> to vector<2x16x16x256xf32>
    %61 = arith.mulf %59, %60 : vector<2x16x16x256xf32>
    %62 = arith.addf %56, %61 : vector<2x16x16x256xf32>
    %c0_80 = arith.constant 0 : index
    %c0_81 = arith.constant 0 : index
    %c0_82 = arith.constant 0 : index
    %63 = vector.load %arg3[%c0_80, %c0_81, %c0_82] : memref<1x1x256xf32, #tpu.memory_space<vmem>>, vector<1x1x256xf32>
    %64 = vector.shape_cast %63 : vector<1x1x256xf32> to vector<1x1x1x256xf32>
    %65 = vector.broadcast %64 : vector<1x1x1x256xf32> to vector<2x16x16x256xf32>
    %66 = arith.addf %62, %65 : vector<2x16x16x256xf32>
    %cst_83 = arith.constant 0.000000e+00 : f32
    %67 = vector.broadcast %cst_83 : f32 to vector<2x16x16x256xf32>
    %68 = arith.maximumf %66, %67 : vector<2x16x16x256xf32>
    %69 = vector.shape_cast %68 : vector<2x16x16x256xf32> to vector<512x256xf32>
    %70 = arith.truncf %69 : vector<512x256xf32> to vector<512x256xbf16>
    %c0_84 = arith.constant 0 : index
    %c0_85 = arith.constant 0 : index
    %c0_86 = arith.constant 0 : index
    %71 = vector.load %arg4[%c0_84, %c0_85, %c0_86] : memref<1x256x256xbf16, #tpu.memory_space<vmem>>, vector<1x256x256xbf16>
    %72 = vector.shape_cast %71 : vector<1x256x256xbf16> to vector<256x256xbf16>
    %cst_87 = arith.constant dense<0.000000e+00> : vector<512x256xf32>
    %73 = tpu.matmul %70, %72, %cst_87 {dimension_numbers = #tpu.dot_dimension_numbers<[1], [0], [0], [1], [0, 0, 1, 1], [], []>} : vector<512x256xbf16>, vector<256x256xbf16>, vector<512x256xf32> -> vector<512x256xf32>
    %c0_88 = arith.constant 0 : index
    %c0_89 = arith.constant 0 : index
    %c0_90 = arith.constant 0 : index
    %74 = vector.load %arg5[%c0_88, %c0_89, %c0_90] : memref<1x1x256xf32, #tpu.memory_space<vmem>>, vector<1x1x256xf32>
    %75 = vector.shape_cast %74 : vector<1x1x256xf32> to vector<1x256xf32>
    %76 = vector.broadcast %75 : vector<1x256xf32> to vector<512x256xf32>
    %77 = arith.addf %73, %76 : vector<512x256xf32>
    %cst_91 = arith.constant 0.000000e+00 : f32
    %78 = vector.broadcast %cst_91 : f32 to vector<512x256xf32>
    %79 = arith.maximumf %77, %78 : vector<512x256xf32>
    %80 = vector.shape_cast %79 : vector<512x256xf32> to vector<2x256x256xf32>
    %cst_92 = arith.constant dense<0.000000e+00> : vector<2x256xf32>
    %81 = vector.multi_reduction <add>, %80, %cst_92 [1] : vector<2x256x256xf32> to vector<2x256xf32>
    %cst_93 = arith.constant 2.560000e+02 : f32
    %82 = vector.broadcast %cst_93 : f32 to vector<2x256xf32>
    %83 = arith.divf %81, %82 : vector<2x256xf32>
    %84 = vector.shape_cast %83 : vector<2x256xf32> to vector<1x2x256xf32>
    %c0_94 = arith.constant 0 : index
    %c0_95 = arith.constant 0 : index
    %c0_96 = arith.constant 0 : index
    %85 = vector.load %arg6[%c0_94, %c0_95, %c0_96] : memref<1x2x256xf32, #tpu.memory_space<vmem>>, vector<1x2x256xf32>
    tpu.vector_store %arg6[%c0_94, %c0_95, %c0_96], %84 {strides = array<i32>} : memref<1x2x256xf32, #tpu.memory_space<vmem>>, vector<1x2x256xf32>,
    return
  }
  func.func @transform_0(%arg0: i32) -> (i32, i32, i32, i32) {
    %c0_i32 = arith.constant 0 : i32
    %c0_i32_0 = arith.constant 0 : i32
    %c0_i32_1 = arith.constant 0 : i32
    %c0_i32_2 = arith.constant 0 : i32
    return %arg0, %c0_i32, %c0_i32_0, %c0_i32_1 : i32, i32, i32, i32
  }
  func.func @transform_1(%arg0: i32) -> (i32, i32, i32) {
    %c0_i32 = arith.constant 0 : i32
    %c0_i32_0 = arith.constant 0 : i32
    %c0_i32_1 = arith.constant 0 : i32
    return %arg0, %c0_i32, %c0_i32_0 : i32, i32, i32
  }
  func.func @transform_2(%arg0: i32) -> (i32, i32, i32) {
    %c0_i32 = arith.constant 0 : i32
    %c0_i32_0 = arith.constant 0 : i32
    %c0_i32_1 = arith.constant 0 : i32
    return %arg0, %c0_i32, %c0_i32_0 : i32, i32, i32
  }
  func.func @transform_3(%arg0: i32) -> (i32, i32, i32) {
    %c0_i32 = arith.constant 0 : i32
    %c0_i32_0 = arith.constant 0 : i32
    %c0_i32_1 = arith.constant 0 : i32
    return %arg0, %c0_i32, %c0_i32_0 : i32, i32, i32
  }
  func.func @transform_4(%arg0: i32) -> (i32, i32, i32) {
    %c0_i32 = arith.constant 0 : i32
    %c0_i32_0 = arith.constant 0 : i32
    %c0_i32_1 = arith.constant 0 : i32
    return %arg0, %c0_i32, %c0_i32_0 : i32, i32, i32
  }
  func.func @transform_5(%arg0: i32) -> (i32, i32, i32) {
    %c0_i32 = arith.constant 0 : i32
    %c0_i32_0 = arith.constant 0 : i32
    %c0_i32_1 = arith.constant 0 : i32
    return %arg0, %c0_i32, %c0_i32_0 : i32, i32, i32
  }
}

</mosaic_0001>

<llo_original>
// kernel: tpu_custom_call.1
$region0: #{tpu_custom_call.1}
  #allocation0 [shape = 'u32[]', space=smem, size = 0x4, offset = 0x4, fixed_abs, tag = 'smem constant byte address 0x4 - core index']
  #allocation1 [shape = 'u32[144,128]{1,0:T(1,128)}', space=vmem, size = 0x12000, scoped, tag = 'internal scratch']
  #allocation2 [shape = 'f32[2,18,18,256]{3,2,1,0:T(8,128)}', space=vmem, size = 0xd8000, scoped, tag = 'scratch operand']
  %s0 = inlined_call_operand.hbm [shape: f32[4,16,16,256], index: 0, kind: input, shape index: {}]
  %s1 = inlined_call_operand.vmem [shape: f32[2,9,256], index: 1, kind: input, shape index: {}]
  %s2 = inlined_call_operand.vmem [shape: f32[2,1,256], index: 2, kind: input, shape index: {}]
  %s3 = inlined_call_operand.hbm [shape: bf16[2,256,256], index: 3, kind: input, shape index: {}]
  %s4 = inlined_call_operand.vmem [shape: f32[2,1,256], index: 4, kind: input, shape index: {}]
  %s5 = inlined_call_operand.hbm [shape: f32[2,2,256], index: 5, kind: output, shape index: {}]
  %s6 = sld [smem:[#allocation0]]
  $region61: #{tpu_custom_call.1} parent=0
    _
  %s8 = ssub.s32 1, %s6
  %s9 = scalar_select 0, %s8, %s6
  $region1: #{tpu_custom_call.1} parent=0
    #allocation3 [shape = 'u8[1048576]{0}', space=vmem, size = 0x100000, scoped, tag = 'input window, operand 0']
    #allocation4 [shape = 's32[2]{0}', space=sflag, size = 0x8, scoped, tag = 'scoped memory for tpu_custom_call.1']
    #allocation5 [shape = 's32[2]{0}', space=sflag, size = 0x8, scoped, tag = 'scoped memory for tpu_custom_call.1']
    #allocation6 [shape = 'u8[262144]{0}', space=vmem, size = 0x40000, scoped, tag = 'input window, operand 3']
    #allocation7 [shape = 's32[2]{0}', space=sflag, size = 0x8, scoped, tag = 'scoped memory for tpu_custom_call.1']
    #allocation8 [shape = 'u8[4096]{0}', space=vmem, size = 0x1000, scoped, tag = 'output window, operand 0']
    %10 = vsyncpa [#allocation4], 0
    %s11 = scalar_lea.sflag [#allocation4], 1
    %12 = vsyncpa %s11, 0
    %13 = vsyncpa [#allocation7], 0
    %s14 = scalar_lea.sflag [#allocation7], 1
    %15 = vsyncpa %s14, 0
    %16 = vsyncpa [#allocation5], 0
    %s17 = scalar_lea.sflag [#allocation5], 1
    %18 = vsyncpa %s17, 0
    loop: start=0, step=1, limit=4
    $region2: #{tpu_custom_call.1} parent=1 // loop_pre_header
      _
    $region3: #{tpu_custom_call.1} parent=1 // loop_header
      %s20 = sphi 0, %s24
      %p21 = scmp.ge.s32.totalorder %s20, 4
      %s30 = sphi 0, %s32
      %s33 = sphi 0, %s30
      %s34 = sphi 0, %s33
      %s50 = sphi 0, %s34
      %s56 = sphi 0, %s58
      %s59 = sphi 0, %s56
      %s60 = sphi 0, %s59
      %s76 = sphi 0, %s60
      %s82 = sphi 0, %s84
      %s85 = sphi 0, %s82
      %s86 = sphi 0, %s85
      %s102 = sphi 0, %s86
      %s108 = sphi 0, %s110
      %s111 = sphi 0, %s108
      %s112 = sphi 0, %s111
      %s128 = sphi 0, %s112
      %s134 = sphi 0, %s136
      %s137 = sphi 0, %s134
      %s138 = sphi 0, %s137
      %s154 = sphi 0, %s138
      %s160 = sphi 0, %s162
      %s163 = sphi 0, %s160
      %s164 = sphi 0, %s163
      %s180 = sphi 0, %s164
    $region4: #{tpu_custom_call.1} parent=1 // loop_header_branch
      %23 = sbr.rel (%p21) target = $region8
    $region5: #{tpu_custom_call.1} parent=1 // loop_body
      %s25 = ssub.s32 %s20, 1
      %s26 = ssub.s32 %s20, 2
      %s27 = sadd.s32 %s20, 1
      %s28 = ssub.s32 %s20, %s27
      %p29 = scmp.eq.s32.totalorder %s28, 0
      %s31 = sadd.s32 %s30, 1
      %s32 = scalar_select %p29, %s30, %s31
      %p35 = pneg %p29
      %p36 = scmp.eq.s32.totalorder %s20, 1
      %p37 = por %p35, %p36
      %p38 = scmp.ne.s32.totalorder %s30, %s33
      %p39 = scmp.eq.s32.totalorder %s20, 0
      %p40 = por %p38, %p39
      %p41 = scmp.ne.s32.totalorder %s30, %s33
      %p42 = scmp.eq.s32.totalorder %s25, 1
      %p43 = por %p41, %p42
      %p44 = scmp.ne.s32.totalorder %s33, %s34
      %p45 = scmp.eq.s32.totalorder %s25, 0
      %p46 = por %p44, %p45
      %p47 = scmp.ne.s32.totalorder %s33, %s34
      %p48 = scmp.eq.s32.totalorder %s26, 1
      %p49 = por %p47, %p48
      %p51 = scmp.ne.s32.totalorder %s34, %s50
      %p52 = scmp.eq.s32.totalorder %s26, 0
      %p53 = por %p51, %p52
      %s54 = ssub.s32 %s20, %s27
      %p55 = scmp.eq.s32.totalorder %s54, 0
      %s57 = sadd.s32 %s56, 1
      %s58 = scalar_select %p55, %s56, %s57
      %p61 = pneg %p55
      %p62 = scmp.eq.s32.totalorder %s20, 1
      %p63 = por %p61, %p62
      %p64 = scmp.ne.s32.totalorder %s56, %s59
      %p65 = scmp.eq.s32.totalorder %s20, 0
      %p66 = por %p64, %p65
      %p67 = scmp.ne.s32.totalorder %s56, %s59
      %p68 = scmp.eq.s32.totalorder %s25, 1
      %p69 = por %p67, %p68
      %p70 = scmp.ne.s32.totalorder %s59, %s60
      %p71 = scmp.eq.s32.totalorder %s25, 0
      %p72 = por %p70, %p71
      %p73 = scmp.ne.s32.totalorder %s59, %s60
      %p74 = scmp.eq.s32.totalorder %s26, 1
      %p75 = por %p73, %p74
      %p77 = scmp.ne.s32.totalorder %s60, %s76
      %p78 = scmp.eq.s32.totalorder %s26, 0
      %p79 = por %p77, %p78
      %s80 = ssub.s32 %s20, %s27
      %p81 = scmp.eq.s32.totalorder %s80, 0
      %s83 = sadd.s32 %s82, 1
      %s84 = scalar_select %p81, %s82, %s83
      %p87 = pneg %p81
      %p88 = scmp.eq.s32.totalorder %s20, 1
      %p89 = por %p87, %p88
      %p90 = scmp.ne.s32.totalorder %s82, %s85
      %p91 = scmp.eq.s32.totalorder %s20, 0
      %p92 = por %p90, %p91
      %p93 = scmp.ne.s32.totalorder %s82, %s85
      %p94 = scmp.eq.s32.totalorder %s25, 1
      %p95 = por %p93, %p94
      %p96 = scmp.ne.s32.totalorder %s85, %s86
      %p97 = scmp.eq.s32.totalorder %s25, 0
      %p98 = por %p96, %p97
      %p99 = scmp.ne.s32.totalorder %s85, %s86
      %p100 = scmp.eq.s32.totalorder %s26, 1
      %p101 = por %p99, %p100
      %p103 = scmp.ne.s32.totalorder %s86, %s102
      %p104 = scmp.eq.s32.totalorder %s26, 0
      %p105 = por %p103, %p104
      %s106 = ssub.s32 %s20, %s27
      %p107 = scmp.eq.s32.totalorder %s106, 0
      %s109 = sadd.s32 %s108, 1
      %s110 = scalar_select %p107, %s108, %s109
      %p113 = pneg %p107
      %p114 = scmp.eq.s32.totalorder %s20, 1
      %p115 = por %p113, %p114
      %p116 = scmp.ne.s32.totalorder %s108, %s111
      %p117 = scmp.eq.s32.totalorder %s20, 0
      %p118 = por %p116, %p117
      %p119 = scmp.ne.s32.totalorder %s108, %s111
      %p120 = scmp.eq.s32.totalorder %s25, 1
      %p121 = por %p119, %p120
      %p122 = scmp.ne.s32.totalorder %s111, %s112
      %p123 = scmp.eq.s32.totalorder %s25, 0
      %p124 = por %p122, %p123
      %p125 = scmp.ne.s32.totalorder %s111, %s112
      %p126 = scmp.eq.s32.totalorder %s26, 1
      %p127 = por %p125, %p126
      %p129 = scmp.ne.s32.totalorder %s112, %s128
      %p130 = scmp.eq.s32.totalorder %s26, 0
      %p131 = por %p129, %p130
      %s132 = ssub.s32 %s20, %s27
      %p133 = scmp.eq.s32.totalorder %s132, 0
      %s135 = sadd.s32 %s134, 1
      %s136 = scalar_select %p133, %s134, %s135
      %p139 = pneg %p133
      %p140 = scmp.eq.s32.totalorder %s20, 1
      %p141 = por %p139, %p140
      %p142 = scmp.ne.s32.totalorder %s134, %s137
      %p143 = scmp.eq.s32.totalorder %s20, 0
      %p144 = por %p142, %p143
      %p145 = scmp.ne.s32.totalorder %s134, %s137
      %p146 = scmp.eq.s32.totalorder %s25, 1
      %p147 = por %p145, %p146
      %p148 = scmp.ne.s32.totalorder %s137, %s138
      %p149 = scmp.eq.s32.totalorder %s25, 0
      %p150 = por %p148, %p149
      %p151 = scmp.ne.s32.totalorder %s137, %s138
      %p152 = scmp.eq.s32.totalorder %s26, 1
      %p153 = por %p151, %p152
      %p155 = scmp.ne.s32.totalorder %s138, %s154
      %p156 = scmp.eq.s32.totalorder %s26, 0
      %p157 = por %p155, %p156
      %s158 = ssub.s32 %s20, %s27
      %p159 = scmp.eq.s32.totalorder %s158, 0
      %s161 = sadd.s32 %s160, 1
      %s162 = scalar_select %p159, %s160, %s161
      %p165 = pneg %p159
      %p166 = scmp.eq.s32.totalorder %s20, 1
      %p167 = por %p165, %p166
      %p168 = scmp.ne.s32.totalorder %s160, %s163
      %p169 = scmp.eq.s32.totalorder %s20, 0
      %p170 = por %p168, %p169
      %p171 = scmp.ne.s32.totalorder %s160, %s163
      %p172 = scmp.eq.s32.totalorder %s25, 1
      %p173 = por %p171, %p172
      %p174 = scmp.ne.s32.totalorder %s163, %s164
      %p175 = scmp.eq.s32.totalorder %s25, 0
      %p176 = por %p174, %p175
      %p177 = scmp.ne.s32.totalorder %s163, %s164
      %p178 = scmp.eq.s32.totalorder %s26, 1
      %p179 = por %p177, %p178
      %p181 = scmp.ne.s32.totalorder %s164, %s180
      %p182 = scmp.eq.s32.totalorder %s26, 0
      %p183 = por %p181, %p182
      %p184 = scmp.le.s32.totalorder 1, %s20
      %p185 = scmp.lt.s32.totalorder %s20, 3
      %p186 = pnand %p184, %p185
      %p187 = pneg %p186
      // Predicated region
      $region9: #{tpu_custom_call.1} parent=5 // pred_check
        _
      $region10: #{tpu_custom_call.1} parent=5 // pred_check_branch
        %189 = sbr.rel (%p186) target = $region12
      $region11: #{tpu_custom_call.1} parent=5 // pred_region
        %s190 = ssub.s32 %s20, 1
      $region12: #{tpu_custom_call.1} parent=5 // pred_fallthru
        _
      %p191 = scmp.lt.s32.totalorder %s20, 2
      // Predicated region
      $region13: #{tpu_custom_call.1} parent=5 // pred_check
        %p192 = pneg %p191
      $region14: #{tpu_custom_call.1} parent=5 // pred_check_branch
        %194 = sbr.rel (%p192) target = $region16
      $region15: #{tpu_custom_call.1} parent=5 // pred_region
        // Predicated region
        $region17: #{tpu_custom_call.1} parent=15 // pred_check
          %p195 = pneg %p40
        $region18: #{tpu_custom_call.1} parent=15 // pred_check_branch
          %197 = sbr.rel (%p195) target = $region20
        $region19: #{tpu_custom_call.1} parent=15 // pred_region
          %s198 = sand.u32 %s30, 1
          %s199 = scalar_lea.sflag [#allocation4], %s198
          %s200 = sand.u32 %s30, 1
          %s201 = smul.addr %s200, 1024
          %s202 = scalar_lea.vmem [#allocation3], %s201
          %s203 = smul.u32 2, %s20
          %s205 = ssub.s32 16384, 16384
          %206 = vsyncadd %s199, %s205
          %s207 = smul.addr %s203, 64
          %s208 = smul.addr %s207, 128
          %s209 = scalar_lea.hbm %s0, %s208
          %s210 = sshll.u32 %s202, 4
          %s211 = int_to_ptr.vmem [resolvable:$true] %s210
          %216 = dma.hbm_to_vmem [thread:$0]  %s209, 16384, %s211, %s199, 256, 256, 16
        $region20: #{tpu_custom_call.1} parent=15 // pred_fallthru
          _
        // Predicated region
        $region21: #{tpu_custom_call.1} parent=15 // pred_check
          %p217 = pneg %p66
        $region22: #{tpu_custom_call.1} parent=15 // pred_check_branch
          %219 = sbr.rel (%p217) target = $region24
        $region23: #{tpu_custom_call.1} parent=15 // pred_region
          %p220 = scmp.lt.s32.totalorder %s20, 1
          %s221 = scalar_select %p220, %s20, 1
          %s222 = smul.addr %s221, 4
          %s223 = smul.addr %s222, 8
          %s224 = scalar_lea.vmem %s1, %s223
        $region24: #{tpu_custom_call.1} parent=15 // pred_fallthru
          _
        // Predicated region
        $region25: #{tpu_custom_call.1} parent=15 // pred_check
          %p225 = pneg %p92
        $region26: #{tpu_custom_call.1} parent=15 // pred_check_branch
          %227 = sbr.rel (%p225) target = $region28
        $region27: #{tpu_custom_call.1} parent=15 // pred_region
          %p228 = scmp.lt.s32.totalorder %s20, 1
          %s229 = scalar_select %p228, %s20, 1
          %s230 = smul.addr %s229, 2
          %s231 = scalar_lea.vmem %s2, %s230
        $region28: #{tpu_custom_call.1} parent=15 // pred_fallthru
          _
        // Predicated region
        $region29: #{tpu_custom_call.1} parent=15 // pred_check
          %p232 = pneg %p118
        $region30: #{tpu_custom_call.1} parent=15 // pred_check_branch
          %234 = sbr.rel (%p232) target = $region32
        $region31: #{tpu_custom_call.1} parent=15 // pred_region
          %s235 = sand.u32 %s108, 1
          %s236 = scalar_lea.sflag [#allocation7], %s235
          %s237 = sand.u32 %s108, 1
          %s238 = smul.addr %s237, 256
          %s239 = scalar_lea.vmem [#allocation6], %s238
          %s241 = ssub.s32 4096, 4096
          %242 = vsyncadd %s236, %s241
          %s243 = smul.addr %s20, 64
          %s244 = smul.addr %s243, 64
          %s245 = scalar_lea.hbm %s3, %s244
          %s246 = sshll.u32 %s239, 4
          %s247 = int_to_ptr.vmem [resolvable:$true] %s246
          %252 = dma.hbm_to_vmem [thread:$0]  %s245, 4096, %s247, %s236, 128, 128, 8
        $region32: #{tpu_custom_call.1} parent=15 // pred_fallthru
          _
        // Predicated region
        $region33: #{tpu_custom_call.1} parent=15 // pred_check
          %p253 = pneg %p144
        $region34: #{tpu_custom_call.1} parent=15 // pred_check_branch
          %255 = sbr.rel (%p253) target = $region36
        $region35: #{tpu_custom_call.1} parent=15 // pred_region
          %p256 = scmp.lt.s32.totalorder %s20, 1
          %s257 = scalar_select %p256, %s20, 1
          %s258 = smul.addr %s257, 2
          %s259 = scalar_lea.vmem %s4, %s258
        $region36: #{tpu_custom_call.1} parent=15 // pred_fallthru
          _
      $region16: #{tpu_custom_call.1} parent=5 // pred_fallthru
        _
      %p260 = scmp.le.s32.totalorder 1, %s20
      %p261 = scmp.lt.s32.totalorder %s20, 3
      %p262 = pnand %p260, %p261
      %p263 = pneg %p262
      // Predicated region
      $region37: #{tpu_custom_call.1} parent=5 // pred_check
        _
      $region38: #{tpu_custom_call.1} parent=5 // pred_check_branch
        %265 = sbr.rel (%p262) target = $region40
      $region39: #{tpu_custom_call.1} parent=5 // pred_region
        %s266 = ssub.s32 %s20, 1
        %s267 = sand.u32 %s33, 1
        %s268 = scalar_lea.sflag [#allocation4], %s267
        %s269 = sand.u32 %s33, 1
        %s270 = smul.addr %s269, 1024
        %s271 = scalar_lea.vmem [#allocation3], %s270
        // Predicated region
        $region41: #{tpu_custom_call.1} parent=39 // pred_check
          %p272 = pneg %p46
        $region42: #{tpu_custom_call.1} parent=39 // pred_check_branch
          %274 = sbr.rel (%p272) target = $region44
        $region43: #{tpu_custom_call.1} parent=39 // pred_region
          %275 = dma.done %s268, 16384
        $region44: #{tpu_custom_call.1} parent=39 // pred_fallthru
          _
        %s276 = sand.u32 %s111, 1
        %s277 = scalar_lea.sflag [#allocation7], %s276
        %s278 = sand.u32 %s111, 1
        %s279 = smul.addr %s278, 256
        %s280 = scalar_lea.vmem [#allocation6], %s279
        // Predicated region
        $region45: #{tpu_custom_call.1} parent=39 // pred_check
          %p281 = pneg %p124
        $region46: #{tpu_custom_call.1} parent=39 // pred_check_branch
          %283 = sbr.rel (%p281) target = $region48
        $region47: #{tpu_custom_call.1} parent=39 // pred_region
          %284 = dma.done %s277, 4096
        $region48: #{tpu_custom_call.1} parent=39 // pred_fallthru
          _
        %s285 = sand.u32 %s33, 1
        %s286 = scalar_lea.sflag [#allocation4], %s285
        %s287 = sand.u32 %s33, 1
        %s288 = smul.addr %s287, 1024
        %s289 = scalar_lea.vmem [#allocation3], %s288
        %p290 = pneg %p46
        %p291 = pneg %p43
        %p292 = scmp.lt.s32.totalorder %s25, 1
        %s293 = scalar_select %p292, %s25, 1
        %s294 = smul.addr %s293, 4
        %s295 = smul.addr %s294, 8
        %s296 = scalar_lea.vmem %s1, %s295
        %p297 = pneg %p72
        %p298 = pneg %p69
        %p299 = scmp.lt.s32.totalorder %s25, 1
        %s300 = scalar_select %p299, %s25, 1
        %s301 = smul.addr %s300, 2
        %s302 = scalar_lea.vmem %s2, %s301
        %p303 = pneg %p98
        %p304 = pneg %p95
        %s305 = sand.u32 %s111, 1
        %s306 = scalar_lea.sflag [#allocation7], %s305
        %s307 = sand.u32 %s111, 1
        %s308 = smul.addr %s307, 256
        %s309 = scalar_lea.vmem [#allocation6], %s308
        %p310 = pneg %p124
        %p311 = pneg %p121
        %p312 = scmp.lt.s32.totalorder %s25, 1
        %s313 = scalar_select %p312, %s25, 1
        %s314 = smul.addr %s313, 2
        %s315 = scalar_lea.vmem %s4, %s314
        %p316 = pneg %p150
        %p317 = pneg %p147
        %p318 = pneg %p176
        %p319 = pneg %p173
        %s320 = sand.u32 %s163, 1
        %s321 = scalar_lea.sflag [#allocation5], %s320
        %s322 = sand.u32 %s163, 1
        %s323 = smul.addr %s322, 4
        %s324 = scalar_lea.vmem [#allocation8], %s323
        %s325 = smul.u32 2, %s25
        %p326 = scmp.lt.s32.totalorder %s25, 1
        %s327 = scalar_select %p326, %s25, 1
        %s328 = smul.addr %s327, 4
        %s329 = smul.addr %s328, 8
        %s330 = scalar_lea.vmem %s1, %s329
        %p331 = scmp.lt.s32.totalorder %s25, 1
        %s332 = scalar_select %p331, %s25, 1
        %s333 = smul.addr %s332, 2
        %s334 = scalar_lea.vmem %s2, %s333
        %p335 = scmp.lt.s32.totalorder %s25, 1
        %s336 = scalar_select %p335, %s25, 1
        %s337 = smul.addr %s336, 2
        %s338 = scalar_lea.vmem %s4, %s337
        %339 = vst [vmem:[#allocation2] sm:$0xff] 0.0
        %340 = vst [vmem:[#allocation2 + $0x8] sm:$0xff] 0.0
        %341 = vst [vmem:[#allocation2 + $0x10] sm:$0xff] 0.0
        %342 = vst [vmem:[#allocation2 + $0x18] sm:$0xff] 0.0
        %343 = vst [vmem:[#allocation2 + $0x20] sm:$0x3] 0.0
        %344 = vst [vmem:[#allocation2 + $0x28] sm:$0x3] 0.0
        %345 = vst [vmem:[#allocation2 + $0x360] sm:$0xff] 0.0
        %346 = vst [vmem:[#allocation2 + $0x368] sm:$0xff] 0.0
        %347 = vst [vmem:[#allocation2 + $0x370] sm:$0xff] 0.0
        %348 = vst [vmem:[#allocation2 + $0x378] sm:$0xff] 0.0
        %349 = vst [vmem:[#allocation2 + $0x380] sm:$0x3] 0.0
        %350 = vst [vmem:[#allocation2 + $0x388] sm:$0x3] 0.0
        %s351 = scalar_lea.vmem [#allocation2], 816
        %352 = vst [vmem:[%s351] sm:$0xff] 0.0
        %353 = vst [vmem:[%s351 + $0x8] sm:$0xff] 0.0
        %354 = vst [vmem:[%s351 + $0x10] sm:$0xff] 0.0
        %355 = vst [vmem:[%s351 + $0x18] sm:$0xff] 0.0
        %356 = vst [vmem:[%s351 + $0x20] sm:$0x3] 0.0
        %357 = vst [vmem:[%s351 + $0x28] sm:$0x3] 0.0
        %358 = vst [vmem:[%s351 + $0x360] sm:$0xff] 0.0
        %359 = vst [vmem:[%s351 + $0x368] sm:$0xff] 0.0
        %360 = vst [vmem:[%s351 + $0x370] sm:$0xff] 0.0
        %361 = vst [vmem:[%s351 + $0x378] sm:$0xff] 0.0
        %362 = vst [vmem:[%s351 + $0x380] sm:$0x3] 0.0
        %363 = vst [vmem:[%s351 + $0x388] sm:$0x3] 0.0
        %v364 = vlaneseq
        %vm365 = vcmp.ge.s32.totalorder %v364, 0
        %vm366 = vcmp.lt.s32.totalorder %v364, 256
        %vm367 = vmand %vm365, %vm366
        %368 = vst.msk [vmem:[#allocation2] ss:$8 sm:$0x3] %vm367, 0.0
        %369 = vst.msk [vmem:[#allocation2] ss:$8 sm:$0x0] %vm367, 0.0
        %s370 = scalar_lea.vmem [#allocation2], 48
        %371 = vst.msk [vmem:[%s370] ss:$8 sm:$0x3] %vm367, 0.0
        %372 = vst.msk [vmem:[%s370] ss:$8 sm:$0x0] %vm367, 0.0
        %s373 = scalar_lea.vmem [#allocation2], 96
        %374 = vst.msk [vmem:[%s373] ss:$8 sm:$0x3] %vm367, 0.0
        %375 = vst.msk [vmem:[%s373] ss:$8 sm:$0x0] %vm367, 0.0
        %s376 = scalar_lea.vmem [#allocation2], 144
        %377 = vst.msk [vmem:[%s376] ss:$8 sm:$0x3] %vm367, 0.0
        %378 = vst.msk [vmem:[%s376] ss:$8 sm:$0x0] %vm367, 0.0
        %s379 = scalar_lea.vmem [#allocation2], 192
        %380 = vst.msk [vmem:[%s379] ss:$8 sm:$0x3] %vm367, 0.0
        %381 = vst.msk [vmem:[%s379] ss:$8 sm:$0x0] %vm367, 0.0
        %s382 = scalar_lea.vmem [#allocation2], 240
        %383 = vst.msk [vmem:[%s382] ss:$8 sm:$0x3] %vm367, 0.0
        %384 = vst.msk [vmem:[%s382] ss:$8 sm:$0x0] %vm367, 0.0
        %s385 = scalar_lea.vmem [#allocation2], 288
        %386 = vst.msk [vmem:[%s385] ss:$8 sm:$0x3] %vm367, 0.0
        %387 = vst.msk [vmem:[%s385] ss:$8 sm:$0x0] %vm367, 0.0
        %s388 = scalar_lea.vmem [#allocation2], 336
        %389 = vst.msk [vmem:[%s388] ss:$8 sm:$0x3] %vm367, 0.0
        %390 = vst.msk [vmem:[%s388] ss:$8 sm:$0x0] %vm367, 0.0
        %s391 = scalar_lea.vmem [#allocation2], 384
        %392 = vst.msk [vmem:[%s391] ss:$8 sm:$0x3] %vm367, 0.0
        %393 = vst.msk [vmem:[%s391] ss:$8 sm:$0x0] %vm367, 0.0
        %s394 = scalar_lea.vmem [#allocation2], 432
        %395 = vst.msk [vmem:[%s394] ss:$8 sm:$0x3] %vm367, 0.0
        %396 = vst.msk [vmem:[%s394] ss:$8 sm:$0x0] %vm367, 0.0
        %s397 = scalar_lea.vmem [#allocation2], 480
        %398 = vst.msk [vmem:[%s397] ss:$8 sm:$0x3] %vm367, 0.0
        %399 = vst.msk [vmem:[%s397] ss:$8 sm:$0x0] %vm367, 0.0
        %s400 = scalar_lea.vmem [#allocation2], 528
        %401 = vst.msk [vmem:[%s400] ss:$8 sm:$0x3] %vm367, 0.0
        %402 = vst.msk [vmem:[%s400] ss:$8 sm:$0x0] %vm367, 0.0
        %s403 = scalar_lea.vmem [#allocation2], 576
        %404 = vst.msk [vmem:[%s403] ss:$8 sm:$0x3] %vm367, 0.0
        %405 = vst.msk [vmem:[%s403] ss:$8 sm:$0x0] %vm367, 0.0
        %s406 = scalar_lea.vmem [#allocation2], 624
        %407 = vst.msk [vmem:[%s406] ss:$8 sm:$0x3] %vm367, 0.0
        %408 = vst.msk [vmem:[%s406] ss:$8 sm:$0x0] %vm367, 0.0
        %s409 = scalar_lea.vmem [#allocation2], 672
        %410 = vst.msk [vmem:[%s409] ss:$8 sm:$0x3] %vm367, 0.0
        %411 = vst.msk [vmem:[%s409] ss:$8 sm:$0x0] %vm367, 0.0
        %s412 = scalar_lea.vmem [#allocation2], 720
        %413 = vst.msk [vmem:[%s412] ss:$8 sm:$0x3] %vm367, 0.0
        %414 = vst.msk [vmem:[%s412] ss:$8 sm:$0x0] %vm367, 0.0
        %s415 = scalar_lea.vmem [#allocation2], 768
        %416 = vst.msk [vmem:[%s415] ss:$8 sm:$0x3] %vm367, 0.0
        %417 = vst.msk [vmem:[%s415] ss:$8 sm:$0x0] %vm367, 0.0
        %s418 = scalar_lea.vmem [#allocation2], 816
        %419 = vst.msk [vmem:[%s418] ss:$8 sm:$0x3] %vm367, 0.0
        %420 = vst.msk [vmem:[%s418] ss:$8 sm:$0x0] %vm367, 0.0
        %s421 = scalar_lea.vmem [#allocation2], 864
        %422 = vst.msk [vmem:[%s421] ss:$8 sm:$0x3] %vm367, 0.0
        %423 = vst.msk [vmem:[%s421] ss:$8 sm:$0x0] %vm367, 0.0
        %s424 = scalar_lea.vmem [#allocation2], 912
        %425 = vst.msk [vmem:[%s424] ss:$8 sm:$0x3] %vm367, 0.0
        %426 = vst.msk [vmem:[%s424] ss:$8 sm:$0x0] %vm367, 0.0
        %s427 = scalar_lea.vmem [#allocation2], 960
        %428 = vst.msk [vmem:[%s427] ss:$8 sm:$0x3] %vm367, 0.0
        %429 = vst.msk [vmem:[%s427] ss:$8 sm:$0x0] %vm367, 0.0
        %s430 = scalar_lea.vmem [#allocation2], 1008
        %431 = vst.msk [vmem:[%s430] ss:$8 sm:$0x3] %vm367, 0.0
        %432 = vst.msk [vmem:[%s430] ss:$8 sm:$0x0] %vm367, 0.0
        %s433 = scalar_lea.vmem [#allocation2], 1056
        %434 = vst.msk [vmem:[%s433] ss:$8 sm:$0x3] %vm367, 0.0
        %435 = vst.msk [vmem:[%s433] ss:$8 sm:$0x0] %vm367, 0.0
        %s436 = scalar_lea.vmem [#allocation2], 1104
        %437 = vst.msk [vmem:[%s436] ss:$8 sm:$0x3] %vm367, 0.0
        %438 = vst.msk [vmem:[%s436] ss:$8 sm:$0x0] %vm367, 0.0
        %s439 = scalar_lea.vmem [#allocation2], 1152
        %440 = vst.msk [vmem:[%s439] ss:$8 sm:$0x3] %vm367, 0.0
        %441 = vst.msk [vmem:[%s439] ss:$8 sm:$0x0] %vm367, 0.0
        %s442 = scalar_lea.vmem [#allocation2], 1200
        %443 = vst.msk [vmem:[%s442] ss:$8 sm:$0x3] %vm367, 0.0
        %444 = vst.msk [vmem:[%s442] ss:$8 sm:$0x0] %vm367, 0.0
        %s445 = scalar_lea.vmem [#allocation2], 1248
        %446 = vst.msk [vmem:[%s445] ss:$8 sm:$0x3] %vm367, 0.0
        %447 = vst.msk [vmem:[%s445] ss:$8 sm:$0x0] %vm367, 0.0
        %s448 = scalar_lea.vmem [#allocation2], 1296
        %449 = vst.msk [vmem:[%s448] ss:$8 sm:$0x3] %vm367, 0.0
        %450 = vst.msk [vmem:[%s448] ss:$8 sm:$0x0] %vm367, 0.0
        %s451 = scalar_lea.vmem [#allocation2], 1344
        %452 = vst.msk [vmem:[%s451] ss:$8 sm:$0x3] %vm367, 0.0
        %453 = vst.msk [vmem:[%s451] ss:$8 sm:$0x0] %vm367, 0.0
        %s454 = scalar_lea.vmem [#allocation2], 1392
        %455 = vst.msk [vmem:[%s454] ss:$8 sm:$0x3] %vm367, 0.0
        %456 = vst.msk [vmem:[%s454] ss:$8 sm:$0x0] %vm367, 0.0
        %s457 = scalar_lea.vmem [#allocation2], 1440
        %458 = vst.msk [vmem:[%s457] ss:$8 sm:$0x3] %vm367, 0.0
        %459 = vst.msk [vmem:[%s457] ss:$8 sm:$0x0] %vm367, 0.0
        %s460 = scalar_lea.vmem [#allocation2], 1488
        %461 = vst.msk [vmem:[%s460] ss:$8 sm:$0x3] %vm367, 0.0
        %462 = vst.msk [vmem:[%s460] ss:$8 sm:$0x0] %vm367, 0.0
        %s463 = scalar_lea.vmem [#allocation2], 1536
        %464 = vst.msk [vmem:[%s463] ss:$8 sm:$0x3] %vm367, 0.0
        %465 = vst.msk [vmem:[%s463] ss:$8 sm:$0x0] %vm367, 0.0
        %s466 = scalar_lea.vmem [#allocation2], 1584
        %467 = vst.msk [vmem:[%s466] ss:$8 sm:$0x3] %vm367, 0.0
        %468 = vst.msk [vmem:[%s466] ss:$8 sm:$0x0] %vm367, 0.0
        %s469 = scalar_lea.vmem [#allocation2], 1632
        %470 = vst.msk [vmem:[%s469] ss:$8 sm:$0x3] %vm367, 0.0
        %471 = vst.msk [vmem:[%s469] ss:$8 sm:$0x0] %vm367, 0.0
        %s472 = scalar_lea.vmem [#allocation2], 1680
        %473 = vst.msk [vmem:[%s472] ss:$8 sm:$0x3] %vm367, 0.0
        %474 = vst.msk [vmem:[%s472] ss:$8 sm:$0x0] %vm367, 0.0
        %s475 = scalar_lea.vmem [#allocation2], 33
        %476 = vst.msk [vmem:[%s475] ss:$8 sm:$0x3] %vm367, 0.0
        %477 = vst.msk [vmem:[%s475] ss:$8 sm:$0x0] %vm367, 0.0
        %s478 = scalar_lea.vmem [#allocation2], 81
        %479 = vst.msk [vmem:[%s478] ss:$8 sm:$0x3] %vm367, 0.0
        %480 = vst.msk [vmem:[%s478] ss:$8 sm:$0x0] %vm367, 0.0
        %s481 = scalar_lea.vmem [#allocation2], 129
        %482 = vst.msk [vmem:[%s481] ss:$8 sm:$0x3] %vm367, 0.0
        %483 = vst.msk [vmem:[%s481] ss:$8 sm:$0x0] %vm367, 0.0
        %s484 = scalar_lea.vmem [#allocation2], 177
        %485 = vst.msk [vmem:[%s484] ss:$8 sm:$0x3] %vm367, 0.0
        %486 = vst.msk [vmem:[%s484] ss:$8 sm:$0x0] %vm367, 0.0
        %s487 = scalar_lea.vmem [#allocation2], 225
        %488 = vst.msk [vmem:[%s487] ss:$8 sm:$0x3] %vm367, 0.0
        %489 = vst.msk [vmem:[%s487] ss:$8 sm:$0x0] %vm367, 0.0
        %s490 = scalar_lea.vmem [#allocation2], 273
        %491 = vst.msk [vmem:[%s490] ss:$8 sm:$0x3] %vm367, 0.0
        %492 = vst.msk [vmem:[%s490] ss:$8 sm:$0x0] %vm367, 0.0
        %s493 = scalar_lea.vmem [#allocation2], 321
        %494 = vst.msk [vmem:[%s493] ss:$8 sm:$0x3] %vm367, 0.0
        %495 = vst.msk [vmem:[%s493] ss:$8 sm:$0x0] %vm367, 0.0
        %s496 = scalar_lea.vmem [#allocation2], 369
        %497 = vst.msk [vmem:[%s496] ss:$8 sm:$0x3] %vm367, 0.0
        %498 = vst.msk [vmem:[%s496] ss:$8 sm:$0x0] %vm367, 0.0
        %s499 = scalar_lea.vmem [#allocation2], 417
        %500 = vst.msk [vmem:[%s499] ss:$8 sm:$0x3] %vm367, 0.0
        %501 = vst.msk [vmem:[%s499] ss:$8 sm:$0x0] %vm367, 0.0
        %s502 = scalar_lea.vmem [#allocation2], 465
        %503 = vst.msk [vmem:[%s502] ss:$8 sm:$0x3] %vm367, 0.0
        %504 = vst.msk [vmem:[%s502] ss:$8 sm:$0x0] %vm367, 0.0
        %s505 = scalar_lea.vmem [#allocation2], 513
        %506 = vst.msk [vmem:[%s505] ss:$8 sm:$0x3] %vm367, 0.0
        %507 = vst.msk [vmem:[%s505] ss:$8 sm:$0x0] %vm367, 0.0
        %s508 = scalar_lea.vmem [#allocation2], 561
        %509 = vst.msk [vmem:[%s508] ss:$8 sm:$0x3] %vm367, 0.0
        %510 = vst.msk [vmem:[%s508] ss:$8 sm:$0x0] %vm367, 0.0
        %s511 = scalar_lea.vmem [#allocation2], 609
        %512 = vst.msk [vmem:[%s511] ss:$8 sm:$0x3] %vm367, 0.0
        %513 = vst.msk [vmem:[%s511] ss:$8 sm:$0x0] %vm367, 0.0
        %s514 = scalar_lea.vmem [#allocation2], 657
        %515 = vst.msk [vmem:[%s514] ss:$8 sm:$0x3] %vm367, 0.0
        %516 = vst.msk [vmem:[%s514] ss:$8 sm:$0x0] %vm367, 0.0
        %s517 = scalar_lea.vmem [#allocation2], 705
        %518 = vst.msk [vmem:[%s517] ss:$8 sm:$0x3] %vm367, 0.0
        %519 = vst.msk [vmem:[%s517] ss:$8 sm:$0x0] %vm367, 0.0
        %s520 = scalar_lea.vmem [#allocation2], 753
        %521 = vst.msk [vmem:[%s520] ss:$8 sm:$0x3] %vm367, 0.0
        %522 = vst.msk [vmem:[%s520] ss:$8 sm:$0x0] %vm367, 0.0
        %s523 = scalar_lea.vmem [#allocation2], 801
        %524 = vst.msk [vmem:[%s523] ss:$8 sm:$0x3] %vm367, 0.0
        %525 = vst.msk [vmem:[%s523] ss:$8 sm:$0x0] %vm367, 0.0
        %s526 = scalar_lea.vmem [#allocation2], 849
        %527 = vst.msk [vmem:[%s526] ss:$8 sm:$0x3] %vm367, 0.0
        %528 = vst.msk [vmem:[%s526] ss:$8 sm:$0x0] %vm367, 0.0
        %s529 = scalar_lea.vmem [#allocation2], 897
        %530 = vst.msk [vmem:[%s529] ss:$8 sm:$0x3] %vm367, 0.0
        %531 = vst.msk [vmem:[%s529] ss:$8 sm:$0x0] %vm367, 0.0
        %s532 = scalar_lea.vmem [#allocation2], 945
        %533 = vst.msk [vmem:[%s532] ss:$8 sm:$0x3] %vm367, 0.0
        %534 = vst.msk [vmem:[%s532] ss:$8 sm:$0x0] %vm367, 0.0
        %s535 = scalar_lea.vmem [#allocation2], 993
        %536 = vst.msk [vmem:[%s535] ss:$8 sm:$0x3] %vm367, 0.0
        %537 = vst.msk [vmem:[%s535] ss:$8 sm:$0x0] %vm367, 0.0
        %s538 = scalar_lea.vmem [#allocation2], 1041
        %539 = vst.msk [vmem:[%s538] ss:$8 sm:$0x3] %vm367, 0.0
        %540 = vst.msk [vmem:[%s538] ss:$8 sm:$0x0] %vm367, 0.0
        %s541 = scalar_lea.vmem [#allocation2], 1089
        %542 = vst.msk [vmem:[%s541] ss:$8 sm:$0x3] %vm367, 0.0
        %543 = vst.msk [vmem:[%s541] ss:$8 sm:$0x0] %vm367, 0.0
        %s544 = scalar_lea.vmem [#allocation2], 1137
        %545 = vst.msk [vmem:[%s544] ss:$8 sm:$0x3] %vm367, 0.0
        %546 = vst.msk [vmem:[%s544] ss:$8 sm:$0x0] %vm367, 0.0
        %s547 = scalar_lea.vmem [#allocation2], 1185
        %548 = vst.msk [vmem:[%s547] ss:$8 sm:$0x3] %vm367, 0.0
        %549 = vst.msk [vmem:[%s547] ss:$8 sm:$0x0] %vm367, 0.0
        %s550 = scalar_lea.vmem [#allocation2], 1233
        %551 = vst.msk [vmem:[%s550] ss:$8 sm:$0x3] %vm367, 0.0
        %552 = vst.msk [vmem:[%s550] ss:$8 sm:$0x0] %vm367, 0.0
        %s553 = scalar_lea.vmem [#allocation2], 1281
        %554 = vst.msk [vmem:[%s553] ss:$8 sm:$0x3] %vm367, 0.0
        %555 = vst.msk [vmem:[%s553] ss:$8 sm:$0x0] %vm367, 0.0
        %s556 = scalar_lea.vmem [#allocation2], 1329
        %557 = vst.msk [vmem:[%s556] ss:$8 sm:$0x3] %vm367, 0.0
        %558 = vst.msk [vmem:[%s556] ss:$8 sm:$0x0] %vm367, 0.0
        %s559 = scalar_lea.vmem [#allocation2], 1377
        %560 = vst.msk [vmem:[%s559] ss:$8 sm:$0x3] %vm367, 0.0
        %561 = vst.msk [vmem:[%s559] ss:$8 sm:$0x0] %vm367, 0.0
        %s562 = scalar_lea.vmem [#allocation2], 1425
        %563 = vst.msk [vmem:[%s562] ss:$8 sm:$0x3] %vm367, 0.0
        %564 = vst.msk [vmem:[%s562] ss:$8 sm:$0x0] %vm367, 0.0
        %s565 = scalar_lea.vmem [#allocation2], 1473
        %566 = vst.msk [vmem:[%s565] ss:$8 sm:$0x3] %vm367, 0.0
        %567 = vst.msk [vmem:[%s565] ss:$8 sm:$0x0] %vm367, 0.0
        %s568 = scalar_lea.vmem [#allocation2], 1521
        %569 = vst.msk [vmem:[%s568] ss:$8 sm:$0x3] %vm367, 0.0
        %570 = vst.msk [vmem:[%s568] ss:$8 sm:$0x0] %vm367, 0.0
        %s571 = scalar_lea.vmem [#allocation2], 1569
        %572 = vst.msk [vmem:[%s571] ss:$8 sm:$0x3] %vm367, 0.0
        %573 = vst.msk [vmem:[%s571] ss:$8 sm:$0x0] %vm367, 0.0
        %s574 = scalar_lea.vmem [#allocation2], 1617
        %575 = vst.msk [vmem:[%s574] ss:$8 sm:$0x3] %vm367, 0.0
        %576 = vst.msk [vmem:[%s574] ss:$8 sm:$0x0] %vm367, 0.0
        %s577 = scalar_lea.vmem [#allocation2], 1665
        %578 = vst.msk [vmem:[%s577] ss:$8 sm:$0x3] %vm367, 0.0
        %579 = vst.msk [vmem:[%s577] ss:$8 sm:$0x0] %vm367, 0.0
        %s580 = scalar_lea.vmem [#allocation2], 1713
        %581 = vst.msk [vmem:[%s580] ss:$8 sm:$0x3] %vm367, 0.0
        %582 = vst.msk [vmem:[%s580] ss:$8 sm:$0x0] %vm367, 0.0
        %v583 = vld [vmem:[%s271] sm:$0xff]
        %v584 = vld [vmem:[%s271 + $0x8] sm:$0xff]
        %v585 = vld [vmem:[%s271 + $0x10] sm:$0xff]
        %v586 = vld [vmem:[%s271 + $0x18] sm:$0xff]
        %v587 = vld [vmem:[%s271 + $0x20] sm:$0xff]
        %v588 = vld [vmem:[%s271 + $0x28] sm:$0xff]
        %v589 = vld [vmem:[%s271 + $0x30] sm:$0xff]
        %v590 = vld [vmem:[%s271 + $0x38] sm:$0xff]
        %v591 = vld [vmem:[%s271 + $0x40] sm:$0xff]
        %v592 = vld [vmem:[%s271 + $0x48] sm:$0xff]
        %v593 = vld [vmem:[%s271 + $0x50] sm:$0xff]
        %v594 = vld [vmem:[%s271 + $0x58] sm:$0xff]
        %v595 = vld [vmem:[%s271 + $0x60] sm:$0xff]
        %v596 = vld [vmem:[%s271 + $0x68] sm:$0xff]
        %v597 = vld [vmem:[%s271 + $0x70] sm:$0xff]
        %v598 = vld [vmem:[%s271 + $0x78] sm:$0xff]
        %v599 = vld [vmem:[%s271 + $0x80] sm:$0xff]
        %v600 = vld [vmem:[%s271 + $0x88] sm:$0xff]
        %v601 = vld [vmem:[%s271 + $0x90] sm:$0xff]
        %v602 = vld [vmem:[%s271 + $0x98] sm:$0xff]
        %v603 = vld [vmem:[%s271 + $0xa0] sm:$0xff]
        %v604 = vld [vmem:[%s271 + $0xa8] sm:$0xff]
        %v605 = vld [vmem:[%s271 + $0xb0] sm:$0xff]
        %v606 = vld [vmem:[%s271 + $0xb8] sm:$0xff]
        %v607 = vld [vmem:[%s271 + $0xc0] sm:$0xff]
        %v608 = vld [vmem:[%s271 + $0xc8] sm:$0xff]
        %v609 = vld [vmem:[%s271 + $0xd0] sm:$0xff]
        %v610 = vld [vmem:[%s271 + $0xd8] sm:$0xff]
        %v611 = vld [vmem:[%s271 + $0xe0] sm:$0xff]
        %v612 = vld [vmem:[%s271 + $0xe8] sm:$0xff]
        %v613 = vld [vmem:[%s271 + $0xf0] sm:$0xff]
        %v614 = vld [vmem:[%s271 + $0xf8] sm:$0xff]
        %v615 = vld [vmem:[%s271 + $0x100] sm:$0xff]
        %v616 = vld [vmem:[%s271 + $0x108] sm:$0xff]
        %v617 = vld [vmem:[%s271 + $0x110] sm:$0xff]
        %v618 = vld [vmem:[%s271 + $0x118] sm:$0xff]
        %v619 = vld [vmem:[%s271 + $0x120] sm:$0xff]
        %v620 = vld [vmem:[%s271 + $0x128] sm:$0xff]
        %v621 = vld [vmem:[%s271 + $0x130] sm:$0xff]
        %v622 = vld [vmem:[%s271 + $0x138] sm:$0xff]
        %v623 = vld [vmem:[%s271 + $0x140] sm:$0xff]
        %v624 = vld [vmem:[%s271 + $0x148] sm:$0xff]
        %v625 = vld [vmem:[%s271 + $0x150] sm:$0xff]
        %v626 = vld [vmem:[%s271 + $0x158] sm:$0xff]
        %v627 = vld [vmem:[%s271 + $0x160] sm:$0xff]
        %v628 = vld [vmem:[%s271 + $0x168] sm:$0xff]
        %v629 = vld [vmem:[%s271 + $0x170] sm:$0xff]
        %v630 = vld [vmem:[%s271 + $0x178] sm:$0xff]
        %v631 = vld [vmem:[%s271 + $0x180] sm:$0xff]
        %v632 = vld [vmem:[%s271 + $0x188] sm:$0xff]
        %v633 = vld [vmem:[%s271 + $0x190] sm:$0xff]
        %v634 = vld [vmem:[%s271 + $0x198] sm:$0xff]
        %v635 = vld [vmem:[%s271 + $0x1a0] sm:$0xff]
        %v636 = vld [vmem:[%s271 + $0x1a8] sm:$0xff]
        %v637 = vld [vmem:[%s271 + $0x1b0] sm:$0xff]
        %v638 = vld [vmem:[%s271 + $0x1b8] sm:$0xff]
        %v639 = vld [vmem:[%s271 + $0x1c0] sm:$0xff]
        %v640 = vld [vmem:[%s271 + $0x1c8] sm:$0xff]
        %v641 = vld [vmem:[%s271 + $0x1d0] sm:$0xff]
        %v642 = vld [vmem:[%s271 + $0x1d8] sm:$0xff]
        %v643 = vld [vmem:[%s271 + $0x1e0] sm:$0xff]
        %v644 = vld [vmem:[%s271 + $0x1e8] sm:$0xff]
        %v645 = vld [vmem:[%s271 + $0x1f0] sm:$0xff]
        %v646 = vld [vmem:[%s271 + $0x1f8] sm:$0xff]
        %v647 = vld [vmem:[%s271 + $0x200] sm:$0xff]
        %v648 = vld [vmem:[%s271 + $0x208] sm:$0xff]
        %v649 = vld [vmem:[%s271 + $0x210] sm:$0xff]
        %v650 = vld [vmem:[%s271 + $0x218] sm:$0xff]
        %v651 = vld [vmem:[%s271 + $0x220] sm:$0xff]
        %v652 = vld [vmem:[%s271 + $0x228] sm:$0xff]
        %v653 = vld [vmem:[%s271 + $0x230] sm:$0xff]
        %v654 = vld [vmem:[%s271 + $0x238] sm:$0xff]
        %v655 = vld [vmem:[%s271 + $0x240] sm:$0xff]
        %v656 = vld [vmem:[%s271 + $0x248] sm:$0xff]
        %v657 = vld [vmem:[%s271 + $0x250] sm:$0xff]
        %v658 = vld [vmem:[%s271 + $0x258] sm:$0xff]
        %v659 = vld [vmem:[%s271 + $0x260] sm:$0xff]
        %v660 = vld [vmem:[%s271 + $0x268] sm:$0xff]
        %v661 = vld [vmem:[%s271 + $0x270] sm:$0xff]
        %v662 = vld [vmem:[%s271 + $0x278] sm:$0xff]
        %v663 = vld [vmem:[%s271 + $0x280] sm:$0xff]
        %v664 = vld [vmem:[%s271 + $0x288] sm:$0xff]
        %v665 = vld [vmem:[%s271 + $0x290] sm:$0xff]
        %v666 = vld [vmem:[%s271 + $0x298] sm:$0xff]
        %v667 = vld [vmem:[%s271 + $0x2a0] sm:$0xff]
        %v668 = vld [vmem:[%s271 + $0x2a8] sm:$0xff]
        %v669 = vld [vmem:[%s271 + $0x2b0] sm:$0xff]
        %v670 = vld [vmem:[%s271 + $0x2b8] sm:$0xff]
        %v671 = vld [vmem:[%s271 + $0x2c0] sm:$0xff]
        %v672 = vld [vmem:[%s271 + $0x2c8] sm:$0xff]
        %v673 = vld [vmem:[%s271 + $0x2d0] sm:$0xff]
        %v674 = vld [vmem:[%s271 + $0x2d8] sm:$0xff]
        %v675 = vld [vmem:[%s271 + $0x2e0] sm:$0xff]
        %v676 = vld [vmem:[%s271 + $0x2e8] sm:$0xff]
        %v677 = vld [vmem:[%s271 + $0x2f0] sm:$0xff]
        %v678 = vld [vmem:[%s271 + $0x2f8] sm:$0xff]
        %v679 = vld [vmem:[%s271 + $0x300] sm:$0xff]
        %v680 = vld [vmem:[%s271 + $0x308] sm:$0xff]
        %v681 = vld [vmem:[%s271 + $0x310] sm:$0xff]
        %v682 = vld [vmem:[%s271 + $0x318] sm:$0xff]
        %v683 = vld [vmem:[%s271 + $0x320] sm:$0xff]
        %v684 = vld [vmem:[%s271 + $0x328] sm:$0xff]
        %v685 = vld [vmem:[%s271 + $0x330] sm:$0xff]
        %v686 = vld [vmem:[%s271 + $0x338] sm:$0xff]
        %v687 = vld [vmem:[%s271 + $0x340] sm:$0xff]
        %v688 = vld [vmem:[%s271 + $0x348] sm:$0xff]
        %v689 = vld [vmem:[%s271 + $0x350] sm:$0xff]
        %v690 = vld [vmem:[%s271 + $0x358] sm:$0xff]
        %v691 = vld [vmem:[%s271 + $0x360] sm:$0xff]
        %v692 = vld [vmem:[%s271 + $0x368] sm:$0xff]
        %v693 = vld [vmem:[%s271 + $0x370] sm:$0xff]
        %v694 = vld [vmem:[%s271 + $0x378] sm:$0xff]
        %v695 = vld [vmem:[%s271 + $0x380] sm:$0xff]
        %v696 = vld [vmem:[%s271 + $0x388] sm:$0xff]
        %v697 = vld [vmem:[%s271 + $0x390] sm:$0xff]
        %v698 = vld [vmem:[%s271 + $0x398] sm:$0xff]
        %v699 = vld [vmem:[%s271 + $0x3a0] sm:$0xff]
        %v700 = vld [vmem:[%s271 + $0x3a8] sm:$0xff]
        %v701 = vld [vmem:[%s271 + $0x3b0] sm:$0xff]
        %v702 = vld [vmem:[%s271 + $0x3b8] sm:$0xff]
        %v703 = vld [vmem:[%s271 + $0x3c0] sm:$0xff]
        %v704 = vld [vmem:[%s271 + $0x3c8] sm:$0xff]
        %v705 = vld [vmem:[%s271 + $0x3d0] sm:$0xff]
        %v706 = vld [vmem:[%s271 + $0x3d8] sm:$0xff]
        %v707 = vld [vmem:[%s271 + $0x3e0] sm:$0xff]
        %v708 = vld [vmem:[%s271 + $0x3e8] sm:$0xff]
        %v709 = vld [vmem:[%s271 + $0x3f0] sm:$0xff]
        %v710 = vld [vmem:[%s271 + $0x3f8] sm:$0xff]
        %vm839 = vcmask 1040384
        %v840 = vrot.slane %v583, 7
        %v841 = vrot.slane %v584, 7
        %v842 = vrot.slane %v585, 7
        %v843 = vsel %vm839, %v840, %v842
        %v844 = vrot.slane %v586, 7
        %v845 = vsel %vm839, %v841, %v844
        %v846 = vrot.slane %v587, 7
        %v847 = vrot.slane %v588, 7
        %v848 = vrot.slane %v589, 7
        %v849 = vsel %vm839, %v846, %v848
        %v850 = vrot.slane %v590, 7
        %v851 = vsel %vm839, %v847, %v850
        %v852 = vrot.slane %v591, 7
        %v853 = vrot.slane %v592, 7
        %v854 = vrot.slane %v593, 7
        %v855 = vsel %vm839, %v852, %v854
        %v856 = vrot.slane %v594, 7
        %v857 = vsel %vm839, %v853, %v856
        %v858 = vrot.slane %v595, 7
        %v859 = vrot.slane %v596, 7
        %v860 = vrot.slane %v597, 7
        %v861 = vsel %vm839, %v858, %v860
        %v862 = vrot.slane %v598, 7
        %v863 = vsel %vm839, %v859, %v862
        %v864 = vrot.slane %v599, 7
        %v865 = vrot.slane %v600, 7
        %v866 = vrot.slane %v601, 7
        %v867 = vsel %vm839, %v864, %v866
        %v868 = vrot.slane %v602, 7
        %v869 = vsel %vm839, %v865, %v868
        %v870 = vrot.slane %v603, 7
        %v871 = vrot.slane %v604, 7
        %v872 = vrot.slane %v605, 7
        %v873 = vsel %vm839, %v870, %v872
        %v874 = vrot.slane %v606, 7
        %v875 = vsel %vm839, %v871, %v874
        %v876 = vrot.slane %v607, 7
        %v877 = vrot.slane %v608, 7
        %v878 = vrot.slane %v609, 7
        %v879 = vsel %vm839, %v876, %v878
        %v880 = vrot.slane %v610, 7
        %v881 = vsel %vm839, %v877, %v880
        %v882 = vrot.slane %v611, 7
        %v883 = vrot.slane %v612, 7
        %v884 = vrot.slane %v613, 7
        %v885 = vsel %vm839, %v882, %v884
        %v886 = vrot.slane %v614, 7
        %v887 = vsel %vm839, %v883, %v886
        %v888 = vrot.slane %v615, 7
        %v889 = vrot.slane %v616, 7
        %v890 = vrot.slane %v617, 7
        %v891 = vsel %vm839, %v888, %v890
        %v892 = vrot.slane %v618, 7
        %v893 = vsel %vm839, %v889, %v892
        %v894 = vrot.slane %v619, 7
        %v895 = vrot.slane %v620, 7
        %v896 = vrot.slane %v621, 7
        %v897 = vsel %vm839, %v894, %v896
        %v898 = vrot.slane %v622, 7
        %v899 = vsel %vm839, %v895, %v898
        %v900 = vrot.slane %v623, 7
        %v901 = vrot.slane %v624, 7
        %v902 = vrot.slane %v625, 7
        %v903 = vsel %vm839, %v900, %v902
        %v904 = vrot.slane %v626, 7
        %v905 = vsel %vm839, %v901, %v904
        %v906 = vrot.slane %v627, 7
        %v907 = vrot.slane %v628, 7
        %v908 = vrot.slane %v629, 7
        %v909 = vsel %vm839, %v906, %v908
        %v910 = vrot.slane %v630, 7
        %v911 = vsel %vm839, %v907, %v910
        %v912 = vrot.slane %v631, 7
        %v913 = vrot.slane %v632, 7
        %v914 = vrot.slane %v633, 7
        %v915 = vsel %vm839, %v912, %v914
        %v916 = vrot.slane %v634, 7
        %v917 = vsel %vm839, %v913, %v916
        %v918 = vrot.slane %v635, 7
        %v919 = vrot.slane %v636, 7
        %v920 = vrot.slane %v637, 7
        %v921 = vsel %vm839, %v918, %v920
        %v922 = vrot.slane %v638, 7
        %v923 = vsel %vm839, %v919, %v922
        %v924 = vrot.slane %v639, 7
        %v925 = vrot.slane %v640, 7
        %v926 = vrot.slane %v641, 7
        %v927 = vsel %vm839, %v924, %v926
        %v928 = vrot.slane %v642, 7
        %v929 = vsel %vm839, %v925, %v928
        %v930 = vrot.slane %v643, 7
        %v931 = vrot.slane %v644, 7
        %v932 = vrot.slane %v645, 7
        %v933 = vsel %vm839, %v930, %v932
        %v934 = vrot.slane %v646, 7
        %v935 = vsel %vm839, %v931, %v934
        %v936 = vrot.slane %v647, 7
        %v937 = vrot.slane %v648, 7
        %v938 = vrot.slane %v649, 7
        %v939 = vsel %vm839, %v936, %v938
        %v940 = vrot.slane %v650, 7
        %v941 = vsel %vm839, %v937, %v940
        %v942 = vrot.slane %v651, 7
        %v943 = vrot.slane %v652, 7
        %v944 = vrot.slane %v653, 7
        %v945 = vsel %vm839, %v942, %v944
        %v946 = vrot.slane %v654, 7
        %v947 = vsel %vm839, %v943, %v946
        %v948 = vrot.slane %v655, 7
        %v949 = vrot.slane %v656, 7
        %v950 = vrot.slane %v657, 7
        %v951 = vsel %vm839, %v948, %v950
        %v952 = vrot.slane %v658, 7
        %v953 = vsel %vm839, %v949, %v952
        %v954 = vrot.slane %v659, 7
        %v955 = vrot.slane %v660, 7
        %v956 = vrot.slane %v661, 7
        %v957 = vsel %vm839, %v954, %v956
        %v958 = vrot.slane %v662, 7
        %v959 = vsel %vm839, %v955, %v958
        %v960 = vrot.slane %v663, 7
        %v961 = vrot.slane %v664, 7
        %v962 = vrot.slane %v665, 7
        %v963 = vsel %vm839, %v960, %v962
        %v964 = vrot.slane %v666, 7
        %v965 = vsel %vm839, %v961, %v964
        %v966 = vrot.slane %v667, 7
        %v967 = vrot.slane %v668, 7
        %v968 = vrot.slane %v669, 7
        %v969 = vsel %vm839, %v966, %v968
        %v970 = vrot.slane %v670, 7
        %v971 = vsel %vm839, %v967, %v970
        %v972 = vrot.slane %v671, 7
        %v973 = vrot.slane %v672, 7
        %v974 = vrot.slane %v673, 7
        %v975 = vsel %vm839, %v972, %v974
        %v976 = vrot.slane %v674, 7
        %v977 = vsel %vm839, %v973, %v976
        %v978 = vrot.slane %v675, 7
        %v979 = vrot.slane %v676, 7
        %v980 = vrot.slane %v677, 7
        %v981 = vsel %vm839, %v978, %v980
        %v982 = vrot.slane %v678, 7
        %v983 = vsel %vm839, %v979, %v982
        %v984 = vrot.slane %v679, 7
        %v985 = vrot.slane %v680, 7
        %v986 = vrot.slane %v681, 7
        %v987 = vsel %vm839, %v984, %v986
        %v988 = vrot.slane %v682, 7
        %v989 = vsel %vm839, %v985, %v988
        %v990 = vrot.slane %v683, 7
        %v991 = vrot.slane %v684, 7
        %v992 = vrot.slane %v685, 7
        %v993 = vsel %vm839, %v990, %v992
        %v994 = vrot.slane %v686, 7
        %v995 = vsel %vm839, %v991, %v994
        %v996 = vrot.slane %v687, 7
        %v997 = vrot.slane %v688, 7
        %v998 = vrot.slane %v689, 7
        %v999 = vsel %vm839, %v996, %v998
        %v1000 = vrot.slane %v690, 7
        %v1001 = vsel %vm839, %v997, %v1000
        %v1002 = vrot.slane %v691, 7
        %v1003 = vrot.slane %v692, 7
        %v1004 = vrot.slane %v693, 7
        %v1005 = vsel %vm839, %v1002, %v1004
        %v1006 = vrot.slane %v694, 7
        %v1007 = vsel %vm839, %v1003, %v1006
        %v1008 = vrot.slane %v695, 7
        %v1009 = vrot.slane %v696, 7
        %v1010 = vrot.slane %v697, 7
        %v1011 = vsel %vm839, %v1008, %v1010
        %v1012 = vrot.slane %v698, 7
        %v1013 = vsel %vm839, %v1009, %v1012
        %v1014 = vrot.slane %v699, 7
        %v1015 = vrot.slane %v700, 7
        %v1016 = vrot.slane %v701, 7
        %v1017 = vsel %vm839, %v1014, %v1016
        %v1018 = vrot.slane %v702, 7
        %v1019 = vsel %vm839, %v1015, %v1018
        %v1020 = vrot.slane %v703, 7
        %v1021 = vrot.slane %v704, 7
        %v1022 = vrot.slane %v705, 7
        %v1023 = vsel %vm839, %v1020, %v1022
        %v1024 = vrot.slane %v706, 7
        %v1025 = vsel %vm839, %v1021, %v1024
        %v1026 = vrot.slane %v707, 7
        %v1027 = vrot.slane %v708, 7
        %v1028 = vrot.slane %v709, 7
        %v1029 = vsel %vm839, %v1026, %v1028
        %v1030 = vrot.slane %v710, 7
        %v1031 = vsel %vm839, %v1027, %v1030
        %s1224 = scalar_lea.vmem [#allocation2], 48
        %1225 = vst [vmem:[%s1224] sm:$0xfe] %v840
        %1226 = vst [vmem:[%s1224 + $0x8] sm:$0xfe] %v841
        %1227 = vst [vmem:[%s1224 + $0x10] sm:$0xff] %v843
        %1228 = vst [vmem:[%s1224 + $0x18] sm:$0xff] %v845
        %1229 = vst [vmem:[%s1224 + $0x20] sm:$0x1] %v842
        %1230 = vst [vmem:[%s1224 + $0x28] sm:$0x1] %v844
        %1231 = vst [vmem:[%s1224 + $0x30] sm:$0xfe] %v846
        %1232 = vst [vmem:[%s1224 + $0x38] sm:$0xfe] %v847
        %1233 = vst [vmem:[%s1224 + $0x40] sm:$0xff] %v849
        %1234 = vst [vmem:[%s1224 + $0x48] sm:$0xff] %v851
        %1235 = vst [vmem:[%s1224 + $0x50] sm:$0x1] %v848
        %1236 = vst [vmem:[%s1224 + $0x58] sm:$0x1] %v850
        %1237 = vst [vmem:[%s1224 + $0x60] sm:$0xfe] %v852
        %1238 = vst [vmem:[%s1224 + $0x68] sm:$0xfe] %v853
        %1239 = vst [vmem:[%s1224 + $0x70] sm:$0xff] %v855
        %1240 = vst [vmem:[%s1224 + $0x78] sm:$0xff] %v857
        %1241 = vst [vmem:[%s1224 + $0x80] sm:$0x1] %v854
        %1242 = vst [vmem:[%s1224 + $0x88] sm:$0x1] %v856
        %1243 = vst [vmem:[%s1224 + $0x90] sm:$0xfe] %v858
        %1244 = vst [vmem:[%s1224 + $0x98] sm:$0xfe] %v859
        %1245 = vst [vmem:[%s1224 + $0xa0] sm:$0xff] %v861
        %1246 = vst [vmem:[%s1224 + $0xa8] sm:$0xff] %v863
        %1247 = vst [vmem:[%s1224 + $0xb0] sm:$0x1] %v860
        %1248 = vst [vmem:[%s1224 + $0xb8] sm:$0x1] %v862
        %1249 = vst [vmem:[%s1224 + $0xc0] sm:$0xfe] %v864
        %1250 = vst [vmem:[%s1224 + $0xc8] sm:$0xfe] %v865
        %1251 = vst [vmem:[%s1224 + $0xd0] sm:$0xff] %v867
        %1252 = vst [vmem:[%s1224 + $0xd8] sm:$0xff] %v869
        %1253 = vst [vmem:[%s1224 + $0xe0] sm:$0x1] %v866
        %1254 = vst [vmem:[%s1224 + $0xe8] sm:$0x1] %v868
        %1255 = vst [vmem:[%s1224 + $0xf0] sm:$0xfe] %v870
        %1256 = vst [vmem:[%s1224 + $0xf8] sm:$0xfe] %v871
        %1257 = vst [vmem:[%s1224 + $0x100] sm:$0xff] %v873
        %1258 = vst [vmem:[%s1224 + $0x108] sm:$0xff] %v875
        %1259 = vst [vmem:[%s1224 + $0x110] sm:$0x1] %v872
        %1260 = vst [vmem:[%s1224 + $0x118] sm:$0x1] %v874
        %1261 = vst [vmem:[%s1224 + $0x120] sm:$0xfe] %v876
        %1262 = vst [vmem:[%s1224 + $0x128] sm:$0xfe] %v877
        %1263 = vst [vmem:[%s1224 + $0x130] sm:$0xff] %v879
        %1264 = vst [vmem:[%s1224 + $0x138] sm:$0xff] %v881
        %1265 = vst [vmem:[%s1224 + $0x140] sm:$0x1] %v878
        %1266 = vst [vmem:[%s1224 + $0x148] sm:$0x1] %v880
        %1267 = vst [vmem:[%s1224 + $0x150] sm:$0xfe] %v882
        %1268 = vst [vmem:[%s1224 + $0x158] sm:$0xfe] %v883
        %1269 = vst [vmem:[%s1224 + $0x160] sm:$0xff] %v885
        %1270 = vst [vmem:[%s1224 + $0x168] sm:$0xff] %v887
        %1271 = vst [vmem:[%s1224 + $0x170] sm:$0x1] %v884
        %1272 = vst [vmem:[%s1224 + $0x178] sm:$0x1] %v886
        %1273 = vst [vmem:[%s1224 + $0x180] sm:$0xfe] %v888
        %1274 = vst [vmem:[%s1224 + $0x188] sm:$0xfe] %v889
        %1275 = vst [vmem:[%s1224 + $0x190] sm:$0xff] %v891
        %1276 = vst [vmem:[%s1224 + $0x198] sm:$0xff] %v893
        %1277 = vst [vmem:[%s1224 + $0x1a0] sm:$0x1] %v890
        %1278 = vst [vmem:[%s1224 + $0x1a8] sm:$0x1] %v892
        %1279 = vst [vmem:[%s1224 + $0x1b0] sm:$0xfe] %v894
        %1280 = vst [vmem:[%s1224 + $0x1b8] sm:$0xfe] %v895
        %1281 = vst [vmem:[%s1224 + $0x1c0] sm:$0xff] %v897
        %1282 = vst [vmem:[%s1224 + $0x1c8] sm:$0xff] %v899
        %1283 = vst [vmem:[%s1224 + $0x1d0] sm:$0x1] %v896
        %1284 = vst [vmem:[%s1224 + $0x1d8] sm:$0x1] %v898
        %1285 = vst [vmem:[%s1224 + $0x1e0] sm:$0xfe] %v900
        %1286 = vst [vmem:[%s1224 + $0x1e8] sm:$0xfe] %v901
        %1287 = vst [vmem:[%s1224 + $0x1f0] sm:$0xff] %v903
        %1288 = vst [vmem:[%s1224 + $0x1f8] sm:$0xff] %v905
        %1289 = vst [vmem:[%s1224 + $0x200] sm:$0x1] %v902
        %1290 = vst [vmem:[%s1224 + $0x208] sm:$0x1] %v904
        %1291 = vst [vmem:[%s1224 + $0x210] sm:$0xfe] %v906
        %1292 = vst [vmem:[%s1224 + $0x218] sm:$0xfe] %v907
        %1293 = vst [vmem:[%s1224 + $0x220] sm:$0xff] %v909
        %1294 = vst [vmem:[%s1224 + $0x228] sm:$0xff] %v911
        %1295 = vst [vmem:[%s1224 + $0x230] sm:$0x1] %v908
        %1296 = vst [vmem:[%s1224 + $0x238] sm:$0x1] %v910
        %1297 = vst [vmem:[%s1224 + $0x240] sm:$0xfe] %v912
        %1298 = vst [vmem:[%s1224 + $0x248] sm:$0xfe] %v913
        %1299 = vst [vmem:[%s1224 + $0x250] sm:$0xff] %v915
        %1300 = vst [vmem:[%s1224 + $0x258] sm:$0xff] %v917
        %1301 = vst [vmem:[%s1224 + $0x260] sm:$0x1] %v914
        %1302 = vst [vmem:[%s1224 + $0x268] sm:$0x1] %v916
        %1303 = vst [vmem:[%s1224 + $0x270] sm:$0xfe] %v918
        %1304 = vst [vmem:[%s1224 + $0x278] sm:$0xfe] %v919
        %1305 = vst [vmem:[%s1224 + $0x280] sm:$0xff] %v921
        %1306 = vst [vmem:[%s1224 + $0x288] sm:$0xff] %v923
        %1307 = vst [vmem:[%s1224 + $0x290] sm:$0x1] %v920
        %1308 = vst [vmem:[%s1224 + $0x298] sm:$0x1] %v922
        %1309 = vst [vmem:[%s1224 + $0x2a0] sm:$0xfe] %v924
        %1310 = vst [vmem:[%s1224 + $0x2a8] sm:$0xfe] %v925
        %1311 = vst [vmem:[%s1224 + $0x2b0] sm:$0xff] %v927
        %1312 = vst [vmem:[%s1224 + $0x2b8] sm:$0xff] %v929
        %1313 = vst [vmem:[%s1224 + $0x2c0] sm:$0x1] %v926
        %1314 = vst [vmem:[%s1224 + $0x2c8] sm:$0x1] %v928
        %1315 = vst [vmem:[%s1224 + $0x2d0] sm:$0xfe] %v930
        %1316 = vst [vmem:[%s1224 + $0x2d8] sm:$0xfe] %v931
        %1317 = vst [vmem:[%s1224 + $0x2e0] sm:$0xff] %v933
        %1318 = vst [vmem:[%s1224 + $0x2e8] sm:$0xff] %v935
        %1319 = vst [vmem:[%s1224 + $0x2f0] sm:$0x1] %v932
        %1320 = vst [vmem:[%s1224 + $0x2f8] sm:$0x1] %v934
        %1321 = vst [vmem:[%s1224 + $0x360] sm:$0xfe] %v936
        %1322 = vst [vmem:[%s1224 + $0x368] sm:$0xfe] %v937
        %1323 = vst [vmem:[%s1224 + $0x370] sm:$0xff] %v939
        %1324 = vst [vmem:[%s1224 + $0x378] sm:$0xff] %v941
        %1325 = vst [vmem:[%s1224 + $0x380] sm:$0x1] %v938
        %1326 = vst [vmem:[%s1224 + $0x388] sm:$0x1] %v940
        %1327 = vst [vmem:[%s1224 + $0x390] sm:$0xfe] %v942
        %1328 = vst [vmem:[%s1224 + $0x398] sm:$0xfe] %v943
        %1329 = vst [vmem:[%s1224 + $0x3a0] sm:$0xff] %v945
        %1330 = vst [vmem:[%s1224 + $0x3a8] sm:$0xff] %v947
        %1331 = vst [vmem:[%s1224 + $0x3b0] sm:$0x1] %v944
        %1332 = vst [vmem:[%s1224 + $0x3b8] sm:$0x1] %v946
        %1333 = vst [vmem:[%s1224 + $0x3c0] sm:$0xfe] %v948
        %1334 = vst [vmem:[%s1224 + $0x3c8] sm:$0xfe] %v949
        %1335 = vst [vmem:[%s1224 + $0x3d0] sm:$0xff] %v951
        %1336 = vst [vmem:[%s1224 + $0x3d8] sm:$0xff] %v953
        %1337 = vst [vmem:[%s1224 + $0x3e0] sm:$0x1] %v950
        %1338 = vst [vmem:[%s1224 + $0x3e8] sm:$0x1] %v952
        %1339 = vst [vmem:[%s1224 + $0x3f0] sm:$0xfe] %v954
        %1340 = vst [vmem:[%s1224 + $0x3f8] sm:$0xfe] %v955
        %1341 = vst [vmem:[%s1224 + $0x400] sm:$0xff] %v957
        %1342 = vst [vmem:[%s1224 + $0x408] sm:$0xff] %v959
        %1343 = vst [vmem:[%s1224 + $0x410] sm:$0x1] %v956
        %1344 = vst [vmem:[%s1224 + $0x418] sm:$0x1] %v958
        %1345 = vst [vmem:[%s1224 + $0x420] sm:$0xfe] %v960
        %1346 = vst [vmem:[%s1224 + $0x428] sm:$0xfe] %v961
        %1347 = vst [vmem:[%s1224 + $0x430] sm:$0xff] %v963
        %1348 = vst [vmem:[%s1224 + $0x438] sm:$0xff] %v965
        %1349 = vst [vmem:[%s1224 + $0x440] sm:$0x1] %v962
        %1350 = vst [vmem:[%s1224 + $0x448] sm:$0x1] %v964
        %1351 = vst [vmem:[%s1224 + $0x450] sm:$0xfe] %v966
        %1352 = vst [vmem:[%s1224 + $0x458] sm:$0xfe] %v967
        %1353 = vst [vmem:[%s1224 + $0x460] sm:$0xff] %v969
        %1354 = vst [vmem:[%s1224 + $0x468] sm:$0xff] %v971
        %1355 = vst [vmem:[%s1224 + $0x470] sm:$0x1] %v968
        %1356 = vst [vmem:[%s1224 + $0x478] sm:$0x1] %v970
        %1357 = vst [vmem:[%s1224 + $0x480] sm:$0xfe] %v972
        %1358 = vst [vmem:[%s1224 + $0x488] sm:$0xfe] %v973
        %1359 = vst [vmem:[%s1224 + $0x490] sm:$0xff] %v975
        %1360 = vst [vmem:[%s1224 + $0x498] sm:$0xff] %v977
        %1361 = vst [vmem:[%s1224 + $0x4a0] sm:$0x1] %v974
        %1362 = vst [vmem:[%s1224 + $0x4a8] sm:$0x1] %v976
        %1363 = vst [vmem:[%s1224 + $0x4b0] sm:$0xfe] %v978
        %1364 = vst [vmem:[%s1224 + $0x4b8] sm:$0xfe] %v979
        %1365 = vst [vmem:[%s1224 + $0x4c0] sm:$0xff] %v981
        %1366 = vst [vmem:[%s1224 + $0x4c8] sm:$0xff] %v983
        %1367 = vst [vmem:[%s1224 + $0x4d0] sm:$0x1] %v980
        %1368 = vst [vmem:[%s1224 + $0x4d8] sm:$0x1] %v982
        %1369 = vst [vmem:[%s1224 + $0x4e0] sm:$0xfe] %v984
        %1370 = vst [vmem:[%s1224 + $0x4e8] sm:$0xfe] %v985
        %1371 = vst [vmem:[%s1224 + $0x4f0] sm:$0xff] %v987
        %1372 = vst [vmem:[%s1224 + $0x4f8] sm:$0xff] %v989
        %1373 = vst [vmem:[%s1224 + $0x500] sm:$0x1] %v986
        %1374 = vst [vmem:[%s1224 + $0x508] sm:$0x1] %v988
        %1375 = vst [vmem:[%s1224 + $0x510] sm:$0xfe] %v990
        %1376 = vst [vmem:[%s1224 + $0x518] sm:$0xfe] %v991
        %1377 = vst [vmem:[%s1224 + $0x520] sm:$0xff] %v993
        %1378 = vst [vmem:[%s1224 + $0x528] sm:$0xff] %v995
        %1379 = vst [vmem:[%s1224 + $0x530] sm:$0x1] %v992
        %1380 = vst [vmem:[%s1224 + $0x538] sm:$0x1] %v994
        %1381 = vst [vmem:[%s1224 + $0x540] sm:$0xfe] %v996
        %1382 = vst [vmem:[%s1224 + $0x548] sm:$0xfe] %v997
        %1383 = vst [vmem:[%s1224 + $0x550] sm:$0xff] %v999
        %1384 = vst [vmem:[%s1224 + $0x558] sm:$0xff] %v1001
        %1385 = vst [vmem:[%s1224 + $0x560] sm:$0x1] %v998
        %1386 = vst [vmem:[%s1224 + $0x568] sm:$0x1] %v1000
        %1387 = vst [vmem:[%s1224 + $0x570] sm:$0xfe] %v1002
        %1388 = vst [vmem:[%s1224 + $0x578] sm:$0xfe] %v1003
        %1389 = vst [vmem:[%s1224 + $0x580] sm:$0xff] %v1005
        %1390 = vst [vmem:[%s1224 + $0x588] sm:$0xff] %v1007
        %1391 = vst [vmem:[%s1224 + $0x590] sm:$0x1] %v1004
        %1392 = vst [vmem:[%s1224 + $0x598] sm:$0x1] %v1006
        %1393 = vst [vmem:[%s1224 + $0x5a0] sm:$0xfe] %v1008
        %1394 = vst [vmem:[%s1224 + $0x5a8] sm:$0xfe] %v1009
        %1395 = vst [vmem:[%s1224 + $0x5b0] sm:$0xff] %v1011
        %1396 = vst [vmem:[%s1224 + $0x5b8] sm:$0xff] %v1013
        %1397 = vst [vmem:[%s1224 + $0x5c0] sm:$0x1] %v1010
        %1398 = vst [vmem:[%s1224 + $0x5c8] sm:$0x1] %v1012
        %1399 = vst [vmem:[%s1224 + $0x5d0] sm:$0xfe] %v1014
        %1400 = vst [vmem:[%s1224 + $0x5d8] sm:$0xfe] %v1015
        %1401 = vst [vmem:[%s1224 + $0x5e0] sm:$0xff] %v1017
        %1402 = vst [vmem:[%s1224 + $0x5e8] sm:$0xff] %v1019
        %1403 = vst [vmem:[%s1224 + $0x5f0] sm:$0x1] %v1016
        %1404 = vst [vmem:[%s1224 + $0x5f8] sm:$0x1] %v1018
        %1405 = vst [vmem:[%s1224 + $0x600] sm:$0xfe] %v1020
        %1406 = vst [vmem:[%s1224 + $0x608] sm:$0xfe] %v1021
        %1407 = vst [vmem:[%s1224 + $0x610] sm:$0xff] %v1023
        %1408 = vst [vmem:[%s1224 + $0x618] sm:$0xff] %v1025
        %1409 = vst [vmem:[%s1224 + $0x620] sm:$0x1] %v1022
        %1410 = vst [vmem:[%s1224 + $0x628] sm:$0x1] %v1024
        %1411 = vst [vmem:[%s1224 + $0x630] sm:$0xfe] %v1026
        %1412 = vst [vmem:[%s1224 + $0x638] sm:$0xfe] %v1027
        %1413 = vst [vmem:[%s1224 + $0x640] sm:$0xff] %v1029
        %1414 = vst [vmem:[%s1224 + $0x648] sm:$0xff] %v1031
        %1415 = vst [vmem:[%s1224 + $0x650] sm:$0x1] %v1028
        %1416 = vst [vmem:[%s1224 + $0x658] sm:$0x1] %v1030
        %v1417 = vld [vmem:[%s330] ss:$8 sm:$0x3]
        %v1418 = vld [vmem:[#allocation2] sm:$0xff]
        %v1419 = vld [vmem:[#allocation2 + $0x8] sm:$0xff]
        %v1420 = vld [vmem:[#allocation2 + $0x10] sm:$0xff]
        %v1421 = vld [vmem:[#allocation2 + $0x18] sm:$0xff]
        %v1422 = vld [vmem:[#allocation2 + $0x30] sm:$0xff]
        %v1423 = vld [vmem:[#allocation2 + $0x38] sm:$0xff]
        %v1424 = vld [vmem:[#allocation2 + $0x40] sm:$0xff]
        %v1425 = vld [vmem:[#allocation2 + $0x48] sm:$0xff]
        %v1426 = vld [vmem:[#allocation2 + $0x60] sm:$0xff]
        %v1427 = vld [vmem:[#allocation2 + $0x68] sm:$0xff]
        %v1428 = vld [vmem:[#allocation2 + $0x70] sm:$0xff]
        %v1429 = vld [vmem:[#allocation2 + $0x78] sm:$0xff]
        %v1430 = vld [vmem:[#allocation2 + $0x90] sm:$0xff]
        %v1431 = vld [vmem:[#allocation2 + $0x98] sm:$0xff]
        %v1432 = vld [vmem:[#allocation2 + $0xa0] sm:$0xff]
        %v1433 = vld [vmem:[#allocation2 + $0xa8] sm:$0xff]
        %v1434 = vld [vmem:[#allocation2 + $0xc0] sm:$0xff]
        %v1435 = vld [vmem:[#allocation2 + $0xc8] sm:$0xff]
        %v1436 = vld [vmem:[#allocation2 + $0xd0] sm:$0xff]
        %v1437 = vld [vmem:[#allocation2 + $0xd8] sm:$0xff]
        %v1438 = vld [vmem:[#allocation2 + $0xf0] sm:$0xff]
        %v1439 = vld [vmem:[#allocation2 + $0xf8] sm:$0xff]
        %v1440 = vld [vmem:[#allocation2 + $0x100] sm:$0xff]
        %v1441 = vld [vmem:[#allocation2 + $0x108] sm:$0xff]
        %v1442 = vld [vmem:[#allocation2 + $0x120] sm:$0xff]
        %v1443 = vld [vmem:[#allocation2 + $0x128] sm:$0xff]
        %v1444 = vld [vmem:[#allocation2 + $0x130] sm:$0xff]
        %v1445 = vld [vmem:[#allocation2 + $0x138] sm:$0xff]
        %v1446 = vld [vmem:[#allocation2 + $0x150] sm:$0xff]
        %v1447 = vld [vmem:[#allocation2 + $0x158] sm:$0xff]
        %v1448 = vld [vmem:[#allocation2 + $0x160] sm:$0xff]
        %v1449 = vld [vmem:[#allocation2 + $0x168] sm:$0xff]
        %v1450 = vld [vmem:[#allocation2 + $0x180] sm:$0xff]
        %v1451 = vld [vmem:[#allocation2 + $0x188] sm:$0xff]
        %v1452 = vld [vmem:[#allocation2 + $0x190] sm:$0xff]
        %v1453 = vld [vmem:[#allocation2 + $0x198] sm:$0xff]
        %v1454 = vld [vmem:[#allocation2 + $0x1b0] sm:$0xff]
        %v1455 = vld [vmem:[#allocation2 + $0x1b8] sm:$0xff]
        %v1456 = vld [vmem:[#allocation2 + $0x1c0] sm:$0xff]
        %v1457 = vld [vmem:[#allocation2 + $0x1c8] sm:$0xff]
        %v1458 = vld [vmem:[#allocation2 + $0x1e0] sm:$0xff]
        %v1459 = vld [vmem:[#allocation2 + $0x1e8] sm:$0xff]
        %v1460 = vld [vmem:[#allocation2 + $0x1f0] sm:$0xff]
        %v1461 = vld [vmem:[#allocation2 + $0x1f8] sm:$0xff]
        %v1462 = vld [vmem:[#allocation2 + $0x210] sm:$0xff]
        %v1463 = vld [vmem:[#allocation2 + $0x218] sm:$0xff]
        %v1464 = vld [vmem:[#allocation2 + $0x220] sm:$0xff]
        %v1465 = vld [vmem:[#allocation2 + $0x228] sm:$0xff]
        %v1466 = vld [vmem:[#allocation2 + $0x240] sm:$0xff]
        %v1467 = vld [vmem:[#allocation2 + $0x248] sm:$0xff]
        %v1468 = vld [vmem:[#allocation2 + $0x250] sm:$0xff]
        %v1469 = vld [vmem:[#allocation2 + $0x258] sm:$0xff]
        %v1470 = vld [vmem:[#allocation2 + $0x270] sm:$0xff]
        %v1471 = vld [vmem:[#allocation2 + $0x278] sm:$0xff]
        %v1472 = vld [vmem:[#allocation2 + $0x280] sm:$0xff]
        %v1473 = vld [vmem:[#allocation2 + $0x288] sm:$0xff]
        %v1474 = vld [vmem:[#allocation2 + $0x2a0] sm:$0xff]
        %v1475 = vld [vmem:[#allocation2 + $0x2a8] sm:$0xff]
        %v1476 = vld [vmem:[#allocation2 + $0x2b0] sm:$0xff]
        %v1477 = vld [vmem:[#allocation2 + $0x2b8] sm:$0xff]
        %v1478 = vld [vmem:[#allocation2 + $0x2d0] sm:$0xff]
        %v1479 = vld [vmem:[#allocation2 + $0x2d8] sm:$0xff]
        %v1480 = vld [vmem:[#allocation2 + $0x2e0] sm:$0xff]
        %v1481 = vld [vmem:[#allocation2 + $0x2e8] sm:$0xff]
        %v1482 = vld [vmem:[#allocation2 + $0x360] sm:$0xff]
        %v1483 = vld [vmem:[#allocation2 + $0x368] sm:$0xff]
        %v1484 = vld [vmem:[#allocation2 + $0x370] sm:$0xff]
        %v1485 = vld [vmem:[#allocation2 + $0x378] sm:$0xff]
        %v1486 = vld [vmem:[#allocation2 + $0x390] sm:$0xff]
        %v1487 = vld [vmem:[#allocation2 + $0x398] sm:$0xff]
        %v1488 = vld [vmem:[#allocation2 + $0x3a0] sm:$0xff]
        %v1489 = vld [vmem:[#allocation2 + $0x3a8] sm:$0xff]
        %v1490 = vld [vmem:[#allocation2 + $0x3c0] sm:$0xff]
        %v1491 = vld [vmem:[#allocation2 + $0x3c8] sm:$0xff]
        %v1492 = vld [vmem:[#allocation2 + $0x3d0] sm:$0xff]
        %v1493 = vld [vmem:[#allocation2 + $0x3d8] sm:$0xff]
        %v1494 = vld [vmem:[#allocation2 + $0x3f0] sm:$0xff]
        %v1495 = vld [vmem:[#allocation2 + $0x3f8] sm:$0xff]
        %v1496 = vld [vmem:[#allocation2 + $0x400] sm:$0xff]
        %v1497 = vld [vmem:[#allocation2 + $0x408] sm:$0xff]
        %v1498 = vld [vmem:[#allocation2 + $0x420] sm:$0xff]
        %v1499 = vld [vmem:[#allocation2 + $0x428] sm:$0xff]
        %v1500 = vld [vmem:[#allocation2 + $0x430] sm:$0xff]
        %v1501 = vld [vmem:[#allocation2 + $0x438] sm:$0xff]
        %v1502 = vld [vmem:[#allocation2 + $0x450] sm:$0xff]
        %v1503 = vld [vmem:[#allocation2 + $0x458] sm:$0xff]
        %v1504 = vld [vmem:[#allocation2 + $0x460] sm:$0xff]
        %v1505 = vld [vmem:[#allocation2 + $0x468] sm:$0xff]
        %v1506 = vld [vmem:[#allocation2 + $0x480] sm:$0xff]
        %v1507 = vld [vmem:[#allocation2 + $0x488] sm:$0xff]
        %v1508 = vld [vmem:[#allocation2 + $0x490] sm:$0xff]
        %v1509 = vld [vmem:[#allocation2 + $0x498] sm:$0xff]
        %v1510 = vld [vmem:[#allocation2 + $0x4b0] sm:$0xff]
        %v1511 = vld [vmem:[#allocation2 + $0x4b8] sm:$0xff]
        %v1512 = vld [vmem:[#allocation2 + $0x4c0] sm:$0xff]
        %v1513 = vld [vmem:[#allocation2 + $0x4c8] sm:$0xff]
        %v1514 = vld [vmem:[#allocation2 + $0x4e0] sm:$0xff]
        %v1515 = vld [vmem:[#allocation2 + $0x4e8] sm:$0xff]
        %v1516 = vld [vmem:[#allocation2 + $0x4f0] sm:$0xff]
        %v1517 = vld [vmem:[#allocation2 + $0x4f8] sm:$0xff]
        %v1518 = vld [vmem:[#allocation2 + $0x510] sm:$0xff]
        %v1519 = vld [vmem:[#allocation2 + $0x518] sm:$0xff]
        %v1520 = vld [vmem:[#allocation2 + $0x520] sm:$0xff]
        %v1521 = vld [vmem:[#allocation2 + $0x528] sm:$0xff]
        %v1522 = vld [vmem:[#allocation2 + $0x540] sm:$0xff]
        %v1523 = vld [vmem:[#allocation2 + $0x548] sm:$0xff]
        %v1524 = vld [vmem:[#allocation2 + $0x550] sm:$0xff]
        %v1525 = vld [vmem:[#allocation2 + $0x558] sm:$0xff]
        %v1526 = vld [vmem:[#allocation2 + $0x570] sm:$0xff]
        %v1527 = vld [vmem:[#allocation2 + $0x578] sm:$0xff]
        %v1528 = vld [vmem:[#allocation2 + $0x580] sm:$0xff]
        %v1529 = vld [vmem:[#allocation2 + $0x588] sm:$0xff]
        %v1530 = vld [vmem:[#allocation2 + $0x5a0] sm:$0xff]
        %v1531 = vld [vmem:[#allocation2 + $0x5a8] sm:$0xff]
        %v1532 = vld [vmem:[#allocation2 + $0x5b0] sm:$0xff]
        %v1533 = vld [vmem:[#allocation2 + $0x5b8] sm:$0xff]
        %v1534 = vld [vmem:[#allocation2 + $0x5d0] sm:$0xff]
        %v1535 = vld [vmem:[#allocation2 + $0x5d8] sm:$0xff]
        %v1536 = vld [vmem:[#allocation2 + $0x5e0] sm:$0xff]
        %v1537 = vld [vmem:[#allocation2 + $0x5e8] sm:$0xff]
        %v1538 = vld [vmem:[#allocation2 + $0x600] sm:$0xff]
        %v1539 = vld [vmem:[#allocation2 + $0x608] sm:$0xff]
        %v1540 = vld [vmem:[#allocation2 + $0x610] sm:$0xff]
        %v1541 = vld [vmem:[#allocation2 + $0x618] sm:$0xff]
        %v1542 = vld [vmem:[#allocation2 + $0x630] sm:$0xff]
        %v1543 = vld [vmem:[#allocation2 + $0x638] sm:$0xff]
        %v1544 = vld [vmem:[#allocation2 + $0x640] sm:$0xff]
        %v1545 = vld [vmem:[#allocation2 + $0x648] sm:$0xff]
        %v1547 = vlaneseq
        %v1548 = vshrl.u32 %v1547, 7
        %v1549 = vsub.s32 0, %v1548
        %v1550 = vrot.slane %v1417, %v1549
        %v1551 = vlaneseq
        %v1552 = vshrl.u32 %v1551, 7
        %v1553 = vsub.s32 1, %v1552
        %v1554 = vrot.slane %v1417, %v1553
        %v1557 = vmul.f32 %v1418, %v1550
        %v1558 = vmul.f32 %v1419, %v1554
        %v1559 = vmul.f32 %v1420, %v1550
        %v1560 = vmul.f32 %v1421, %v1554
        %v1561 = vmul.f32 %v1422, %v1550
        %v1562 = vmul.f32 %v1423, %v1554
        %v1563 = vmul.f32 %v1424, %v1550
        %v1564 = vmul.f32 %v1425, %v1554
        %v1565 = vmul.f32 %v1426, %v1550
        %v1566 = vmul.f32 %v1427, %v1554
        %v1567 = vmul.f32 %v1428, %v1550
        %v1568 = vmul.f32 %v1429, %v1554
        %v1569 = vmul.f32 %v1430, %v1550
        %v1570 = vmul.f32 %v1431, %v1554
        %v1571 = vmul.f32 %v1432, %v1550
        %v1572 = vmul.f32 %v1433, %v1554
        %v1573 = vmul.f32 %v1434, %v1550
        %v1574 = vmul.f32 %v1435, %v1554
        %v1575 = vmul.f32 %v1436, %v1550
        %v1576 = vmul.f32 %v1437, %v1554
        %v1577 = vmul.f32 %v1438, %v1550
        %v1578 = vmul.f32 %v1439, %v1554
        %v1579 = vmul.f32 %v1440, %v1550
        %v1580 = vmul.f32 %v1441, %v1554
        %v1581 = vmul.f32 %v1442, %v1550
        %v1582 = vmul.f32 %v1443, %v1554
        %v1583 = vmul.f32 %v1444, %v1550
        %v1584 = vmul.f32 %v1445, %v1554
        %v1585 = vmul.f32 %v1446, %v1550
        %v1586 = vmul.f32 %v1447, %v1554
        %v1587 = vmul.f32 %v1448, %v1550
        %v1588 = vmul.f32 %v1449, %v1554
        %v1589 = vmul.f32 %v1450, %v1550
        %v1590 = vmul.f32 %v1451, %v1554
        %v1591 = vmul.f32 %v1452, %v1550
        %v1592 = vmul.f32 %v1453, %v1554
        %v1593 = vmul.f32 %v1454, %v1550
        %v1594 = vmul.f32 %v1455, %v1554
        %v1595 = vmul.f32 %v1456, %v1550
        %v1596 = vmul.f32 %v1457, %v1554
        %v1597 = vmul.f32 %v1458, %v1550
        %v1598 = vmul.f32 %v1459, %v1554
        %v1599 = vmul.f32 %v1460, %v1550
        %v1600 = vmul.f32 %v1461, %v1554
        %v1601 = vmul.f32 %v1462, %v1550
        %v1602 = vmul.f32 %v1463, %v1554
        %v1603 = vmul.f32 %v1464, %v1550
        %v1604 = vmul.f32 %v1465, %v1554
        %v1605 = vmul.f32 %v1466, %v1550
        %v1606 = vmul.f32 %v1467, %v1554
        %v1607 = vmul.f32 %v1468, %v1550
        %v1608 = vmul.f32 %v1469, %v1554
        %v1609 = vmul.f32 %v1470, %v1550
        %v1610 = vmul.f32 %v1471, %v1554
        %v1611 = vmul.f32 %v1472, %v1550
        %v1612 = vmul.f32 %v1473, %v1554
        %v1613 = vmul.f32 %v1474, %v1550
        %v1614 = vmul.f32 %v1475, %v1554
        %v1615 = vmul.f32 %v1476, %v1550
        %v1616 = vmul.f32 %v1477, %v1554
        %v1617 = vmul.f32 %v1478, %v1550
        %v1618 = vmul.f32 %v1479, %v1554
        %v1619 = vmul.f32 %v1480, %v1550
        %v1620 = vmul.f32 %v1481, %v1554
        %v1621 = vmul.f32 %v1482, %v1550
        %v1622 = vmul.f32 %v1483, %v1554
        %v1623 = vmul.f32 %v1484, %v1550
        %v1624 = vmul.f32 %v1485, %v1554
        %v1625 = vmul.f32 %v1486, %v1550
        %v1626 = vmul.f32 %v1487, %v1554
        %v1627 = vmul.f32 %v1488, %v1550
        %v1628 = vmul.f32 %v1489, %v1554
        %v1629 = vmul.f32 %v1490, %v1550
        %v1630 = vmul.f32 %v1491, %v1554
        %v1631 = vmul.f32 %v1492, %v1550
        %v1632 = vmul.f32 %v1493, %v1554
        %v1633 = vmul.f32 %v1494, %v1550
        %v1634 = vmul.f32 %v1495, %v1554
        %v1635 = vmul.f32 %v1496, %v1550
        %v1636 = vmul.f32 %v1497, %v1554
        %v1637 = vmul.f32 %v1498, %v1550
        %v1638 = vmul.f32 %v1499, %v1554
        %v1639 = vmul.f32 %v1500, %v1550
        %v1640 = vmul.f32 %v1501, %v1554
        %v1641 = vmul.f32 %v1502, %v1550
        %v1642 = vmul.f32 %v1503, %v1554
        %v1643 = vmul.f32 %v1504, %v1550
        %v1644 = vmul.f32 %v1505, %v1554
        %v1645 = vmul.f32 %v1506, %v1550
        %v1646 = vmul.f32 %v1507, %v1554
        %v1647 = vmul.f32 %v1508, %v1550
        %v1648 = vmul.f32 %v1509, %v1554
        %v1649 = vmul.f32 %v1510, %v1550
        %v1650 = vmul.f32 %v1511, %v1554
        %v1651 = vmul.f32 %v1512, %v1550
        %v1652 = vmul.f32 %v1513, %v1554
        %v1653 = vmul.f32 %v1514, %v1550
        %v1654 = vmul.f32 %v1515, %v1554
        %v1655 = vmul.f32 %v1516, %v1550
        %v1656 = vmul.f32 %v1517, %v1554
        %v1657 = vmul.f32 %v1518, %v1550
        %v1658 = vmul.f32 %v1519, %v1554
        %v1659 = vmul.f32 %v1520, %v1550
        %v1660 = vmul.f32 %v1521, %v1554
        %v1661 = vmul.f32 %v1522, %v1550
        %v1662 = vmul.f32 %v1523, %v1554
        %v1663 = vmul.f32 %v1524, %v1550
        %v1664 = vmul.f32 %v1525, %v1554
        %v1665 = vmul.f32 %v1526, %v1550
        %v1666 = vmul.f32 %v1527, %v1554
        %v1667 = vmul.f32 %v1528, %v1550
        %v1668 = vmul.f32 %v1529, %v1554
        %v1669 = vmul.f32 %v1530, %v1550
        %v1670 = vmul.f32 %v1531, %v1554
        %v1671 = vmul.f32 %v1532, %v1550
        %v1672 = vmul.f32 %v1533, %v1554
        %v1673 = vmul.f32 %v1534, %v1550
        %v1674 = vmul.f32 %v1535, %v1554
        %v1675 = vmul.f32 %v1536, %v1550
        %v1676 = vmul.f32 %v1537, %v1554
        %v1677 = vmul.f32 %v1538, %v1550
        %v1678 = vmul.f32 %v1539, %v1554
        %v1679 = vmul.f32 %v1540, %v1550
        %v1680 = vmul.f32 %v1541, %v1554
        %v1681 = vmul.f32 %v1542, %v1550
        %v1682 = vmul.f32 %v1543, %v1554
        %v1683 = vmul.f32 %v1544, %v1550
        %v1684 = vmul.f32 %v1545, %v1554
        %s1685 = scalar_lea.vmem %s330, 1
        %v1686 = vld [vmem:[%s1685] ss:$8 sm:$0x3]
        %v1687 = vld [vmem:[#allocation2] sm:$0xfe]
        %v1688 = vld [vmem:[#allocation2 + $0x8] sm:$0xfe]
        %v1689 = vld [vmem:[#allocation2 + $0x20] sm:$0x1]
        %v1690 = vld [vmem:[#allocation2 + $0x28] sm:$0x1]
        %v1691 = vld [vmem:[#allocation2 + $0x30] sm:$0xfe]
        %v1692 = vld [vmem:[#allocation2 + $0x38] sm:$0xfe]
        %v1693 = vld [vmem:[#allocation2 + $0x50] sm:$0x1]
        %v1694 = vld [vmem:[#allocation2 + $0x58] sm:$0x1]
        %v1695 = vld [vmem:[#allocation2 + $0x60] sm:$0xfe]
        %v1696 = vld [vmem:[#allocation2 + $0x68] sm:$0xfe]
        %v1697 = vld [vmem:[#allocation2 + $0x80] sm:$0x1]
        %v1698 = vld [vmem:[#allocation2 + $0x88] sm:$0x1]
        %v1699 = vld [vmem:[#allocation2 + $0x90] sm:$0xfe]
        %v1700 = vld [vmem:[#allocation2 + $0x98] sm:$0xfe]
        %v1701 = vld [vmem:[#allocation2 + $0xb0] sm:$0x1]
        %v1702 = vld [vmem:[#allocation2 + $0xb8] sm:$0x1]
        %v1703 = vld [vmem:[#allocation2 + $0xc0] sm:$0xfe]
        %v1704 = vld [vmem:[#allocation2 + $0xc8] sm:$0xfe]
        %v1705 = vld [vmem:[#allocation2 + $0xe0] sm:$0x1]
        %v1706 = vld [vmem:[#allocation2 + $0xe8] sm:$0x1]
        %v1707 = vld [vmem:[#allocation2 + $0xf0] sm:$0xfe]
        %v1708 = vld [vmem:[#allocation2 + $0xf8] sm:$0xfe]
        %v1709 = vld [vmem:[#allocation2 + $0x110] sm:$0x1]
        %v1710 = vld [vmem:[#allocation2 + $0x118] sm:$0x1]
        %v1711 = vld [vmem:[#allocation2 + $0x120] sm:$0xfe]
        %v1712 = vld [vmem:[#allocation2 + $0x128] sm:$0xfe]
        %v1713 = vld [vmem:[#allocation2 + $0x140] sm:$0x1]
        %v1714 = vld [vmem:[#allocation2 + $0x148] sm:$0x1]
        %v1715 = vld [vmem:[#allocation2 + $0x150] sm:$0xfe]
        %v1716 = vld [vmem:[#allocation2 + $0x158] sm:$0xfe]
        %v1717 = vld [vmem:[#allocation2 + $0x170] sm:$0x1]
        %v1718 = vld [vmem:[#allocation2 + $0x178] sm:$0x1]
        %v1719 = vld [vmem:[#allocation2 + $0x180] sm:$0xfe]
        %v1720 = vld [vmem:[#allocation2 + $0x188] sm:$0xfe]
        %v1721 = vld [vmem:[#allocation2 + $0x1a0] sm:$0x1]
        %v1722 = vld [vmem:[#allocation2 + $0x1a8] sm:$0x1]
        %v1723 = vld [vmem:[#allocation2 + $0x1b0] sm:$0xfe]
        %v1724 = vld [vmem:[#allocation2 + $0x1b8] sm:$0xfe]
        %v1725 = vld [vmem:[#allocation2 + $0x1d0] sm:$0x1]
        %v1726 = vld [vmem:[#allocation2 + $0x1d8] sm:$0x1]
        %v1727 = vld [vmem:[#allocation2 + $0x1e0] sm:$0xfe]
        %v1728 = vld [vmem:[#allocation2 + $0x1e8] sm:$0xfe]
        %v1729 = vld [vmem:[#allocation2 + $0x200] sm:$0x1]
        %v1730 = vld [vmem:[#allocation2 + $0x208] sm:$0x1]
        %v1731 = vld [vmem:[#allocation2 + $0x210] sm:$0xfe]
        %v1732 = vld [vmem:[#allocation2 + $0x218] sm:$0xfe]
        %v1733 = vld [vmem:[#allocation2 + $0x230] sm:$0x1]
        %v1734 = vld [vmem:[#allocation2 + $0x238] sm:$0x1]
        %v1735 = vld [vmem:[#allocation2 + $0x240] sm:$0xfe]
        %v1736 = vld [vmem:[#allocation2 + $0x248] sm:$0xfe]
        %v1737 = vld [vmem:[#allocation2 + $0x260] sm:$0x1]
        %v1738 = vld [vmem:[#allocation2 + $0x268] sm:$0x1]
        %v1739 = vld [vmem:[#allocation2 + $0x270] sm:$0xfe]
        %v1740 = vld [vmem:[#allocation2 + $0x278] sm:$0xfe]
        %v1741 = vld [vmem:[#allocation2 + $0x290] sm:$0x1]
        %v1742 = vld [vmem:[#allocation2 + $0x298] sm:$0x1]
        %v1743 = vld [vmem:[#allocation2 + $0x2a0] sm:$0xfe]
        %v1744 = vld [vmem:[#allocation2 + $0x2a8] sm:$0xfe]
        %v1745 = vld [vmem:[#allocation2 + $0x2c0] sm:$0x1]
        %v1746 = vld [vmem:[#allocation2 + $0x2c8] sm:$0x1]
        %v1747 = vld [vmem:[#allocation2 + $0x2d0] sm:$0xfe]
        %v1748 = vld [vmem:[#allocation2 + $0x2d8] sm:$0xfe]
        %v1749 = vld [vmem:[#allocation2 + $0x2f0] sm:$0x1]
        %v1750 = vld [vmem:[#allocation2 + $0x2f8] sm:$0x1]
        %v1751 = vld [vmem:[#allocation2 + $0x360] sm:$0xfe]
        %v1752 = vld [vmem:[#allocation2 + $0x368] sm:$0xfe]
        %v1753 = vld [vmem:[#allocation2 + $0x380] sm:$0x1]
        %v1754 = vld [vmem:[#allocation2 + $0x388] sm:$0x1]
        %v1755 = vld [vmem:[#allocation2 + $0x390] sm:$0xfe]
        %v1756 = vld [vmem:[#allocation2 + $0x398] sm:$0xfe]
        %v1757 = vld [vmem:[#allocation2 + $0x3b0] sm:$0x1]
        %v1758 = vld [vmem:[#allocation2 + $0x3b8] sm:$0x1]
        %v1759 = vld [vmem:[#allocation2 + $0x3c0] sm:$0xfe]
        %v1760 = vld [vmem:[#allocation2 + $0x3c8] sm:$0xfe]
        %v1761 = vld [vmem:[#allocation2 + $0x3e0] sm:$0x1]
        %v1762 = vld [vmem:[#allocation2 + $0x3e8] sm:$0x1]
        %v1763 = vld [vmem:[#allocation2 + $0x3f0] sm:$0xfe]
        %v1764 = vld [vmem:[#allocation2 + $0x3f8] sm:$0xfe]
        %v1765 = vld [vmem:[#allocation2 + $0x410] sm:$0x1]
        %v1766 = vld [vmem:[#allocation2 + $0x418] sm:$0x1]
        %v1767 = vld [vmem:[#allocation2 + $0x420] sm:$0xfe]
        %v1768 = vld [vmem:[#allocation2 + $0x428] sm:$0xfe]
        %v1769 = vld [vmem:[#allocation2 + $0x440] sm:$0x1]
        %v1770 = vld [vmem:[#allocation2 + $0x448] sm:$0x1]
        %v1771 = vld [vmem:[#allocation2 + $0x450] sm:$0xfe]
        %v1772 = vld [vmem:[#allocation2 + $0x458] sm:$0xfe]
        %v1773 = vld [vmem:[#allocation2 + $0x470] sm:$0x1]
        %v1774 = vld [vmem:[#allocation2 + $0x478] sm:$0x1]
        %v1775 = vld [vmem:[#allocation2 + $0x480] sm:$0xfe]
        %v1776 = vld [vmem:[#allocation2 + $0x488] sm:$0xfe]
        %v1777 = vld [vmem:[#allocation2 + $0x4a0] sm:$0x1]
        %v1778 = vld [vmem:[#allocation2 + $0x4a8] sm:$0x1]
        %v1779 = vld [vmem:[#allocation2 + $0x4b0] sm:$0xfe]
        %v1780 = vld [vmem:[#allocation2 + $0x4b8] sm:$0xfe]
        %v1781 = vld [vmem:[#allocation2 + $0x4d0] sm:$0x1]
        %v1782 = vld [vmem:[#allocation2 + $0x4d8] sm:$0x1]
        %v1783 = vld [vmem:[#allocation2 + $0x4e0] sm:$0xfe]
        %v1784 = vld [vmem:[#allocation2 + $0x4e8] sm:$0xfe]
        %v1785 = vld [vmem:[#allocation2 + $0x500] sm:$0x1]
        %v1786 = vld [vmem:[#allocation2 + $0x508] sm:$0x1]
        %v1787 = vld [vmem:[#allocation2 + $0x510] sm:$0xfe]
        %v1788 = vld [vmem:[#allocation2 + $0x518] sm:$0xfe]
        %v1789 = vld [vmem:[#allocation2 + $0x530] sm:$0x1]
        %v1790 = vld [vmem:[#allocation2 + $0x538] sm:$0x1]
        %v1791 = vld [vmem:[#allocation2 + $0x540] sm:$0xfe]
        %v1792 = vld [vmem:[#allocation2 + $0x548] sm:$0xfe]
        %v1793 = vld [vmem:[#allocation2 + $0x560] sm:$0x1]
        %v1794 = vld [vmem:[#allocation2 + $0x568] sm:$0x1]
        %v1795 = vld [vmem:[#allocation2 + $0x570] sm:$0xfe]
        %v1796 = vld [vmem:[#allocation2 + $0x578] sm:$0xfe]
        %v1797 = vld [vmem:[#allocation2 + $0x590] sm:$0x1]
        %v1798 = vld [vmem:[#allocation2 + $0x598] sm:$0x1]
        %v1799 = vld [vmem:[#allocation2 + $0x5a0] sm:$0xfe]
        %v1800 = vld [vmem:[#allocation2 + $0x5a8] sm:$0xfe]
        %v1801 = vld [vmem:[#allocation2 + $0x5c0] sm:$0x1]
        %v1802 = vld [vmem:[#allocation2 + $0x5c8] sm:$0x1]
        %v1803 = vld [vmem:[#allocation2 + $0x5d0] sm:$0xfe]
        %v1804 = vld [vmem:[#allocation2 + $0x5d8] sm:$0xfe]
        %v1805 = vld [vmem:[#allocation2 + $0x5f0] sm:$0x1]
        %v1806 = vld [vmem:[#allocation2 + $0x5f8] sm:$0x1]
        %v1807 = vld [vmem:[#allocation2 + $0x600] sm:$0xfe]
        %v1808 = vld [vmem:[#allocation2 + $0x608] sm:$0xfe]
        %v1809 = vld [vmem:[#allocation2 + $0x620] sm:$0x1]
        %v1810 = vld [vmem:[#allocation2 + $0x628] sm:$0x1]
        %v1811 = vld [vmem:[#allocation2 + $0x630] sm:$0xfe]
        %v1812 = vld [vmem:[#allocation2 + $0x638] sm:$0xfe]
        %v1813 = vld [vmem:[#allocation2 + $0x650] sm:$0x1]
        %v1814 = vld [vmem:[#allocation2 + $0x658] sm:$0x1]
        %v1816 = vlaneseq
        %v1817 = vshrl.u32 %v1816, 7
        %v1818 = vsub.s32 0, %v1817
        %v1819 = vrot.slane %v1686, %v1818
        %v1820 = vlaneseq
        %v1821 = vshrl.u32 %v1820, 7
        %v1822 = vsub.s32 1, %v1821
        %v1823 = vrot.slane %v1686, %v1822
        %v1826 = vmul.f32 %v1687, %v1819
        %v1827 = vmul.f32 %v1688, %v1823
        %v1828 = vmul.f32 %v1420, %v1819
        %v1829 = vmul.f32 %v1421, %v1823
        %v1830 = vmul.f32 %v1689, %v1819
        %v1831 = vmul.f32 %v1690, %v1823
        %v1832 = vmul.f32 %v1691, %v1819
        %v1833 = vmul.f32 %v1692, %v1823
        %v1834 = vmul.f32 %v1424, %v1819
        %v1835 = vmul.f32 %v1425, %v1823
        %v1836 = vmul.f32 %v1693, %v1819
        %v1837 = vmul.f32 %v1694, %v1823
        %v1838 = vmul.f32 %v1695, %v1819
        %v1839 = vmul.f32 %v1696, %v1823
        %v1840 = vmul.f32 %v1428, %v1819
        %v1841 = vmul.f32 %v1429, %v1823
        %v1842 = vmul.f32 %v1697, %v1819
        %v1843 = vmul.f32 %v1698, %v1823
        %v1844 = vmul.f32 %v1699, %v1819
        %v1845 = vmul.f32 %v1700, %v1823
        %v1846 = vmul.f32 %v1432, %v1819
        %v1847 = vmul.f32 %v1433, %v1823
        %v1848 = vmul.f32 %v1701, %v1819
        %v1849 = vmul.f32 %v1702, %v1823
        %v1850 = vmul.f32 %v1703, %v1819
        %v1851 = vmul.f32 %v1704, %v1823
        %v1852 = vmul.f32 %v1436, %v1819
        %v1853 = vmul.f32 %v1437, %v1823
        %v1854 = vmul.f32 %v1705, %v1819
        %v1855 = vmul.f32 %v1706, %v1823
        %v1856 = vmul.f32 %v1707, %v1819
        %v1857 = vmul.f32 %v1708, %v1823
        %v1858 = vmul.f32 %v1440, %v1819
        %v1859 = vmul.f32 %v1441, %v1823
        %v1860 = vmul.f32 %v1709, %v1819
        %v1861 = vmul.f32 %v1710, %v1823
        %v1862 = vmul.f32 %v1711, %v1819
        %v1863 = vmul.f32 %v1712, %v1823
        %v1864 = vmul.f32 %v1444, %v1819
        %v1865 = vmul.f32 %v1445, %v1823
        %v1866 = vmul.f32 %v1713, %v1819
        %v1867 = vmul.f32 %v1714, %v1823
        %v1868 = vmul.f32 %v1715, %v1819
        %v1869 = vmul.f32 %v1716, %v1823
        %v1870 = vmul.f32 %v1448, %v1819
        %v1871 = vmul.f32 %v1449, %v1823
        %v1872 = vmul.f32 %v1717, %v1819
        %v1873 = vmul.f32 %v1718, %v1823
        %v1874 = vmul.f32 %v1719, %v1819
        %v1875 = vmul.f32 %v1720, %v1823
        %v1876 = vmul.f32 %v1452, %v1819
        %v1877 = vmul.f32 %v1453, %v1823
        %v1878 = vmul.f32 %v1721, %v1819
        %v1879 = vmul.f32 %v1722, %v1823
        %v1880 = vmul.f32 %v1723, %v1819
        %v1881 = vmul.f32 %v1724, %v1823
        %v1882 = vmul.f32 %v1456, %v1819
        %v1883 = vmul.f32 %v1457, %v1823
        %v1884 = vmul.f32 %v1725, %v1819
        %v1885 = vmul.f32 %v1726, %v1823
        %v1886 = vmul.f32 %v1727, %v1819
        %v1887 = vmul.f32 %v1728, %v1823
        %v1888 = vmul.f32 %v1460, %v1819
        %v1889 = vmul.f32 %v1461, %v1823
        %v1890 = vmul.f32 %v1729, %v1819
        %v1891 = vmul.f32 %v1730, %v1823
        %v1892 = vmul.f32 %v1731, %v1819
        %v1893 = vmul.f32 %v1732, %v1823
        %v1894 = vmul.f32 %v1464, %v1819
        %v1895 = vmul.f32 %v1465, %v1823
        %v1896 = vmul.f32 %v1733, %v1819
        %v1897 = vmul.f32 %v1734, %v1823
        %v1898 = vmul.f32 %v1735, %v1819
        %v1899 = vmul.f32 %v1736, %v1823
        %v1900 = vmul.f32 %v1468, %v1819
        %v1901 = vmul.f32 %v1469, %v1823
        %v1902 = vmul.f32 %v1737, %v1819
        %v1903 = vmul.f32 %v1738, %v1823
        %v1904 = vmul.f32 %v1739, %v1819
        %v1905 = vmul.f32 %v1740, %v1823
        %v1906 = vmul.f32 %v1472, %v1819
        %v1907 = vmul.f32 %v1473, %v1823
        %v1908 = vmul.f32 %v1741, %v1819
        %v1909 = vmul.f32 %v1742, %v1823
        %v1910 = vmul.f32 %v1743, %v1819
        %v1911 = vmul.f32 %v1744, %v1823
        %v1912 = vmul.f32 %v1476, %v1819
        %v1913 = vmul.f32 %v1477, %v1823
        %v1914 = vmul.f32 %v1745, %v1819
        %v1915 = vmul.f32 %v1746, %v1823
        %v1916 = vmul.f32 %v1747, %v1819
        %v1917 = vmul.f32 %v1748, %v1823
        %v1918 = vmul.f32 %v1480, %v1819
        %v1919 = vmul.f32 %v1481, %v1823
        %v1920 = vmul.f32 %v1749, %v1819
        %v1921 = vmul.f32 %v1750, %v1823
        %v1922 = vmul.f32 %v1751, %v1819
        %v1923 = vmul.f32 %v1752, %v1823
        %v1924 = vmul.f32 %v1484, %v1819
        %v1925 = vmul.f32 %v1485, %v1823
        %v1926 = vmul.f32 %v1753, %v1819
        %v1927 = vmul.f32 %v1754, %v1823
        %v1928 = vmul.f32 %v1755, %v1819
        %v1929 = vmul.f32 %v1756, %v1823
        %v1930 = vmul.f32 %v1488, %v1819
        %v1931 = vmul.f32 %v1489, %v1823
        %v1932 = vmul.f32 %v1757, %v1819
        %v1933 = vmul.f32 %v1758, %v1823
        %v1934 = vmul.f32 %v1759, %v1819
        %v1935 = vmul.f32 %v1760, %v1823
        %v1936 = vmul.f32 %v1492, %v1819
        %v1937 = vmul.f32 %v1493, %v1823
        %v1938 = vmul.f32 %v1761, %v1819
        %v1939 = vmul.f32 %v1762, %v1823
        %v1940 = vmul.f32 %v1763, %v1819
        %v1941 = vmul.f32 %v1764, %v1823
        %v1942 = vmul.f32 %v1496, %v1819
        %v1943 = vmul.f32 %v1497, %v1823
        %v1944 = vmul.f32 %v1765, %v1819
        %v1945 = vmul.f32 %v1766, %v1823
        %v1946 = vmul.f32 %v1767, %v1819
        %v1947 = vmul.f32 %v1768, %v1823
        %v1948 = vmul.f32 %v1500, %v1819
        %v1949 = vmul.f32 %v1501, %v1823
        %v1950 = vmul.f32 %v1769, %v1819
        %v1951 = vmul.f32 %v1770, %v1823
        %v1952 = vmul.f32 %v1771, %v1819
        %v1953 = vmul.f32 %v1772, %v1823
        %v1954 = vmul.f32 %v1504, %v1819
        %v1955 = vmul.f32 %v1505, %v1823
        %v1956 = vmul.f32 %v1773, %v1819
        %v1957 = vmul.f32 %v1774, %v1823
        %v1958 = vmul.f32 %v1775, %v1819
        %v1959 = vmul.f32 %v1776, %v1823
        %v1960 = vmul.f32 %v1508, %v1819
        %v1961 = vmul.f32 %v1509, %v1823
        %v1962 = vmul.f32 %v1777, %v1819
        %v1963 = vmul.f32 %v1778, %v1823
        %v1964 = vmul.f32 %v1779, %v1819
        %v1965 = vmul.f32 %v1780, %v1823
        %v1966 = vmul.f32 %v1512, %v1819
        %v1967 = vmul.f32 %v1513, %v1823
        %v1968 = vmul.f32 %v1781, %v1819
        %v1969 = vmul.f32 %v1782, %v1823
        %v1970 = vmul.f32 %v1783, %v1819
        %v1971 = vmul.f32 %v1784, %v1823
        %v1972 = vmul.f32 %v1516, %v1819
        %v1973 = vmul.f32 %v1517, %v1823
        %v1974 = vmul.f32 %v1785, %v1819
        %v1975 = vmul.f32 %v1786, %v1823
        %v1976 = vmul.f32 %v1787, %v1819
        %v1977 = vmul.f32 %v1788, %v1823
        %v1978 = vmul.f32 %v1520, %v1819
        %v1979 = vmul.f32 %v1521, %v1823
        %v1980 = vmul.f32 %v1789, %v1819
        %v1981 = vmul.f32 %v1790, %v1823
        %v1982 = vmul.f32 %v1791, %v1819
        %v1983 = vmul.f32 %v1792, %v1823
        %v1984 = vmul.f32 %v1524, %v1819
        %v1985 = vmul.f32 %v1525, %v1823
        %v1986 = vmul.f32 %v1793, %v1819
        %v1987 = vmul.f32 %v1794, %v1823
        %v1988 = vmul.f32 %v1795, %v1819
        %v1989 = vmul.f32 %v1796, %v1823
        %v1990 = vmul.f32 %v1528, %v1819
        %v1991 = vmul.f32 %v1529, %v1823
        %v1992 = vmul.f32 %v1797, %v1819
        %v1993 = vmul.f32 %v1798, %v1823
        %v1994 = vmul.f32 %v1799, %v1819
        %v1995 = vmul.f32 %v1800, %v1823
        %v1996 = vmul.f32 %v1532, %v1819
        %v1997 = vmul.f32 %v1533, %v1823
        %v1998 = vmul.f32 %v1801, %v1819
        %v1999 = vmul.f32 %v1802, %v1823
        %v2000 = vmul.f32 %v1803, %v1819
        %v2001 = vmul.f32 %v1804, %v1823
        %v2002 = vmul.f32 %v1536, %v1819
        %v2003 = vmul.f32 %v1537, %v1823
        %v2004 = vmul.f32 %v1805, %v1819
        %v2005 = vmul.f32 %v1806, %v1823
        %v2006 = vmul.f32 %v1807, %v1819
        %v2007 = vmul.f32 %v1808, %v1823
        %v2008 = vmul.f32 %v1540, %v1819
        %v2009 = vmul.f32 %v1541, %v1823
        %v2010 = vmul.f32 %v1809, %v1819
        %v2011 = vmul.f32 %v1810, %v1823
        %v2012 = vmul.f32 %v1811, %v1819
        %v2013 = vmul.f32 %v1812, %v1823
        %v2014 = vmul.f32 %v1544, %v1819
        %v2015 = vmul.f32 %v1545, %v1823
        %v2016 = vmul.f32 %v1813, %v1819
        %v2017 = vmul.f32 %v1814, %v1823
        %vm2210 = vcmask 1046528
        %v2211 = vrot.slane %v1826, 1
        %v2212 = vrot.slane %v1828, 1
        %v2213 = vsel %vm2210, %v2211, %v2212
        %v2214 = vrot.slane %v1827, 1
        %v2215 = vrot.slane %v1829, 1
        %v2216 = vsel %vm2210, %v2214, %v2215
        %v2217 = vrot.slane %v1830, 1
        %v2218 = vsel %vm2210, %v2212, %v2217
        %v2219 = vrot.slane %v1831, 1
        %v2220 = vsel %vm2210, %v2215, %v2219
        %v2221 = vrot.slane %v1832, 1
        %v2222 = vrot.slane %v1834, 1
        %v2223 = vsel %vm2210, %v2221, %v2222
        %v2224 = vrot.slane %v1833, 1
        %v2225 = vrot.slane %v1835, 1
        %v2226 = vsel %vm2210, %v2224, %v2225
        %v2227 = vrot.slane %v1836, 1
        %v2228 = vsel %vm2210, %v2222, %v2227
        %v2229 = vrot.slane %v1837, 1
        %v2230 = vsel %vm2210, %v2225, %v2229
        %v2231 = vrot.slane %v1838, 1
        %v2232 = vrot.slane %v1840, 1
        %v2233 = vsel %vm2210, %v2231, %v2232
        %v2234 = vrot.slane %v1839, 1
        %v2235 = vrot.slane %v1841, 1
        %v2236 = vsel %vm2210, %v2234, %v2235
        %v2237 = vrot.slane %v1842, 1
        %v2238 = vsel %vm2210, %v2232, %v2237
        %v2239 = vrot.slane %v1843, 1
        %v2240 = vsel %vm2210, %v2235, %v2239
        %v2241 = vrot.slane %v1844, 1
        %v2242 = vrot.slane %v1846, 1
        %v2243 = vsel %vm2210, %v2241, %v2242
        %v2244 = vrot.slane %v1845, 1
        %v2245 = vrot.slane %v1847, 1
        %v2246 = vsel %vm2210, %v2244, %v2245
        %v2247 = vrot.slane %v1848, 1
        %v2248 = vsel %vm2210, %v2242, %v2247
        %v2249 = vrot.slane %v1849, 1
        %v2250 = vsel %vm2210, %v2245, %v2249
        %v2251 = vrot.slane %v1850, 1
        %v2252 = vrot.slane %v1852, 1
        %v2253 = vsel %vm2210, %v2251, %v2252
        %v2254 = vrot.slane %v1851, 1
        %v2255 = vrot.slane %v1853, 1
        %v2256 = vsel %vm2210, %v2254, %v2255
        %v2257 = vrot.slane %v1854, 1
        %v2258 = vsel %vm2210, %v2252, %v2257
        %v2259 = vrot.slane %v1855, 1
        %v2260 = vsel %vm2210, %v2255, %v2259
        %v2261 = vrot.slane %v1856, 1
        %v2262 = vrot.slane %v1858, 1
        %v2263 = vsel %vm2210, %v2261, %v2262
        %v2264 = vrot.slane %v1857, 1
        %v2265 = vrot.slane %v1859, 1
        %v2266 = vsel %vm2210, %v2264, %v2265
        %v2267 = vrot.slane %v1860, 1
        %v2268 = vsel %vm2210, %v2262, %v2267
        %v2269 = vrot.slane %v1861, 1
        %v2270 = vsel %vm2210, %v2265, %v2269
        %v2271 = vrot.slane %v1862, 1
        %v2272 = vrot.slane %v1864, 1
        %v2273 = vsel %vm2210, %v2271, %v2272
        %v2274 = vrot.slane %v1863, 1
        %v2275 = vrot.slane %v1865, 1
        %v2276 = vsel %vm2210, %v2274, %v2275
        %v2277 = vrot.slane %v1866, 1
        %v2278 = vsel %vm2210, %v2272, %v2277
        %v2279 = vrot.slane %v1867, 1
        %v2280 = vsel %vm2210, %v2275, %v2279
        %v2281 = vrot.slane %v1868, 1
        %v2282 = vrot.slane %v1870, 1
        %v2283 = vsel %vm2210, %v2281, %v2282
        %v2284 = vrot.slane %v1869, 1
        %v2285 = vrot.slane %v1871, 1
        %v2286 = vsel %vm2210, %v2284, %v2285
        %v2287 = vrot.slane %v1872, 1
        %v2288 = vsel %vm2210, %v2282, %v2287
        %v2289 = vrot.slane %v1873, 1
        %v2290 = vsel %vm2210, %v2285, %v2289
        %v2291 = vrot.slane %v1874, 1
        %v2292 = vrot.slane %v1876, 1
        %v2293 = vsel %vm2210, %v2291, %v2292
        %v2294 = vrot.slane %v1875, 1
        %v2295 = vrot.slane %v1877, 1
        %v2296 = vsel %vm2210, %v2294, %v2295
        %v2297 = vrot.slane %v1878, 1
        %v2298 = vsel %vm2210, %v2292, %v2297
        %v2299 = vrot.slane %v1879, 1
        %v2300 = vsel %vm2210, %v2295, %v2299
        %v2301 = vrot.slane %v1880, 1
        %v2302 = vrot.slane %v1882, 1
        %v2303 = vsel %vm2210, %v2301, %v2302
        %v2304 = vrot.slane %v1881, 1
        %v2305 = vrot.slane %v1883, 1
        %v2306 = vsel %vm2210, %v2304, %v2305
        %v2307 = vrot.slane %v1884, 1
        %v2308 = vsel %vm2210, %v2302, %v2307
        %v2309 = vrot.slane %v1885, 1
        %v2310 = vsel %vm2210, %v2305, %v2309
        %v2311 = vrot.slane %v1886, 1
        %v2312 = vrot.slane %v1888, 1
        %v2313 = vsel %vm2210, %v2311, %v2312
        %v2314 = vrot.slane %v1887, 1
        %v2315 = vrot.slane %v1889, 1
        %v2316 = vsel %vm2210, %v2314, %v2315
        %v2317 = vrot.slane %v1890, 1
        %v2318 = vsel %vm2210, %v2312, %v2317
        %v2319 = vrot.slane %v1891, 1
        %v2320 = vsel %vm2210, %v2315, %v2319
        %v2321 = vrot.slane %v1892, 1
        %v2322 = vrot.slane %v1894, 1
        %v2323 = vsel %vm2210, %v2321, %v2322
        %v2324 = vrot.slane %v1893, 1
        %v2325 = vrot.slane %v1895, 1
        %v2326 = vsel %vm2210, %v2324, %v2325
        %v2327 = vrot.slane %v1896, 1
        %v2328 = vsel %vm2210, %v2322, %v2327
        %v2329 = vrot.slane %v1897, 1
        %v2330 = vsel %vm2210, %v2325, %v2329
        %v2331 = vrot.slane %v1898, 1
        %v2332 = vrot.slane %v1900, 1
        %v2333 = vsel %vm2210, %v2331, %v2332
        %v2334 = vrot.slane %v1899, 1
        %v2335 = vrot.slane %v1901, 1
        %v2336 = vsel %vm2210, %v2334, %v2335
        %v2337 = vrot.slane %v1902, 1
        %v2338 = vsel %vm2210, %v2332, %v2337
        %v2339 = vrot.slane %v1903, 1
        %v2340 = vsel %vm2210, %v2335, %v2339
        %v2341 = vrot.slane %v1904, 1
        %v2342 = vrot.slane %v1906, 1
        %v2343 = vsel %vm2210, %v2341, %v2342
        %v2344 = vrot.slane %v1905, 1
        %v2345 = vrot.slane %v1907, 1
        %v2346 = vsel %vm2210, %v2344, %v2345
        %v2347 = vrot.slane %v1908, 1
        %v2348 = vsel %vm2210, %v2342, %v2347
        %v2349 = vrot.slane %v1909, 1
        %v2350 = vsel %vm2210, %v2345, %v2349
        %v2351 = vrot.slane %v1910, 1
        %v2352 = vrot.slane %v1912, 1
        %v2353 = vsel %vm2210, %v2351, %v2352
        %v2354 = vrot.slane %v1911, 1
        %v2355 = vrot.slane %v1913, 1
        %v2356 = vsel %vm2210, %v2354, %v2355
        %v2357 = vrot.slane %v1914, 1
        %v2358 = vsel %vm2210, %v2352, %v2357
        %v2359 = vrot.slane %v1915, 1
        %v2360 = vsel %vm2210, %v2355, %v2359
        %v2361 = vrot.slane %v1916, 1
        %v2362 = vrot.slane %v1918, 1
        %v2363 = vsel %vm2210, %v2361, %v2362
        %v2364 = vrot.slane %v1917, 1
        %v2365 = vrot.slane %v1919, 1
        %v2366 = vsel %vm2210, %v2364, %v2365
        %v2367 = vrot.slane %v1920, 1
        %v2368 = vsel %vm2210, %v2362, %v2367
        %v2369 = vrot.slane %v1921, 1
        %v2370 = vsel %vm2210, %v2365, %v2369
        %v2371 = vrot.slane %v1922, 1
        %v2372 = vrot.slane %v1924, 1
        %v2373 = vsel %vm2210, %v2371, %v2372
        %v2374 = vrot.slane %v1923, 1
        %v2375 = vrot.slane %v1925, 1
        %v2376 = vsel %vm2210, %v2374, %v2375
        %v2377 = vrot.slane %v1926, 1
        %v2378 = vsel %vm2210, %v2372, %v2377
        %v2379 = vrot.slane %v1927, 1
        %v2380 = vsel %vm2210, %v2375, %v2379
        %v2381 = vrot.slane %v1928, 1
        %v2382 = vrot.slane %v1930, 1
        %v2383 = vsel %vm2210, %v2381, %v2382
        %v2384 = vrot.slane %v1929, 1
        %v2385 = vrot.slane %v1931, 1
        %v2386 = vsel %vm2210, %v2384, %v2385
        %v2387 = vrot.slane %v1932, 1
        %v2388 = vsel %vm2210, %v2382, %v2387
        %v2389 = vrot.slane %v1933, 1
        %v2390 = vsel %vm2210, %v2385, %v2389
        %v2391 = vrot.slane %v1934, 1
        %v2392 = vrot.slane %v1936, 1
        %v2393 = vsel %vm2210, %v2391, %v2392
        %v2394 = vrot.slane %v1935, 1
        %v2395 = vrot.slane %v1937, 1
        %v2396 = vsel %vm2210, %v2394, %v2395
        %v2397 = vrot.slane %v1938, 1
        %v2398 = vsel %vm2210, %v2392, %v2397
        %v2399 = vrot.slane %v1939, 1
        %v2400 = vsel %vm2210, %v2395, %v2399
        %v2401 = vrot.slane %v1940, 1
        %v2402 = vrot.slane %v1942, 1
        %v2403 = vsel %vm2210, %v2401, %v2402
        %v2404 = vrot.slane %v1941, 1
        %v2405 = vrot.slane %v1943, 1
        %v2406 = vsel %vm2210, %v2404, %v2405
        %v2407 = vrot.slane %v1944, 1
        %v2408 = vsel %vm2210, %v2402, %v2407
        %v2409 = vrot.slane %v1945, 1
        %v2410 = vsel %vm2210, %v2405, %v2409
        %v2411 = vrot.slane %v1946, 1
        %v2412 = vrot.slane %v1948, 1
        %v2413 = vsel %vm2210, %v2411, %v2412
        %v2414 = vrot.slane %v1947, 1
        %v2415 = vrot.slane %v1949, 1
        %v2416 = vsel %vm2210, %v2414, %v2415
        %v2417 = vrot.slane %v1950, 1
        %v2418 = vsel %vm2210, %v2412, %v2417
        %v2419 = vrot.slane %v1951, 1
        %v2420 = vsel %vm2210, %v2415, %v2419
        %v2421 = vrot.slane %v1952, 1
        %v2422 = vrot.slane %v1954, 1
        %v2423 = vsel %vm2210, %v2421, %v2422
        %v2424 = vrot.slane %v1953, 1
        %v2425 = vrot.slane %v1955, 1
        %v2426 = vsel %vm2210, %v2424, %v2425
        %v2427 = vrot.slane %v1956, 1
        %v2428 = vsel %vm2210, %v2422, %v2427
        %v2429 = vrot.slane %v1957, 1
        %v2430 = vsel %vm2210, %v2425, %v2429
        %v2431 = vrot.slane %v1958, 1
        %v2432 = vrot.slane %v1960, 1
        %v2433 = vsel %vm2210, %v2431, %v2432
        %v2434 = vrot.slane %v1959, 1
        %v2435 = vrot.slane %v1961, 1
        %v2436 = vsel %vm2210, %v2434, %v2435
        %v2437 = vrot.slane %v1962, 1
        %v2438 = vsel %vm2210, %v2432, %v2437
        %v2439 = vrot.slane %v1963, 1
        %v2440 = vsel %vm2210, %v2435, %v2439
        %v2441 = vrot.slane %v1964, 1
        %v2442 = vrot.slane %v1966, 1
        %v2443 = vsel %vm2210, %v2441, %v2442
        %v2444 = vrot.slane %v1965, 1
        %v2445 = vrot.slane %v1967, 1
        %v2446 = vsel %vm2210, %v2444, %v2445
        %v2447 = vrot.slane %v1968, 1
        %v2448 = vsel %vm2210, %v2442, %v2447
        %v2449 = vrot.slane %v1969, 1
        %v2450 = vsel %vm2210, %v2445, %v2449
        %v2451 = vrot.slane %v1970, 1
        %v2452 = vrot.slane %v1972, 1
        %v2453 = vsel %vm2210, %v2451, %v2452
        %v2454 = vrot.slane %v1971, 1
        %v2455 = vrot.slane %v1973, 1
        %v2456 = vsel %vm2210, %v2454, %v2455
        %v2457 = vrot.slane %v1974, 1
        %v2458 = vsel %vm2210, %v2452, %v2457
        %v2459 = vrot.slane %v1975, 1
        %v2460 = vsel %vm2210, %v2455, %v2459
        %v2461 = vrot.slane %v1976, 1
        %v2462 = vrot.slane %v1978, 1
        %v2463 = vsel %vm2210, %v2461, %v2462
        %v2464 = vrot.slane %v1977, 1
        %v2465 = vrot.slane %v1979, 1
        %v2466 = vsel %vm2210, %v2464, %v2465
        %v2467 = vrot.slane %v1980, 1
        %v2468 = vsel %vm2210, %v2462, %v2467
        %v2469 = vrot.slane %v1981, 1
        %v2470 = vsel %vm2210, %v2465, %v2469
        %v2471 = vrot.slane %v1982, 1
        %v2472 = vrot.slane %v1984, 1
        %v2473 = vsel %vm2210, %v2471, %v2472
        %v2474 = vrot.slane %v1983, 1
        %v2475 = vrot.slane %v1985, 1
        %v2476 = vsel %vm2210, %v2474, %v2475
        %v2477 = vrot.slane %v1986, 1
        %v2478 = vsel %vm2210, %v2472, %v2477
        %v2479 = vrot.slane %v1987, 1
        %v2480 = vsel %vm2210, %v2475, %v2479
        %v2481 = vrot.slane %v1988, 1
        %v2482 = vrot.slane %v1990, 1
        %v2483 = vsel %vm2210, %v2481, %v2482
        %v2484 = vrot.slane %v1989, 1
        %v2485 = vrot.slane %v1991, 1
        %v2486 = vsel %vm2210, %v2484, %v2485
        %v2487 = vrot.slane %v1992, 1
        %v2488 = vsel %vm2210, %v2482, %v2487
        %v2489 = vrot.slane %v1993, 1
        %v2490 = vsel %vm2210, %v2485, %v2489
        %v2491 = vrot.slane %v1994, 1
        %v2492 = vrot.slane %v1996, 1
        %v2493 = vsel %vm2210, %v2491, %v2492
        %v2494 = vrot.slane %v1995, 1
        %v2495 = vrot.slane %v1997, 1
        %v2496 = vsel %vm2210, %v2494, %v2495
        %v2497 = vrot.slane %v1998, 1
        %v2498 = vsel %vm2210, %v2492, %v2497
        %v2499 = vrot.slane %v1999, 1
        %v2500 = vsel %vm2210, %v2495, %v2499
        %v2501 = vrot.slane %v2000, 1
        %v2502 = vrot.slane %v2002, 1
        %v2503 = vsel %vm2210, %v2501, %v2502
        %v2504 = vrot.slane %v2001, 1
        %v2505 = vrot.slane %v2003, 1
        %v2506 = vsel %vm2210, %v2504, %v2505
        %v2507 = vrot.slane %v2004, 1
        %v2508 = vsel %vm2210, %v2502, %v2507
        %v2509 = vrot.slane %v2005, 1
        %v2510 = vsel %vm2210, %v2505, %v2509
        %v2511 = vrot.slane %v2006, 1
        %v2512 = vrot.slane %v2008, 1
        %v2513 = vsel %vm2210, %v2511, %v2512
        %v2514 = vrot.slane %v2007, 1
        %v2515 = vrot.slane %v2009, 1
        %v2516 = vsel %vm2210, %v2514, %v2515
        %v2517 = vrot.slane %v2010, 1
        %v2518 = vsel %vm2210, %v2512, %v2517
        %v2519 = vrot.slane %v2011, 1
        %v2520 = vsel %vm2210, %v2515, %v2519
        %v2521 = vrot.slane %v2012, 1
        %v2522 = vrot.slane %v2014, 1
        %v2523 = vsel %vm2210, %v2521, %v2522
        %v2524 = vrot.slane %v2013, 1
        %v2525 = vrot.slane %v2015, 1
        %v2526 = vsel %vm2210, %v2524, %v2525
        %v2527 = vrot.slane %v2016, 1
        %v2528 = vsel %vm2210, %v2522, %v2527
        %v2529 = vrot.slane %v2017, 1
        %v2530 = vsel %vm2210, %v2525, %v2529
        %v2659 = vadd.f32 %v1557, %v2213
        %v2660 = vadd.f32 %v1558, %v2216
        %v2661 = vadd.f32 %v1559, %v2218
        %v2662 = vadd.f32 %v1560, %v2220
        %v2663 = vadd.f32 %v1561, %v2223
        %v2664 = vadd.f32 %v1562, %v2226
        %v2665 = vadd.f32 %v1563, %v2228
        %v2666 = vadd.f32 %v1564, %v2230
        %v2667 = vadd.f32 %v1565, %v2233
        %v2668 = vadd.f32 %v1566, %v2236
        %v2669 = vadd.f32 %v1567, %v2238
        %v2670 = vadd.f32 %v1568, %v2240
        %v2671 = vadd.f32 %v1569, %v2243
        %v2672 = vadd.f32 %v1570, %v2246
        %v2673 = vadd.f32 %v1571, %v2248
        %v2674 = vadd.f32 %v1572, %v2250
        %v2675 = vadd.f32 %v1573, %v2253
        %v2676 = vadd.f32 %v1574, %v2256
        %v2677 = vadd.f32 %v1575, %v2258
        %v2678 = vadd.f32 %v1576, %v2260
        %v2679 = vadd.f32 %v1577, %v2263
        %v2680 = vadd.f32 %v1578, %v2266
        %v2681 = vadd.f32 %v1579, %v2268
        %v2682 = vadd.f32 %v1580, %v2270
        %v2683 = vadd.f32 %v1581, %v2273
        %v2684 = vadd.f32 %v1582, %v2276
        %v2685 = vadd.f32 %v1583, %v2278
        %v2686 = vadd.f32 %v1584, %v2280
        %v2687 = vadd.f32 %v1585, %v2283
        %v2688 = vadd.f32 %v1586, %v2286
        %v2689 = vadd.f32 %v1587, %v2288
        %v2690 = vadd.f32 %v1588, %v2290
        %v2691 = vadd.f32 %v1589, %v2293
        %v2692 = vadd.f32 %v1590, %v2296
        %v2693 = vadd.f32 %v1591, %v2298
        %v2694 = vadd.f32 %v1592, %v2300
        %v2695 = vadd.f32 %v1593, %v2303
        %v2696 = vadd.f32 %v1594, %v2306
        %v2697 = vadd.f32 %v1595, %v2308
        %v2698 = vadd.f32 %v1596, %v2310
        %v2699 = vadd.f32 %v1597, %v2313
        %v2700 = vadd.f32 %v1598, %v2316
        %v2701 = vadd.f32 %v1599, %v2318
        %v2702 = vadd.f32 %v1600, %v2320
        %v2703 = vadd.f32 %v1601, %v2323
        %v2704 = vadd.f32 %v1602, %v2326
        %v2705 = vadd.f32 %v1603, %v2328
        %v2706 = vadd.f32 %v1604, %v2330
        %v2707 = vadd.f32 %v1605, %v2333
        %v2708 = vadd.f32 %v1606, %v2336
        %v2709 = vadd.f32 %v1607, %v2338
        %v2710 = vadd.f32 %v1608, %v2340
        %v2711 = vadd.f32 %v1609, %v2343
        %v2712 = vadd.f32 %v1610, %v2346
        %v2713 = vadd.f32 %v1611, %v2348
        %v2714 = vadd.f32 %v1612, %v2350
        %v2715 = vadd.f32 %v1613, %v2353
        %v2716 = vadd.f32 %v1614, %v2356
        %v2717 = vadd.f32 %v1615, %v2358
        %v2718 = vadd.f32 %v1616, %v2360
        %v2719 = vadd.f32 %v1617, %v2363
        %v2720 = vadd.f32 %v1618, %v2366
        %v2721 = vadd.f32 %v1619, %v2368
        %v2722 = vadd.f32 %v1620, %v2370
        %v2723 = vadd.f32 %v1621, %v2373
        %v2724 = vadd.f32 %v1622, %v2376
        %v2725 = vadd.f32 %v1623, %v2378
        %v2726 = vadd.f32 %v1624, %v2380
        %v2727 = vadd.f32 %v1625, %v2383
        %v2728 = vadd.f32 %v1626, %v2386
        %v2729 = vadd.f32 %v1627, %v2388
        %v2730 = vadd.f32 %v1628, %v2390
        %v2731 = vadd.f32 %v1629, %v2393
        %v2732 = vadd.f32 %v1630, %v2396
        %v2733 = vadd.f32 %v1631, %v2398
        %v2734 = vadd.f32 %v1632, %v2400
        %v2735 = vadd.f32 %v1633, %v2403
        %v2736 = vadd.f32 %v1634, %v2406
        %v2737 = vadd.f32 %v1635, %v2408
        %v2738 = vadd.f32 %v1636, %v2410
        %v2739 = vadd.f32 %v1637, %v2413
        %v2740 = vadd.f32 %v1638, %v2416
        %v2741 = vadd.f32 %v1639, %v2418
        %v2742 = vadd.f32 %v1640, %v2420
        %v2743 = vadd.f32 %v1641, %v2423
        %v2744 = vadd.f32 %v1642, %v2426
        %v2745 = vadd.f32 %v1643, %v2428
        %v2746 = vadd.f32 %v1644, %v2430
        %v2747 = vadd.f32 %v1645, %v2433
        %v2748 = vadd.f32 %v1646, %v2436
        %v2749 = vadd.f32 %v1647, %v2438
        %v2750 = vadd.f32 %v1648, %v2440
        %v2751 = vadd.f32 %v1649, %v2443
        %v2752 = vadd.f32 %v1650, %v2446
        %v2753 = vadd.f32 %v1651, %v2448
        %v2754 = vadd.f32 %v1652, %v2450
        %v2755 = vadd.f32 %v1653, %v2453
        %v2756 = vadd.f32 %v1654, %v2456
        %v2757 = vadd.f32 %v1655, %v2458
        %v2758 = vadd.f32 %v1656, %v2460
        %v2759 = vadd.f32 %v1657, %v2463
        %v2760 = vadd.f32 %v1658, %v2466
        %v2761 = vadd.f32 %v1659, %v2468
        %v2762 = vadd.f32 %v1660, %v2470
        %v2763 = vadd.f32 %v1661, %v2473
        %v2764 = vadd.f32 %v1662, %v2476
        %v2765 = vadd.f32 %v1663, %v2478
        %v2766 = vadd.f32 %v1664, %v2480
        %v2767 = vadd.f32 %v1665, %v2483
        %v2768 = vadd.f32 %v1666, %v2486
        %v2769 = vadd.f32 %v1667, %v2488
        %v2770 = vadd.f32 %v1668, %v2490
        %v2771 = vadd.f32 %v1669, %v2493
        %v2772 = vadd.f32 %v1670, %v2496
        %v2773 = vadd.f32 %v1671, %v2498
        %v2774 = vadd.f32 %v1672, %v2500
        %v2775 = vadd.f32 %v1673, %v2503
        %v2776 = vadd.f32 %v1674, %v2506
        %v2777 = vadd.f32 %v1675, %v2508
        %v2778 = vadd.f32 %v1676, %v2510
        %v2779 = vadd.f32 %v1677, %v2513
        %v2780 = vadd.f32 %v1678, %v2516
        %v2781 = vadd.f32 %v1679, %v2518
        %v2782 = vadd.f32 %v1680, %v2520
        %v2783 = vadd.f32 %v1681, %v2523
        %v2784 = vadd.f32 %v1682, %v2526
        %v2785 = vadd.f32 %v1683, %v2528
        %v2786 = vadd.f32 %v1684, %v2530
        %s2787 = scalar_lea.vmem %s330, 2
        %v2788 = vld [vmem:[%s2787] ss:$8 sm:$0x3]
        %v2789 = vld [vmem:[#allocation2] sm:$0xfc]
        %v2790 = vld [vmem:[#allocation2 + $0x8] sm:$0xfc]
        %v2791 = vld [vmem:[#allocation2 + $0x20] sm:$0x3]
        %v2792 = vld [vmem:[#allocation2 + $0x28] sm:$0x3]
        %v2793 = vld [vmem:[#allocation2 + $0x30] sm:$0xfc]
        %v2794 = vld [vmem:[#allocation2 + $0x38] sm:$0xfc]
        %v2795 = vld [vmem:[#allocation2 + $0x50] sm:$0x3]
        %v2796 = vld [vmem:[#allocation2 + $0x58] sm:$0x3]
        %v2797 = vld [vmem:[#allocation2 + $0x60] sm:$0xfc]
        %v2798 = vld [vmem:[#allocation2 + $0x68] sm:$0xfc]
        %v2799 = vld [vmem:[#allocation2 + $0x80] sm:$0x3]
        %v2800 = vld [vmem:[#allocation2 + $0x88] sm:$0x3]
        %v2801 = vld [vmem:[#allocation2 + $0x90] sm:$0xfc]
        %v2802 = vld [vmem:[#allocation2 + $0x98] sm:$0xfc]
        %v2803 = vld [vmem:[#allocation2 + $0xb0] sm:$0x3]
        %v2804 = vld [vmem:[#allocation2 + $0xb8] sm:$0x3]
        %v2805 = vld [vmem:[#allocation2 + $0xc0] sm:$0xfc]
        %v2806 = vld [vmem:[#allocation2 + $0xc8] sm:$0xfc]
        %v2807 = vld [vmem:[#allocation2 + $0xe0] sm:$0x3]
        %v2808 = vld [vmem:[#allocation2 + $0xe8] sm:$0x3]
        %v2809 = vld [vmem:[#allocation2 + $0xf0] sm:$0xfc]
        %v2810 = vld [vmem:[#allocation2 + $0xf8] sm:$0xfc]
        %v2811 = vld [vmem:[#allocation2 + $0x110] sm:$0x3]
        %v2812 = vld [vmem:[#allocation2 + $0x118] sm:$0x3]
        %v2813 = vld [vmem:[#allocation2 + $0x120] sm:$0xfc]
        %v2814 = vld [vmem:[#allocation2 + $0x128] sm:$0xfc]
        %v2815 = vld [vmem:[#allocation2 + $0x140] sm:$0x3]
        %v2816 = vld [vmem:[#allocation2 + $0x148] sm:$0x3]
        %v2817 = vld [vmem:[#allocation2 + $0x150] sm:$0xfc]
        %v2818 = vld [vmem:[#allocation2 + $0x158] sm:$0xfc]
        %v2819 = vld [vmem:[#allocation2 + $0x170] sm:$0x3]
        %v2820 = vld [vmem:[#allocation2 + $0x178] sm:$0x3]
        %v2821 = vld [vmem:[#allocation2 + $0x180] sm:$0xfc]
        %v2822 = vld [vmem:[#allocation2 + $0x188] sm:$0xfc]
        %v2823 = vld [vmem:[#allocation2 + $0x1a0] sm:$0x3]
        %v2824 = vld [vmem:[#allocation2 + $0x1a8] sm:$0x3]
        %v2825 = vld [vmem:[#allocation2 + $0x1b0] sm:$0xfc]
        %v2826 = vld [vmem:[#allocation2 + $0x1b8] sm:$0xfc]
        %v2827 = vld [vmem:[#allocation2 + $0x1d0] sm:$0x3]
        %v2828 = vld [vmem:[#allocation2 + $0x1d8] sm:$0x3]
        %v2829 = vld [vmem:[#allocation2 + $0x1e0] sm:$0xfc]
        %v2830 = vld [vmem:[#allocation2 + $0x1e8] sm:$0xfc]
        %v2831 = vld [vmem:[#allocation2 + $0x200] sm:$0x3]
        %v2832 = vld [vmem:[#allocation2 + $0x208] sm:$0x3]
        %v2833 = vld [vmem:[#allocation2 + $0x210] sm:$0xfc]
        %v2834 = vld [vmem:[#allocation2 + $0x218] sm:$0xfc]
        %v2835 = vld [vmem:[#allocation2 + $0x230] sm:$0x3]
        %v2836 = vld [vmem:[#allocation2 + $0x238] sm:$0x3]
        %v2837 = vld [vmem:[#allocation2 + $0x240] sm:$0xfc]
        %v2838 = vld [vmem:[#allocation2 + $0x248] sm:$0xfc]
        %v2839 = vld [vmem:[#allocation2 + $0x260] sm:$0x3]
        %v2840 = vld [vmem:[#allocation2 + $0x268] sm:$0x3]
        %v2841 = vld [vmem:[#allocation2 + $0x270] sm:$0xfc]
        %v2842 = vld [vmem:[#allocation2 + $0x278] sm:$0xfc]
        %v2843 = vld [vmem:[#allocation2 + $0x290] sm:$0x3]
        %v2844 = vld [vmem:[#allocation2 + $0x298] sm:$0x3]
        %v2845 = vld [vmem:[#allocation2 + $0x2a0] sm:$0xfc]
        %v2846 = vld [vmem:[#allocation2 + $0x2a8] sm:$0xfc]
        %v2847 = vld [vmem:[#allocation2 + $0x2c0] sm:$0x3]
        %v2848 = vld [vmem:[#allocation2 + $0x2c8] sm:$0x3]
        %v2849 = vld [vmem:[#allocation2 + $0x2d0] sm:$0xfc]
        %v2850 = vld [vmem:[#allocation2 + $0x2d8] sm:$0xfc]
        %v2851 = vld [vmem:[#allocation2 + $0x2f0] sm:$0x3]
        %v2852 = vld [vmem:[#allocation2 + $0x2f8] sm:$0x3]
        %v2853 = vld [vmem:[#allocation2 + $0x360] sm:$0xfc]
        %v2854 = vld [vmem:[#allocation2 + $0x368] sm:$0xfc]
        %v2855 = vld [vmem:[#allocation2 + $0x380] sm:$0x3]
        %v2856 = vld [vmem:[#allocation2 + $0x388] sm:$0x3]
        %v2857 = vld [vmem:[#allocation2 + $0x390] sm:$0xfc]
        %v2858 = vld [vmem:[#allocation2 + $0x398] sm:$0xfc]
        %v2859 = vld [vmem:[#allocation2 + $0x3b0] sm:$0x3]
        %v2860 = vld [vmem:[#allocation2 + $0x3b8] sm:$0x3]
        %v2861 = vld [vmem:[#allocation2 + $0x3c0] sm:$0xfc]
        %v2862 = vld [vmem:[#allocation2 + $0x3c8] sm:$0xfc]
        %v2863 = vld [vmem:[#allocation2 + $0x3e0] sm:$0x3]
        %v2864 = vld [vmem:[#allocation2 + $0x3e8] sm:$0x3]
        %v2865 = vld [vmem:[#allocation2 + $0x3f0] sm:$0xfc]
        %v2866 = vld [vmem:[#allocation2 + $0x3f8] sm:$0xfc]
        %v2867 = vld [vmem:[#allocation2 + $0x410] sm:$0x3]
        %v2868 = vld [vmem:[#allocation2 + $0x418] sm:$0x3]
        %v2869 = vld [vmem:[#allocation2 + $0x420] sm:$0xfc]
        %v2870 = vld [vmem:[#allocation2 + $0x428] sm:$0xfc]
        %v2871 = vld [vmem:[#allocation2 + $0x440] sm:$0x3]
        %v2872 = vld [vmem:[#allocation2 + $0x448] sm:$0x3]
        %v2873 = vld [vmem:[#allocation2 + $0x450] sm:$0xfc]
        %v2874 = vld [vmem:[#allocation2 + $0x458] sm:$0xfc]
        %v2875 = vld [vmem:[#allocation2 + $0x470] sm:$0x3]
        %v2876 = vld [vmem:[#allocation2 + $0x478] sm:$0x3]
        %v2877 = vld [vmem:[#allocation2 + $0x480] sm:$0xfc]
        %v2878 = vld [vmem:[#allocation2 + $0x488] sm:$0xfc]
        %v2879 = vld [vmem:[#allocation2 + $0x4a0] sm:$0x3]
        %v2880 = vld [vmem:[#allocation2 + $0x4a8] sm:$0x3]
        %v2881 = vld [vmem:[#allocation2 + $0x4b0] sm:$0xfc]
        %v2882 = vld [vmem:[#allocation2 + $0x4b8] sm:$0xfc]
        %v2883 = vld [vmem:[#allocation2 + $0x4d0] sm:$0x3]
        %v2884 = vld [vmem:[#allocation2 + $0x4d8] sm:$0x3]
        %v2885 = vld [vmem:[#allocation2 + $0x4e0] sm:$0xfc]
        %v2886 = vld [vmem:[#allocation2 + $0x4e8] sm:$0xfc]
        %v2887 = vld [vmem:[#allocation2 + $0x500] sm:$0x3]
        %v2888 = vld [vmem:[#allocation2 + $0x508] sm:$0x3]
        %v2889 = vld [vmem:[#allocation2 + $0x510] sm:$0xfc]
        %v2890 = vld [vmem:[#allocation2 + $0x518] sm:$0xfc]
        %v2891 = vld [vmem:[#allocation2 + $0x530] sm:$0x3]
        %v2892 = vld [vmem:[#allocation2 + $0x538] sm:$0x3]
        %v2893 = vld [vmem:[#allocation2 + $0x540] sm:$0xfc]
        %v2894 = vld [vmem:[#allocation2 + $0x548] sm:$0xfc]
        %v2895 = vld [vmem:[#allocation2 + $0x560] sm:$0x3]
        %v2896 = vld [vmem:[#allocation2 + $0x568] sm:$0x3]
        %v2897 = vld [vmem:[#allocation2 + $0x570] sm:$0xfc]
        %v2898 = vld [vmem:[#allocation2 + $0x578] sm:$0xfc]
        %v2899 = vld [vmem:[#allocation2 + $0x590] sm:$0x3]
        %v2900 = vld [vmem:[#allocation2 + $0x598] sm:$0x3]
        %v2901 = vld [vmem:[#allocation2 + $0x5a0] sm:$0xfc]
        %v2902 = vld [vmem:[#allocation2 + $0x5a8] sm:$0xfc]
        %v2903 = vld [vmem:[#allocation2 + $0x5c0] sm:$0x3]
        %v2904 = vld [vmem:[#allocation2 + $0x5c8] sm:$0x3]
        %v2905 = vld [vmem:[#allocation2 + $0x5d0] sm:$0xfc]
        %v2906 = vld [vmem:[#allocation2 + $0x5d8] sm:$0xfc]
        %v2907 = vld [vmem:[#allocation2 + $0x5f0] sm:$0x3]
        %v2908 = vld [vmem:[#allocation2 + $0x5f8] sm:$0x3]
        %v2909 = vld [vmem:[#allocation2 + $0x600] sm:$0xfc]
        %v2910 = vld [vmem:[#allocation2 + $0x608] sm:$0xfc]
        %v2911 = vld [vmem:[#allocation2 + $0x620] sm:$0x3]
        %v2912 = vld [vmem:[#allocation2 + $0x628] sm:$0x3]
        %v2913 = vld [vmem:[#allocation2 + $0x630] sm:$0xfc]
        %v2914 = vld [vmem:[#allocation2 + $0x638] sm:$0xfc]
        %v2915 = vld [vmem:[#allocation2 + $0x650] sm:$0x3]
        %v2916 = vld [vmem:[#allocation2 + $0x658] sm:$0x3]
        %v2918 = vlaneseq
        %v2919 = vshrl.u32 %v2918, 7
        %v2920 = vsub.s32 0, %v2919
        %v2921 = vrot.slane %v2788, %v2920
        %v2922 = vlaneseq
        %v2923 = vshrl.u32 %v2922, 7
        %v2924 = vsub.s32 1, %v2923
        %v2925 = vrot.slane %v2788, %v2924
        %v2928 = vmul.f32 %v2789, %v2921
        %v2929 = vmul.f32 %v2790, %v2925
        %v2930 = vmul.f32 %v1420, %v2921
        %v2931 = vmul.f32 %v1421, %v2925
        %v2932 = vmul.f32 %v2791, %v2921
        %v2933 = vmul.f32 %v2792, %v2925
        %v2934 = vmul.f32 %v2793, %v2921
        %v2935 = vmul.f32 %v2794, %v2925
        %v2936 = vmul.f32 %v1424, %v2921
        %v2937 = vmul.f32 %v1425, %v2925
        %v2938 = vmul.f32 %v2795, %v2921
        %v2939 = vmul.f32 %v2796, %v2925
        %v2940 = vmul.f32 %v2797, %v2921
        %v2941 = vmul.f32 %v2798, %v2925
        %v2942 = vmul.f32 %v1428, %v2921
        %v2943 = vmul.f32 %v1429, %v2925
        %v2944 = vmul.f32 %v2799, %v2921
        %v2945 = vmul.f32 %v2800, %v2925
        %v2946 = vmul.f32 %v2801, %v2921
        %v2947 = vmul.f32 %v2802, %v2925
        %v2948 = vmul.f32 %v1432, %v2921
        %v2949 = vmul.f32 %v1433, %v2925
        %v2950 = vmul.f32 %v2803, %v2921
        %v2951 = vmul.f32 %v2804, %v2925
        %v2952 = vmul.f32 %v2805, %v2921
        %v2953 = vmul.f32 %v2806, %v2925
        %v2954 = vmul.f32 %v1436, %v2921
        %v2955 = vmul.f32 %v1437, %v2925
        %v2956 = vmul.f32 %v2807, %v2921
        %v2957 = vmul.f32 %v2808, %v2925
        %v2958 = vmul.f32 %v2809, %v2921
        %v2959 = vmul.f32 %v2810, %v2925
        %v2960 = vmul.f32 %v1440, %v2921
        %v2961 = vmul.f32 %v1441, %v2925
        %v2962 = vmul.f32 %v2811, %v2921
        %v2963 = vmul.f32 %v2812, %v2925
        %v2964 = vmul.f32 %v2813, %v2921
        %v2965 = vmul.f32 %v2814, %v2925
        %v2966 = vmul.f32 %v1444, %v2921
        %v2967 = vmul.f32 %v1445, %v2925
        %v2968 = vmul.f32 %v2815, %v2921
        %v2969 = vmul.f32 %v2816, %v2925
        %v2970 = vmul.f32 %v2817, %v2921
        %v2971 = vmul.f32 %v2818, %v2925
        %v2972 = vmul.f32 %v1448, %v2921
        %v2973 = vmul.f32 %v1449, %v2925
        %v2974 = vmul.f32 %v2819, %v2921
        %v2975 = vmul.f32 %v2820, %v2925
        %v2976 = vmul.f32 %v2821, %v2921
        %v2977 = vmul.f32 %v2822, %v2925
        %v2978 = vmul.f32 %v1452, %v2921
        %v2979 = vmul.f32 %v1453, %v2925
        %v2980 = vmul.f32 %v2823, %v2921
        %v2981 = vmul.f32 %v2824, %v2925
        %v2982 = vmul.f32 %v2825, %v2921
        %v2983 = vmul.f32 %v2826, %v2925
        %v2984 = vmul.f32 %v1456, %v2921
        %v2985 = vmul.f32 %v1457, %v2925
        %v2986 = vmul.f32 %v2827, %v2921
        %v2987 = vmul.f32 %v2828, %v2925
        %v2988 = vmul.f32 %v2829, %v2921
        %v2989 = vmul.f32 %v2830, %v2925
        %v2990 = vmul.f32 %v1460, %v2921
        %v2991 = vmul.f32 %v1461, %v2925
        %v2992 = vmul.f32 %v2831, %v2921
        %v2993 = vmul.f32 %v2832, %v2925
        %v2994 = vmul.f32 %v2833, %v2921
        %v2995 = vmul.f32 %v2834, %v2925
        %v2996 = vmul.f32 %v1464, %v2921
        %v2997 = vmul.f32 %v1465, %v2925
        %v2998 = vmul.f32 %v2835, %v2921
        %v2999 = vmul.f32 %v2836, %v2925
        %v3000 = vmul.f32 %v2837, %v2921
        %v3001 = vmul.f32 %v2838, %v2925
        %v3002 = vmul.f32 %v1468, %v2921
        %v3003 = vmul.f32 %v1469, %v2925
        %v3004 = vmul.f32 %v2839, %v2921
        %v3005 = vmul.f32 %v2840, %v2925
        %v3006 = vmul.f32 %v2841, %v2921
        %v3007 = vmul.f32 %v2842, %v2925
        %v3008 = vmul.f32 %v1472, %v2921
        %v3009 = vmul.f32 %v1473, %v2925
        %v3010 = vmul.f32 %v2843, %v2921
        %v3011 = vmul.f32 %v2844, %v2925
        %v3012 = vmul.f32 %v2845, %v2921
        %v3013 = vmul.f32 %v2846, %v2925
        %v3014 = vmul.f32 %v1476, %v2921
        %v3015 = vmul.f32 %v1477, %v2925
        %v3016 = vmul.f32 %v2847, %v2921
        %v3017 = vmul.f32 %v2848, %v2925
        %v3018 = vmul.f32 %v2849, %v2921
        %v3019 = vmul.f32 %v2850, %v2925
        %v3020 = vmul.f32 %v1480, %v2921
        %v3021 = vmul.f32 %v1481, %v2925
        %v3022 = vmul.f32 %v2851, %v2921
        %v3023 = vmul.f32 %v2852, %v2925
        %v3024 = vmul.f32 %v2853, %v2921
        %v3025 = vmul.f32 %v2854, %v2925
        %v3026 = vmul.f32 %v1484, %v2921
        %v3027 = vmul.f32 %v1485, %v2925
        %v3028 = vmul.f32 %v2855, %v2921
        %v3029 = vmul.f32 %v2856, %v2925
        %v3030 = vmul.f32 %v2857, %v2921
        %v3031 = vmul.f32 %v2858, %v2925
        %v3032 = vmul.f32 %v1488, %v2921
        %v3033 = vmul.f32 %v1489, %v2925
        %v3034 = vmul.f32 %v2859, %v2921
        %v3035 = vmul.f32 %v2860, %v2925
        %v3036 = vmul.f32 %v2861, %v2921
        %v3037 = vmul.f32 %v2862, %v2925
        %v3038 = vmul.f32 %v1492, %v2921
        %v3039 = vmul.f32 %v1493, %v2925
        %v3040 = vmul.f32 %v2863, %v2921
        %v3041 = vmul.f32 %v2864, %v2925
        %v3042 = vmul.f32 %v2865, %v2921
        %v3043 = vmul.f32 %v2866, %v2925
        %v3044 = vmul.f32 %v1496, %v2921
        %v3045 = vmul.f32 %v1497, %v2925
        %v3046 = vmul.f32 %v2867, %v2921
        %v3047 = vmul.f32 %v2868, %v2925
        %v3048 = vmul.f32 %v2869, %v2921
        %v3049 = vmul.f32 %v2870, %v2925
        %v3050 = vmul.f32 %v1500, %v2921
        %v3051 = vmul.f32 %v1501, %v2925
        %v3052 = vmul.f32 %v2871, %v2921
        %v3053 = vmul.f32 %v2872, %v2925
        %v3054 = vmul.f32 %v2873, %v2921
        %v3055 = vmul.f32 %v2874, %v2925
        %v3056 = vmul.f32 %v1504, %v2921
        %v3057 = vmul.f32 %v1505, %v2925
        %v3058 = vmul.f32 %v2875, %v2921
        %v3059 = vmul.f32 %v2876, %v2925
        %v3060 = vmul.f32 %v2877, %v2921
        %v3061 = vmul.f32 %v2878, %v2925
        %v3062 = vmul.f32 %v1508, %v2921
        %v3063 = vmul.f32 %v1509, %v2925
        %v3064 = vmul.f32 %v2879, %v2921
        %v3065 = vmul.f32 %v2880, %v2925
        %v3066 = vmul.f32 %v2881, %v2921
        %v3067 = vmul.f32 %v2882, %v2925
        %v3068 = vmul.f32 %v1512, %v2921
        %v3069 = vmul.f32 %v1513, %v2925
        %v3070 = vmul.f32 %v2883, %v2921
        %v3071 = vmul.f32 %v2884, %v2925
        %v3072 = vmul.f32 %v2885, %v2921
        %v3073 = vmul.f32 %v2886, %v2925
        %v3074 = vmul.f32 %v1516, %v2921
        %v3075 = vmul.f32 %v1517, %v2925
        %v3076 = vmul.f32 %v2887, %v2921
        %v3077 = vmul.f32 %v2888, %v2925
        %v3078 = vmul.f32 %v2889, %v2921
        %v3079 = vmul.f32 %v2890, %v2925
        %v3080 = vmul.f32 %v1520, %v2921
        %v3081 = vmul.f32 %v1521, %v2925
        %v3082 = vmul.f32 %v2891, %v2921
        %v3083 = vmul.f32 %v2892, %v2925
        %v3084 = vmul.f32 %v2893, %v2921
        %v3085 = vmul.f32 %v2894, %v2925
        %v3086 = vmul.f32 %v1524, %v2921
        %v3087 = vmul.f32 %v1525, %v2925
        %v3088 = vmul.f32 %v2895, %v2921
        %v3089 = vmul.f32 %v2896, %v2925
        %v3090 = vmul.f32 %v2897, %v2921
        %v3091 = vmul.f32 %v2898, %v2925
        %v3092 = vmul.f32 %v1528, %v2921
        %v3093 = vmul.f32 %v1529, %v2925
        %v3094 = vmul.f32 %v2899, %v2921
        %v3095 = vmul.f32 %v2900, %v2925
        %v3096 = vmul.f32 %v2901, %v2921
        %v3097 = vmul.f32 %v2902, %v2925
        %v3098 = vmul.f32 %v1532, %v2921
        %v3099 = vmul.f32 %v1533, %v2925
        %v3100 = vmul.f32 %v2903, %v2921
        %v3101 = vmul.f32 %v2904, %v2925
        %v3102 = vmul.f32 %v2905, %v2921
        %v3103 = vmul.f32 %v2906, %v2925
        %v3104 = vmul.f32 %v1536, %v2921
        %v3105 = vmul.f32 %v1537, %v2925
        %v3106 = vmul.f32 %v2907, %v2921
        %v3107 = vmul.f32 %v2908, %v2925
        %v3108 = vmul.f32 %v2909, %v2921
        %v3109 = vmul.f32 %v2910, %v2925
        %v3110 = vmul.f32 %v1540, %v2921
        %v3111 = vmul.f32 %v1541, %v2925
        %v3112 = vmul.f32 %v2911, %v2921
        %v3113 = vmul.f32 %v2912, %v2925
        %v3114 = vmul.f32 %v2913, %v2921
        %v3115 = vmul.f32 %v2914, %v2925
        %v3116 = vmul.f32 %v1544, %v2921
        %v3117 = vmul.f32 %v1545, %v2925
        %v3118 = vmul.f32 %v2915, %v2921
        %v3119 = vmul.f32 %v2916, %v2925
        %vm3312 = vcmask 1045504
        %v3313 = vrot.slane %v2928, 2
        %v3314 = vrot.slane %v2930, 2
        %v3315 = vsel %vm3312, %v3313, %v3314
        %v3316 = vrot.slane %v2929, 2
        %v3317 = vrot.slane %v2931, 2
        %v3318 = vsel %vm3312, %v3316, %v3317
        %v3319 = vrot.slane %v2932, 2
        %v3320 = vsel %vm3312, %v3314, %v3319
        %v3321 = vrot.slane %v2933, 2
        %v3322 = vsel %vm3312, %v3317, %v3321
        %v3323 = vrot.slane %v2934, 2
        %v3324 = vrot.slane %v2936, 2
        %v3325 = vsel %vm3312, %v3323, %v3324
        %v3326 = vrot.slane %v2935, 2
        %v3327 = vrot.slane %v2937, 2
        %v3328 = vsel %vm3312, %v3326, %v3327
        %v3329 = vrot.slane %v2938, 2
        %v3330 = vsel %vm3312, %v3324, %v3329
        %v3331 = vrot.slane %v2939, 2
        %v3332 = vsel %vm3312, %v3327, %v3331
        %v3333 = vrot.slane %v2940, 2
        %v3334 = vrot.slane %v2942, 2
        %v3335 = vsel %vm3312, %v3333, %v3334
        %v3336 = vrot.slane %v2941, 2
        %v3337 = vrot.slane %v2943, 2
        %v3338 = vsel %vm3312, %v3336, %v3337
        %v3339 = vrot.slane %v2944, 2
        %v3340 = vsel %vm3312, %v3334, %v3339
        %v3341 = vrot.slane %v2945, 2
        %v3342 = vsel %vm3312, %v3337, %v3341
        %v3343 = vrot.slane %v2946, 2
        %v3344 = vrot.slane %v2948, 2
        %v3345 = vsel %vm3312, %v3343, %v3344
        %v3346 = vrot.slane %v2947, 2
        %v3347 = vrot.slane %v2949, 2
        %v3348 = vsel %vm3312, %v3346, %v3347
        %v3349 = vrot.slane %v2950, 2
        %v3350 = vsel %vm3312, %v3344, %v3349
        %v3351 = vrot.slane %v2951, 2
        %v3352 = vsel %vm3312, %v3347, %v3351
        %v3353 = vrot.slane %v2952, 2
        %v3354 = vrot.slane %v2954, 2
        %v3355 = vsel %vm3312, %v3353, %v3354
        %v3356 = vrot.slane %v2953, 2
        %v3357 = vrot.slane %v2955, 2
        %v3358 = vsel %vm3312, %v3356, %v3357
        %v3359 = vrot.slane %v2956, 2
        %v3360 = vsel %vm3312, %v3354, %v3359
        %v3361 = vrot.slane %v2957, 2
        %v3362 = vsel %vm3312, %v3357, %v3361
        %v3363 = vrot.slane %v2958, 2
        %v3364 = vrot.slane %v2960, 2
        %v3365 = vsel %vm3312, %v3363, %v3364
        %v3366 = vrot.slane %v2959, 2
        %v3367 = vrot.slane %v2961, 2
        %v3368 = vsel %vm3312, %v3366, %v3367
        %v3369 = vrot.slane %v2962, 2
        %v3370 = vsel %vm3312, %v3364, %v3369
        %v3371 = vrot.slane %v2963, 2
        %v3372 = vsel %vm3312, %v3367, %v3371
        %v3373 = vrot.slane %v2964, 2
        %v3374 = vrot.slane %v2966, 2
        %v3375 = vsel %vm3312, %v3373, %v3374
        %v3376 = vrot.slane %v2965, 2
        %v3377 = vrot.slane %v2967, 2
        %v3378 = vsel %vm3312, %v3376, %v3377
        %v3379 = vrot.slane %v2968, 2
        %v3380 = vsel %vm3312, %v3374, %v3379
        %v3381 = vrot.slane %v2969, 2
        %v3382 = vsel %vm3312, %v3377, %v3381
        %v3383 = vrot.slane %v2970, 2
        %v3384 = vrot.slane %v2972, 2
        %v3385 = vsel %vm3312, %v3383, %v3384
        %v3386 = vrot.slane %v2971, 2
        %v3387 = vrot.slane %v2973, 2
        %v3388 = vsel %vm3312, %v3386, %v3387
        %v3389 = vrot.slane %v2974, 2
        %v3390 = vsel %vm3312, %v3384, %v3389
        %v3391 = vrot.slane %v2975, 2
        %v3392 = vsel %vm3312, %v3387, %v3391
        %v3393 = vrot.slane %v2976, 2
        %v3394 = vrot.slane %v2978, 2
        %v3395 = vsel %vm3312, %v3393, %v3394
        %v3396 = vrot.slane %v2977, 2
        %v3397 = vrot.slane %v2979, 2
        %v3398 = vsel %vm3312, %v3396, %v3397
        %v3399 = vrot.slane %v2980, 2
        %v3400 = vsel %vm3312, %v3394, %v3399
        %v3401 = vrot.slane %v2981, 2
        %v3402 = vsel %vm3312, %v3397, %v3401
        %v3403 = vrot.slane %v2982, 2
        %v3404 = vrot.slane %v2984, 2
        %v3405 = vsel %vm3312, %v3403, %v3404
        %v3406 = vrot.slane %v2983, 2
        %v3407 = vrot.slane %v2985, 2
        %v3408 = vsel %vm3312, %v3406, %v3407
        %v3409 = vrot.slane %v2986, 2
        %v3410 = vsel %vm3312, %v3404, %v3409
        %v3411 = vrot.slane %v2987, 2
        %v3412 = vsel %vm3312, %v3407, %v3411
        %v3413 = vrot.slane %v2988, 2
        %v3414 = vrot.slane %v2990, 2
        %v3415 = vsel %vm3312, %v3413, %v3414
        %v3416 = vrot.slane %v2989, 2
        %v3417 = vrot.slane %v2991, 2
        %v3418 = vsel %vm3312, %v3416, %v3417
        %v3419 = vrot.slane %v2992, 2
        %v3420 = vsel %vm3312, %v3414, %v3419
        %v3421 = vrot.slane %v2993, 2
        %v3422 = vsel %vm3312, %v3417, %v3421
        %v3423 = vrot.slane %v2994, 2
        %v3424 = vrot.slane %v2996, 2
        %v3425 = vsel %vm3312, %v3423, %v3424
        %v3426 = vrot.slane %v2995, 2
        %v3427 = vrot.slane %v2997, 2
        %v3428 = vsel %vm3312, %v3426, %v3427
        %v3429 = vrot.slane %v2998, 2
        %v3430 = vsel %vm3312, %v3424, %v3429
        %v3431 = vrot.slane %v2999, 2
        %v3432 = vsel %vm3312, %v3427, %v3431
        %v3433 = vrot.slane %v3000, 2
        %v3434 = vrot.slane %v3002, 2
        %v3435 = vsel %vm3312, %v3433, %v3434
        %v3436 = vrot.slane %v3001, 2
        %v3437 = vrot.slane %v3003, 2
        %v3438 = vsel %vm3312, %v3436, %v3437
        %v3439 = vrot.slane %v3004, 2
        %v3440 = vsel %vm3312, %v3434, %v3439
        %v3441 = vrot.slane %v3005, 2
        %v3442 = vsel %vm3312, %v3437, %v3441
        %v3443 = vrot.slane %v3006, 2
        %v3444 = vrot.slane %v3008, 2
        %v3445 = vsel %vm3312, %v3443, %v3444
        %v3446 = vrot.slane %v3007, 2
        %v3447 = vrot.slane %v3009, 2
        %v3448 = vsel %vm3312, %v3446, %v3447
        %v3449 = vrot.slane %v3010, 2
        %v3450 = vsel %vm3312, %v3444, %v3449
        %v3451 = vrot.slane %v3011, 2
        %v3452 = vsel %vm3312, %v3447, %v3451
        %v3453 = vrot.slane %v3012, 2
        %v3454 = vrot.slane %v3014, 2
        %v3455 = vsel %vm3312, %v3453, %v3454
        %v3456 = vrot.slane %v3013, 2
        %v3457 = vrot.slane %v3015, 2
        %v3458 = vsel %vm3312, %v3456, %v3457
        %v3459 = vrot.slane %v3016, 2
        %v3460 = vsel %vm3312, %v3454, %v3459
        %v3461 = vrot.slane %v3017, 2
        %v3462 = vsel %vm3312, %v3457, %v3461
        %v3463 = vrot.slane %v3018, 2
        %v3464 = vrot.slane %v3020, 2
        %v3465 = vsel %vm3312, %v3463, %v3464
        %v3466 = vrot.slane %v3019, 2
        %v3467 = vrot.slane %v3021, 2
        %v3468 = vsel %vm3312, %v3466, %v3467
        %v3469 = vrot.slane %v3022, 2
        %v3470 = vsel %vm3312, %v3464, %v3469
        %v3471 = vrot.slane %v3023, 2
        %v3472 = vsel %vm3312, %v3467, %v3471
        %v3473 = vrot.slane %v3024, 2
        %v3474 = vrot.slane %v3026, 2
        %v3475 = vsel %vm3312, %v3473, %v3474
        %v3476 = vrot.slane %v3025, 2
        %v3477 = vrot.slane %v3027, 2
        %v3478 = vsel %vm3312, %v3476, %v3477
        %v3479 = vrot.slane %v3028, 2
        %v3480 = vsel %vm3312, %v3474, %v3479
        %v3481 = vrot.slane %v3029, 2
        %v3482 = vsel %vm3312, %v3477, %v3481
        %v3483 = vrot.slane %v3030, 2
        %v3484 = vrot.slane %v3032, 2
        %v3485 = vsel %vm3312, %v3483, %v3484
        %v3486 = vrot.slane %v3031, 2
        %v3487 = vrot.slane %v3033, 2
        %v3488 = vsel %vm3312, %v3486, %v3487
        %v3489 = vrot.slane %v3034, 2
        %v3490 = vsel %vm3312, %v3484, %v3489
        %v3491 = vrot.slane %v3035, 2
        %v3492 = vsel %vm3312, %v3487, %v3491
        %v3493 = vrot.slane %v3036, 2
        %v3494 = vrot.slane %v3038, 2
        %v3495 = vsel %vm3312, %v3493, %v3494
        %v3496 = vrot.slane %v3037, 2
        %v3497 = vrot.slane %v3039, 2
        %v3498 = vsel %vm3312, %v3496, %v3497
        %v3499 = vrot.slane %v3040, 2
        %v3500 = vsel %vm3312, %v3494, %v3499
        %v3501 = vrot.slane %v3041, 2
        %v3502 = vsel %vm3312, %v3497, %v3501
        %v3503 = vrot.slane %v3042, 2
        %v3504 = vrot.slane %v3044, 2
        %v3505 = vsel %vm3312, %v3503, %v3504
        %v3506 = vrot.slane %v3043, 2
        %v3507 = vrot.slane %v3045, 2
        %v3508 = vsel %vm3312, %v3506, %v3507
        %v3509 = vrot.slane %v3046, 2
        %v3510 = vsel %vm3312, %v3504, %v3509
        %v3511 = vrot.slane %v3047, 2
        %v3512 = vsel %vm3312, %v3507, %v3511
        %v3513 = vrot.slane %v3048, 2
        %v3514 = vrot.slane %v3050, 2
        %v3515 = vsel %vm3312, %v3513, %v3514
        %v3516 = vrot.slane %v3049, 2
        %v3517 = vrot.slane %v3051, 2
        %v3518 = vsel %vm3312, %v3516, %v3517
        %v3519 = vrot.slane %v3052, 2
        %v3520 = vsel %vm3312, %v3514, %v3519
        %v3521 = vrot.slane %v3053, 2
        %v3522 = vsel %vm3312, %v3517, %v3521
        %v3523 = vrot.slane %v3054, 2
        %v3524 = vrot.slane %v3056, 2
        %v3525 = vsel %vm3312, %v3523, %v3524
        %v3526 = vrot.slane %v3055, 2
        %v3527 = vrot.slane %v3057, 2
        %v3528 = vsel %vm3312, %v3526, %v3527
        %v3529 = vrot.slane %v3058, 2
        %v3530 = vsel %vm3312, %v3524, %v3529
        %v3531 = vrot.slane %v3059, 2
        %v3532 = vsel %vm3312, %v3527, %v3531
        %v3533 = vrot.slane %v3060, 2
        %v3534 = vrot.slane %v3062, 2
        %v3535 = vsel %vm3312, %v3533, %v3534
        %v3536 = vrot.slane %v3061, 2
        %v3537 = vrot.slane %v3063, 2
        %v3538 = vsel %vm3312, %v3536, %v3537
        %v3539 = vrot.slane %v3064, 2
        %v3540 = vsel %vm3312, %v3534, %v3539
        %v3541 = vrot.slane %v3065, 2
        %v3542 = vsel %vm3312, %v3537, %v3541
        %v3543 = vrot.slane %v3066, 2
        %v3544 = vrot.slane %v3068, 2
        %v3545 = vsel %vm3312, %v3543, %v3544
        %v3546 = vrot.slane %v3067, 2
        %v3547 = vrot.slane %v3069, 2
        %v3548 = vsel %vm3312, %v3546, %v3547
        %v3549 = vrot.slane %v3070, 2
        %v3550 = vsel %vm3312, %v3544, %v3549
        %v3551 = vrot.slane %v3071, 2
        %v3552 = vsel %vm3312, %v3547, %v3551
        %v3553 = vrot.slane %v3072, 2
        %v3554 = vrot.slane %v3074, 2
        %v3555 = vsel %vm3312, %v3553, %v3554
        %v3556 = vrot.slane %v3073, 2
        %v3557 = vrot.slane %v3075, 2
        %v3558 = vsel %vm3312, %v3556, %v3557
        %v3559 = vrot.slane %v3076, 2
        %v3560 = vsel %vm3312, %v3554, %v3559
        %v3561 = vrot.slane %v3077, 2
        %v3562 = vsel %vm3312, %v3557, %v3561
        %v3563 = vrot.slane %v3078, 2
        %v3564 = vrot.slane %v3080, 2
        %v3565 = vsel %vm3312, %v3563, %v3564
        %v3566 = vrot.slane %v3079, 2
        %v3567 = vrot.slane %v3081, 2
        %v3568 = vsel %vm3312, %v3566, %v3567
        %v3569 = vrot.slane %v3082, 2
        %v3570 = vsel %vm3312, %v3564, %v3569
        %v3571 = vrot.slane %v3083, 2
        %v3572 = vsel %vm3312, %v3567, %v3571
        %v3573 = vrot.slane %v3084, 2
        %v3574 = vrot.slane %v3086, 2
        %v3575 = vsel %vm3312, %v3573, %v3574
        %v3576 = vrot.slane %v3085, 2
        %v3577 = vrot.slane %v3087, 2
        %v3578 = vsel %vm3312, %v3576, %v3577
        %v3579 = vrot.slane %v3088, 2
        %v3580 = vsel %vm3312, %v3574, %v3579
        %v3581 = vrot.slane %v3089, 2
        %v3582 = vsel %vm3312, %v3577, %v3581
        %v3583 = vrot.slane %v3090, 2
        %v3584 = vrot.slane %v3092, 2
        %v3585 = vsel %vm3312, %v3583, %v3584
        %v3586 = vrot.slane %v3091, 2
        %v3587 = vrot.slane %v3093, 2
        %v3588 = vsel %vm3312, %v3586, %v3587
        %v3589 = vrot.slane %v3094, 2
        %v3590 = vsel %vm3312, %v3584, %v3589
        %v3591 = vrot.slane %v3095, 2
        %v3592 = vsel %vm3312, %v3587, %v3591
        %v3593 = vrot.slane %v3096, 2
        %v3594 = vrot.slane %v3098, 2
        %v3595 = vsel %vm3312, %v3593, %v3594
        %v3596 = vrot.slane %v3097, 2
        %v3597 = vrot.slane %v3099, 2
        %v3598 = vsel %vm3312, %v3596, %v3597
        %v3599 = vrot.slane %v3100, 2
        %v3600 = vsel %vm3312, %v3594, %v3599
        %v3601 = vrot.slane %v3101, 2
        %v3602 = vsel %vm3312, %v3597, %v3601
        %v3603 = vrot.slane %v3102, 2
        %v3604 = vrot.slane %v3104, 2
        %v3605 = vsel %vm3312, %v3603, %v3604
        %v3606 = vrot.slane %v3103, 2
        %v3607 = vrot.slane %v3105, 2
        %v3608 = vsel %vm3312, %v3606, %v3607
        %v3609 = vrot.slane %v3106, 2
        %v3610 = vsel %vm3312, %v3604, %v3609
        %v3611 = vrot.slane %v3107, 2
        %v3612 = vsel %vm3312, %v3607, %v3611
        %v3613 = vrot.slane %v3108, 2
        %v3614 = vrot.slane %v3110, 2
        %v3615 = vsel %vm3312, %v3613, %v3614
        %v3616 = vrot.slane %v3109, 2
        %v3617 = vrot.slane %v3111, 2
        %v3618 = vsel %vm3312, %v3616, %v3617
        %v3619 = vrot.slane %v3112, 2
        %v3620 = vsel %vm3312, %v3614, %v3619
        %v3621 = vrot.slane %v3113, 2
        %v3622 = vsel %vm3312, %v3617, %v3621
        %v3623 = vrot.slane %v3114, 2
        %v3624 = vrot.slane %v3116, 2
        %v3625 = vsel %vm3312, %v3623, %v3624
        %v3626 = vrot.slane %v3115, 2
        %v3627 = vrot.slane %v3117, 2
        %v3628 = vsel %vm3312, %v3626, %v3627
        %v3629 = vrot.slane %v3118, 2
        %v3630 = vsel %vm3312, %v3624, %v3629
        %v3631 = vrot.slane %v3119, 2
        %v3632 = vsel %vm3312, %v3627, %v3631
        %v3761 = vadd.f32 %v2659, %v3315
        %v3762 = vadd.f32 %v2660, %v3318
        %v3763 = vadd.f32 %v2661, %v3320
        %v3764 = vadd.f32 %v2662, %v3322
        %v3765 = vadd.f32 %v2663, %v3325
        %v3766 = vadd.f32 %v2664, %v3328
        %v3767 = vadd.f32 %v2665, %v3330
        %v3768 = vadd.f32 %v2666, %v3332
        %v3769 = vadd.f32 %v2667, %v3335
        %v3770 = vadd.f32 %v2668, %v3338
        %v3771 = vadd.f32 %v2669, %v3340
        %v3772 = vadd.f32 %v2670, %v3342
        %v3773 = vadd.f32 %v2671, %v3345
        %v3774 = vadd.f32 %v2672, %v3348
        %v3775 = vadd.f32 %v2673, %v3350
        %v3776 = vadd.f32 %v2674, %v3352
        %v3777 = vadd.f32 %v2675, %v3355
        %v3778 = vadd.f32 %v2676, %v3358
        %v3779 = vadd.f32 %v2677, %v3360
        %v3780 = vadd.f32 %v2678, %v3362
        %v3781 = vadd.f32 %v2679, %v3365
        %v3782 = vadd.f32 %v2680, %v3368
        %v3783 = vadd.f32 %v2681, %v3370
        %v3784 = vadd.f32 %v2682, %v3372
        %v3785 = vadd.f32 %v2683, %v3375
        %v3786 = vadd.f32 %v2684, %v3378
        %v3787 = vadd.f32 %v2685, %v3380
        %v3788 = vadd.f32 %v2686, %v3382
        %v3789 = vadd.f32 %v2687, %v3385
        %v3790 = vadd.f32 %v2688, %v3388
        %v3791 = vadd.f32 %v2689, %v3390
        %v3792 = vadd.f32 %v2690, %v3392
        %v3793 = vadd.f32 %v2691, %v3395
        %v3794 = vadd.f32 %v2692, %v3398
        %v3795 = vadd.f32 %v2693, %v3400
        %v3796 = vadd.f32 %v2694, %v3402
        %v3797 = vadd.f32 %v2695, %v3405
        %v3798 = vadd.f32 %v2696, %v3408
        %v3799 = vadd.f32 %v2697, %v3410
        %v3800 = vadd.f32 %v2698, %v3412
        %v3801 = vadd.f32 %v2699, %v3415
        %v3802 = vadd.f32 %v2700, %v3418
        %v3803 = vadd.f32 %v2701, %v3420
        %v3804 = vadd.f32 %v2702, %v3422
        %v3805 = vadd.f32 %v2703, %v3425
        %v3806 = vadd.f32 %v2704, %v3428
        %v3807 = vadd.f32 %v2705, %v3430
        %v3808 = vadd.f32 %v2706, %v3432
        %v3809 = vadd.f32 %v2707, %v3435
        %v3810 = vadd.f32 %v2708, %v3438
        %v3811 = vadd.f32 %v2709, %v3440
        %v3812 = vadd.f32 %v2710, %v3442
        %v3813 = vadd.f32 %v2711, %v3445
        %v3814 = vadd.f32 %v2712, %v3448
        %v3815 = vadd.f32 %v2713, %v3450
        %v3816 = vadd.f32 %v2714, %v3452
        %v3817 = vadd.f32 %v2715, %v3455
        %v3818 = vadd.f32 %v2716, %v3458
        %v3819 = vadd.f32 %v2717, %v3460
        %v3820 = vadd.f32 %v2718, %v3462
        %v3821 = vadd.f32 %v2719, %v3465
        %v3822 = vadd.f32 %v2720, %v3468
        %v3823 = vadd.f32 %v2721, %v3470
        %v3824 = vadd.f32 %v2722, %v3472
        %v3825 = vadd.f32 %v2723, %v3475
        %v3826 = vadd.f32 %v2724, %v3478
        %v3827 = vadd.f32 %v2725, %v3480
        %v3828 = vadd.f32 %v2726, %v3482
        %v3829 = vadd.f32 %v2727, %v3485
        %v3830 = vadd.f32 %v2728, %v3488
        %v3831 = vadd.f32 %v2729, %v3490
        %v3832 = vadd.f32 %v2730, %v3492
        %v3833 = vadd.f32 %v2731, %v3495
        %v3834 = vadd.f32 %v2732, %v3498
        %v3835 = vadd.f32 %v2733, %v3500
        %v3836 = vadd.f32 %v2734, %v3502
        %v3837 = vadd.f32 %v2735, %v3505
        %v3838 = vadd.f32 %v2736, %v3508
        %v3839 = vadd.f32 %v2737, %v3510
        %v3840 = vadd.f32 %v2738, %v3512
        %v3841 = vadd.f32 %v2739, %v3515
        %v3842 = vadd.f32 %v2740, %v3518
        %v3843 = vadd.f32 %v2741, %v3520
        %v3844 = vadd.f32 %v2742, %v3522
        %v3845 = vadd.f32 %v2743, %v3525
        %v3846 = vadd.f32 %v2744, %v3528
        %v3847 = vadd.f32 %v2745, %v3530
        %v3848 = vadd.f32 %v2746, %v3532
        %v3849 = vadd.f32 %v2747, %v3535
        %v3850 = vadd.f32 %v2748, %v3538
        %v3851 = vadd.f32 %v2749, %v3540
        %v3852 = vadd.f32 %v2750, %v3542
        %v3853 = vadd.f32 %v2751, %v3545
        %v3854 = vadd.f32 %v2752, %v3548
        %v3855 = vadd.f32 %v2753, %v3550
        %v3856 = vadd.f32 %v2754, %v3552
        %v3857 = vadd.f32 %v2755, %v3555
        %v3858 = vadd.f32 %v2756, %v3558
        %v3859 = vadd.f32 %v2757, %v3560
        %v3860 = vadd.f32 %v2758, %v3562
        %v3861 = vadd.f32 %v2759, %v3565
        %v3862 = vadd.f32 %v2760, %v3568
        %v3863 = vadd.f32 %v2761, %v3570
        %v3864 = vadd.f32 %v2762, %v3572
        %v3865 = vadd.f32 %v2763, %v3575
        %v3866 = vadd.f32 %v2764, %v3578
        %v3867 = vadd.f32 %v2765, %v3580
        %v3868 = vadd.f32 %v2766, %v3582
        %v3869 = vadd.f32 %v2767, %v3585
        %v3870 = vadd.f32 %v2768, %v3588
        %v3871 = vadd.f32 %v2769, %v3590
        %v3872 = vadd.f32 %v2770, %v3592
        %v3873 = vadd.f32 %v2771, %v3595
        %v3874 = vadd.f32 %v2772, %v3598
        %v3875 = vadd.f32 %v2773, %v3600
        %v3876 = vadd.f32 %v2774, %v3602
        %v3877 = vadd.f32 %v2775, %v3605
        %v3878 = vadd.f32 %v2776, %v3608
        %v3879 = vadd.f32 %v2777, %v3610
        %v3880 = vadd.f32 %v2778, %v3612
        %v3881 = vadd.f32 %v2779, %v3615
        %v3882 = vadd.f32 %v2780, %v3618
        %v3883 = vadd.f32 %v2781, %v3620
        %v3884 = vadd.f32 %v2782, %v3622
        %v3885 = vadd.f32 %v2783, %v3625
        %v3886 = vadd.f32 %v2784, %v3628
        %v3887 = vadd.f32 %v2785, %v3630
        %v3888 = vadd.f32 %v2786, %v3632
        %s3889 = scalar_lea.vmem %s330, 3
        %v3890 = vld [vmem:[%s3889] ss:$8 sm:$0x3]
        %v3891 = vld [vmem:[%s1224] sm:$0xff]
        %v3892 = vld [vmem:[%s1224 + $0x8] sm:$0xff]
        %v3893 = vld [vmem:[%s1224 + $0x10] sm:$0xff]
        %v3894 = vld [vmem:[%s1224 + $0x18] sm:$0xff]
        %v3895 = vld [vmem:[%s1224 + $0x30] sm:$0xff]
        %v3896 = vld [vmem:[%s1224 + $0x38] sm:$0xff]
        %v3897 = vld [vmem:[%s1224 + $0x40] sm:$0xff]
        %v3898 = vld [vmem:[%s1224 + $0x48] sm:$0xff]
        %v3899 = vld [vmem:[%s1224 + $0x60] sm:$0xff]
        %v3900 = vld [vmem:[%s1224 + $0x68] sm:$0xff]
        %v3901 = vld [vmem:[%s1224 + $0x70] sm:$0xff]
        %v3902 = vld [vmem:[%s1224 + $0x78] sm:$0xff]
        %v3903 = vld [vmem:[%s1224 + $0x90] sm:$0xff]
        %v3904 = vld [vmem:[%s1224 + $0x98] sm:$0xff]
        %v3905 = vld [vmem:[%s1224 + $0xa0] sm:$0xff]
        %v3906 = vld [vmem:[%s1224 + $0xa8] sm:$0xff]
        %v3907 = vld [vmem:[%s1224 + $0xc0] sm:$0xff]
        %v3908 = vld [vmem:[%s1224 + $0xc8] sm:$0xff]
        %v3909 = vld [vmem:[%s1224 + $0xd0] sm:$0xff]
        %v3910 = vld [vmem:[%s1224 + $0xd8] sm:$0xff]
        %v3911 = vld [vmem:[%s1224 + $0xf0] sm:$0xff]
        %v3912 = vld [vmem:[%s1224 + $0xf8] sm:$0xff]
        %v3913 = vld [vmem:[%s1224 + $0x100] sm:$0xff]
        %v3914 = vld [vmem:[%s1224 + $0x108] sm:$0xff]
        %v3915 = vld [vmem:[%s1224 + $0x120] sm:$0xff]
        %v3916 = vld [vmem:[%s1224 + $0x128] sm:$0xff]
        %v3917 = vld [vmem:[%s1224 + $0x130] sm:$0xff]
        %v3918 = vld [vmem:[%s1224 + $0x138] sm:$0xff]
        %v3919 = vld [vmem:[%s1224 + $0x150] sm:$0xff]
        %v3920 = vld [vmem:[%s1224 + $0x158] sm:$0xff]
        %v3921 = vld [vmem:[%s1224 + $0x160] sm:$0xff]
        %v3922 = vld [vmem:[%s1224 + $0x168] sm:$0xff]
        %v3923 = vld [vmem:[%s1224 + $0x180] sm:$0xff]
        %v3924 = vld [vmem:[%s1224 + $0x188] sm:$0xff]
        %v3925 = vld [vmem:[%s1224 + $0x190] sm:$0xff]
        %v3926 = vld [vmem:[%s1224 + $0x198] sm:$0xff]
        %v3927 = vld [vmem:[%s1224 + $0x1b0] sm:$0xff]
        %v3928 = vld [vmem:[%s1224 + $0x1b8] sm:$0xff]
        %v3929 = vld [vmem:[%s1224 + $0x1c0] sm:$0xff]
        %v3930 = vld [vmem:[%s1224 + $0x1c8] sm:$0xff]
        %v3931 = vld [vmem:[%s1224 + $0x1e0] sm:$0xff]
        %v3932 = vld [vmem:[%s1224 + $0x1e8] sm:$0xff]
        %v3933 = vld [vmem:[%s1224 + $0x1f0] sm:$0xff]
        %v3934 = vld [vmem:[%s1224 + $0x1f8] sm:$0xff]
        %v3935 = vld [vmem:[%s1224 + $0x210] sm:$0xff]
        %v3936 = vld [vmem:[%s1224 + $0x218] sm:$0xff]
        %v3937 = vld [vmem:[%s1224 + $0x220] sm:$0xff]
        %v3938 = vld [vmem:[%s1224 + $0x228] sm:$0xff]
        %v3939 = vld [vmem:[%s1224 + $0x240] sm:$0xff]
        %v3940 = vld [vmem:[%s1224 + $0x248] sm:$0xff]
        %v3941 = vld [vmem:[%s1224 + $0x250] sm:$0xff]
        %v3942 = vld [vmem:[%s1224 + $0x258] sm:$0xff]
        %v3943 = vld [vmem:[%s1224 + $0x270] sm:$0xff]
        %v3944 = vld [vmem:[%s1224 + $0x278] sm:$0xff]
        %v3945 = vld [vmem:[%s1224 + $0x280] sm:$0xff]
        %v3946 = vld [vmem:[%s1224 + $0x288] sm:$0xff]
        %v3947 = vld [vmem:[%s1224 + $0x2a0] sm:$0xff]
        %v3948 = vld [vmem:[%s1224 + $0x2a8] sm:$0xff]
        %v3949 = vld [vmem:[%s1224 + $0x2b0] sm:$0xff]
        %v3950 = vld [vmem:[%s1224 + $0x2b8] sm:$0xff]
        %v3951 = vld [vmem:[%s1224 + $0x2d0] sm:$0xff]
        %v3952 = vld [vmem:[%s1224 + $0x2d8] sm:$0xff]
        %v3953 = vld [vmem:[%s1224 + $0x2e0] sm:$0xff]
        %v3954 = vld [vmem:[%s1224 + $0x2e8] sm:$0xff]
        %v3955 = vld [vmem:[%s1224 + $0x360] sm:$0xff]
        %v3956 = vld [vmem:[%s1224 + $0x368] sm:$0xff]
        %v3957 = vld [vmem:[%s1224 + $0x370] sm:$0xff]
        %v3958 = vld [vmem:[%s1224 + $0x378] sm:$0xff]
        %v3959 = vld [vmem:[%s1224 + $0x390] sm:$0xff]
        %v3960 = vld [vmem:[%s1224 + $0x398] sm:$0xff]
        %v3961 = vld [vmem:[%s1224 + $0x3a0] sm:$0xff]
        %v3962 = vld [vmem:[%s1224 + $0x3a8] sm:$0xff]
        %v3963 = vld [vmem:[%s1224 + $0x3c0] sm:$0xff]
        %v3964 = vld [vmem:[%s1224 + $0x3c8] sm:$0xff]
        %v3965 = vld [vmem:[%s1224 + $0x3d0] sm:$0xff]
        %v3966 = vld [vmem:[%s1224 + $0x3d8] sm:$0xff]
        %v3967 = vld [vmem:[%s1224 + $0x3f0] sm:$0xff]
        %v3968 = vld [vmem:[%s1224 + $0x3f8] sm:$0xff]
        %v3969 = vld [vmem:[%s1224 + $0x400] sm:$0xff]
        %v3970 = vld [vmem:[%s1224 + $0x408] sm:$0xff]
        %v3971 = vld [vmem:[%s1224 + $0x420] sm:$0xff]
        %v3972 = vld [vmem:[%s1224 + $0x428] sm:$0xff]
        %v3973 = vld [vmem:[%s1224 + $0x430] sm:$0xff]
        %v3974 = vld [vmem:[%s1224 + $0x438] sm:$0xff]
        %v3975 = vld [vmem:[%s1224 + $0x450] sm:$0xff]
        %v3976 = vld [vmem:[%s1224 + $0x458] sm:$0xff]
        %v3977 = vld [vmem:[%s1224 + $0x460] sm:$0xff]
        %v3978 = vld [vmem:[%s1224 + $0x468] sm:$0xff]
        %v3979 = vld [vmem:[%s1224 + $0x480] sm:$0xff]
        %v3980 = vld [vmem:[%s1224 + $0x488] sm:$0xff]
        %v3981 = vld [vmem:[%s1224 + $0x490] sm:$0xff]
        %v3982 = vld [vmem:[%s1224 + $0x498] sm:$0xff]
        %v3983 = vld [vmem:[%s1224 + $0x4b0] sm:$0xff]
        %v3984 = vld [vmem:[%s1224 + $0x4b8] sm:$0xff]
        %v3985 = vld [vmem:[%s1224 + $0x4c0] sm:$0xff]
        %v3986 = vld [vmem:[%s1224 + $0x4c8] sm:$0xff]
        %v3987 = vld [vmem:[%s1224 + $0x4e0] sm:$0xff]
        %v3988 = vld [vmem:[%s1224 + $0x4e8] sm:$0xff]
        %v3989 = vld [vmem:[%s1224 + $0x4f0] sm:$0xff]
        %v3990 = vld [vmem:[%s1224 + $0x4f8] sm:$0xff]
        %v3991 = vld [vmem:[%s1224 + $0x510] sm:$0xff]
        %v3992 = vld [vmem:[%s1224 + $0x518] sm:$0xff]
        %v3993 = vld [vmem:[%s1224 + $0x520] sm:$0xff]
        %v3994 = vld [vmem:[%s1224 + $0x528] sm:$0xff]
        %v3995 = vld [vmem:[%s1224 + $0x540] sm:$0xff]
        %v3996 = vld [vmem:[%s1224 + $0x548] sm:$0xff]
        %v3997 = vld [vmem:[%s1224 + $0x550] sm:$0xff]
        %v3998 = vld [vmem:[%s1224 + $0x558] sm:$0xff]
        %v3999 = vld [vmem:[%s1224 + $0x570] sm:$0xff]
        %v4000 = vld [vmem:[%s1224 + $0x578] sm:$0xff]
        %v4001 = vld [vmem:[%s1224 + $0x580] sm:$0xff]
        %v4002 = vld [vmem:[%s1224 + $0x588] sm:$0xff]
        %v4003 = vld [vmem:[%s1224 + $0x5a0] sm:$0xff]
        %v4004 = vld [vmem:[%s1224 + $0x5a8] sm:$0xff]
        %v4005 = vld [vmem:[%s1224 + $0x5b0] sm:$0xff]
        %v4006 = vld [vmem:[%s1224 + $0x5b8] sm:$0xff]
        %v4007 = vld [vmem:[%s1224 + $0x5d0] sm:$0xff]
        %v4008 = vld [vmem:[%s1224 + $0x5d8] sm:$0xff]
        %v4009 = vld [vmem:[%s1224 + $0x5e0] sm:$0xff]
        %v4010 = vld [vmem:[%s1224 + $0x5e8] sm:$0xff]
        %v4011 = vld [vmem:[%s1224 + $0x600] sm:$0xff]
        %v4012 = vld [vmem:[%s1224 + $0x608] sm:$0xff]
        %v4013 = vld [vmem:[%s1224 + $0x610] sm:$0xff]
        %v4014 = vld [vmem:[%s1224 + $0x618] sm:$0xff]
        %v4015 = vld [vmem:[%s1224 + $0x630] sm:$0xff]
        %v4016 = vld [vmem:[%s1224 + $0x638] sm:$0xff]
        %v4017 = vld [vmem:[%s1224 + $0x640] sm:$0xff]
        %v4018 = vld [vmem:[%s1224 + $0x648] sm:$0xff]
        %v4020 = vlaneseq
        %v4021 = vshrl.u32 %v4020, 7
        %v4022 = vsub.s32 0, %v4021
        %v4023 = vrot.slane %v3890, %v4022
        %v4024 = vlaneseq
        %v4025 = vshrl.u32 %v4024, 7
        %v4026 = vsub.s32 1, %v4025
        %v4027 = vrot.slane %v3890, %v4026
        %v4030 = vmul.f32 %v3891, %v4023
        %v4031 = vmul.f32 %v3892, %v4027
        %v4032 = vmul.f32 %v3893, %v4023
        %v4033 = vmul.f32 %v3894, %v4027
        %v4034 = vmul.f32 %v3895, %v4023
        %v4035 = vmul.f32 %v3896, %v4027
        %v4036 = vmul.f32 %v3897, %v4023
        %v4037 = vmul.f32 %v3898, %v4027
        %v4038 = vmul.f32 %v3899, %v4023
        %v4039 = vmul.f32 %v3900, %v4027
        %v4040 = vmul.f32 %v3901, %v4023
        %v4041 = vmul.f32 %v3902, %v4027
        %v4042 = vmul.f32 %v3903, %v4023
        %v4043 = vmul.f32 %v3904, %v4027
        %v4044 = vmul.f32 %v3905, %v4023
        %v4045 = vmul.f32 %v3906, %v4027
        %v4046 = vmul.f32 %v3907, %v4023
        %v4047 = vmul.f32 %v3908, %v4027
        %v4048 = vmul.f32 %v3909, %v4023
        %v4049 = vmul.f32 %v3910, %v4027
        %v4050 = vmul.f32 %v3911, %v4023
        %v4051 = vmul.f32 %v3912, %v4027
        %v4052 = vmul.f32 %v3913, %v4023
        %v4053 = vmul.f32 %v3914, %v4027
        %v4054 = vmul.f32 %v3915, %v4023
        %v4055 = vmul.f32 %v3916, %v4027
        %v4056 = vmul.f32 %v3917, %v4023
        %v4057 = vmul.f32 %v3918, %v4027
        %v4058 = vmul.f32 %v3919, %v4023
        %v4059 = vmul.f32 %v3920, %v4027
        %v4060 = vmul.f32 %v3921, %v4023
        %v4061 = vmul.f32 %v3922, %v4027
        %v4062 = vmul.f32 %v3923, %v4023
        %v4063 = vmul.f32 %v3924, %v4027
        %v4064 = vmul.f32 %v3925, %v4023
        %v4065 = vmul.f32 %v3926, %v4027
        %v4066 = vmul.f32 %v3927, %v4023
        %v4067 = vmul.f32 %v3928, %v4027
        %v4068 = vmul.f32 %v3929, %v4023
        %v4069 = vmul.f32 %v3930, %v4027
        %v4070 = vmul.f32 %v3931, %v4023
        %v4071 = vmul.f32 %v3932, %v4027
        %v4072 = vmul.f32 %v3933, %v4023
        %v4073 = vmul.f32 %v3934, %v4027
        %v4074 = vmul.f32 %v3935, %v4023
        %v4075 = vmul.f32 %v3936, %v4027
        %v4076 = vmul.f32 %v3937, %v4023
        %v4077 = vmul.f32 %v3938, %v4027
        %v4078 = vmul.f32 %v3939, %v4023
        %v4079 = vmul.f32 %v3940, %v4027
        %v4080 = vmul.f32 %v3941, %v4023
        %v4081 = vmul.f32 %v3942, %v4027
        %v4082 = vmul.f32 %v3943, %v4023
        %v4083 = vmul.f32 %v3944, %v4027
        %v4084 = vmul.f32 %v3945, %v4023
        %v4085 = vmul.f32 %v3946, %v4027
        %v4086 = vmul.f32 %v3947, %v4023
        %v4087 = vmul.f32 %v3948, %v4027
        %v4088 = vmul.f32 %v3949, %v4023
        %v4089 = vmul.f32 %v3950, %v4027
        %v4090 = vmul.f32 %v3951, %v4023
        %v4091 = vmul.f32 %v3952, %v4027
        %v4092 = vmul.f32 %v3953, %v4023
        %v4093 = vmul.f32 %v3954, %v4027
        %v4094 = vmul.f32 %v3955, %v4023
        %v4095 = vmul.f32 %v3956, %v4027
        %v4096 = vmul.f32 %v3957, %v4023
        %v4097 = vmul.f32 %v3958, %v4027
        %v4098 = vmul.f32 %v3959, %v4023
        %v4099 = vmul.f32 %v3960, %v4027
        %v4100 = vmul.f32 %v3961, %v4023
        %v4101 = vmul.f32 %v3962, %v4027
        %v4102 = vmul.f32 %v3963, %v4023
        %v4103 = vmul.f32 %v3964, %v4027
        %v4104 = vmul.f32 %v3965, %v4023
        %v4105 = vmul.f32 %v3966, %v4027
        %v4106 = vmul.f32 %v3967, %v4023
        %v4107 = vmul.f32 %v3968, %v4027
        %v4108 = vmul.f32 %v3969, %v4023
        %v4109 = vmul.f32 %v3970, %v4027
        %v4110 = vmul.f32 %v3971, %v4023
        %v4111 = vmul.f32 %v3972, %v4027
        %v4112 = vmul.f32 %v3973, %v4023
        %v4113 = vmul.f32 %v3974, %v4027
        %v4114 = vmul.f32 %v3975, %v4023
        %v4115 = vmul.f32 %v3976, %v4027
        %v4116 = vmul.f32 %v3977, %v4023
        %v4117 = vmul.f32 %v3978, %v4027
        %v4118 = vmul.f32 %v3979, %v4023
        %v4119 = vmul.f32 %v3980, %v4027
        %v4120 = vmul.f32 %v3981, %v4023
        %v4121 = vmul.f32 %v3982, %v4027
        %v4122 = vmul.f32 %v3983, %v4023
        %v4123 = vmul.f32 %v3984, %v4027
        %v4124 = vmul.f32 %v3985, %v4023
        %v4125 = vmul.f32 %v3986, %v4027
        %v4126 = vmul.f32 %v3987, %v4023
        %v4127 = vmul.f32 %v3988, %v4027
        %v4128 = vmul.f32 %v3989, %v4023
        %v4129 = vmul.f32 %v3990, %v4027
        %v4130 = vmul.f32 %v3991, %v4023
        %v4131 = vmul.f32 %v3992, %v4027
        %v4132 = vmul.f32 %v3993, %v4023
        %v4133 = vmul.f32 %v3994, %v4027
        %v4134 = vmul.f32 %v3995, %v4023
        %v4135 = vmul.f32 %v3996, %v4027
        %v4136 = vmul.f32 %v3997, %v4023
        %v4137 = vmul.f32 %v3998, %v4027
        %v4138 = vmul.f32 %v3999, %v4023
        %v4139 = vmul.f32 %v4000, %v4027
        %v4140 = vmul.f32 %v4001, %v4023
        %v4141 = vmul.f32 %v4002, %v4027
        %v4142 = vmul.f32 %v4003, %v4023
        %v4143 = vmul.f32 %v4004, %v4027
        %v4144 = vmul.f32 %v4005, %v4023
        %v4145 = vmul.f32 %v4006, %v4027
        %v4146 = vmul.f32 %v4007, %v4023
        %v4147 = vmul.f32 %v4008, %v4027
        %v4148 = vmul.f32 %v4009, %v4023
        %v4149 = vmul.f32 %v4010, %v4027
        %v4150 = vmul.f32 %v4011, %v4023
        %v4151 = vmul.f32 %v4012, %v4027
        %v4152 = vmul.f32 %v4013, %v4023
        %v4153 = vmul.f32 %v4014, %v4027
        %v4154 = vmul.f32 %v4015, %v4023
        %v4155 = vmul.f32 %v4016, %v4027
        %v4156 = vmul.f32 %v4017, %v4023
        %v4157 = vmul.f32 %v4018, %v4027
        %v4158 = vadd.f32 %v3761, %v4030
        %v4159 = vadd.f32 %v3762, %v4031
        %v4160 = vadd.f32 %v3763, %v4032
        %v4161 = vadd.f32 %v3764, %v4033
        %v4162 = vadd.f32 %v3765, %v4034
        %v4163 = vadd.f32 %v3766, %v4035
        %v4164 = vadd.f32 %v3767, %v4036
        %v4165 = vadd.f32 %v3768, %v4037
        %v4166 = vadd.f32 %v3769, %v4038
        %v4167 = vadd.f32 %v3770, %v4039
        %v4168 = vadd.f32 %v3771, %v4040
        %v4169 = vadd.f32 %v3772, %v4041
        %v4170 = vadd.f32 %v3773, %v4042
        %v4171 = vadd.f32 %v3774, %v4043
        %v4172 = vadd.f32 %v3775, %v4044
        %v4173 = vadd.f32 %v3776, %v4045
        %v4174 = vadd.f32 %v3777, %v4046
        %v4175 = vadd.f32 %v3778, %v4047
        %v4176 = vadd.f32 %v3779, %v4048
        %v4177 = vadd.f32 %v3780, %v4049
        %v4178 = vadd.f32 %v3781, %v4050
        %v4179 = vadd.f32 %v3782, %v4051
        %v4180 = vadd.f32 %v3783, %v4052
        %v4181 = vadd.f32 %v3784, %v4053
        %v4182 = vadd.f32 %v3785, %v4054
        %v4183 = vadd.f32 %v3786, %v4055
        %v4184 = vadd.f32 %v3787, %v4056
        %v4185 = vadd.f32 %v3788, %v4057
        %v4186 = vadd.f32 %v3789, %v4058
        %v4187 = vadd.f32 %v3790, %v4059
        %v4188 = vadd.f32 %v3791, %v4060
        %v4189 = vadd.f32 %v3792, %v4061
        %v4190 = vadd.f32 %v3793, %v4062
        %v4191 = vadd.f32 %v3794, %v4063
        %v4192 = vadd.f32 %v3795, %v4064
        %v4193 = vadd.f32 %v3796, %v4065
        %v4194 = vadd.f32 %v3797, %v4066
        %v4195 = vadd.f32 %v3798, %v4067
        %v4196 = vadd.f32 %v3799, %v4068
        %v4197 = vadd.f32 %v3800, %v4069
        %v4198 = vadd.f32 %v3801, %v4070
        %v4199 = vadd.f32 %v3802, %v4071
        %v4200 = vadd.f32 %v3803, %v4072
        %v4201 = vadd.f32 %v3804, %v4073
        %v4202 = vadd.f32 %v3805, %v4074
        %v4203 = vadd.f32 %v3806, %v4075
        %v4204 = vadd.f32 %v3807, %v4076
        %v4205 = vadd.f32 %v3808, %v4077
        %v4206 = vadd.f32 %v3809, %v4078
        %v4207 = vadd.f32 %v3810, %v4079
        %v4208 = vadd.f32 %v3811, %v4080
        %v4209 = vadd.f32 %v3812, %v4081
        %v4210 = vadd.f32 %v3813, %v4082
        %v4211 = vadd.f32 %v3814, %v4083
        %v4212 = vadd.f32 %v3815, %v4084
        %v4213 = vadd.f32 %v3816, %v4085
        %v4214 = vadd.f32 %v3817, %v4086
        %v4215 = vadd.f32 %v3818, %v4087
        %v4216 = vadd.f32 %v3819, %v4088
        %v4217 = vadd.f32 %v3820, %v4089
        %v4218 = vadd.f32 %v3821, %v4090
        %v4219 = vadd.f32 %v3822, %v4091
        %v4220 = vadd.f32 %v3823, %v4092
        %v4221 = vadd.f32 %v3824, %v4093
        %v4222 = vadd.f32 %v3825, %v4094
        %v4223 = vadd.f32 %v3826, %v4095
        %v4224 = vadd.f32 %v3827, %v4096
        %v4225 = vadd.f32 %v3828, %v4097
        %v4226 = vadd.f32 %v3829, %v4098
        %v4227 = vadd.f32 %v3830, %v4099
        %v4228 = vadd.f32 %v3831, %v4100
        %v4229 = vadd.f32 %v3832, %v4101
        %v4230 = vadd.f32 %v3833, %v4102
        %v4231 = vadd.f32 %v3834, %v4103
        %v4232 = vadd.f32 %v3835, %v4104
        %v4233 = vadd.f32 %v3836, %v4105
        %v4234 = vadd.f32 %v3837, %v4106
        %v4235 = vadd.f32 %v3838, %v4107
        %v4236 = vadd.f32 %v3839, %v4108
        %v4237 = vadd.f32 %v3840, %v4109
        %v4238 = vadd.f32 %v3841, %v4110
        %v4239 = vadd.f32 %v3842, %v4111
        %v4240 = vadd.f32 %v3843, %v4112
        %v4241 = vadd.f32 %v3844, %v4113
        %v4242 = vadd.f32 %v3845, %v4114
        %v4243 = vadd.f32 %v3846, %v4115
        %v4244 = vadd.f32 %v3847, %v4116
        %v4245 = vadd.f32 %v3848, %v4117
        %v4246 = vadd.f32 %v3849, %v4118
        %v4247 = vadd.f32 %v3850, %v4119
        %v4248 = vadd.f32 %v3851, %v4120
        %v4249 = vadd.f32 %v3852, %v4121
        %v4250 = vadd.f32 %v3853, %v4122
        %v4251 = vadd.f32 %v3854, %v4123
        %v4252 = vadd.f32 %v3855, %v4124
        %v4253 = vadd.f32 %v3856, %v4125
        %v4254 = vadd.f32 %v3857, %v4126
        %v4255 = vadd.f32 %v3858, %v4127
        %v4256 = vadd.f32 %v3859, %v4128
        %v4257 = vadd.f32 %v3860, %v4129
        %v4258 = vadd.f32 %v3861, %v4130
        %v4259 = vadd.f32 %v3862, %v4131
        %v4260 = vadd.f32 %v3863, %v4132
        %v4261 = vadd.f32 %v3864, %v4133
        %v4262 = vadd.f32 %v3865, %v4134
        %v4263 = vadd.f32 %v3866, %v4135
        %v4264 = vadd.f32 %v3867, %v4136
        %v4265 = vadd.f32 %v3868, %v4137
        %v4266 = vadd.f32 %v3869, %v4138
        %v4267 = vadd.f32 %v3870, %v4139
        %v4268 = vadd.f32 %v3871, %v4140
        %v4269 = vadd.f32 %v3872, %v4141
        %v4270 = vadd.f32 %v3873, %v4142
        %v4271 = vadd.f32 %v3874, %v4143
        %v4272 = vadd.f32 %v3875, %v4144
        %v4273 = vadd.f32 %v3876, %v4145
        %v4274 = vadd.f32 %v3877, %v4146
        %v4275 = vadd.f32 %v3878, %v4147
        %v4276 = vadd.f32 %v3879, %v4148
        %v4277 = vadd.f32 %v3880, %v4149
        %v4278 = vadd.f32 %v3881, %v4150
        %v4279 = vadd.f32 %v3882, %v4151
        %v4280 = vadd.f32 %v3883, %v4152
        %v4281 = vadd.f32 %v3884, %v4153
        %v4282 = vadd.f32 %v3885, %v4154
        %v4283 = vadd.f32 %v3886, %v4155
        %v4284 = vadd.f32 %v3887, %v4156
        %v4285 = vadd.f32 %v3888, %v4157
        %s4286 = scalar_lea.vmem %s330, 4
        %v4287 = vld [vmem:[%s4286] ss:$8 sm:$0x3]
        %v4288 = vld [vmem:[%s1224] sm:$0xfe]
        %v4289 = vld [vmem:[%s1224 + $0x8] sm:$0xfe]
        %v4290 = vld [vmem:[%s1224 + $0x20] sm:$0x1]
        %v4291 = vld [vmem:[%s1224 + $0x28] sm:$0x1]
        %v4292 = vld [vmem:[%s1224 + $0x30] sm:$0xfe]
        %v4293 = vld [vmem:[%s1224 + $0x38] sm:$0xfe]
        %v4294 = vld [vmem:[%s1224 + $0x50] sm:$0x1]
        %v4295 = vld [vmem:[%s1224 + $0x58] sm:$0x1]
        %v4296 = vld [vmem:[%s1224 + $0x60] sm:$0xfe]
        %v4297 = vld [vmem:[%s1224 + $0x68] sm:$0xfe]
        %v4298 = vld [vmem:[%s1224 + $0x80] sm:$0x1]
        %v4299 = vld [vmem:[%s1224 + $0x88] sm:$0x1]
        %v4300 = vld [vmem:[%s1224 + $0x90] sm:$0xfe]
        %v4301 = vld [vmem:[%s1224 + $0x98] sm:$0xfe]
        %v4302 = vld [vmem:[%s1224 + $0xb0] sm:$0x1]
        %v4303 = vld [vmem:[%s1224 + $0xb8] sm:$0x1]
        %v4304 = vld [vmem:[%s1224 + $0xc0] sm:$0xfe]
        %v4305 = vld [vmem:[%s1224 + $0xc8] sm:$0xfe]
        %v4306 = vld [vmem:[%s1224 + $0xe0] sm:$0x1]
        %v4307 = vld [vmem:[%s1224 + $0xe8] sm:$0x1]
        %v4308 = vld [vmem:[%s1224 + $0xf0] sm:$0xfe]
        %v4309 = vld [vmem:[%s1224 + $0xf8] sm:$0xfe]
        %v4310 = vld [vmem:[%s1224 + $0x110] sm:$0x1]
        %v4311 = vld [vmem:[%s1224 + $0x118] sm:$0x1]
        %v4312 = vld [vmem:[%s1224 + $0x120] sm:$0xfe]
        %v4313 = vld [vmem:[%s1224 + $0x128] sm:$0xfe]
        %v4314 = vld [vmem:[%s1224 + $0x140] sm:$0x1]
        %v4315 = vld [vmem:[%s1224 + $0x148] sm:$0x1]
        %v4316 = vld [vmem:[%s1224 + $0x150] sm:$0xfe]
        %v4317 = vld [vmem:[%s1224 + $0x158] sm:$0xfe]
        %v4318 = vld [vmem:[%s1224 + $0x170] sm:$0x1]
        %v4319 = vld [vmem:[%s1224 + $0x178] sm:$0x1]
        %v4320 = vld [vmem:[%s1224 + $0x180] sm:$0xfe]
        %v4321 = vld [vmem:[%s1224 + $0x188] sm:$0xfe]
        %v4322 = vld [vmem:[%s1224 + $0x1a0] sm:$0x1]
        %v4323 = vld [vmem:[%s1224 + $0x1a8] sm:$0x1]
        %v4324 = vld [vmem:[%s1224 + $0x1b0] sm:$0xfe]
        %v4325 = vld [vmem:[%s1224 + $0x1b8] sm:$0xfe]
        %v4326 = vld [vmem:[%s1224 + $0x1d0] sm:$0x1]
        %v4327 = vld [vmem:[%s1224 + $0x1d8] sm:$0x1]
        %v4328 = vld [vmem:[%s1224 + $0x1e0] sm:$0xfe]
        %v4329 = vld [vmem:[%s1224 + $0x1e8] sm:$0xfe]
        %v4330 = vld [vmem:[%s1224 + $0x200] sm:$0x1]
        %v4331 = vld [vmem:[%s1224 + $0x208] sm:$0x1]
        %v4332 = vld [vmem:[%s1224 + $0x210] sm:$0xfe]
        %v4333 = vld [vmem:[%s1224 + $0x218] sm:$0xfe]
        %v4334 = vld [vmem:[%s1224 + $0x230] sm:$0x1]
        %v4335 = vld [vmem:[%s1224 + $0x238] sm:$0x1]
        %v4336 = vld [vmem:[%s1224 + $0x240] sm:$0xfe]
        %v4337 = vld [vmem:[%s1224 + $0x248] sm:$0xfe]
        %v4338 = vld [vmem:[%s1224 + $0x260] sm:$0x1]
        %v4339 = vld [vmem:[%s1224 + $0x268] sm:$0x1]
        %v4340 = vld [vmem:[%s1224 + $0x270] sm:$0xfe]
        %v4341 = vld [vmem:[%s1224 + $0x278] sm:$0xfe]
        %v4342 = vld [vmem:[%s1224 + $0x290] sm:$0x1]
        %v4343 = vld [vmem:[%s1224 + $0x298] sm:$0x1]
        %v4344 = vld [vmem:[%s1224 + $0x2a0] sm:$0xfe]
        %v4345 = vld [vmem:[%s1224 + $0x2a8] sm:$0xfe]
        %v4346 = vld [vmem:[%s1224 + $0x2c0] sm:$0x1]
        %v4347 = vld [vmem:[%s1224 + $0x2c8] sm:$0x1]
        %v4348 = vld [vmem:[%s1224 + $0x2d0] sm:$0xfe]
        %v4349 = vld [vmem:[%s1224 + $0x2d8] sm:$0xfe]
        %v4350 = vld [vmem:[%s1224 + $0x2f0] sm:$0x1]
        %v4351 = vld [vmem:[%s1224 + $0x2f8] sm:$0x1]
        %v4352 = vld [vmem:[%s1224 + $0x360] sm:$0xfe]
        %v4353 = vld [vmem:[%s1224 + $0x368] sm:$0xfe]
        %v4354 = vld [vmem:[%s1224 + $0x380] sm:$0x1]
        %v4355 = vld [vmem:[%s1224 + $0x388] sm:$0x1]
        %v4356 = vld [vmem:[%s1224 + $0x390] sm:$0xfe]
        %v4357 = vld [vmem:[%s1224 + $0x398] sm:$0xfe]
        %v4358 = vld [vmem:[%s1224 + $0x3b0] sm:$0x1]
        %v4359 = vld [vmem:[%s1224 + $0x3b8] sm:$0x1]
        %v4360 = vld [vmem:[%s1224 + $0x3c0] sm:$0xfe]
        %v4361 = vld [vmem:[%s1224 + $0x3c8] sm:$0xfe]
        %v4362 = vld [vmem:[%s1224 + $0x3e0] sm:$0x1]
        %v4363 = vld [vmem:[%s1224 + $0x3e8] sm:$0x1]
        %v4364 = vld [vmem:[%s1224 + $0x3f0] sm:$0xfe]
        %v4365 = vld [vmem:[%s1224 + $0x3f8] sm:$0xfe]
        %v4366 = vld [vmem:[%s1224 + $0x410] sm:$0x1]
        %v4367 = vld [vmem:[%s1224 + $0x418] sm:$0x1]
        %v4368 = vld [vmem:[%s1224 + $0x420] sm:$0xfe]
        %v4369 = vld [vmem:[%s1224 + $0x428] sm:$0xfe]
        %v4370 = vld [vmem:[%s1224 + $0x440] sm:$0x1]
        %v4371 = vld [vmem:[%s1224 + $0x448] sm:$0x1]
        %v4372 = vld [vmem:[%s1224 + $0x450] sm:$0xfe]
        %v4373 = vld [vmem:[%s1224 + $0x458] sm:$0xfe]
        %v4374 = vld [vmem:[%s1224 + $0x470] sm:$0x1]
        %v4375 = vld [vmem:[%s1224 + $0x478] sm:$0x1]
        %v4376 = vld [vmem:[%s1224 + $0x480] sm:$0xfe]
        %v4377 = vld [vmem:[%s1224 + $0x488] sm:$0xfe]
        %v4378 = vld [vmem:[%s1224 + $0x4a0] sm:$0x1]
        %v4379 = vld [vmem:[%s1224 + $0x4a8] sm:$0x1]
        %v4380 = vld [vmem:[%s1224 + $0x4b0] sm:$0xfe]
        %v4381 = vld [vmem:[%s1224 + $0x4b8] sm:$0xfe]
        %v4382 = vld [vmem:[%s1224 + $0x4d0] sm:$0x1]
        %v4383 = vld [vmem:[%s1224 + $0x4d8] sm:$0x1]
        %v4384 = vld [vmem:[%s1224 + $0x4e0] sm:$0xfe]
        %v4385 = vld [vmem:[%s1224 + $0x4e8] sm:$0xfe]
        %v4386 = vld [vmem:[%s1224 + $0x500] sm:$0x1]
        %v4387 = vld [vmem:[%s1224 + $0x508] sm:$0x1]
        %v4388 = vld [vmem:[%s1224 + $0x510] sm:$0xfe]
        %v4389 = vld [vmem:[%s1224 + $0x518] sm:$0xfe]
        %v4390 = vld [vmem:[%s1224 + $0x530] sm:$0x1]
        %v4391 = vld [vmem:[%s1224 + $0x538] sm:$0x1]
        %v4392 = vld [vmem:[%s1224 + $0x540] sm:$0xfe]
        %v4393 = vld [vmem:[%s1224 + $0x548] sm:$0xfe]
        %v4394 = vld [vmem:[%s1224 + $0x560] sm:$0x1]
        %v4395 = vld [vmem:[%s1224 + $0x568] sm:$0x1]
        %v4396 = vld [vmem:[%s1224 + $0x570] sm:$0xfe]
        %v4397 = vld [vmem:[%s1224 + $0x578] sm:$0xfe]
        %v4398 = vld [vmem:[%s1224 + $0x590] sm:$0x1]
        %v4399 = vld [vmem:[%s1224 + $0x598] sm:$0x1]
        %v4400 = vld [vmem:[%s1224 + $0x5a0] sm:$0xfe]
        %v4401 = vld [vmem:[%s1224 + $0x5a8] sm:$0xfe]
        %v4402 = vld [vmem:[%s1224 + $0x5c0] sm:$0x1]
        %v4403 = vld [vmem:[%s1224 + $0x5c8] sm:$0x1]
        %v4404 = vld [vmem:[%s1224 + $0x5d0] sm:$0xfe]
        %v4405 = vld [vmem:[%s1224 + $0x5d8] sm:$0xfe]
        %v4406 = vld [vmem:[%s1224 + $0x5f0] sm:$0x1]
        %v4407 = vld [vmem:[%s1224 + $0x5f8] sm:$0x1]
        %v4408 = vld [vmem:[%s1224 + $0x600] sm:$0xfe]
        %v4409 = vld [vmem:[%s1224 + $0x608] sm:$0xfe]
        %v4410 = vld [vmem:[%s1224 + $0x620] sm:$0x1]
        %v4411 = vld [vmem:[%s1224 + $0x628] sm:$0x1]
        %v4412 = vld [vmem:[%s1224 + $0x630] sm:$0xfe]
        %v4413 = vld [vmem:[%s1224 + $0x638] sm:$0xfe]
        %v4414 = vld [vmem:[%s1224 + $0x650] sm:$0x1]
        %v4415 = vld [vmem:[%s1224 + $0x658] sm:$0x1]
        %v4417 = vlaneseq
        %v4418 = vshrl.u32 %v4417, 7
        %v4419 = vsub.s32 0, %v4418
        %v4420 = vrot.slane %v4287, %v4419
        %v4421 = vlaneseq
        %v4422 = vshrl.u32 %v4421, 7
        %v4423 = vsub.s32 1, %v4422
        %v4424 = vrot.slane %v4287, %v4423
        %v4427 = vmul.f32 %v4288, %v4420
        %v4428 = vmul.f32 %v4289, %v4424
        %v4429 = vmul.f32 %v3893, %v4420
        %v4430 = vmul.f32 %v3894, %v4424
        %v4431 = vmul.f32 %v4290, %v4420
        %v4432 = vmul.f32 %v4291, %v4424
        %v4433 = vmul.f32 %v4292, %v4420
        %v4434 = vmul.f32 %v4293, %v4424
        %v4435 = vmul.f32 %v3897, %v4420
        %v4436 = vmul.f32 %v3898, %v4424
        %v4437 = vmul.f32 %v4294, %v4420
        %v4438 = vmul.f32 %v4295, %v4424
        %v4439 = vmul.f32 %v4296, %v4420
        %v4440 = vmul.f32 %v4297, %v4424
        %v4441 = vmul.f32 %v3901, %v4420
        %v4442 = vmul.f32 %v3902, %v4424
        %v4443 = vmul.f32 %v4298, %v4420
        %v4444 = vmul.f32 %v4299, %v4424
        %v4445 = vmul.f32 %v4300, %v4420
        %v4446 = vmul.f32 %v4301, %v4424
        %v4447 = vmul.f32 %v3905, %v4420
        %v4448 = vmul.f32 %v3906, %v4424
        %v4449 = vmul.f32 %v4302, %v4420
        %v4450 = vmul.f32 %v4303, %v4424
        %v4451 = vmul.f32 %v4304, %v4420
        %v4452 = vmul.f32 %v4305, %v4424
        %v4453 = vmul.f32 %v3909, %v4420
        %v4454 = vmul.f32 %v3910, %v4424
        %v4455 = vmul.f32 %v4306, %v4420
        %v4456 = vmul.f32 %v4307, %v4424
        %v4457 = vmul.f32 %v4308, %v4420
        %v4458 = vmul.f32 %v4309, %v4424
        %v4459 = vmul.f32 %v3913, %v4420
        %v4460 = vmul.f32 %v3914, %v4424
        %v4461 = vmul.f32 %v4310, %v4420
        %v4462 = vmul.f32 %v4311, %v4424
        %v4463 = vmul.f32 %v4312, %v4420
        %v4464 = vmul.f32 %v4313, %v4424
        %v4465 = vmul.f32 %v3917, %v4420
        %v4466 = vmul.f32 %v3918, %v4424
        %v4467 = vmul.f32 %v4314, %v4420
        %v4468 = vmul.f32 %v4315, %v4424
        %v4469 = vmul.f32 %v4316, %v4420
        %v4470 = vmul.f32 %v4317, %v4424
        %v4471 = vmul.f32 %v3921, %v4420
        %v4472 = vmul.f32 %v3922, %v4424
        %v4473 = vmul.f32 %v4318, %v4420
        %v4474 = vmul.f32 %v4319, %v4424
        %v4475 = vmul.f32 %v4320, %v4420
        %v4476 = vmul.f32 %v4321, %v4424
        %v4477 = vmul.f32 %v3925, %v4420
        %v4478 = vmul.f32 %v3926, %v4424
        %v4479 = vmul.f32 %v4322, %v4420
        %v4480 = vmul.f32 %v4323, %v4424
        %v4481 = vmul.f32 %v4324, %v4420
        %v4482 = vmul.f32 %v4325, %v4424
        %v4483 = vmul.f32 %v3929, %v4420
        %v4484 = vmul.f32 %v3930, %v4424
        %v4485 = vmul.f32 %v4326, %v4420
        %v4486 = vmul.f32 %v4327, %v4424
        %v4487 = vmul.f32 %v4328, %v4420
        %v4488 = vmul.f32 %v4329, %v4424
        %v4489 = vmul.f32 %v3933, %v4420
        %v4490 = vmul.f32 %v3934, %v4424
        %v4491 = vmul.f32 %v4330, %v4420
        %v4492 = vmul.f32 %v4331, %v4424
        %v4493 = vmul.f32 %v4332, %v4420
        %v4494 = vmul.f32 %v4333, %v4424
        %v4495 = vmul.f32 %v3937, %v4420
        %v4496 = vmul.f32 %v3938, %v4424
        %v4497 = vmul.f32 %v4334, %v4420
        %v4498 = vmul.f32 %v4335, %v4424
        %v4499 = vmul.f32 %v4336, %v4420
        %v4500 = vmul.f32 %v4337, %v4424
        %v4501 = vmul.f32 %v3941, %v4420
        %v4502 = vmul.f32 %v3942, %v4424
        %v4503 = vmul.f32 %v4338, %v4420
        %v4504 = vmul.f32 %v4339, %v4424
        %v4505 = vmul.f32 %v4340, %v4420
        %v4506 = vmul.f32 %v4341, %v4424
        %v4507 = vmul.f32 %v3945, %v4420
        %v4508 = vmul.f32 %v3946, %v4424
        %v4509 = vmul.f32 %v4342, %v4420
        %v4510 = vmul.f32 %v4343, %v4424
        %v4511 = vmul.f32 %v4344, %v4420
        %v4512 = vmul.f32 %v4345, %v4424
        %v4513 = vmul.f32 %v3949, %v4420
        %v4514 = vmul.f32 %v3950, %v4424
        %v4515 = vmul.f32 %v4346, %v4420
        %v4516 = vmul.f32 %v4347, %v4424
        %v4517 = vmul.f32 %v4348, %v4420
        %v4518 = vmul.f32 %v4349, %v4424
        %v4519 = vmul.f32 %v3953, %v4420
        %v4520 = vmul.f32 %v3954, %v4424
        %v4521 = vmul.f32 %v4350, %v4420
        %v4522 = vmul.f32 %v4351, %v4424
        %v4523 = vmul.f32 %v4352, %v4420
        %v4524 = vmul.f32 %v4353, %v4424
        %v4525 = vmul.f32 %v3957, %v4420
        %v4526 = vmul.f32 %v3958, %v4424
        %v4527 = vmul.f32 %v4354, %v4420
        %v4528 = vmul.f32 %v4355, %v4424
        %v4529 = vmul.f32 %v4356, %v4420
        %v4530 = vmul.f32 %v4357, %v4424
        %v4531 = vmul.f32 %v3961, %v4420
        %v4532 = vmul.f32 %v3962, %v4424
        %v4533 = vmul.f32 %v4358, %v4420
        %v4534 = vmul.f32 %v4359, %v4424
        %v4535 = vmul.f32 %v4360, %v4420
        %v4536 = vmul.f32 %v4361, %v4424
        %v4537 = vmul.f32 %v3965, %v4420
        %v4538 = vmul.f32 %v3966, %v4424
        %v4539 = vmul.f32 %v4362, %v4420
        %v4540 = vmul.f32 %v4363, %v4424
        %v4541 = vmul.f32 %v4364, %v4420
        %v4542 = vmul.f32 %v4365, %v4424
        %v4543 = vmul.f32 %v3969, %v4420
        %v4544 = vmul.f32 %v3970, %v4424
        %v4545 = vmul.f32 %v4366, %v4420
        %v4546 = vmul.f32 %v4367, %v4424
        %v4547 = vmul.f32 %v4368, %v4420
        %v4548 = vmul.f32 %v4369, %v4424
        %v4549 = vmul.f32 %v3973, %v4420
        %v4550 = vmul.f32 %v3974, %v4424
        %v4551 = vmul.f32 %v4370, %v4420
        %v4552 = vmul.f32 %v4371, %v4424
        %v4553 = vmul.f32 %v4372, %v4420
        %v4554 = vmul.f32 %v4373, %v4424
        %v4555 = vmul.f32 %v3977, %v4420
        %v4556 = vmul.f32 %v3978, %v4424
        %v4557 = vmul.f32 %v4374, %v4420
        %v4558 = vmul.f32 %v4375, %v4424
        %v4559 = vmul.f32 %v4376, %v4420
        %v4560 = vmul.f32 %v4377, %v4424
        %v4561 = vmul.f32 %v3981, %v4420
        %v4562 = vmul.f32 %v3982, %v4424
        %v4563 = vmul.f32 %v4378, %v4420
        %v4564 = vmul.f32 %v4379, %v4424
        %v4565 = vmul.f32 %v4380, %v4420
        %v4566 = vmul.f32 %v4381, %v4424
        %v4567 = vmul.f32 %v3985, %v4420
        %v4568 = vmul.f32 %v3986, %v4424
        %v4569 = vmul.f32 %v4382, %v4420
        %v4570 = vmul.f32 %v4383, %v4424
        %v4571 = vmul.f32 %v4384, %v4420
        %v4572 = vmul.f32 %v4385, %v4424
        %v4573 = vmul.f32 %v3989, %v4420
        %v4574 = vmul.f32 %v3990, %v4424
        %v4575 = vmul.f32 %v4386, %v4420
        %v4576 = vmul.f32 %v4387, %v4424
        %v4577 = vmul.f32 %v4388, %v4420
        %v4578 = vmul.f32 %v4389, %v4424
        %v4579 = vmul.f32 %v3993, %v4420
        %v4580 = vmul.f32 %v3994, %v4424
        %v4581 = vmul.f32 %v4390, %v4420
        %v4582 = vmul.f32 %v4391, %v4424
        %v4583 = vmul.f32 %v4392, %v4420
        %v4584 = vmul.f32 %v4393, %v4424
        %v4585 = vmul.f32 %v3997, %v4420
        %v4586 = vmul.f32 %v3998, %v4424
        %v4587 = vmul.f32 %v4394, %v4420
        %v4588 = vmul.f32 %v4395, %v4424
        %v4589 = vmul.f32 %v4396, %v4420
        %v4590 = vmul.f32 %v4397, %v4424
        %v4591 = vmul.f32 %v4001, %v4420
        %v4592 = vmul.f32 %v4002, %v4424
        %v4593 = vmul.f32 %v4398, %v4420
        %v4594 = vmul.f32 %v4399, %v4424
        %v4595 = vmul.f32 %v4400, %v4420
        %v4596 = vmul.f32 %v4401, %v4424
        %v4597 = vmul.f32 %v4005, %v4420
        %v4598 = vmul.f32 %v4006, %v4424
        %v4599 = vmul.f32 %v4402, %v4420
        %v4600 = vmul.f32 %v4403, %v4424
        %v4601 = vmul.f32 %v4404, %v4420
        %v4602 = vmul.f32 %v4405, %v4424
        %v4603 = vmul.f32 %v4009, %v4420
        %v4604 = vmul.f32 %v4010, %v4424
        %v4605 = vmul.f32 %v4406, %v4420
        %v4606 = vmul.f32 %v4407, %v4424
        %v4607 = vmul.f32 %v4408, %v4420
        %v4608 = vmul.f32 %v4409, %v4424
        %v4609 = vmul.f32 %v4013, %v4420
        %v4610 = vmul.f32 %v4014, %v4424
        %v4611 = vmul.f32 %v4410, %v4420
        %v4612 = vmul.f32 %v4411, %v4424
        %v4613 = vmul.f32 %v4412, %v4420
        %v4614 = vmul.f32 %v4413, %v4424
        %v4615 = vmul.f32 %v4017, %v4420
        %v4616 = vmul.f32 %v4018, %v4424
        %v4617 = vmul.f32 %v4414, %v4420
        %v4618 = vmul.f32 %v4415, %v4424
        %v4811 = vrot.slane %v4427, 1
        %v4812 = vrot.slane %v4429, 1
        %v4813 = vsel %vm2210, %v4811, %v4812
        %v4814 = vrot.slane %v4428, 1
        %v4815 = vrot.slane %v4430, 1
        %v4816 = vsel %vm2210, %v4814, %v4815
        %v4817 = vrot.slane %v4431, 1
        %v4818 = vsel %vm2210, %v4812, %v4817
        %v4819 = vrot.slane %v4432, 1
        %v4820 = vsel %vm2210, %v4815, %v4819
        %v4821 = vrot.slane %v4433, 1
        %v4822 = vrot.slane %v4435, 1
        %v4823 = vsel %vm2210, %v4821, %v4822
        %v4824 = vrot.slane %v4434, 1
        %v4825 = vrot.slane %v4436, 1
        %v4826 = vsel %vm2210, %v4824, %v4825
        %v4827 = vrot.slane %v4437, 1
        %v4828 = vsel %vm2210, %v4822, %v4827
        %v4829 = vrot.slane %v4438, 1
        %v4830 = vsel %vm2210, %v4825, %v4829
        %v4831 = vrot.slane %v4439, 1
        %v4832 = vrot.slane %v4441, 1
        %v4833 = vsel %vm2210, %v4831, %v4832
        %v4834 = vrot.slane %v4440, 1
        %v4835 = vrot.slane %v4442, 1
        %v4836 = vsel %vm2210, %v4834, %v4835
        %v4837 = vrot.slane %v4443, 1
        %v4838 = vsel %vm2210, %v4832, %v4837
        %v4839 = vrot.slane %v4444, 1
        %v4840 = vsel %vm2210, %v4835, %v4839
        %v4841 = vrot.slane %v4445, 1
        %v4842 = vrot.slane %v4447, 1
        %v4843 = vsel %vm2210, %v4841, %v4842
        %v4844 = vrot.slane %v4446, 1
        %v4845 = vrot.slane %v4448, 1
        %v4846 = vsel %vm2210, %v4844, %v4845
        %v4847 = vrot.slane %v4449, 1
        %v4848 = vsel %vm2210, %v4842, %v4847
        %v4849 = vrot.slane %v4450, 1
        %v4850 = vsel %vm2210, %v4845, %v4849
        %v4851 = vrot.slane %v4451, 1
        %v4852 = vrot.slane %v4453, 1
        %v4853 = vsel %vm2210, %v4851, %v4852
        %v4854 = vrot.slane %v4452, 1
        %v4855 = vrot.slane %v4454, 1
        %v4856 = vsel %vm2210, %v4854, %v4855
        %v4857 = vrot.slane %v4455, 1
        %v4858 = vsel %vm2210, %v4852, %v4857
        %v4859 = vrot.slane %v4456, 1
        %v4860 = vsel %vm2210, %v4855, %v4859
        %v4861 = vrot.slane %v4457, 1
        %v4862 = vrot.slane %v4459, 1
        %v4863 = vsel %vm2210, %v4861, %v4862
        %v4864 = vrot.slane %v4458, 1
        %v4865 = vrot.slane %v4460, 1
        %v4866 = vsel %vm2210, %v4864, %v4865
        %v4867 = vrot.slane %v4461, 1
        %v4868 = vsel %vm2210, %v4862, %v4867
        %v4869 = vrot.slane %v4462, 1
        %v4870 = vsel %vm2210, %v4865, %v4869
        %v4871 = vrot.slane %v4463, 1
        %v4872 = vrot.slane %v4465, 1
        %v4873 = vsel %vm2210, %v4871, %v4872
        %v4874 = vrot.slane %v4464, 1
        %v4875 = vrot.slane %v4466, 1
        %v4876 = vsel %vm2210, %v4874, %v4875
        %v4877 = vrot.slane %v4467, 1
        %v4878 = vsel %vm2210, %v4872, %v4877
        %v4879 = vrot.slane %v4468, 1
        %v4880 = vsel %vm2210, %v4875, %v4879
        %v4881 = vrot.slane %v4469, 1
        %v4882 = vrot.slane %v4471, 1
        %v4883 = vsel %vm2210, %v4881, %v4882
        %v4884 = vrot.slane %v4470, 1
        %v4885 = vrot.slane %v4472, 1
        %v4886 = vsel %vm2210, %v4884, %v4885
        %v4887 = vrot.slane %v4473, 1
        %v4888 = vsel %vm2210, %v4882, %v4887
        %v4889 = vrot.slane %v4474, 1
        %v4890 = vsel %vm2210, %v4885, %v4889
        %v4891 = vrot.slane %v4475, 1
        %v4892 = vrot.slane %v4477, 1
        %v4893 = vsel %vm2210, %v4891, %v4892
        %v4894 = vrot.slane %v4476, 1
        %v4895 = vrot.slane %v4478, 1
        %v4896 = vsel %vm2210, %v4894, %v4895
        %v4897 = vrot.slane %v4479, 1
        %v4898 = vsel %vm2210, %v4892, %v4897
        %v4899 = vrot.slane %v4480, 1
        %v4900 = vsel %vm2210, %v4895, %v4899
        %v4901 = vrot.slane %v4481, 1
        %v4902 = vrot.slane %v4483, 1
        %v4903 = vsel %vm2210, %v4901, %v4902
        %v4904 = vrot.slane %v4482, 1
        %v4905 = vrot.slane %v4484, 1
        %v4906 = vsel %vm2210, %v4904, %v4905
        %v4907 = vrot.slane %v4485, 1
        %v4908 = vsel %vm2210, %v4902, %v4907
        %v4909 = vrot.slane %v4486, 1
        %v4910 = vsel %vm2210, %v4905, %v4909
        %v4911 = vrot.slane %v4487, 1
        %v4912 = vrot.slane %v4489, 1
        %v4913 = vsel %vm2210, %v4911, %v4912
        %v4914 = vrot.slane %v4488, 1
        %v4915 = vrot.slane %v4490, 1
        %v4916 = vsel %vm2210, %v4914, %v4915
        %v4917 = vrot.slane %v4491, 1
        %v4918 = vsel %vm2210, %v4912, %v4917
        %v4919 = vrot.slane %v4492, 1
        %v4920 = vsel %vm2210, %v4915, %v4919
        %v4921 = vrot.slane %v4493, 1
        %v4922 = vrot.slane %v4495, 1
        %v4923 = vsel %vm2210, %v4921, %v4922
        %v4924 = vrot.slane %v4494, 1
        %v4925 = vrot.slane %v4496, 1
        %v4926 = vsel %vm2210, %v4924, %v4925
        %v4927 = vrot.slane %v4497, 1
        %v4928 = vsel %vm2210, %v4922, %v4927
        %v4929 = vrot.slane %v4498, 1
        %v4930 = vsel %vm2210, %v4925, %v4929
        %v4931 = vrot.slane %v4499, 1
        %v4932 = vrot.slane %v4501, 1
        %v4933 = vsel %vm2210, %v4931, %v4932
        %v4934 = vrot.slane %v4500, 1
        %v4935 = vrot.slane %v4502, 1
        %v4936 = vsel %vm2210, %v4934, %v4935
        %v4937 = vrot.slane %v4503, 1
        %v4938 = vsel %vm2210, %v4932, %v4937
        %v4939 = vrot.slane %v4504, 1
        %v4940 = vsel %vm2210, %v4935, %v4939
        %v4941 = vrot.slane %v4505, 1
        %v4942 = vrot.slane %v4507, 1
        %v4943 = vsel %vm2210, %v4941, %v4942
        %v4944 = vrot.slane %v4506, 1
        %v4945 = vrot.slane %v4508, 1
        %v4946 = vsel %vm2210, %v4944, %v4945
        %v4947 = vrot.slane %v4509, 1
        %v4948 = vsel %vm2210, %v4942, %v4947
        %v4949 = vrot.slane %v4510, 1
        %v4950 = vsel %vm2210, %v4945, %v4949
        %v4951 = vrot.slane %v4511, 1
        %v4952 = vrot.slane %v4513, 1
        %v4953 = vsel %vm2210, %v4951, %v4952
        %v4954 = vrot.slane %v4512, 1
        %v4955 = vrot.slane %v4514, 1
        %v4956 = vsel %vm2210, %v4954, %v4955
        %v4957 = vrot.slane %v4515, 1
        %v4958 = vsel %vm2210, %v4952, %v4957
        %v4959 = vrot.slane %v4516, 1
        %v4960 = vsel %vm2210, %v4955, %v4959
        %v4961 = vrot.slane %v4517, 1
        %v4962 = vrot.slane %v4519, 1
        %v4963 = vsel %vm2210, %v4961, %v4962
        %v4964 = vrot.slane %v4518, 1
        %v4965 = vrot.slane %v4520, 1
        %v4966 = vsel %vm2210, %v4964, %v4965
        %v4967 = vrot.slane %v4521, 1
        %v4968 = vsel %vm2210, %v4962, %v4967
        %v4969 = vrot.slane %v4522, 1
        %v4970 = vsel %vm2210, %v4965, %v4969
        %v4971 = vrot.slane %v4523, 1
        %v4972 = vrot.slane %v4525, 1
        %v4973 = vsel %vm2210, %v4971, %v4972
        %v4974 = vrot.slane %v4524, 1
        %v4975 = vrot.slane %v4526, 1
        %v4976 = vsel %vm2210, %v4974, %v4975
        %v4977 = vrot.slane %v4527, 1
        %v4978 = vsel %vm2210, %v4972, %v4977
        %v4979 = vrot.slane %v4528, 1
        %v4980 = vsel %vm2210, %v4975, %v4979
        %v4981 = vrot.slane %v4529, 1
        %v4982 = vrot.slane %v4531, 1
        %v4983 = vsel %vm2210, %v4981, %v4982
        %v4984 = vrot.slane %v4530, 1
        %v4985 = vrot.slane %v4532, 1
        %v4986 = vsel %vm2210, %v4984, %v4985
        %v4987 = vrot.slane %v4533, 1
        %v4988 = vsel %vm2210, %v4982, %v4987
        %v4989 = vrot.slane %v4534, 1
        %v4990 = vsel %vm2210, %v4985, %v4989
        %v4991 = vrot.slane %v4535, 1
        %v4992 = vrot.slane %v4537, 1
        %v4993 = vsel %vm2210, %v4991, %v4992
        %v4994 = vrot.slane %v4536, 1
        %v4995 = vrot.slane %v4538, 1
        %v4996 = vsel %vm2210, %v4994, %v4995
        %v4997 = vrot.slane %v4539, 1
        %v4998 = vsel %vm2210, %v4992, %v4997
        %v4999 = vrot.slane %v4540, 1
        %v5000 = vsel %vm2210, %v4995, %v4999
        %v5001 = vrot.slane %v4541, 1
        %v5002 = vrot.slane %v4543, 1
        %v5003 = vsel %vm2210, %v5001, %v5002
        %v5004 = vrot.slane %v4542, 1
        %v5005 = vrot.slane %v4544, 1
        %v5006 = vsel %vm2210, %v5004, %v5005
        %v5007 = vrot.slane %v4545, 1
        %v5008 = vsel %vm2210, %v5002, %v5007
        %v5009 = vrot.slane %v4546, 1
        %v5010 = vsel %vm2210, %v5005, %v5009
        %v5011 = vrot.slane %v4547, 1
        %v5012 = vrot.slane %v4549, 1
        %v5013 = vsel %vm2210, %v5011, %v5012
        %v5014 = vrot.slane %v4548, 1
        %v5015 = vrot.slane %v4550, 1
        %v5016 = vsel %vm2210, %v5014, %v5015
        %v5017 = vrot.slane %v4551, 1
        %v5018 = vsel %vm2210, %v5012, %v5017
        %v5019 = vrot.slane %v4552, 1
        %v5020 = vsel %vm2210, %v5015, %v5019
        %v5021 = vrot.slane %v4553, 1
        %v5022 = vrot.slane %v4555, 1
        %v5023 = vsel %vm2210, %v5021, %v5022
        %v5024 = vrot.slane %v4554, 1
        %v5025 = vrot.slane %v4556, 1
        %v5026 = vsel %vm2210, %v5024, %v5025
        %v5027 = vrot.slane %v4557, 1
        %v5028 = vsel %vm2210, %v5022, %v5027
        %v5029 = vrot.slane %v4558, 1
        %v5030 = vsel %vm2210, %v5025, %v5029
        %v5031 = vrot.slane %v4559, 1
        %v5032 = vrot.slane %v4561, 1
        %v5033 = vsel %vm2210, %v5031, %v5032
        %v5034 = vrot.slane %v4560, 1
        %v5035 = vrot.slane %v4562, 1
        %v5036 = vsel %vm2210, %v5034, %v5035
        %v5037 = vrot.slane %v4563, 1
        %v5038 = vsel %vm2210, %v5032, %v5037
        %v5039 = vrot.slane %v4564, 1
        %v5040 = vsel %vm2210, %v5035, %v5039
        %v5041 = vrot.slane %v4565, 1
        %v5042 = vrot.slane %v4567, 1
        %v5043 = vsel %vm2210, %v5041, %v5042
        %v5044 = vrot.slane %v4566, 1
        %v5045 = vrot.slane %v4568, 1
        %v5046 = vsel %vm2210, %v5044, %v5045
        %v5047 = vrot.slane %v4569, 1
        %v5048 = vsel %vm2210, %v5042, %v5047
        %v5049 = vrot.slane %v4570, 1
        %v5050 = vsel %vm2210, %v5045, %v5049
        %v5051 = vrot.slane %v4571, 1
        %v5052 = vrot.slane %v4573, 1
        %v5053 = vsel %vm2210, %v5051, %v5052
        %v5054 = vrot.slane %v4572, 1
        %v5055 = vrot.slane %v4574, 1
        %v5056 = vsel %vm2210, %v5054, %v5055
        %v5057 = vrot.slane %v4575, 1
        %v5058 = vsel %vm2210, %v5052, %v5057
        %v5059 = vrot.slane %v4576, 1
        %v5060 = vsel %vm2210, %v5055, %v5059
        %v5061 = vrot.slane %v4577, 1
        %v5062 = vrot.slane %v4579, 1
        %v5063 = vsel %vm2210, %v5061, %v5062
        %v5064 = vrot.slane %v4578, 1
        %v5065 = vrot.slane %v4580, 1
        %v5066 = vsel %vm2210, %v5064, %v5065
        %v5067 = vrot.slane %v4581, 1
        %v5068 = vsel %vm2210, %v5062, %v5067
        %v5069 = vrot.slane %v4582, 1
        %v5070 = vsel %vm2210, %v5065, %v5069
        %v5071 = vrot.slane %v4583, 1
        %v5072 = vrot.slane %v4585, 1
        %v5073 = vsel %vm2210, %v5071, %v5072
        %v5074 = vrot.slane %v4584, 1
        %v5075 = vrot.slane %v4586, 1
        %v5076 = vsel %vm2210, %v5074, %v5075
        %v5077 = vrot.slane %v4587, 1
        %v5078 = vsel %vm2210, %v5072, %v5077
        %v5079 = vrot.slane %v4588, 1
        %v5080 = vsel %vm2210, %v5075, %v5079
        %v5081 = vrot.slane %v4589, 1
        %v5082 = vrot.slane %v4591, 1
        %v5083 = vsel %vm2210, %v5081, %v5082
        %v5084 = vrot.slane %v4590, 1
        %v5085 = vrot.slane %v4592, 1
        %v5086 = vsel %vm2210, %v5084, %v5085
        %v5087 = vrot.slane %v4593, 1
        %v5088 = vsel %vm2210, %v5082, %v5087
        %v5089 = vrot.slane %v4594, 1
        %v5090 = vsel %vm2210, %v5085, %v5089
        %v5091 = vrot.slane %v4595, 1
        %v5092 = vrot.slane %v4597, 1
        %v5093 = vsel %vm2210, %v5091, %v5092
        %v5094 = vrot.slane %v4596, 1
        %v5095 = vrot.slane %v4598, 1
        %v5096 = vsel %vm2210, %v5094, %v5095
        %v5097 = vrot.slane %v4599, 1
        %v5098 = vsel %vm2210, %v5092, %v5097
        %v5099 = vrot.slane %v4600, 1
        %v5100 = vsel %vm2210, %v5095, %v5099
        %v5101 = vrot.slane %v4601, 1
        %v5102 = vrot.slane %v4603, 1
        %v5103 = vsel %vm2210, %v5101, %v5102
        %v5104 = vrot.slane %v4602, 1
        %v5105 = vrot.slane %v4604, 1
        %v5106 = vsel %vm2210, %v5104, %v5105
        %v5107 = vrot.slane %v4605, 1
        %v5108 = vsel %vm2210, %v5102, %v5107
        %v5109 = vrot.slane %v4606, 1
        %v5110 = vsel %vm2210, %v5105, %v5109
        %v5111 = vrot.slane %v4607, 1
        %v5112 = vrot.slane %v4609, 1
        %v5113 = vsel %vm2210, %v5111, %v5112
        %v5114 = vrot.slane %v4608, 1
        %v5115 = vrot.slane %v4610, 1
        %v5116 = vsel %vm2210, %v5114, %v5115
        %v5117 = vrot.slane %v4611, 1
        %v5118 = vsel %vm2210, %v5112, %v5117
        %v5119 = vrot.slane %v4612, 1
        %v5120 = vsel %vm2210, %v5115, %v5119
        %v5121 = vrot.slane %v4613, 1
        %v5122 = vrot.slane %v4615, 1
        %v5123 = vsel %vm2210, %v5121, %v5122
        %v5124 = vrot.slane %v4614, 1
        %v5125 = vrot.slane %v4616, 1
        %v5126 = vsel %vm2210, %v5124, %v5125
        %v5127 = vrot.slane %v4617, 1
        %v5128 = vsel %vm2210, %v5122, %v5127
        %v5129 = vrot.slane %v4618, 1
        %v5130 = vsel %vm2210, %v5125, %v5129
        %v5259 = vadd.f32 %v4158, %v4813
        %v5260 = vadd.f32 %v4159, %v4816
        %v5261 = vadd.f32 %v4160, %v4818
        %v5262 = vadd.f32 %v4161, %v4820
        %v5263 = vadd.f32 %v4162, %v4823
        %v5264 = vadd.f32 %v4163, %v4826
        %v5265 = vadd.f32 %v4164, %v4828
        %v5266 = vadd.f32 %v4165, %v4830
        %v5267 = vadd.f32 %v4166, %v4833
        %v5268 = vadd.f32 %v4167, %v4836
        %v5269 = vadd.f32 %v4168, %v4838
        %v5270 = vadd.f32 %v4169, %v4840
        %v5271 = vadd.f32 %v4170, %v4843
        %v5272 = vadd.f32 %v4171, %v4846
        %v5273 = vadd.f32 %v4172, %v4848
        %v5274 = vadd.f32 %v4173, %v4850
        %v5275 = vadd.f32 %v4174, %v4853
        %v5276 = vadd.f32 %v4175, %v4856
        %v5277 = vadd.f32 %v4176, %v4858
        %v5278 = vadd.f32 %v4177, %v4860
        %v5279 = vadd.f32 %v4178, %v4863
        %v5280 = vadd.f32 %v4179, %v4866
        %v5281 = vadd.f32 %v4180, %v4868
        %v5282 = vadd.f32 %v4181, %v4870
        %v5283 = vadd.f32 %v4182, %v4873
        %v5284 = vadd.f32 %v4183, %v4876
        %v5285 = vadd.f32 %v4184, %v4878
        %v5286 = vadd.f32 %v4185, %v4880
        %v5287 = vadd.f32 %v4186, %v4883
        %v5288 = vadd.f32 %v4187, %v4886
        %v5289 = vadd.f32 %v4188, %v4888
        %v5290 = vadd.f32 %v4189, %v4890
        %v5291 = vadd.f32 %v4190, %v4893
        %v5292 = vadd.f32 %v4191, %v4896
        %v5293 = vadd.f32 %v4192, %v4898
        %v5294 = vadd.f32 %v4193, %v4900
        %v5295 = vadd.f32 %v4194, %v4903
        %v5296 = vadd.f32 %v4195, %v4906
        %v5297 = vadd.f32 %v4196, %v4908
        %v5298 = vadd.f32 %v4197, %v4910
        %v5299 = vadd.f32 %v4198, %v4913
        %v5300 = vadd.f32 %v4199, %v4916
        %v5301 = vadd.f32 %v4200, %v4918
        %v5302 = vadd.f32 %v4201, %v4920
        %v5303 = vadd.f32 %v4202, %v4923
        %v5304 = vadd.f32 %v4203, %v4926
        %v5305 = vadd.f32 %v4204, %v4928
        %v5306 = vadd.f32 %v4205, %v4930
        %v5307 = vadd.f32 %v4206, %v4933
        %v5308 = vadd.f32 %v4207, %v4936
        %v5309 = vadd.f32 %v4208, %v4938
        %v5310 = vadd.f32 %v4209, %v4940
        %v5311 = vadd.f32 %v4210, %v4943
        %v5312 = vadd.f32 %v4211, %v4946
        %v5313 = vadd.f32 %v4212, %v4948
        %v5314 = vadd.f32 %v4213, %v4950
        %v5315 = vadd.f32 %v4214, %v4953
        %v5316 = vadd.f32 %v4215, %v4956
        %v5317 = vadd.f32 %v4216, %v4958
        %v5318 = vadd.f32 %v4217, %v4960
        %v5319 = vadd.f32 %v4218, %v4963
        %v5320 = vadd.f32 %v4219, %v4966
        %v5321 = vadd.f32 %v4220, %v4968
        %v5322 = vadd.f32 %v4221, %v4970
        %v5323 = vadd.f32 %v4222, %v4973
        %v5324 = vadd.f32 %v4223, %v4976
        %v5325 = vadd.f32 %v4224, %v4978
        %v5326 = vadd.f32 %v4225, %v4980
        %v5327 = vadd.f32 %v4226, %v4983
        %v5328 = vadd.f32 %v4227, %v4986
        %v5329 = vadd.f32 %v4228, %v4988
        %v5330 = vadd.f32 %v4229, %v4990
        %v5331 = vadd.f32 %v4230, %v4993
        %v5332 = vadd.f32 %v4231, %v4996
        %v5333 = vadd.f32 %v4232, %v4998
        %v5334 = vadd.f32 %v4233, %v5000
        %v5335 = vadd.f32 %v4234, %v5003
        %v5336 = vadd.f32 %v4235, %v5006
        %v5337 = vadd.f32 %v4236, %v5008
        %v5338 = vadd.f32 %v4237, %v5010
        %v5339 = vadd.f32 %v4238, %v5013
        %v5340 = vadd.f32 %v4239, %v5016
        %v5341 = vadd.f32 %v4240, %v5018
        %v5342 = vadd.f32 %v4241, %v5020
        %v5343 = vadd.f32 %v4242, %v5023
        %v5344 = vadd.f32 %v4243, %v5026
        %v5345 = vadd.f32 %v4244, %v5028
        %v5346 = vadd.f32 %v4245, %v5030
        %v5347 = vadd.f32 %v4246, %v5033
        %v5348 = vadd.f32 %v4247, %v5036
        %v5349 = vadd.f32 %v4248, %v5038
        %v5350 = vadd.f32 %v4249, %v5040
        %v5351 = vadd.f32 %v4250, %v5043
        %v5352 = vadd.f32 %v4251, %v5046
        %v5353 = vadd.f32 %v4252, %v5048
        %v5354 = vadd.f32 %v4253, %v5050
        %v5355 = vadd.f32 %v4254, %v5053
        %v5356 = vadd.f32 %v4255, %v5056
        %v5357 = vadd.f32 %v4256, %v5058
        %v5358 = vadd.f32 %v4257, %v5060
        %v5359 = vadd.f32 %v4258, %v5063
        %v5360 = vadd.f32 %v4259, %v5066
        %v5361 = vadd.f32 %v4260, %v5068
        %v5362 = vadd.f32 %v4261, %v5070
        %v5363 = vadd.f32 %v4262, %v5073
        %v5364 = vadd.f32 %v4263, %v5076
        %v5365 = vadd.f32 %v4264, %v5078
        %v5366 = vadd.f32 %v4265, %v5080
        %v5367 = vadd.f32 %v4266, %v5083
        %v5368 = vadd.f32 %v4267, %v5086
        %v5369 = vadd.f32 %v4268, %v5088
        %v5370 = vadd.f32 %v4269, %v5090
        %v5371 = vadd.f32 %v4270, %v5093
        %v5372 = vadd.f32 %v4271, %v5096
        %v5373 = vadd.f32 %v4272, %v5098
        %v5374 = vadd.f32 %v4273, %v5100
        %v5375 = vadd.f32 %v4274, %v5103
        %v5376 = vadd.f32 %v4275, %v5106
        %v5377 = vadd.f32 %v4276, %v5108
        %v5378 = vadd.f32 %v4277, %v5110
        %v5379 = vadd.f32 %v4278, %v5113
        %v5380 = vadd.f32 %v4279, %v5116
        %v5381 = vadd.f32 %v4280, %v5118
        %v5382 = vadd.f32 %v4281, %v5120
        %v5383 = vadd.f32 %v4282, %v5123
        %v5384 = vadd.f32 %v4283, %v5126
        %v5385 = vadd.f32 %v4284, %v5128
        %v5386 = vadd.f32 %v4285, %v5130
        %s5387 = scalar_lea.vmem %s330, 5
        %v5388 = vld [vmem:[%s5387] ss:$8 sm:$0x3]
        %v5389 = vld [vmem:[%s1224] sm:$0xfc]
        %v5390 = vld [vmem:[%s1224 + $0x8] sm:$0xfc]
        %v5391 = vld [vmem:[%s1224 + $0x20] sm:$0x3]
        %v5392 = vld [vmem:[%s1224 + $0x28] sm:$0x3]
        %v5393 = vld [vmem:[%s1224 + $0x30] sm:$0xfc]
        %v5394 = vld [vmem:[%s1224 + $0x38] sm:$0xfc]
        %v5395 = vld [vmem:[%s1224 + $0x50] sm:$0x3]
        %v5396 = vld [vmem:[%s1224 + $0x58] sm:$0x3]
        %v5397 = vld [vmem:[%s1224 + $0x60] sm:$0xfc]
        %v5398 = vld [vmem:[%s1224 + $0x68] sm:$0xfc]
        %v5399 = vld [vmem:[%s1224 + $0x80] sm:$0x3]
        %v5400 = vld [vmem:[%s1224 + $0x88] sm:$0x3]
        %v5401 = vld [vmem:[%s1224 + $0x90] sm:$0xfc]
        %v5402 = vld [vmem:[%s1224 + $0x98] sm:$0xfc]
        %v5403 = vld [vmem:[%s1224 + $0xb0] sm:$0x3]
        %v5404 = vld [vmem:[%s1224 + $0xb8] sm:$0x3]
        %v5405 = vld [vmem:[%s1224 + $0xc0] sm:$0xfc]
        %v5406 = vld [vmem:[%s1224 + $0xc8] sm:$0xfc]
        %v5407 = vld [vmem:[%s1224 + $0xe0] sm:$0x3]
        %v5408 = vld [vmem:[%s1224 + $0xe8] sm:$0x3]
        %v5409 = vld [vmem:[%s1224 + $0xf0] sm:$0xfc]
        %v5410 = vld [vmem:[%s1224 + $0xf8] sm:$0xfc]
        %v5411 = vld [vmem:[%s1224 + $0x110] sm:$0x3]
        %v5412 = vld [vmem:[%s1224 + $0x118] sm:$0x3]
        %v5413 = vld [vmem:[%s1224 + $0x120] sm:$0xfc]
        %v5414 = vld [vmem:[%s1224 + $0x128] sm:$0xfc]
        %v5415 = vld [vmem:[%s1224 + $0x140] sm:$0x3]
        %v5416 = vld [vmem:[%s1224 + $0x148] sm:$0x3]
        %v5417 = vld [vmem:[%s1224 + $0x150] sm:$0xfc]
        %v5418 = vld [vmem:[%s1224 + $0x158] sm:$0xfc]
        %v5419 = vld [vmem:[%s1224 + $0x170] sm:$0x3]
        %v5420 = vld [vmem:[%s1224 + $0x178] sm:$0x3]
        %v5421 = vld [vmem:[%s1224 + $0x180] sm:$0xfc]
        %v5422 = vld [vmem:[%s1224 + $0x188] sm:$0xfc]
        %v5423 = vld [vmem:[%s1224 + $0x1a0] sm:$0x3]
        %v5424 = vld [vmem:[%s1224 + $0x1a8] sm:$0x3]
        %v5425 = vld [vmem:[%s1224 + $0x1b0] sm:$0xfc]
        %v5426 = vld [vmem:[%s1224 + $0x1b8] sm:$0xfc]
        %v5427 = vld [vmem:[%s1224 + $0x1d0] sm:$0x3]
        %v5428 = vld [vmem:[%s1224 + $0x1d8] sm:$0x3]
        %v5429 = vld [vmem:[%s1224 + $0x1e0] sm:$0xfc]
        %v5430 = vld [vmem:[%s1224 + $0x1e8] sm:$0xfc]
        %v5431 = vld [vmem:[%s1224 + $0x200] sm:$0x3]
        %v5432 = vld [vmem:[%s1224 + $0x208] sm:$0x3]
        %v5433 = vld [vmem:[%s1224 + $0x210] sm:$0xfc]
        %v5434 = vld [vmem:[%s1224 + $0x218] sm:$0xfc]
        %v5435 = vld [vmem:[%s1224 + $0x230] sm:$0x3]
        %v5436 = vld [vmem:[%s1224 + $0x238] sm:$0x3]
        %v5437 = vld [vmem:[%s1224 + $0x240] sm:$0xfc]
        %v5438 = vld [vmem:[%s1224 + $0x248] sm:$0xfc]
        %v5439 = vld [vmem:[%s1224 + $0x260] sm:$0x3]
        %v5440 = vld [vmem:[%s1224 + $0x268] sm:$0x3]
        %v5441 = vld [vmem:[%s1224 + $0x270] sm:$0xfc]
        %v5442 = vld [vmem:[%s1224 + $0x278] sm:$0xfc]
        %v5443 = vld [vmem:[%s1224 + $0x290] sm:$0x3]
        %v5444 = vld [vmem:[%s1224 + $0x298] sm:$0x3]
        %v5445 = vld [vmem:[%s1224 + $0x2a0] sm:$0xfc]
        %v5446 = vld [vmem:[%s1224 + $0x2a8] sm:$0xfc]
        %v5447 = vld [vmem:[%s1224 + $0x2c0] sm:$0x3]
        %v5448 = vld [vmem:[%s1224 + $0x2c8] sm:$0x3]
        %v5449 = vld [vmem:[%s1224 + $0x2d0] sm:$0xfc]
        %v5450 = vld [vmem:[%s1224 + $0x2d8] sm:$0xfc]
        %v5451 = vld [vmem:[%s1224 + $0x2f0] sm:$0x3]
        %v5452 = vld [vmem:[%s1224 + $0x2f8] sm:$0x3]
        %v5453 = vld [vmem:[%s1224 + $0x360] sm:$0xfc]
        %v5454 = vld [vmem:[%s1224 + $0x368] sm:$0xfc]
        %v5455 = vld [vmem:[%s1224 + $0x380] sm:$0x3]
        %v5456 = vld [vmem:[%s1224 + $0x388] sm:$0x3]
        %v5457 = vld [vmem:[%s1224 + $0x390] sm:$0xfc]
        %v5458 = vld [vmem:[%s1224 + $0x398] sm:$0xfc]
        %v5459 = vld [vmem:[%s1224 + $0x3b0] sm:$0x3]
        %v5460 = vld [vmem:[%s1224 + $0x3b8] sm:$0x3]
        %v5461 = vld [vmem:[%s1224 + $0x3c0] sm:$0xfc]
        %v5462 = vld [vmem:[%s1224 + $0x3c8] sm:$0xfc]
        %v5463 = vld [vmem:[%s1224 + $0x3e0] sm:$0x3]
        %v5464 = vld [vmem:[%s1224 + $0x3e8] sm:$0x3]
        %v5465 = vld [vmem:[%s1224 + $0x3f0] sm:$0xfc]
        %v5466 = vld [vmem:[%s1224 + $0x3f8] sm:$0xfc]
        %v5467 = vld [vmem:[%s1224 + $0x410] sm:$0x3]
        %v5468 = vld [vmem:[%s1224 + $0x418] sm:$0x3]
        %v5469 = vld [vmem:[%s1224 + $0x420] sm:$0xfc]
        %v5470 = vld [vmem:[%s1224 + $0x428] sm:$0xfc]
        %v5471 = vld [vmem:[%s1224 + $0x440] sm:$0x3]
        %v5472 = vld [vmem:[%s1224 + $0x448] sm:$0x3]
        %v5473 = vld [vmem:[%s1224 + $0x450] sm:$0xfc]
        %v5474 = vld [vmem:[%s1224 + $0x458] sm:$0xfc]
        %v5475 = vld [vmem:[%s1224 + $0x470] sm:$0x3]
        %v5476 = vld [vmem:[%s1224 + $0x478] sm:$0x3]
        %v5477 = vld [vmem:[%s1224 + $0x480] sm:$0xfc]
        %v5478 = vld [vmem:[%s1224 + $0x488] sm:$0xfc]
        %v5479 = vld [vmem:[%s1224 + $0x4a0] sm:$0x3]
        %v5480 = vld [vmem:[%s1224 + $0x4a8] sm:$0x3]
        %v5481 = vld [vmem:[%s1224 + $0x4b0] sm:$0xfc]
        %v5482 = vld [vmem:[%s1224 + $0x4b8] sm:$0xfc]
        %v5483 = vld [vmem:[%s1224 + $0x4d0] sm:$0x3]
        %v5484 = vld [vmem:[%s1224 + $0x4d8] sm:$0x3]
        %v5485 = vld [vmem:[%s1224 + $0x4e0] sm:$0xfc]
        %v5486 = vld [vmem:[%s1224 + $0x4e8] sm:$0xfc]
        %v5487 = vld [vmem:[%s1224 + $0x500] sm:$0x3]
        %v5488 = vld [vmem:[%s1224 + $0x508] sm:$0x3]
        %v5489 = vld [vmem:[%s1224 + $0x510] sm:$0xfc]
        %v5490 = vld [vmem:[%s1224 + $0x518] sm:$0xfc]
        %v5491 = vld [vmem:[%s1224 + $0x530] sm:$0x3]
        %v5492 = vld [vmem:[%s1224 + $0x538] sm:$0x3]
        %v5493 = vld [vmem:[%s1224 + $0x540] sm:$0xfc]
        %v5494 = vld [vmem:[%s1224 + $0x548] sm:$0xfc]
        %v5495 = vld [vmem:[%s1224 + $0x560] sm:$0x3]
        %v5496 = vld [vmem:[%s1224 + $0x568] sm:$0x3]
        %v5497 = vld [vmem:[%s1224 + $0x570] sm:$0xfc]
        %v5498 = vld [vmem:[%s1224 + $0x578] sm:$0xfc]
        %v5499 = vld [vmem:[%s1224 + $0x590] sm:$0x3]
        %v5500 = vld [vmem:[%s1224 + $0x598] sm:$0x3]
        %v5501 = vld [vmem:[%s1224 + $0x5a0] sm:$0xfc]
        %v5502 = vld [vmem:[%s1224 + $0x5a8] sm:$0xfc]
        %v5503 = vld [vmem:[%s1224 + $0x5c0] sm:$0x3]
        %v5504 = vld [vmem:[%s1224 + $0x5c8] sm:$0x3]
        %v5505 = vld [vmem:[%s1224 + $0x5d0] sm:$0xfc]
        %v5506 = vld [vmem:[%s1224 + $0x5d8] sm:$0xfc]
        %v5507 = vld [vmem:[%s1224 + $0x5f0] sm:$0x3]
        %v5508 = vld [vmem:[%s1224 + $0x5f8] sm:$0x3]
        %v5509 = vld [vmem:[%s1224 + $0x600] sm:$0xfc]
        %v5510 = vld [vmem:[%s1224 + $0x608] sm:$0xfc]
        %v5511 = vld [vmem:[%s1224 + $0x620] sm:$0x3]
        %v5512 = vld [vmem:[%s1224 + $0x628] sm:$0x3]
        %v5513 = vld [vmem:[%s1224 + $0x630] sm:$0xfc]
        %v5514 = vld [vmem:[%s1224 + $0x638] sm:$0xfc]
        %v5515 = vld [vmem:[%s1224 + $0x650] sm:$0x3]
        %v5516 = vld [vmem:[%s1224 + $0x658] sm:$0x3]
        %v5518 = vlaneseq
        %v5519 = vshrl.u32 %v5518, 7
        %v5520 = vsub.s32 0, %v5519
        %v5521 = vrot.slane %v5388, %v5520
        %v5522 = vlaneseq
        %v5523 = vshrl.u32 %v5522, 7
        %v5524 = vsub.s32 1, %v5523
        %v5525 = vrot.slane %v5388, %v5524
        %v5528 = vmul.f32 %v5389, %v5521
        %v5529 = vmul.f32 %v5390, %v5525
        %v5530 = vmul.f32 %v3893, %v5521
        %v5531 = vmul.f32 %v3894, %v5525
        %v5532 = vmul.f32 %v5391, %v5521
        %v5533 = vmul.f32 %v5392, %v5525
        %v5534 = vmul.f32 %v5393, %v5521
        %v5535 = vmul.f32 %v5394, %v5525
        %v5536 = vmul.f32 %v3897, %v5521
        %v5537 = vmul.f32 %v3898, %v5525
        %v5538 = vmul.f32 %v5395, %v5521
        %v5539 = vmul.f32 %v5396, %v5525
        %v5540 = vmul.f32 %v5397, %v5521
        %v5541 = vmul.f32 %v5398, %v5525
        %v5542 = vmul.f32 %v3901, %v5521
        %v5543 = vmul.f32 %v3902, %v5525
        %v5544 = vmul.f32 %v5399, %v5521
        %v5545 = vmul.f32 %v5400, %v5525
        %v5546 = vmul.f32 %v5401, %v5521
        %v5547 = vmul.f32 %v5402, %v5525
        %v5548 = vmul.f32 %v3905, %v5521
        %v5549 = vmul.f32 %v3906, %v5525
        %v5550 = vmul.f32 %v5403, %v5521
        %v5551 = vmul.f32 %v5404, %v5525
        %v5552 = vmul.f32 %v5405, %v5521
        %v5553 = vmul.f32 %v5406, %v5525
        %v5554 = vmul.f32 %v3909, %v5521
        %v5555 = vmul.f32 %v3910, %v5525
        %v5556 = vmul.f32 %v5407, %v5521
        %v5557 = vmul.f32 %v5408, %v5525
        %v5558 = vmul.f32 %v5409, %v5521
        %v5559 = vmul.f32 %v5410, %v5525
        %v5560 = vmul.f32 %v3913, %v5521
        %v5561 = vmul.f32 %v3914, %v5525
        %v5562 = vmul.f32 %v5411, %v5521
        %v5563 = vmul.f32 %v5412, %v5525
        %v5564 = vmul.f32 %v5413, %v5521
        %v5565 = vmul.f32 %v5414, %v5525
        %v5566 = vmul.f32 %v3917, %v5521
        %v5567 = vmul.f32 %v3918, %v5525
        %v5568 = vmul.f32 %v5415, %v5521
        %v5569 = vmul.f32 %v5416, %v5525
        %v5570 = vmul.f32 %v5417, %v5521
        %v5571 = vmul.f32 %v5418, %v5525
        %v5572 = vmul.f32 %v3921, %v5521
        %v5573 = vmul.f32 %v3922, %v5525
        %v5574 = vmul.f32 %v5419, %v5521
        %v5575 = vmul.f32 %v5420, %v5525
        %v5576 = vmul.f32 %v5421, %v5521
        %v5577 = vmul.f32 %v5422, %v5525
        %v5578 = vmul.f32 %v3925, %v5521
        %v5579 = vmul.f32 %v3926, %v5525
        %v5580 = vmul.f32 %v5423, %v5521
        %v5581 = vmul.f32 %v5424, %v5525
        %v5582 = vmul.f32 %v5425, %v5521
        %v5583 = vmul.f32 %v5426, %v5525
        %v5584 = vmul.f32 %v3929, %v5521
        %v5585 = vmul.f32 %v3930, %v5525
        %v5586 = vmul.f32 %v5427, %v5521
        %v5587 = vmul.f32 %v5428, %v5525
        %v5588 = vmul.f32 %v5429, %v5521
        %v5589 = vmul.f32 %v5430, %v5525
        %v5590 = vmul.f32 %v3933, %v5521
        %v5591 = vmul.f32 %v3934, %v5525
        %v5592 = vmul.f32 %v5431, %v5521
        %v5593 = vmul.f32 %v5432, %v5525
        %v5594 = vmul.f32 %v5433, %v5521
        %v5595 = vmul.f32 %v5434, %v5525
        %v5596 = vmul.f32 %v3937, %v5521
        %v5597 = vmul.f32 %v3938, %v5525
        %v5598 = vmul.f32 %v5435, %v5521
        %v5599 = vmul.f32 %v5436, %v5525
        %v5600 = vmul.f32 %v5437, %v5521
        %v5601 = vmul.f32 %v5438, %v5525
        %v5602 = vmul.f32 %v3941, %v5521
        %v5603 = vmul.f32 %v3942, %v5525
        %v5604 = vmul.f32 %v5439, %v5521
        %v5605 = vmul.f32 %v5440, %v5525
        %v5606 = vmul.f32 %v5441, %v5521
        %v5607 = vmul.f32 %v5442, %v5525
        %v5608 = vmul.f32 %v3945, %v5521
        %v5609 = vmul.f32 %v3946, %v5525
        %v5610 = vmul.f32 %v5443, %v5521
        %v5611 = vmul.f32 %v5444, %v5525
        %v5612 = vmul.f32 %v5445, %v5521
        %v5613 = vmul.f32 %v5446, %v5525
        %v5614 = vmul.f32 %v3949, %v5521
        %v5615 = vmul.f32 %v3950, %v5525
        %v5616 = vmul.f32 %v5447, %v5521
        %v5617 = vmul.f32 %v5448, %v5525
        %v5618 = vmul.f32 %v5449, %v5521
        %v5619 = vmul.f32 %v5450, %v5525
        %v5620 = vmul.f32 %v3953, %v5521
        %v5621 = vmul.f32 %v3954, %v5525
        %v5622 = vmul.f32 %v5451, %v5521
        %v5623 = vmul.f32 %v5452, %v5525
        %v5624 = vmul.f32 %v5453, %v5521
        %v5625 = vmul.f32 %v5454, %v5525
        %v5626 = vmul.f32 %v3957, %v5521
        %v5627 = vmul.f32 %v3958, %v5525
        %v5628 = vmul.f32 %v5455, %v5521
        %v5629 = vmul.f32 %v5456, %v5525
        %v5630 = vmul.f32 %v5457, %v5521
        %v5631 = vmul.f32 %v5458, %v5525
        %v5632 = vmul.f32 %v3961, %v5521
        %v5633 = vmul.f32 %v3962, %v5525
        %v5634 = vmul.f32 %v5459, %v5521
        %v5635 = vmul.f32 %v5460, %v5525
        %v5636 = vmul.f32 %v5461, %v5521
        %v5637 = vmul.f32 %v5462, %v5525
        %v5638 = vmul.f32 %v3965, %v5521
        %v5639 = vmul.f32 %v3966, %v5525
        %v5640 = vmul.f32 %v5463, %v5521
        %v5641 = vmul.f32 %v5464, %v5525
        %v5642 = vmul.f32 %v5465, %v5521
        %v5643 = vmul.f32 %v5466, %v5525
        %v5644 = vmul.f32 %v3969, %v5521
        %v5645 = vmul.f32 %v3970, %v5525
        %v5646 = vmul.f32 %v5467, %v5521
        %v5647 = vmul.f32 %v5468, %v5525
        %v5648 = vmul.f32 %v5469, %v5521
        %v5649 = vmul.f32 %v5470, %v5525
        %v5650 = vmul.f32 %v3973, %v5521
        %v5651 = vmul.f32 %v3974, %v5525
        %v5652 = vmul.f32 %v5471, %v5521
        %v5653 = vmul.f32 %v5472, %v5525
        %v5654 = vmul.f32 %v5473, %v5521
        %v5655 = vmul.f32 %v5474, %v5525
        %v5656 = vmul.f32 %v3977, %v5521
        %v5657 = vmul.f32 %v3978, %v5525
        %v5658 = vmul.f32 %v5475, %v5521
        %v5659 = vmul.f32 %v5476, %v5525
        %v5660 = vmul.f32 %v5477, %v5521
        %v5661 = vmul.f32 %v5478, %v5525
        %v5662 = vmul.f32 %v3981, %v5521
        %v5663 = vmul.f32 %v3982, %v5525
        %v5664 = vmul.f32 %v5479, %v5521
        %v5665 = vmul.f32 %v5480, %v5525
        %v5666 = vmul.f32 %v5481, %v5521
        %v5667 = vmul.f32 %v5482, %v5525
        %v5668 = vmul.f32 %v3985, %v5521
        %v5669 = vmul.f32 %v3986, %v5525
        %v5670 = vmul.f32 %v5483, %v5521
        %v5671 = vmul.f32 %v5484, %v5525
        %v5672 = vmul.f32 %v5485, %v5521
        %v5673 = vmul.f32 %v5486, %v5525
        %v5674 = vmul.f32 %v3989, %v5521
        %v5675 = vmul.f32 %v3990, %v5525
        %v5676 = vmul.f32 %v5487, %v5521
        %v5677 = vmul.f32 %v5488, %v5525
        %v5678 = vmul.f32 %v5489, %v5521
        %v5679 = vmul.f32 %v5490, %v5525
        %v5680 = vmul.f32 %v3993, %v5521
        %v5681 = vmul.f32 %v3994, %v5525
        %v5682 = vmul.f32 %v5491, %v5521
        %v5683 = vmul.f32 %v5492, %v5525
        %v5684 = vmul.f32 %v5493, %v5521
        %v5685 = vmul.f32 %v5494, %v5525
        %v5686 = vmul.f32 %v3997, %v5521
        %v5687 = vmul.f32 %v3998, %v5525
        %v5688 = vmul.f32 %v5495, %v5521
        %v5689 = vmul.f32 %v5496, %v5525
        %v5690 = vmul.f32 %v5497, %v5521
        %v5691 = vmul.f32 %v5498, %v5525
        %v5692 = vmul.f32 %v4001, %v5521
        %v5693 = vmul.f32 %v4002, %v5525
        %v5694 = vmul.f32 %v5499, %v5521
        %v5695 = vmul.f32 %v5500, %v5525
        %v5696 = vmul.f32 %v5501, %v5521
        %v5697 = vmul.f32 %v5502, %v5525
        %v5698 = vmul.f32 %v4005, %v5521
        %v5699 = vmul.f32 %v4006, %v5525
        %v5700 = vmul.f32 %v5503, %v5521
        %v5701 = vmul.f32 %v5504, %v5525
        %v5702 = vmul.f32 %v5505, %v5521
        %v5703 = vmul.f32 %v5506, %v5525
        %v5704 = vmul.f32 %v4009, %v5521
        %v5705 = vmul.f32 %v4010, %v5525
        %v5706 = vmul.f32 %v5507, %v5521
        %v5707 = vmul.f32 %v5508, %v5525
        %v5708 = vmul.f32 %v5509, %v5521
        %v5709 = vmul.f32 %v5510, %v5525
        %v5710 = vmul.f32 %v4013, %v5521
        %v5711 = vmul.f32 %v4014, %v5525
        %v5712 = vmul.f32 %v5511, %v5521
        %v5713 = vmul.f32 %v5512, %v5525
        %v5714 = vmul.f32 %v5513, %v5521
        %v5715 = vmul.f32 %v5514, %v5525
        %v5716 = vmul.f32 %v4017, %v5521
        %v5717 = vmul.f32 %v4018, %v5525
        %v5718 = vmul.f32 %v5515, %v5521
        %v5719 = vmul.f32 %v5516, %v5525
        %v5912 = vrot.slane %v5528, 2
        %v5913 = vrot.slane %v5530, 2
        %v5914 = vsel %vm3312, %v5912, %v5913
        %v5915 = vrot.slane %v5529, 2
        %v5916 = vrot.slane %v5531, 2
        %v5917 = vsel %vm3312, %v5915, %v5916
        %v5918 = vrot.slane %v5532, 2
        %v5919 = vsel %vm3312, %v5913, %v5918
        %v5920 = vrot.slane %v5533, 2
        %v5921 = vsel %vm3312, %v5916, %v5920
        %v5922 = vrot.slane %v5534, 2
        %v5923 = vrot.slane %v5536, 2
        %v5924 = vsel %vm3312, %v5922, %v5923
        %v5925 = vrot.slane %v5535, 2
        %v5926 = vrot.slane %v5537, 2
        %v5927 = vsel %vm3312, %v5925, %v5926
        %v5928 = vrot.slane %v5538, 2
        %v5929 = vsel %vm3312, %v5923, %v5928
        %v5930 = vrot.slane %v5539, 2
        %v5931 = vsel %vm3312, %v5926, %v5930
        %v5932 = vrot.slane %v5540, 2
        %v5933 = vrot.slane %v5542, 2
        %v5934 = vsel %vm3312, %v5932, %v5933
        %v5935 = vrot.slane %v5541, 2
        %v5936 = vrot.slane %v5543, 2
        %v5937 = vsel %vm3312, %v5935, %v5936
        %v5938 = vrot.slane %v5544, 2
        %v5939 = vsel %vm3312, %v5933, %v5938
        %v5940 = vrot.slane %v5545, 2
        %v5941 = vsel %vm3312, %v5936, %v5940
        %v5942 = vrot.slane %v5546, 2
        %v5943 = vrot.slane %v5548, 2
        %v5944 = vsel %vm3312, %v5942, %v5943
        %v5945 = vrot.slane %v5547, 2
        %v5946 = vrot.slane %v5549, 2
        %v5947 = vsel %vm3312, %v5945, %v5946
        %v5948 = vrot.slane %v5550, 2
        %v5949 = vsel %vm3312, %v5943, %v5948
        %v5950 = vrot.slane %v5551, 2
        %v5951 = vsel %vm3312, %v5946, %v5950
        %v5952 = vrot.slane %v5552, 2
        %v5953 = vrot.slane %v5554, 2
        %v5954 = vsel %vm3312, %v5952, %v5953
        %v5955 = vrot.slane %v5553, 2
        %v5956 = vrot.slane %v5555, 2
        %v5957 = vsel %vm3312, %v5955, %v5956
        %v5958 = vrot.slane %v5556, 2
        %v5959 = vsel %vm3312, %v5953, %v5958
        %v5960 = vrot.slane %v5557, 2
        %v5961 = vsel %vm3312, %v5956, %v5960
        %v5962 = vrot.slane %v5558, 2
        %v5963 = vrot.slane %v5560, 2
        %v5964 = vsel %vm3312, %v5962, %v5963
        %v5965 = vrot.slane %v5559, 2
        %v5966 = vrot.slane %v5561, 2
        %v5967 = vsel %vm3312, %v5965, %v5966
        %v5968 = vrot.slane %v5562, 2
        %v5969 = vsel %vm3312, %v5963, %v5968
        %v5970 = vrot.slane %v5563, 2
        %v5971 = vsel %vm3312, %v5966, %v5970
        %v5972 = vrot.slane %v5564, 2
        %v5973 = vrot.slane %v5566, 2
        %v5974 = vsel %vm3312, %v5972, %v5973
        %v5975 = vrot.slane %v5565, 2
        %v5976 = vrot.slane %v5567, 2
        %v5977 = vsel %vm3312, %v5975, %v5976
        %v5978 = vrot.slane %v5568, 2
        %v5979 = vsel %vm3312, %v5973, %v5978
        %v5980 = vrot.slane %v5569, 2
        %v5981 = vsel %vm3312, %v5976, %v5980
        %v5982 = vrot.slane %v5570, 2
        %v5983 = vrot.slane %v5572, 2
        %v5984 = vsel %vm3312, %v5982, %v5983
        %v5985 = vrot.slane %v5571, 2
        %v5986 = vrot.slane %v5573, 2
        %v5987 = vsel %vm3312, %v5985, %v5986
        %v5988 = vrot.slane %v5574, 2
        %v5989 = vsel %vm3312, %v5983, %v5988
        %v5990 = vrot.slane %v5575, 2
        %v5991 = vsel %vm3312, %v5986, %v5990
        %v5992 = vrot.slane %v5576, 2
        %v5993 = vrot.slane %v5578, 2
        %v5994 = vsel %vm3312, %v5992, %v5993
        %v5995 = vrot.slane %v5577, 2
        %v5996 = vrot.slane %v5579, 2
        %v5997 = vsel %vm3312, %v5995, %v5996
        %v5998 = vrot.slane %v5580, 2
        %v5999 = vsel %vm3312, %v5993, %v5998
        %v6000 = vrot.slane %v5581, 2
        %v6001 = vsel %vm3312, %v5996, %v6000
        %v6002 = vrot.slane %v5582, 2
        %v6003 = vrot.slane %v5584, 2
        %v6004 = vsel %vm3312, %v6002, %v6003
        %v6005 = vrot.slane %v5583, 2
        %v6006 = vrot.slane %v5585, 2
        %v6007 = vsel %vm3312, %v6005, %v6006
        %v6008 = vrot.slane %v5586, 2
        %v6009 = vsel %vm3312, %v6003, %v6008
        %v6010 = vrot.slane %v5587, 2
        %v6011 = vsel %vm3312, %v6006, %v6010
        %v6012 = vrot.slane %v5588, 2
        %v6013 = vrot.slane %v5590, 2
        %v6014 = vsel %vm3312, %v6012, %v6013
        %v6015 = vrot.slane %v5589, 2
        %v6016 = vrot.slane %v5591, 2
        %v6017 = vsel %vm3312, %v6015, %v6016
        %v6018 = vrot.slane %v5592, 2
        %v6019 = vsel %vm3312, %v6013, %v6018
        %v6020 = vrot.slane %v5593, 2
        %v6021 = vsel %vm3312, %v6016, %v6020
        %v6022 = vrot.slane %v5594, 2
        %v6023 = vrot.slane %v5596, 2
        %v6024 = vsel %vm3312, %v6022, %v6023
        %v6025 = vrot.slane %v5595, 2
        %v6026 = vrot.slane %v5597, 2
        %v6027 = vsel %vm3312, %v6025, %v6026
        %v6028 = vrot.slane %v5598, 2
        %v6029 = vsel %vm3312, %v6023, %v6028
        %v6030 = vrot.slane %v5599, 2
        %v6031 = vsel %vm3312, %v6026, %v6030
        %v6032 = vrot.slane %v5600, 2
        %v6033 = vrot.slane %v5602, 2
        %v6034 = vsel %vm3312, %v6032, %v6033
        %v6035 = vrot.slane %v5601, 2
        %v6036 = vrot.slane %v5603, 2
        %v6037 = vsel %vm3312, %v6035, %v6036
        %v6038 = vrot.slane %v5604, 2
        %v6039 = vsel %vm3312, %v6033, %v6038
        %v6040 = vrot.slane %v5605, 2
        %v6041 = vsel %vm3312, %v6036, %v6040
        %v6042 = vrot.slane %v5606, 2
        %v6043 = vrot.slane %v5608, 2
        %v6044 = vsel %vm3312, %v6042, %v6043
        %v6045 = vrot.slane %v5607, 2
        %v6046 = vrot.slane %v5609, 2
        %v6047 = vsel %vm3312, %v6045, %v6046
        %v6048 = vrot.slane %v5610, 2
        %v6049 = vsel %vm3312, %v6043, %v6048
        %v6050 = vrot.slane %v5611, 2
        %v6051 = vsel %vm3312, %v6046, %v6050
        %v6052 = vrot.slane %v5612, 2
        %v6053 = vrot.slane %v5614, 2
        %v6054 = vsel %vm3312, %v6052, %v6053
        %v6055 = vrot.slane %v5613, 2
        %v6056 = vrot.slane %v5615, 2
        %v6057 = vsel %vm3312, %v6055, %v6056
        %v6058 = vrot.slane %v5616, 2
        %v6059 = vsel %vm3312, %v6053, %v6058
        %v6060 = vrot.slane %v5617, 2
        %v6061 = vsel %vm3312, %v6056, %v6060
        %v6062 = vrot.slane %v5618, 2
        %v6063 = vrot.slane %v5620, 2
        %v6064 = vsel %vm3312, %v6062, %v6063
        %v6065 = vrot.slane %v5619, 2
        %v6066 = vrot.slane %v5621, 2
        %v6067 = vsel %vm3312, %v6065, %v6066
        %v6068 = vrot.slane %v5622, 2
        %v6069 = vsel %vm3312, %v6063, %v6068
        %v6070 = vrot.slane %v5623, 2
        %v6071 = vsel %vm3312, %v6066, %v6070
        %v6072 = vrot.slane %v5624, 2
        %v6073 = vrot.slane %v5626, 2
        %v6074 = vsel %vm3312, %v6072, %v6073
        %v6075 = vrot.slane %v5625, 2
        %v6076 = vrot.slane %v5627, 2
        %v6077 = vsel %vm3312, %v6075, %v6076
        %v6078 = vrot.slane %v5628, 2
        %v6079 = vsel %vm3312, %v6073, %v6078
        %v6080 = vrot.slane %v5629, 2
        %v6081 = vsel %vm3312, %v6076, %v6080
        %v6082 = vrot.slane %v5630, 2
        %v6083 = vrot.slane %v5632, 2
        %v6084 = vsel %vm3312, %v6082, %v6083
        %v6085 = vrot.slane %v5631, 2
        %v6086 = vrot.slane %v5633, 2
        %v6087 = vsel %vm3312, %v6085, %v6086
        %v6088 = vrot.slane %v5634, 2
        %v6089 = vsel %vm3312, %v6083, %v6088
        %v6090 = vrot.slane %v5635, 2
        %v6091 = vsel %vm3312, %v6086, %v6090
        %v6092 = vrot.slane %v5636, 2
        %v6093 = vrot.slane %v5638, 2
        %v6094 = vsel %vm3312, %v6092, %v6093
        %v6095 = vrot.slane %v5637, 2
        %v6096 = vrot.slane %v5639, 2
        %v6097 = vsel %vm3312, %v6095, %v6096
        %v6098 = vrot.slane %v5640, 2
        %v6099 = vsel %vm3312, %v6093, %v6098
        %v6100 = vrot.slane %v5641, 2
        %v6101 = vsel %vm3312, %v6096, %v6100
        %v6102 = vrot.slane %v5642, 2
        %v6103 = vrot.slane %v5644, 2
        %v6104 = vsel %vm3312, %v6102, %v6103
        %v6105 = vrot.slane %v5643, 2
        %v6106 = vrot.slane %v5645, 2
        %v6107 = vsel %vm3312, %v6105, %v6106
        %v6108 = vrot.slane %v5646, 2
        %v6109 = vsel %vm3312, %v6103, %v6108
        %v6110 = vrot.slane %v5647, 2
        %v6111 = vsel %vm3312, %v6106, %v6110
        %v6112 = vrot.slane %v5648, 2
        %v6113 = vrot.slane %v5650, 2
        %v6114 = vsel %vm3312, %v6112, %v6113
        %v6115 = vrot.slane %v5649, 2
        %v6116 = vrot.slane %v5651, 2
        %v6117 = vsel %vm3312, %v6115, %v6116
        %v6118 = vrot.slane %v5652, 2
        %v6119 = vsel %vm3312, %v6113, %v6118
        %v6120 = vrot.slane %v5653, 2
        %v6121 = vsel %vm3312, %v6116, %v6120
        %v6122 = vrot.slane %v5654, 2
        %v6123 = vrot.slane %v5656, 2
        %v6124 = vsel %vm3312, %v6122, %v6123
        %v6125 = vrot.slane %v5655, 2
        %v6126 = vrot.slane %v5657, 2
        %v6127 = vsel %vm3312, %v6125, %v6126
        %v6128 = vrot.slane %v5658, 2
        %v6129 = vsel %vm3312, %v6123, %v6128
        %v6130 = vrot.slane %v5659, 2
        %v6131 = vsel %vm3312, %v6126, %v6130
        %v6132 = vrot.slane %v5660, 2
        %v6133 = vrot.slane %v5662, 2
        %v6134 = vsel %vm3312, %v6132, %v6133
        %v6135 = vrot.slane %v5661, 2
        %v6136 = vrot.slane %v5663, 2
        %v6137 = vsel %vm3312, %v6135, %v6136
        %v6138 = vrot.slane %v5664, 2
        %v6139 = vsel %vm3312, %v6133, %v6138
        %v6140 = vrot.slane %v5665, 2
        %v6141 = vsel %vm3312, %v6136, %v6140
        %v6142 = vrot.slane %v5666, 2
        %v6143 = vrot.slane %v5668, 2
        %v6144 = vsel %vm3312, %v6142, %v6143
        %v6145 = vrot.slane %v5667, 2
        %v6146 = vrot.slane %v5669, 2
        %v6147 = vsel %vm3312, %v6145, %v6146
        %v6148 = vrot.slane %v5670, 2
        %v6149 = vsel %vm3312, %v6143, %v6148
        %v6150 = vrot.slane %v5671, 2
        %v6151 = vsel %vm3312, %v6146, %v6150
        %v6152 = vrot.slane %v5672, 2
        %v6153 = vrot.slane %v5674, 2
        %v6154 = vsel %vm3312, %v6152, %v6153
        %v6155 = vrot.slane %v5673, 2
        %v6156 = vrot.slane %v5675, 2
        %v6157 = vsel %vm3312, %v6155, %v6156
        %v6158 = vrot.slane %v5676, 2
        %v6159 = vsel %vm3312, %v6153, %v6158
        %v6160 = vrot.slane %v5677, 2
        %v6161 = vsel %vm3312, %v6156, %v6160
        %v6162 = vrot.slane %v5678, 2
        %v6163 = vrot.slane %v5680, 2
        %v6164 = vsel %vm3312, %v6162, %v6163
        %v6165 = vrot.slane %v5679, 2
        %v6166 = vrot.slane %v5681, 2
        %v6167 = vsel %vm3312, %v6165, %v6166
        %v6168 = vrot.slane %v5682, 2
        %v6169 = vsel %vm3312, %v6163, %v6168
        %v6170 = vrot.slane %v5683, 2
        %v6171 = vsel %vm3312, %v6166, %v6170
        %v6172 = vrot.slane %v5684, 2
        %v6173 = vrot.slane %v5686, 2
        %v6174 = vsel %vm3312, %v6172, %v6173
        %v6175 = vrot.slane %v5685, 2
        %v6176 = vrot.slane %v5687, 2
        %v6177 = vsel %vm3312, %v6175, %v6176
        %v6178 = vrot.slane %v5688, 2
        %v6179 = vsel %vm3312, %v6173, %v6178
        %v6180 = vrot.slane %v5689, 2
        %v6181 = vsel %vm3312, %v6176, %v6180
        %v6182 = vrot.slane %v5690, 2
        %v6183 = vrot.slane %v5692, 2
        %v6184 = vsel %vm3312, %v6182, %v6183
        %v6185 = vrot.slane %v5691, 2
        %v6186 = vrot.slane %v5693, 2
        %v6187 = vsel %vm3312, %v6185, %v6186
        %v6188 = vrot.slane %v5694, 2
        %v6189 = vsel %vm3312, %v6183, %v6188
        %v6190 = vrot.slane %v5695, 2
        %v6191 = vsel %vm3312, %v6186, %v6190
        %v6192 = vrot.slane %v5696, 2
        %v6193 = vrot.slane %v5698, 2
        %v6194 = vsel %vm3312, %v6192, %v6193
        %v6195 = vrot.slane %v5697, 2
        %v6196 = vrot.slane %v5699, 2
        %v6197 = vsel %vm3312, %v6195, %v6196
        %v6198 = vrot.slane %v5700, 2
        %v6199 = vsel %vm3312, %v6193, %v6198
        %v6200 = vrot.slane %v5701, 2
        %v6201 = vsel %vm3312, %v6196, %v6200
        %v6202 = vrot.slane %v5702, 2
        %v6203 = vrot.slane %v5704, 2
        %v6204 = vsel %vm3312, %v6202, %v6203
        %v6205 = vrot.slane %v5703, 2
        %v6206 = vrot.slane %v5705, 2
        %v6207 = vsel %vm3312, %v6205, %v6206
        %v6208 = vrot.slane %v5706, 2
        %v6209 = vsel %vm3312, %v6203, %v6208
        %v6210 = vrot.slane %v5707, 2
        %v6211 = vsel %vm3312, %v6206, %v6210
        %v6212 = vrot.slane %v5708, 2
        %v6213 = vrot.slane %v5710, 2
        %v6214 = vsel %vm3312, %v6212, %v6213
        %v6215 = vrot.slane %v5709, 2
        %v6216 = vrot.slane %v5711, 2
        %v6217 = vsel %vm3312, %v6215, %v6216
        %v6218 = vrot.slane %v5712, 2
        %v6219 = vsel %vm3312, %v6213, %v6218
        %v6220 = vrot.slane %v5713, 2
        %v6221 = vsel %vm3312, %v6216, %v6220
        %v6222 = vrot.slane %v5714, 2
        %v6223 = vrot.slane %v5716, 2
        %v6224 = vsel %vm3312, %v6222, %v6223
        %v6225 = vrot.slane %v5715, 2
        %v6226 = vrot.slane %v5717, 2
        %v6227 = vsel %vm3312, %v6225, %v6226
        %v6228 = vrot.slane %v5718, 2
        %v6229 = vsel %vm3312, %v6223, %v6228
        %v6230 = vrot.slane %v5719, 2
        %v6231 = vsel %vm3312, %v6226, %v6230
        %v6360 = vadd.f32 %v5259, %v5914
        %v6361 = vadd.f32 %v5260, %v5917
        %v6362 = vadd.f32 %v5261, %v5919
        %v6363 = vadd.f32 %v5262, %v5921
        %v6364 = vadd.f32 %v5263, %v5924
        %v6365 = vadd.f32 %v5264, %v5927
        %v6366 = vadd.f32 %v5265, %v5929
        %v6367 = vadd.f32 %v5266, %v5931
        %v6368 = vadd.f32 %v5267, %v5934
        %v6369 = vadd.f32 %v5268, %v5937
        %v6370 = vadd.f32 %v5269, %v5939
        %v6371 = vadd.f32 %v5270, %v5941
        %v6372 = vadd.f32 %v5271, %v5944
        %v6373 = vadd.f32 %v5272, %v5947
        %v6374 = vadd.f32 %v5273, %v5949
        %v6375 = vadd.f32 %v5274, %v5951
        %v6376 = vadd.f32 %v5275, %v5954
        %v6377 = vadd.f32 %v5276, %v5957
        %v6378 = vadd.f32 %v5277, %v5959
        %v6379 = vadd.f32 %v5278, %v5961
        %v6380 = vadd.f32 %v5279, %v5964
        %v6381 = vadd.f32 %v5280, %v5967
        %v6382 = vadd.f32 %v5281, %v5969
        %v6383 = vadd.f32 %v5282, %v5971
        %v6384 = vadd.f32 %v5283, %v5974
        %v6385 = vadd.f32 %v5284, %v5977
        %v6386 = vadd.f32 %v5285, %v5979
        %v6387 = vadd.f32 %v5286, %v5981
        %v6388 = vadd.f32 %v5287, %v5984
        %v6389 = vadd.f32 %v5288, %v5987
        %v6390 = vadd.f32 %v5289, %v5989
        %v6391 = vadd.f32 %v5290, %v5991
        %v6392 = vadd.f32 %v5291, %v5994
        %v6393 = vadd.f32 %v5292, %v5997
        %v6394 = vadd.f32 %v5293, %v5999
        %v6395 = vadd.f32 %v5294, %v6001
        %v6396 = vadd.f32 %v5295, %v6004
        %v6397 = vadd.f32 %v5296, %v6007
        %v6398 = vadd.f32 %v5297, %v6009
        %v6399 = vadd.f32 %v5298, %v6011
        %v6400 = vadd.f32 %v5299, %v6014
        %v6401 = vadd.f32 %v5300, %v6017
        %v6402 = vadd.f32 %v5301, %v6019
        %v6403 = vadd.f32 %v5302, %v6021
        %v6404 = vadd.f32 %v5303, %v6024
        %v6405 = vadd.f32 %v5304, %v6027
        %v6406 = vadd.f32 %v5305, %v6029
        %v6407 = vadd.f32 %v5306, %v6031
        %v6408 = vadd.f32 %v5307, %v6034
        %v6409 = vadd.f32 %v5308, %v6037
        %v6410 = vadd.f32 %v5309, %v6039
        %v6411 = vadd.f32 %v5310, %v6041
        %v6412 = vadd.f32 %v5311, %v6044
        %v6413 = vadd.f32 %v5312, %v6047
        %v6414 = vadd.f32 %v5313, %v6049
        %v6415 = vadd.f32 %v5314, %v6051
        %v6416 = vadd.f32 %v5315, %v6054
        %v6417 = vadd.f32 %v5316, %v6057
        %v6418 = vadd.f32 %v5317, %v6059
        %v6419 = vadd.f32 %v5318, %v6061
        %v6420 = vadd.f32 %v5319, %v6064
        %v6421 = vadd.f32 %v5320, %v6067
        %v6422 = vadd.f32 %v5321, %v6069
        %v6423 = vadd.f32 %v5322, %v6071
        %v6424 = vadd.f32 %v5323, %v6074
        %v6425 = vadd.f32 %v5324, %v6077
        %v6426 = vadd.f32 %v5325, %v6079
        %v6427 = vadd.f32 %v5326, %v6081
        %v6428 = vadd.f32 %v5327, %v6084
        %v6429 = vadd.f32 %v5328, %v6087
        %v6430 = vadd.f32 %v5329, %v6089
        %v6431 = vadd.f32 %v5330, %v6091
        %v6432 = vadd.f32 %v5331, %v6094
        %v6433 = vadd.f32 %v5332, %v6097
        %v6434 = vadd.f32 %v5333, %v6099
        %v6435 = vadd.f32 %v5334, %v6101
        %v6436 = vadd.f32 %v5335, %v6104
        %v6437 = vadd.f32 %v5336, %v6107
        %v6438 = vadd.f32 %v5337, %v6109
        %v6439 = vadd.f32 %v5338, %v6111
        %v6440 = vadd.f32 %v5339, %v6114
        %v6441 = vadd.f32 %v5340, %v6117
        %v6442 = vadd.f32 %v5341, %v6119
        %v6443 = vadd.f32 %v5342, %v6121
        %v6444 = vadd.f32 %v5343, %v6124
        %v6445 = vadd.f32 %v5344, %v6127
        %v6446 = vadd.f32 %v5345, %v6129
        %v6447 = vadd.f32 %v5346, %v6131
        %v6448 = vadd.f32 %v5347, %v6134
        %v6449 = vadd.f32 %v5348, %v6137
        %v6450 = vadd.f32 %v5349, %v6139
        %v6451 = vadd.f32 %v5350, %v6141
        %v6452 = vadd.f32 %v5351, %v6144
        %v6453 = vadd.f32 %v5352, %v6147
        %v6454 = vadd.f32 %v5353, %v6149
        %v6455 = vadd.f32 %v5354, %v6151
        %v6456 = vadd.f32 %v5355, %v6154
        %v6457 = vadd.f32 %v5356, %v6157
        %v6458 = vadd.f32 %v5357, %v6159
        %v6459 = vadd.f32 %v5358, %v6161
        %v6460 = vadd.f32 %v5359, %v6164
        %v6461 = vadd.f32 %v5360, %v6167
        %v6462 = vadd.f32 %v5361, %v6169
        %v6463 = vadd.f32 %v5362, %v6171
        %v6464 = vadd.f32 %v5363, %v6174
        %v6465 = vadd.f32 %v5364, %v6177
        %v6466 = vadd.f32 %v5365, %v6179
        %v6467 = vadd.f32 %v5366, %v6181
        %v6468 = vadd.f32 %v5367, %v6184
        %v6469 = vadd.f32 %v5368, %v6187
        %v6470 = vadd.f32 %v5369, %v6189
        %v6471 = vadd.f32 %v5370, %v6191
        %v6472 = vadd.f32 %v5371, %v6194
        %v6473 = vadd.f32 %v5372, %v6197
        %v6474 = vadd.f32 %v5373, %v6199
        %v6475 = vadd.f32 %v5374, %v6201
        %v6476 = vadd.f32 %v5375, %v6204
        %v6477 = vadd.f32 %v5376, %v6207
        %v6478 = vadd.f32 %v5377, %v6209
        %v6479 = vadd.f32 %v5378, %v6211
        %v6480 = vadd.f32 %v5379, %v6214
        %v6481 = vadd.f32 %v5380, %v6217
        %v6482 = vadd.f32 %v5381, %v6219
        %v6483 = vadd.f32 %v5382, %v6221
        %v6484 = vadd.f32 %v5383, %v6224
        %v6485 = vadd.f32 %v5384, %v6227
        %v6486 = vadd.f32 %v5385, %v6229
        %v6487 = vadd.f32 %v5386, %v6231
        %s6488 = scalar_lea.vmem %s330, 6
        %v6489 = vld [vmem:[%s6488] ss:$8 sm:$0x3]
        %s6490 = scalar_lea.vmem [#allocation2], 96
        %v6491 = vld [vmem:[%s6490] sm:$0xff]
        %v6492 = vld [vmem:[%s6490 + $0x8] sm:$0xff]
        %v6493 = vld [vmem:[%s6490 + $0x10] sm:$0xff]
        %v6494 = vld [vmem:[%s6490 + $0x18] sm:$0xff]
        %v6495 = vld [vmem:[%s6490 + $0x30] sm:$0xff]
        %v6496 = vld [vmem:[%s6490 + $0x38] sm:$0xff]
        %v6497 = vld [vmem:[%s6490 + $0x40] sm:$0xff]
        %v6498 = vld [vmem:[%s6490 + $0x48] sm:$0xff]
        %v6499 = vld [vmem:[%s6490 + $0x60] sm:$0xff]
        %v6500 = vld [vmem:[%s6490 + $0x68] sm:$0xff]
        %v6501 = vld [vmem:[%s6490 + $0x70] sm:$0xff]
        %v6502 = vld [vmem:[%s6490 + $0x78] sm:$0xff]
        %v6503 = vld [vmem:[%s6490 + $0x90] sm:$0xff]
        %v6504 = vld [vmem:[%s6490 + $0x98] sm:$0xff]
        %v6505 = vld [vmem:[%s6490 + $0xa0] sm:$0xff]
        %v6506 = vld [vmem:[%s6490 + $0xa8] sm:$0xff]
        %v6507 = vld [vmem:[%s6490 + $0xc0] sm:$0xff]
        %v6508 = vld [vmem:[%s6490 + $0xc8] sm:$0xff]
        %v6509 = vld [vmem:[%s6490 + $0xd0] sm:$0xff]
        %v6510 = vld [vmem:[%s6490 + $0xd8] sm:$0xff]
        %v6511 = vld [vmem:[%s6490 + $0xf0] sm:$0xff]
        %v6512 = vld [vmem:[%s6490 + $0xf8] sm:$0xff]
        %v6513 = vld [vmem:[%s6490 + $0x100] sm:$0xff]
        %v6514 = vld [vmem:[%s6490 + $0x108] sm:$0xff]
        %v6515 = vld [vmem:[%s6490 + $0x120] sm:$0xff]
        %v6516 = vld [vmem:[%s6490 + $0x128] sm:$0xff]
        %v6517 = vld [vmem:[%s6490 + $0x130] sm:$0xff]
        %v6518 = vld [vmem:[%s6490 + $0x138] sm:$0xff]
        %v6519 = vld [vmem:[%s6490 + $0x150] sm:$0xff]
        %v6520 = vld [vmem:[%s6490 + $0x158] sm:$0xff]
        %v6521 = vld [vmem:[%s6490 + $0x160] sm:$0xff]
        %v6522 = vld [vmem:[%s6490 + $0x168] sm:$0xff]
        %v6523 = vld [vmem:[%s6490 + $0x180] sm:$0xff]
        %v6524 = vld [vmem:[%s6490 + $0x188] sm:$0xff]
        %v6525 = vld [vmem:[%s6490 + $0x190] sm:$0xff]
        %v6526 = vld [vmem:[%s6490 + $0x198] sm:$0xff]
        %v6527 = vld [vmem:[%s6490 + $0x1b0] sm:$0xff]
        %v6528 = vld [vmem:[%s6490 + $0x1b8] sm:$0xff]
        %v6529 = vld [vmem:[%s6490 + $0x1c0] sm:$0xff]
        %v6530 = vld [vmem:[%s6490 + $0x1c8] sm:$0xff]
        %v6531 = vld [vmem:[%s6490 + $0x1e0] sm:$0xff]
        %v6532 = vld [vmem:[%s6490 + $0x1e8] sm:$0xff]
        %v6533 = vld [vmem:[%s6490 + $0x1f0] sm:$0xff]
        %v6534 = vld [vmem:[%s6490 + $0x1f8] sm:$0xff]
        %v6535 = vld [vmem:[%s6490 + $0x210] sm:$0xff]
        %v6536 = vld [vmem:[%s6490 + $0x218] sm:$0xff]
        %v6537 = vld [vmem:[%s6490 + $0x220] sm:$0xff]
        %v6538 = vld [vmem:[%s6490 + $0x228] sm:$0xff]
        %v6539 = vld [vmem:[%s6490 + $0x240] sm:$0xff]
        %v6540 = vld [vmem:[%s6490 + $0x248] sm:$0xff]
        %v6541 = vld [vmem:[%s6490 + $0x250] sm:$0xff]
        %v6542 = vld [vmem:[%s6490 + $0x258] sm:$0xff]
        %v6543 = vld [vmem:[%s6490 + $0x270] sm:$0xff]
        %v6544 = vld [vmem:[%s6490 + $0x278] sm:$0xff]
        %v6545 = vld [vmem:[%s6490 + $0x280] sm:$0xff]
        %v6546 = vld [vmem:[%s6490 + $0x288] sm:$0xff]
        %v6547 = vld [vmem:[%s6490 + $0x2a0] sm:$0xff]
        %v6548 = vld [vmem:[%s6490 + $0x2a8] sm:$0xff]
        %v6549 = vld [vmem:[%s6490 + $0x2b0] sm:$0xff]
        %v6550 = vld [vmem:[%s6490 + $0x2b8] sm:$0xff]
        %v6551 = vld [vmem:[%s6490 + $0x2d0] sm:$0xff]
        %v6552 = vld [vmem:[%s6490 + $0x2d8] sm:$0xff]
        %v6553 = vld [vmem:[%s6490 + $0x2e0] sm:$0xff]
        %v6554 = vld [vmem:[%s6490 + $0x2e8] sm:$0xff]
        %v6555 = vld [vmem:[%s6490 + $0x360] sm:$0xff]
        %v6556 = vld [vmem:[%s6490 + $0x368] sm:$0xff]
        %v6557 = vld [vmem:[%s6490 + $0x370] sm:$0xff]
        %v6558 = vld [vmem:[%s6490 + $0x378] sm:$0xff]
        %v6559 = vld [vmem:[%s6490 + $0x390] sm:$0xff]
        %v6560 = vld [vmem:[%s6490 + $0x398] sm:$0xff]
        %v6561 = vld [vmem:[%s6490 + $0x3a0] sm:$0xff]
        %v6562 = vld [vmem:[%s6490 + $0x3a8] sm:$0xff]
        %v6563 = vld [vmem:[%s6490 + $0x3c0] sm:$0xff]
        %v6564 = vld [vmem:[%s6490 + $0x3c8] sm:$0xff]
        %v6565 = vld [vmem:[%s6490 + $0x3d0] sm:$0xff]
        %v6566 = vld [vmem:[%s6490 + $0x3d8] sm:$0xff]
        %v6567 = vld [vmem:[%s6490 + $0x3f0] sm:$0xff]
        %v6568 = vld [vmem:[%s6490 + $0x3f8] sm:$0xff]
        %v6569 = vld [vmem:[%s6490 + $0x400] sm:$0xff]
        %v6570 = vld [vmem:[%s6490 + $0x408] sm:$0xff]
        %v6571 = vld [vmem:[%s6490 + $0x420] sm:$0xff]
        %v6572 = vld [vmem:[%s6490 + $0x428] sm:$0xff]
        %v6573 = vld [vmem:[%s6490 + $0x430] sm:$0xff]
        %v6574 = vld [vmem:[%s6490 + $0x438] sm:$0xff]
        %v6575 = vld [vmem:[%s6490 + $0x450] sm:$0xff]
        %v6576 = vld [vmem:[%s6490 + $0x458] sm:$0xff]
        %v6577 = vld [vmem:[%s6490 + $0x460] sm:$0xff]
        %v6578 = vld [vmem:[%s6490 + $0x468] sm:$0xff]
        %v6579 = vld [vmem:[%s6490 + $0x480] sm:$0xff]
        %v6580 = vld [vmem:[%s6490 + $0x488] sm:$0xff]
        %v6581 = vld [vmem:[%s6490 + $0x490] sm:$0xff]
        %v6582 = vld [vmem:[%s6490 + $0x498] sm:$0xff]
        %v6583 = vld [vmem:[%s6490 + $0x4b0] sm:$0xff]
        %v6584 = vld [vmem:[%s6490 + $0x4b8] sm:$0xff]
        %v6585 = vld [vmem:[%s6490 + $0x4c0] sm:$0xff]
        %v6586 = vld [vmem:[%s6490 + $0x4c8] sm:$0xff]
        %v6587 = vld [vmem:[%s6490 + $0x4e0] sm:$0xff]
        %v6588 = vld [vmem:[%s6490 + $0x4e8] sm:$0xff]
        %v6589 = vld [vmem:[%s6490 + $0x4f0] sm:$0xff]
        %v6590 = vld [vmem:[%s6490 + $0x4f8] sm:$0xff]
        %v6591 = vld [vmem:[%s6490 + $0x510] sm:$0xff]
        %v6592 = vld [vmem:[%s6490 + $0x518] sm:$0xff]
        %v6593 = vld [vmem:[%s6490 + $0x520] sm:$0xff]
        %v6594 = vld [vmem:[%s6490 + $0x528] sm:$0xff]
        %v6595 = vld [vmem:[%s6490 + $0x540] sm:$0xff]
        %v6596 = vld [vmem:[%s6490 + $0x548] sm:$0xff]
        %v6597 = vld [vmem:[%s6490 + $0x550] sm:$0xff]
        %v6598 = vld [vmem:[%s6490 + $0x558] sm:$0xff]
        %v6599 = vld [vmem:[%s6490 + $0x570] sm:$0xff]
        %v6600 = vld [vmem:[%s6490 + $0x578] sm:$0xff]
        %v6601 = vld [vmem:[%s6490 + $0x580] sm:$0xff]
        %v6602 = vld [vmem:[%s6490 + $0x588] sm:$0xff]
        %v6603 = vld [vmem:[%s6490 + $0x5a0] sm:$0xff]
        %v6604 = vld [vmem:[%s6490 + $0x5a8] sm:$0xff]
        %v6605 = vld [vmem:[%s6490 + $0x5b0] sm:$0xff]
        %v6606 = vld [vmem:[%s6490 + $0x5b8] sm:$0xff]
        %v6607 = vld [vmem:[%s6490 + $0x5d0] sm:$0xff]
        %v6608 = vld [vmem:[%s6490 + $0x5d8] sm:$0xff]
        %v6609 = vld [vmem:[%s6490 + $0x5e0] sm:$0xff]
        %v6610 = vld [vmem:[%s6490 + $0x5e8] sm:$0xff]
        %v6611 = vld [vmem:[%s6490 + $0x600] sm:$0xff]
        %v6612 = vld [vmem:[%s6490 + $0x608] sm:$0xff]
        %v6613 = vld [vmem:[%s6490 + $0x610] sm:$0xff]
        %v6614 = vld [vmem:[%s6490 + $0x618] sm:$0xff]
        %v6615 = vld [vmem:[%s6490 + $0x630] sm:$0xff]
        %v6616 = vld [vmem:[%s6490 + $0x638] sm:$0xff]
        %v6617 = vld [vmem:[%s6490 + $0x640] sm:$0xff]
        %v6618 = vld [vmem:[%s6490 + $0x648] sm:$0xff]
        %v6620 = vlaneseq
        %v6621 = vshrl.u32 %v6620, 7
        %v6622 = vsub.s32 0, %v6621
        %v6623 = vrot.slane %v6489, %v6622
        %v6624 = vlaneseq
        %v6625 = vshrl.u32 %v6624, 7
        %v6626 = vsub.s32 1, %v6625
        %v6627 = vrot.slane %v6489, %v6626
        %v6630 = vmul.f32 %v6491, %v6623
        %v6631 = vmul.f32 %v6492, %v6627
        %v6632 = vmul.f32 %v6493, %v6623
        %v6633 = vmul.f32 %v6494, %v6627
        %v6634 = vmul.f32 %v6495, %v6623
        %v6635 = vmul.f32 %v6496, %v6627
        %v6636 = vmul.f32 %v6497, %v6623
        %v6637 = vmul.f32 %v6498, %v6627
        %v6638 = vmul.f32 %v6499, %v6623
        %v6639 = vmul.f32 %v6500, %v6627
        %v6640 = vmul.f32 %v6501, %v6623
        %v6641 = vmul.f32 %v6502, %v6627
        %v6642 = vmul.f32 %v6503, %v6623
        %v6643 = vmul.f32 %v6504, %v6627
        %v6644 = vmul.f32 %v6505, %v6623
        %v6645 = vmul.f32 %v6506, %v6627
        %v6646 = vmul.f32 %v6507, %v6623
        %v6647 = vmul.f32 %v6508, %v6627
        %v6648 = vmul.f32 %v6509, %v6623
        %v6649 = vmul.f32 %v6510, %v6627
        %v6650 = vmul.f32 %v6511, %v6623
        %v6651 = vmul.f32 %v6512, %v6627
        %v6652 = vmul.f32 %v6513, %v6623
        %v6653 = vmul.f32 %v6514, %v6627
        %v6654 = vmul.f32 %v6515, %v6623
        %v6655 = vmul.f32 %v6516, %v6627
        %v6656 = vmul.f32 %v6517, %v6623
        %v6657 = vmul.f32 %v6518, %v6627
        %v6658 = vmul.f32 %v6519, %v6623
        %v6659 = vmul.f32 %v6520, %v6627
        %v6660 = vmul.f32 %v6521, %v6623
        %v6661 = vmul.f32 %v6522, %v6627
        %v6662 = vmul.f32 %v6523, %v6623
        %v6663 = vmul.f32 %v6524, %v6627
        %v6664 = vmul.f32 %v6525, %v6623
        %v6665 = vmul.f32 %v6526, %v6627
        %v6666 = vmul.f32 %v6527, %v6623
        %v6667 = vmul.f32 %v6528, %v6627
        %v6668 = vmul.f32 %v6529, %v6623
        %v6669 = vmul.f32 %v6530, %v6627
        %v6670 = vmul.f32 %v6531, %v6623
        %v6671 = vmul.f32 %v6532, %v6627
        %v6672 = vmul.f32 %v6533, %v6623
        %v6673 = vmul.f32 %v6534, %v6627
        %v6674 = vmul.f32 %v6535, %v6623
        %v6675 = vmul.f32 %v6536, %v6627
        %v6676 = vmul.f32 %v6537, %v6623
        %v6677 = vmul.f32 %v6538, %v6627
        %v6678 = vmul.f32 %v6539, %v6623
        %v6679 = vmul.f32 %v6540, %v6627
        %v6680 = vmul.f32 %v6541, %v6623
        %v6681 = vmul.f32 %v6542, %v6627
        %v6682 = vmul.f32 %v6543, %v6623
        %v6683 = vmul.f32 %v6544, %v6627
        %v6684 = vmul.f32 %v6545, %v6623
        %v6685 = vmul.f32 %v6546, %v6627
        %v6686 = vmul.f32 %v6547, %v6623
        %v6687 = vmul.f32 %v6548, %v6627
        %v6688 = vmul.f32 %v6549, %v6623
        %v6689 = vmul.f32 %v6550, %v6627
        %v6690 = vmul.f32 %v6551, %v6623
        %v6691 = vmul.f32 %v6552, %v6627
        %v6692 = vmul.f32 %v6553, %v6623
        %v6693 = vmul.f32 %v6554, %v6627
        %v6694 = vmul.f32 %v6555, %v6623
        %v6695 = vmul.f32 %v6556, %v6627
        %v6696 = vmul.f32 %v6557, %v6623
        %v6697 = vmul.f32 %v6558, %v6627
        %v6698 = vmul.f32 %v6559, %v6623
        %v6699 = vmul.f32 %v6560, %v6627
        %v6700 = vmul.f32 %v6561, %v6623
        %v6701 = vmul.f32 %v6562, %v6627
        %v6702 = vmul.f32 %v6563, %v6623
        %v6703 = vmul.f32 %v6564, %v6627
        %v6704 = vmul.f32 %v6565, %v6623
        %v6705 = vmul.f32 %v6566, %v6627
        %v6706 = vmul.f32 %v6567, %v6623
        %v6707 = vmul.f32 %v6568, %v6627
        %v6708 = vmul.f32 %v6569, %v6623
        %v6709 = vmul.f32 %v6570, %v6627
        %v6710 = vmul.f32 %v6571, %v6623
        %v6711 = vmul.f32 %v6572, %v6627
        %v6712 = vmul.f32 %v6573, %v6623
        %v6713 = vmul.f32 %v6574, %v6627
        %v6714 = vmul.f32 %v6575, %v6623
        %v6715 = vmul.f32 %v6576, %v6627
        %v6716 = vmul.f32 %v6577, %v6623
        %v6717 = vmul.f32 %v6578, %v6627
        %v6718 = vmul.f32 %v6579, %v6623
        %v6719 = vmul.f32 %v6580, %v6627
        %v6720 = vmul.f32 %v6581, %v6623
        %v6721 = vmul.f32 %v6582, %v6627
        %v6722 = vmul.f32 %v6583, %v6623
        %v6723 = vmul.f32 %v6584, %v6627
        %v6724 = vmul.f32 %v6585, %v6623
        %v6725 = vmul.f32 %v6586, %v6627
        %v6726 = vmul.f32 %v6587, %v6623
        %v6727 = vmul.f32 %v6588, %v6627
        %v6728 = vmul.f32 %v6589, %v6623
        %v6729 = vmul.f32 %v6590, %v6627
        %v6730 = vmul.f32 %v6591, %v6623
        %v6731 = vmul.f32 %v6592, %v6627
        %v6732 = vmul.f32 %v6593, %v6623
        %v6733 = vmul.f32 %v6594, %v6627
        %v6734 = vmul.f32 %v6595, %v6623
        %v6735 = vmul.f32 %v6596, %v6627
        %v6736 = vmul.f32 %v6597, %v6623
        %v6737 = vmul.f32 %v6598, %v6627
        %v6738 = vmul.f32 %v6599, %v6623
        %v6739 = vmul.f32 %v6600, %v6627
        %v6740 = vmul.f32 %v6601, %v6623
        %v6741 = vmul.f32 %v6602, %v6627
        %v6742 = vmul.f32 %v6603, %v6623
        %v6743 = vmul.f32 %v6604, %v6627
        %v6744 = vmul.f32 %v6605, %v6623
        %v6745 = vmul.f32 %v6606, %v6627
        %v6746 = vmul.f32 %v6607, %v6623
        %v6747 = vmul.f32 %v6608, %v6627
        %v6748 = vmul.f32 %v6609, %v6623
        %v6749 = vmul.f32 %v6610, %v6627
        %v6750 = vmul.f32 %v6611, %v6623
        %v6751 = vmul.f32 %v6612, %v6627
        %v6752 = vmul.f32 %v6613, %v6623
        %v6753 = vmul.f32 %v6614, %v6627
        %v6754 = vmul.f32 %v6615, %v6623
        %v6755 = vmul.f32 %v6616, %v6627
        %v6756 = vmul.f32 %v6617, %v6623
        %v6757 = vmul.f32 %v6618, %v6627
        %v6758 = vadd.f32 %v6360, %v6630
        %v6759 = vadd.f32 %v6361, %v6631
        %v6760 = vadd.f32 %v6362, %v6632
        %v6761 = vadd.f32 %v6363, %v6633
        %v6762 = vadd.f32 %v6364, %v6634
        %v6763 = vadd.f32 %v6365, %v6635
        %v6764 = vadd.f32 %v6366, %v6636
        %v6765 = vadd.f32 %v6367, %v6637
        %v6766 = vadd.f32 %v6368, %v6638
        %v6767 = vadd.f32 %v6369, %v6639
        %v6768 = vadd.f32 %v6370, %v6640
        %v6769 = vadd.f32 %v6371, %v6641
        %v6770 = vadd.f32 %v6372, %v6642
        %v6771 = vadd.f32 %v6373, %v6643
        %v6772 = vadd.f32 %v6374, %v6644
        %v6773 = vadd.f32 %v6375, %v6645
        %v6774 = vadd.f32 %v6376, %v6646
        %v6775 = vadd.f32 %v6377, %v6647
        %v6776 = vadd.f32 %v6378, %v6648
        %v6777 = vadd.f32 %v6379, %v6649
        %v6778 = vadd.f32 %v6380, %v6650
        %v6779 = vadd.f32 %v6381, %v6651
        %v6780 = vadd.f32 %v6382, %v6652
        %v6781 = vadd.f32 %v6383, %v6653
        %v6782 = vadd.f32 %v6384, %v6654
        %v6783 = vadd.f32 %v6385, %v6655
        %v6784 = vadd.f32 %v6386, %v6656
        %v6785 = vadd.f32 %v6387, %v6657
        %v6786 = vadd.f32 %v6388, %v6658
        %v6787 = vadd.f32 %v6389, %v6659
        %v6788 = vadd.f32 %v6390, %v6660
        %v6789 = vadd.f32 %v6391, %v6661
        %v6790 = vadd.f32 %v6392, %v6662
        %v6791 = vadd.f32 %v6393, %v6663
        %v6792 = vadd.f32 %v6394, %v6664
        %v6793 = vadd.f32 %v6395, %v6665
        %v6794 = vadd.f32 %v6396, %v6666
        %v6795 = vadd.f32 %v6397, %v6667
        %v6796 = vadd.f32 %v6398, %v6668
        %v6797 = vadd.f32 %v6399, %v6669
        %v6798 = vadd.f32 %v6400, %v6670
        %v6799 = vadd.f32 %v6401, %v6671
        %v6800 = vadd.f32 %v6402, %v6672
        %v6801 = vadd.f32 %v6403, %v6673
        %v6802 = vadd.f32 %v6404, %v6674
        %v6803 = vadd.f32 %v6405, %v6675
        %v6804 = vadd.f32 %v6406, %v6676
        %v6805 = vadd.f32 %v6407, %v6677
        %v6806 = vadd.f32 %v6408, %v6678
        %v6807 = vadd.f32 %v6409, %v6679
        %v6808 = vadd.f32 %v6410, %v6680
        %v6809 = vadd.f32 %v6411, %v6681
        %v6810 = vadd.f32 %v6412, %v6682
        %v6811 = vadd.f32 %v6413, %v6683
        %v6812 = vadd.f32 %v6414, %v6684
        %v6813 = vadd.f32 %v6415, %v6685
        %v6814 = vadd.f32 %v6416, %v6686
        %v6815 = vadd.f32 %v6417, %v6687
        %v6816 = vadd.f32 %v6418, %v6688
        %v6817 = vadd.f32 %v6419, %v6689
        %v6818 = vadd.f32 %v6420, %v6690
        %v6819 = vadd.f32 %v6421, %v6691
        %v6820 = vadd.f32 %v6422, %v6692
        %v6821 = vadd.f32 %v6423, %v6693
        %v6822 = vadd.f32 %v6424, %v6694
        %v6823 = vadd.f32 %v6425, %v6695
        %v6824 = vadd.f32 %v6426, %v6696
        %v6825 = vadd.f32 %v6427, %v6697
        %v6826 = vadd.f32 %v6428, %v6698
        %v6827 = vadd.f32 %v6429, %v6699
        %v6828 = vadd.f32 %v6430, %v6700
        %v6829 = vadd.f32 %v6431, %v6701
        %v6830 = vadd.f32 %v6432, %v6702
        %v6831 = vadd.f32 %v6433, %v6703
        %v6832 = vadd.f32 %v6434, %v6704
        %v6833 = vadd.f32 %v6435, %v6705
        %v6834 = vadd.f32 %v6436, %v6706
        %v6835 = vadd.f32 %v6437, %v6707
        %v6836 = vadd.f32 %v6438, %v6708
        %v6837 = vadd.f32 %v6439, %v6709
        %v6838 = vadd.f32 %v6440, %v6710
        %v6839 = vadd.f32 %v6441, %v6711
        %v6840 = vadd.f32 %v6442, %v6712
        %v6841 = vadd.f32 %v6443, %v6713
        %v6842 = vadd.f32 %v6444, %v6714
        %v6843 = vadd.f32 %v6445, %v6715
        %v6844 = vadd.f32 %v6446, %v6716
        %v6845 = vadd.f32 %v6447, %v6717
        %v6846 = vadd.f32 %v6448, %v6718
        %v6847 = vadd.f32 %v6449, %v6719
        %v6848 = vadd.f32 %v6450, %v6720
        %v6849 = vadd.f32 %v6451, %v6721
        %v6850 = vadd.f32 %v6452, %v6722
        %v6851 = vadd.f32 %v6453, %v6723
        %v6852 = vadd.f32 %v6454, %v6724
        %v6853 = vadd.f32 %v6455, %v6725
        %v6854 = vadd.f32 %v6456, %v6726
        %v6855 = vadd.f32 %v6457, %v6727
        %v6856 = vadd.f32 %v6458, %v6728
        %v6857 = vadd.f32 %v6459, %v6729
        %v6858 = vadd.f32 %v6460, %v6730
        %v6859 = vadd.f32 %v6461, %v6731
        %v6860 = vadd.f32 %v6462, %v6732
        %v6861 = vadd.f32 %v6463, %v6733
        %v6862 = vadd.f32 %v6464, %v6734
        %v6863 = vadd.f32 %v6465, %v6735
        %v6864 = vadd.f32 %v6466, %v6736
        %v6865 = vadd.f32 %v6467, %v6737
        %v6866 = vadd.f32 %v6468, %v6738
        %v6867 = vadd.f32 %v6469, %v6739
        %v6868 = vadd.f32 %v6470, %v6740
        %v6869 = vadd.f32 %v6471, %v6741
        %v6870 = vadd.f32 %v6472, %v6742
        %v6871 = vadd.f32 %v6473, %v6743
        %v6872 = vadd.f32 %v6474, %v6744
        %v6873 = vadd.f32 %v6475, %v6745
        %v6874 = vadd.f32 %v6476, %v6746
        %v6875 = vadd.f32 %v6477, %v6747
        %v6876 = vadd.f32 %v6478, %v6748
        %v6877 = vadd.f32 %v6479, %v6749
        %v6878 = vadd.f32 %v6480, %v6750
        %v6879 = vadd.f32 %v6481, %v6751
        %v6880 = vadd.f32 %v6482, %v6752
        %v6881 = vadd.f32 %v6483, %v6753
        %v6882 = vadd.f32 %v6484, %v6754
        %v6883 = vadd.f32 %v6485, %v6755
        %v6884 = vadd.f32 %v6486, %v6756
        %v6885 = vadd.f32 %v6487, %v6757
        %s6886 = scalar_lea.vmem %s330, 7
        %v6887 = vld [vmem:[%s6886] ss:$8 sm:$0x3]
        %v6888 = vld [vmem:[%s6490] sm:$0xfe]
        %v6889 = vld [vmem:[%s6490 + $0x8] sm:$0xfe]
        %v6890 = vld [vmem:[%s6490 + $0x20] sm:$0x1]
        %v6891 = vld [vmem:[%s6490 + $0x28] sm:$0x1]
        %v6892 = vld [vmem:[%s6490 + $0x30] sm:$0xfe]
        %v6893 = vld [vmem:[%s6490 + $0x38] sm:$0xfe]
        %v6894 = vld [vmem:[%s6490 + $0x50] sm:$0x1]
        %v6895 = vld [vmem:[%s6490 + $0x58] sm:$0x1]
        %v6896 = vld [vmem:[%s6490 + $0x60] sm:$0xfe]
        %v6897 = vld [vmem:[%s6490 + $0x68] sm:$0xfe]
        %v6898 = vld [vmem:[%s6490 + $0x80] sm:$0x1]
        %v6899 = vld [vmem:[%s6490 + $0x88] sm:$0x1]
        %v6900 = vld [vmem:[%s6490 + $0x90] sm:$0xfe]
        %v6901 = vld [vmem:[%s6490 + $0x98] sm:$0xfe]
        %v6902 = vld [vmem:[%s6490 + $0xb0] sm:$0x1]
        %v6903 = vld [vmem:[%s6490 + $0xb8] sm:$0x1]
        %v6904 = vld [vmem:[%s6490 + $0xc0] sm:$0xfe]
        %v6905 = vld [vmem:[%s6490 + $0xc8] sm:$0xfe]
        %v6906 = vld [vmem:[%s6490 + $0xe0] sm:$0x1]
        %v6907 = vld [vmem:[%s6490 + $0xe8] sm:$0x1]
        %v6908 = vld [vmem:[%s6490 + $0xf0] sm:$0xfe]
        %v6909 = vld [vmem:[%s6490 + $0xf8] sm:$0xfe]
        %v6910 = vld [vmem:[%s6490 + $0x110] sm:$0x1]
        %v6911 = vld [vmem:[%s6490 + $0x118] sm:$0x1]
        %v6912 = vld [vmem:[%s6490 + $0x120] sm:$0xfe]
        %v6913 = vld [vmem:[%s6490 + $0x128] sm:$0xfe]
        %v6914 = vld [vmem:[%s6490 + $0x140] sm:$0x1]
        %v6915 = vld [vmem:[%s6490 + $0x148] sm:$0x1]
        %v6916 = vld [vmem:[%s6490 + $0x150] sm:$0xfe]
        %v6917 = vld [vmem:[%s6490 + $0x158] sm:$0xfe]
        %v6918 = vld [vmem:[%s6490 + $0x170] sm:$0x1]
        %v6919 = vld [vmem:[%s6490 + $0x178] sm:$0x1]
        %v6920 = vld [vmem:[%s6490 + $0x180] sm:$0xfe]
        %v6921 = vld [vmem:[%s6490 + $0x188] sm:$0xfe]
        %v6922 = vld [vmem:[%s6490 + $0x1a0] sm:$0x1]
        %v6923 = vld [vmem:[%s6490 + $0x1a8] sm:$0x1]
        %v6924 = vld [vmem:[%s6490 + $0x1b0] sm:$0xfe]
        %v6925 = vld [vmem:[%s6490 + $0x1b8] sm:$0xfe]
        %v6926 = vld [vmem:[%s6490 + $0x1d0] sm:$0x1]
        %v6927 = vld [vmem:[%s6490 + $0x1d8] sm:$0x1]
        %v6928 = vld [vmem:[%s6490 + $0x1e0] sm:$0xfe]
        %v6929 = vld [vmem:[%s6490 + $0x1e8] sm:$0xfe]
        %v6930 = vld [vmem:[%s6490 + $0x200] sm:$0x1]
        %v6931 = vld [vmem:[%s6490 + $0x208] sm:$0x1]
        %v6932 = vld [vmem:[%s6490 + $0x210] sm:$0xfe]
        %v6933 = vld [vmem:[%s6490 + $0x218] sm:$0xfe]
        %v6934 = vld [vmem:[%s6490 + $0x230] sm:$0x1]
        %v6935 = vld [vmem:[%s6490 + $0x238] sm:$0x1]
        %v6936 = vld [vmem:[%s6490 + $0x240] sm:$0xfe]
        %v6937 = vld [vmem:[%s6490 + $0x248] sm:$0xfe]
        %v6938 = vld [vmem:[%s6490 + $0x260] sm:$0x1]
        %v6939 = vld [vmem:[%s6490 + $0x268] sm:$0x1]
        %v6940 = vld [vmem:[%s6490 + $0x270] sm:$0xfe]
        %v6941 = vld [vmem:[%s6490 + $0x278] sm:$0xfe]
        %v6942 = vld [vmem:[%s6490 + $0x290] sm:$0x1]
        %v6943 = vld [vmem:[%s6490 + $0x298] sm:$0x1]
        %v6944 = vld [vmem:[%s6490 + $0x2a0] sm:$0xfe]
        %v6945 = vld [vmem:[%s6490 + $0x2a8] sm:$0xfe]
        %v6946 = vld [vmem:[%s6490 + $0x2c0] sm:$0x1]
        %v6947 = vld [vmem:[%s6490 + $0x2c8] sm:$0x1]
        %v6948 = vld [vmem:[%s6490 + $0x2d0] sm:$0xfe]
        %v6949 = vld [vmem:[%s6490 + $0x2d8] sm:$0xfe]
        %v6950 = vld [vmem:[%s6490 + $0x2f0] sm:$0x1]
        %v6951 = vld [vmem:[%s6490 + $0x2f8] sm:$0x1]
        %v6952 = vld [vmem:[%s6490 + $0x360] sm:$0xfe]
        %v6953 = vld [vmem:[%s6490 + $0x368] sm:$0xfe]
        %v6954 = vld [vmem:[%s6490 + $0x380] sm:$0x1]
        %v6955 = vld [vmem:[%s6490 + $0x388] sm:$0x1]
        %v6956 = vld [vmem:[%s6490 + $0x390] sm:$0xfe]
        %v6957 = vld [vmem:[%s6490 + $0x398] sm:$0xfe]
        %v6958 = vld [vmem:[%s6490 + $0x3b0] sm:$0x1]
        %v6959 = vld [vmem:[%s6490 + $0x3b8] sm:$0x1]
        %v6960 = vld [vmem:[%s6490 + $0x3c0] sm:$0xfe]
        %v6961 = vld [vmem:[%s6490 + $0x3c8] sm:$0xfe]
        %v6962 = vld [vmem:[%s6490 + $0x3e0] sm:$0x1]
        %v6963 = vld [vmem:[%s6490 + $0x3e8] sm:$0x1]
        %v6964 = vld [vmem:[%s6490 + $0x3f0] sm:$0xfe]
        %v6965 = vld [vmem:[%s6490 + $0x3f8] sm:$0xfe]
        %v6966 = vld [vmem:[%s6490 + $0x410] sm:$0x1]
        %v6967 = vld [vmem:[%s6490 + $0x418] sm:$0x1]
        %v6968 = vld [vmem:[%s6490 + $0x420] sm:$0xfe]
        %v6969 = vld [vmem:[%s6490 + $0x428] sm:$0xfe]
        %v6970 = vld [vmem:[%s6490 + $0x440] sm:$0x1]
        %v6971 = vld [vmem:[%s6490 + $0x448] sm:$0x1]
        %v6972 = vld [vmem:[%s6490 + $0x450] sm:$0xfe]
        %v6973 = vld [vmem:[%s6490 + $0x458] sm:$0xfe]
        %v6974 = vld [vmem:[%s6490 + $0x470] sm:$0x1]
        %v6975 = vld [vmem:[%s6490 + $0x478] sm:$0x1]
        %v6976 = vld [vmem:[%s6490 + $0x480] sm:$0xfe]
        %v6977 = vld [vmem:[%s6490 + $0x488] sm:$0xfe]
        %v6978 = vld [vmem:[%s6490 + $0x4a0] sm:$0x1]
        %v6979 = vld [vmem:[%s6490 + $0x4a8] sm:$0x1]
        %v6980 = vld [vmem:[%s6490 + $0x4b0] sm:$0xfe]
        %v6981 = vld [vmem:[%s6490 + $0x4b8] sm:$0xfe]
        %v6982 = vld [vmem:[%s6490 + $0x4d0] sm:$0x1]
        %v6983 = vld [vmem:[%s6490 + $0x4d8] sm:$0x1]
        %v6984 = vld [vmem:[%s6490 + $0x4e0] sm:$0xfe]
        %v6985 = vld [vmem:[%s6490 + $0x4e8] sm:$0xfe]
        %v6986 = vld [vmem:[%s6490 + $0x500] sm:$0x1]
        %v6987 = vld [vmem:[%s6490 + $0x508] sm:$0x1]
        %v6988 = vld [vmem:[%s6490 + $0x510] sm:$0xfe]
        %v6989 = vld [vmem:[%s6490 + $0x518] sm:$0xfe]
        %v6990 = vld [vmem:[%s6490 + $0x530] sm:$0x1]
        %v6991 = vld [vmem:[%s6490 + $0x538] sm:$0x1]
        %v6992 = vld [vmem:[%s6490 + $0x540] sm:$0xfe]
        %v6993 = vld [vmem:[%s6490 + $0x548] sm:$0xfe]
        %v6994 = vld [vmem:[%s6490 + $0x560] sm:$0x1]
        %v6995 = vld [vmem:[%s6490 + $0x568] sm:$0x1]
        %v6996 = vld [vmem:[%s6490 + $0x570] sm:$0xfe]
        %v6997 = vld [vmem:[%s6490 + $0x578] sm:$0xfe]
        %v6998 = vld [vmem:[%s6490 + $0x590] sm:$0x1]
        %v6999 = vld [vmem:[%s6490 + $0x598] sm:$0x1]
        %v7000 = vld [vmem:[%s6490 + $0x5a0] sm:$0xfe]
        %v7001 = vld [vmem:[%s6490 + $0x5a8] sm:$0xfe]
        %v7002 = vld [vmem:[%s6490 + $0x5c0] sm:$0x1]
        %v7003 = vld [vmem:[%s6490 + $0x5c8] sm:$0x1]
        %v7004 = vld [vmem:[%s6490 + $0x5d0] sm:$0xfe]
        %v7005 = vld [vmem:[%s6490 + $0x5d8] sm:$0xfe]
        %v7006 = vld [vmem:[%s6490 + $0x5f0] sm:$0x1]
        %v7007 = vld [vmem:[%s6490 + $0x5f8] sm:$0x1]
        %v7008 = vld [vmem:[%s6490 + $0x600] sm:$0xfe]
        %v7009 = vld [vmem:[%s6490 + $0x608] sm:$0xfe]
        %v7010 = vld [vmem:[%s6490 + $0x620] sm:$0x1]
        %v7011 = vld [vmem:[%s6490 + $0x628] sm:$0x1]
        %v7012 = vld [vmem:[%s6490 + $0x630] sm:$0xfe]
        %v7013 = vld [vmem:[%s6490 + $0x638] sm:$0xfe]
        %v7014 = vld [vmem:[%s6490 + $0x650] sm:$0x1]
        %v7015 = vld [vmem:[%s6490 + $0x658] sm:$0x1]
        %v7017 = vlaneseq
        %v7018 = vshrl.u32 %v7017, 7
        %v7019 = vsub.s32 0, %v7018
        %v7020 = vrot.slane %v6887, %v7019
        %v7021 = vlaneseq
        %v7022 = vshrl.u32 %v7021, 7
        %v7023 = vsub.s32 1, %v7022
        %v7024 = vrot.slane %v6887, %v7023
        %v7027 = vmul.f32 %v6888, %v7020
        %v7028 = vmul.f32 %v6889, %v7024
        %v7029 = vmul.f32 %v6493, %v7020
        %v7030 = vmul.f32 %v6494, %v7024
        %v7031 = vmul.f32 %v6890, %v7020
        %v7032 = vmul.f32 %v6891, %v7024
        %v7033 = vmul.f32 %v6892, %v7020
        %v7034 = vmul.f32 %v6893, %v7024
        %v7035 = vmul.f32 %v6497, %v7020
        %v7036 = vmul.f32 %v6498, %v7024
        %v7037 = vmul.f32 %v6894, %v7020
        %v7038 = vmul.f32 %v6895, %v7024
        %v7039 = vmul.f32 %v6896, %v7020
        %v7040 = vmul.f32 %v6897, %v7024
        %v7041 = vmul.f32 %v6501, %v7020
        %v7042 = vmul.f32 %v6502, %v7024
        %v7043 = vmul.f32 %v6898, %v7020
        %v7044 = vmul.f32 %v6899, %v7024
        %v7045 = vmul.f32 %v6900, %v7020
        %v7046 = vmul.f32 %v6901, %v7024
        %v7047 = vmul.f32 %v6505, %v7020
        %v7048 = vmul.f32 %v6506, %v7024
        %v7049 = vmul.f32 %v6902, %v7020
        %v7050 = vmul.f32 %v6903, %v7024
        %v7051 = vmul.f32 %v6904, %v7020
        %v7052 = vmul.f32 %v6905, %v7024
        %v7053 = vmul.f32 %v6509, %v7020
        %v7054 = vmul.f32 %v6510, %v7024
        %v7055 = vmul.f32 %v6906, %v7020
        %v7056 = vmul.f32 %v6907, %v7024
        %v7057 = vmul.f32 %v6908, %v7020
        %v7058 = vmul.f32 %v6909, %v7024
        %v7059 = vmul.f32 %v6513, %v7020
        %v7060 = vmul.f32 %v6514, %v7024
        %v7061 = vmul.f32 %v6910, %v7020
        %v7062 = vmul.f32 %v6911, %v7024
        %v7063 = vmul.f32 %v6912, %v7020
        %v7064 = vmul.f32 %v6913, %v7024
        %v7065 = vmul.f32 %v6517, %v7020
        %v7066 = vmul.f32 %v6518, %v7024
        %v7067 = vmul.f32 %v6914, %v7020
        %v7068 = vmul.f32 %v6915, %v7024
        %v7069 = vmul.f32 %v6916, %v7020
        %v7070 = vmul.f32 %v6917, %v7024
        %v7071 = vmul.f32 %v6521, %v7020
        %v7072 = vmul.f32 %v6522, %v7024
        %v7073 = vmul.f32 %v6918, %v7020
        %v7074 = vmul.f32 %v6919, %v7024
        %v7075 = vmul.f32 %v6920, %v7020
        %v7076 = vmul.f32 %v6921, %v7024
        %v7077 = vmul.f32 %v6525, %v7020
        %v7078 = vmul.f32 %v6526, %v7024
        %v7079 = vmul.f32 %v6922, %v7020
        %v7080 = vmul.f32 %v6923, %v7024
        %v7081 = vmul.f32 %v6924, %v7020
        %v7082 = vmul.f32 %v6925, %v7024
        %v7083 = vmul.f32 %v6529, %v7020
        %v7084 = vmul.f32 %v6530, %v7024
        %v7085 = vmul.f32 %v6926, %v7020
        %v7086 = vmul.f32 %v6927, %v7024
        %v7087 = vmul.f32 %v6928, %v7020
        %v7088 = vmul.f32 %v6929, %v7024
        %v7089 = vmul.f32 %v6533, %v7020
        %v7090 = vmul.f32 %v6534, %v7024
        %v7091 = vmul.f32 %v6930, %v7020
        %v7092 = vmul.f32 %v6931, %v7024
        %v7093 = vmul.f32 %v6932, %v7020
        %v7094 = vmul.f32 %v6933, %v7024
        %v7095 = vmul.f32 %v6537, %v7020
        %v7096 = vmul.f32 %v6538, %v7024
        %v7097 = vmul.f32 %v6934, %v7020
        %v7098 = vmul.f32 %v6935, %v7024
        %v7099 = vmul.f32 %v6936, %v7020
        %v7100 = vmul.f32 %v6937, %v7024
        %v7101 = vmul.f32 %v6541, %v7020
        %v7102 = vmul.f32 %v6542, %v7024
        %v7103 = vmul.f32 %v6938, %v7020
        %v7104 = vmul.f32 %v6939, %v7024
        %v7105 = vmul.f32 %v6940, %v7020
        %v7106 = vmul.f32 %v6941, %v7024
        %v7107 = vmul.f32 %v6545, %v7020
        %v7108 = vmul.f32 %v6546, %v7024
        %v7109 = vmul.f32 %v6942, %v7020
        %v7110 = vmul.f32 %v6943, %v7024
        %v7111 = vmul.f32 %v6944, %v7020
        %v7112 = vmul.f32 %v6945, %v7024
        %v7113 = vmul.f32 %v6549, %v7020
        %v7114 = vmul.f32 %v6550, %v7024
        %v7115 = vmul.f32 %v6946, %v7020
        %v7116 = vmul.f32 %v6947, %v7024
        %v7117 = vmul.f32 %v6948, %v7020
        %v7118 = vmul.f32 %v6949, %v7024
        %v7119 = vmul.f32 %v6553, %v7020
        %v7120 = vmul.f32 %v6554, %v7024
        %v7121 = vmul.f32 %v6950, %v7020
        %v7122 = vmul.f32 %v6951, %v7024
        %v7123 = vmul.f32 %v6952, %v7020
        %v7124 = vmul.f32 %v6953, %v7024
        %v7125 = vmul.f32 %v6557, %v7020
        %v7126 = vmul.f32 %v6558, %v7024
        %v7127 = vmul.f32 %v6954, %v7020
        %v7128 = vmul.f32 %v6955, %v7024
        %v7129 = vmul.f32 %v6956, %v7020
        %v7130 = vmul.f32 %v6957, %v7024
        %v7131 = vmul.f32 %v6561, %v7020
        %v7132 = vmul.f32 %v6562, %v7024
        %v7133 = vmul.f32 %v6958, %v7020
        %v7134 = vmul.f32 %v6959, %v7024
        %v7135 = vmul.f32 %v6960, %v7020
        %v7136 = vmul.f32 %v6961, %v7024
        %v7137 = vmul.f32 %v6565, %v7020
        %v7138 = vmul.f32 %v6566, %v7024
        %v7139 = vmul.f32 %v6962, %v7020
        %v7140 = vmul.f32 %v6963, %v7024
        %v7141 = vmul.f32 %v6964, %v7020
        %v7142 = vmul.f32 %v6965, %v7024
        %v7143 = vmul.f32 %v6569, %v7020
        %v7144 = vmul.f32 %v6570, %v7024
        %v7145 = vmul.f32 %v6966, %v7020
        %v7146 = vmul.f32 %v6967, %v7024
        %v7147 = vmul.f32 %v6968, %v7020
        %v7148 = vmul.f32 %v6969, %v7024
        %v7149 = vmul.f32 %v6573, %v7020
        %v7150 = vmul.f32 %v6574, %v7024
        %v7151 = vmul.f32 %v6970, %v7020
        %v7152 = vmul.f32 %v6971, %v7024
        %v7153 = vmul.f32 %v6972, %v7020
        %v7154 = vmul.f32 %v6973, %v7024
        %v7155 = vmul.f32 %v6577, %v7020
        %v7156 = vmul.f32 %v6578, %v7024
        %v7157 = vmul.f32 %v6974, %v7020
        %v7158 = vmul.f32 %v6975, %v7024
        %v7159 = vmul.f32 %v6976, %v7020
        %v7160 = vmul.f32 %v6977, %v7024
        %v7161 = vmul.f32 %v6581, %v7020
        %v7162 = vmul.f32 %v6582, %v7024
        %v7163 = vmul.f32 %v6978, %v7020
        %v7164 = vmul.f32 %v6979, %v7024
        %v7165 = vmul.f32 %v6980, %v7020
        %v7166 = vmul.f32 %v6981, %v7024
        %v7167 = vmul.f32 %v6585, %v7020
        %v7168 = vmul.f32 %v6586, %v7024
        %v7169 = vmul.f32 %v6982, %v7020
        %v7170 = vmul.f32 %v6983, %v7024
        %v7171 = vmul.f32 %v6984, %v7020
        %v7172 = vmul.f32 %v6985, %v7024
        %v7173 = vmul.f32 %v6589, %v7020
        %v7174 = vmul.f32 %v6590, %v7024
        %v7175 = vmul.f32 %v6986, %v7020
        %v7176 = vmul.f32 %v6987, %v7024
        %v7177 = vmul.f32 %v6988, %v7020
        %v7178 = vmul.f32 %v6989, %v7024
        %v7179 = vmul.f32 %v6593, %v7020
        %v7180 = vmul.f32 %v6594, %v7024
        %v7181 = vmul.f32 %v6990, %v7020
        %v7182 = vmul.f32 %v6991, %v7024
        %v7183 = vmul.f32 %v6992, %v7020
        %v7184 = vmul.f32 %v6993, %v7024
        %v7185 = vmul.f32 %v6597, %v7020
        %v7186 = vmul.f32 %v6598, %v7024
        %v7187 = vmul.f32 %v6994, %v7020
        %v7188 = vmul.f32 %v6995, %v7024
        %v7189 = vmul.f32 %v6996, %v7020
        %v7190 = vmul.f32 %v6997, %v7024
        %v7191 = vmul.f32 %v6601, %v7020
        %v7192 = vmul.f32 %v6602, %v7024
        %v7193 = vmul.f32 %v6998, %v7020
        %v7194 = vmul.f32 %v6999, %v7024
        %v7195 = vmul.f32 %v7000, %v7020
        %v7196 = vmul.f32 %v7001, %v7024
        %v7197 = vmul.f32 %v6605, %v7020
        %v7198 = vmul.f32 %v6606, %v7024
        %v7199 = vmul.f32 %v7002, %v7020
        %v7200 = vmul.f32 %v7003, %v7024
        %v7201 = vmul.f32 %v7004, %v7020
        %v7202 = vmul.f32 %v7005, %v7024
        %v7203 = vmul.f32 %v6609, %v7020
        %v7204 = vmul.f32 %v6610, %v7024
        %v7205 = vmul.f32 %v7006, %v7020
        %v7206 = vmul.f32 %v7007, %v7024
        %v7207 = vmul.f32 %v7008, %v7020
        %v7208 = vmul.f32 %v7009, %v7024
        %v7209 = vmul.f32 %v6613, %v7020
        %v7210 = vmul.f32 %v6614, %v7024
        %v7211 = vmul.f32 %v7010, %v7020
        %v7212 = vmul.f32 %v7011, %v7024
        %v7213 = vmul.f32 %v7012, %v7020
        %v7214 = vmul.f32 %v7013, %v7024
        %v7215 = vmul.f32 %v6617, %v7020
        %v7216 = vmul.f32 %v6618, %v7024
        %v7217 = vmul.f32 %v7014, %v7020
        %v7218 = vmul.f32 %v7015, %v7024
        %v7411 = vrot.slane %v7027, 1
        %v7412 = vrot.slane %v7029, 1
        %v7413 = vsel %vm2210, %v7411, %v7412
        %v7414 = vrot.slane %v7028, 1
        %v7415 = vrot.slane %v7030, 1
        %v7416 = vsel %vm2210, %v7414, %v7415
        %v7417 = vrot.slane %v7031, 1
        %v7418 = vsel %vm2210, %v7412, %v7417
        %v7419 = vrot.slane %v7032, 1
        %v7420 = vsel %vm2210, %v7415, %v7419
        %v7421 = vrot.slane %v7033, 1
        %v7422 = vrot.slane %v7035, 1
        %v7423 = vsel %vm2210, %v7421, %v7422
        %v7424 = vrot.slane %v7034, 1
        %v7425 = vrot.slane %v7036, 1
        %v7426 = vsel %vm2210, %v7424, %v7425
        %v7427 = vrot.slane %v7037, 1
        %v7428 = vsel %vm2210, %v7422, %v7427
        %v7429 = vrot.slane %v7038, 1
        %v7430 = vsel %vm2210, %v7425, %v7429
        %v7431 = vrot.slane %v7039, 1
        %v7432 = vrot.slane %v7041, 1
        %v7433 = vsel %vm2210, %v7431, %v7432
        %v7434 = vrot.slane %v7040, 1
        %v7435 = vrot.slane %v7042, 1
        %v7436 = vsel %vm2210, %v7434, %v7435
        %v7437 = vrot.slane %v7043, 1
        %v7438 = vsel %vm2210, %v7432, %v7437
        %v7439 = vrot.slane %v7044, 1
        %v7440 = vsel %vm2210, %v7435, %v7439
        %v7441 = vrot.slane %v7045, 1
        %v7442 = vrot.slane %v7047, 1
        %v7443 = vsel %vm2210, %v7441, %v7442
        %v7444 = vrot.slane %v7046, 1
        %v7445 = vrot.slane %v7048, 1
        %v7446 = vsel %vm2210, %v7444, %v7445
        %v7447 = vrot.slane %v7049, 1
        %v7448 = vsel %vm2210, %v7442, %v7447
        %v7449 = vrot.slane %v7050, 1
        %v7450 = vsel %vm2210, %v7445, %v7449
        %v7451 = vrot.slane %v7051, 1
        %v7452 = vrot.slane %v7053, 1
        %v7453 = vsel %vm2210, %v7451, %v7452
        %v7454 = vrot.slane %v7052, 1
        %v7455 = vrot.slane %v7054, 1
        %v7456 = vsel %vm2210, %v7454, %v7455
        %v7457 = vrot.slane %v7055, 1
        %v7458 = vsel %vm2210, %v7452, %v7457
        %v7459 = vrot.slane %v7056, 1
        %v7460 = vsel %vm2210, %v7455, %v7459
        %v7461 = vrot.slane %v7057, 1
        %v7462 = vrot.slane %v7059, 1
        %v7463 = vsel %vm2210, %v7461, %v7462
        %v7464 = vrot.slane %v7058, 1
        %v7465 = vrot.slane %v7060, 1
        %v7466 = vsel %vm2210, %v7464, %v7465
        %v7467 = vrot.slane %v7061, 1
        %v7468 = vsel %vm2210, %v7462, %v7467
        %v7469 = vrot.slane %v7062, 1
        %v7470 = vsel %vm2210, %v7465, %v7469
        %v7471 = vrot.slane %v7063, 1
        %v7472 = vrot.slane %v7065, 1
        %v7473 = vsel %vm2210, %v7471, %v7472
        %v7474 = vrot.slane %v7064, 1
        %v7475 = vrot.slane %v7066, 1
        %v7476 = vsel %vm2210, %v7474, %v7475
        %v7477 = vrot.slane %v7067, 1
        %v7478 = vsel %vm2210, %v7472, %v7477
        %v7479 = vrot.slane %v7068, 1
        %v7480 = vsel %vm2210, %v7475, %v7479
        %v7481 = vrot.slane %v7069, 1
        %v7482 = vrot.slane %v7071, 1
        %v7483 = vsel %vm2210, %v7481, %v7482
        %v7484 = vrot.slane %v7070, 1
        %v7485 = vrot.slane %v7072, 1
        %v7486 = vsel %vm2210, %v7484, %v7485
        %v7487 = vrot.slane %v7073, 1
        %v7488 = vsel %vm2210, %v7482, %v7487
        %v7489 = vrot.slane %v7074, 1
        %v7490 = vsel %vm2210, %v7485, %v7489
        %v7491 = vrot.slane %v7075, 1
        %v7492 = vrot.slane %v7077, 1
        %v7493 = vsel %vm2210, %v7491, %v7492
        %v7494 = vrot.slane %v7076, 1
        %v7495 = vrot.slane %v7078, 1
        %v7496 = vsel %vm2210, %v7494, %v7495
        %v7497 = vrot.slane %v7079, 1
        %v7498 = vsel %vm2210, %v7492, %v7497
        %v7499 = vrot.slane %v7080, 1
        %v7500 = vsel %vm2210, %v7495, %v7499
        %v7501 = vrot.slane %v7081, 1
        %v7502 = vrot.slane %v7083, 1
        %v7503 = vsel %vm2210, %v7501, %v7502
        %v7504 = vrot.slane %v7082, 1
        %v7505 = vrot.slane %v7084, 1
        %v7506 = vsel %vm2210, %v7504, %v7505
        %v7507 = vrot.slane %v7085, 1
        %v7508 = vsel %vm2210, %v7502, %v7507
        %v7509 = vrot.slane %v7086, 1
        %v7510 = vsel %vm2210, %v7505, %v7509
        %v7511 = vrot.slane %v7087, 1
        %v7512 = vrot.slane %v7089, 1
        %v7513 = vsel %vm2210, %v7511, %v7512
        %v7514 = vrot.slane %v7088, 1
        %v7515 = vrot.slane %v7090, 1
        %v7516 = vsel %vm2210, %v7514, %v7515
        %v7517 = vrot.slane %v7091, 1
        %v7518 = vsel %vm2210, %v7512, %v7517
        %v7519 = vrot.slane %v7092, 1
        %v7520 = vsel %vm2210, %v7515, %v7519
        %v7521 = vrot.slane %v7093, 1
        %v7522 = vrot.slane %v7095, 1
        %v7523 = vsel %vm2210, %v7521, %v7522
        %v7524 = vrot.slane %v7094, 1
        %v7525 = vrot.slane %v7096, 1
        %v7526 = vsel %vm2210, %v7524, %v7525
        %v7527 = vrot.slane %v7097, 1
        %v7528 = vsel %vm2210, %v7522, %v7527
        %v7529 = vrot.slane %v7098, 1
        %v7530 = vsel %vm2210, %v7525, %v7529
        %v7531 = vrot.slane %v7099, 1
        %v7532 = vrot.slane %v7101, 1
        %v7533 = vsel %vm2210, %v7531, %v7532
        %v7534 = vrot.slane %v7100, 1
        %v7535 = vrot.slane %v7102, 1
        %v7536 = vsel %vm2210, %v7534, %v7535
        %v7537 = vrot.slane %v7103, 1
        %v7538 = vsel %vm2210, %v7532, %v7537
        %v7539 = vrot.slane %v7104, 1
        %v7540 = vsel %vm2210, %v7535, %v7539
        %v7541 = vrot.slane %v7105, 1
        %v7542 = vrot.slane %v7107, 1
        %v7543 = vsel %vm2210, %v7541, %v7542
        %v7544 = vrot.slane %v7106, 1
        %v7545 = vrot.slane %v7108, 1
        %v7546 = vsel %vm2210, %v7544, %v7545
        %v7547 = vrot.slane %v7109, 1
        %v7548 = vsel %vm2210, %v7542, %v7547
        %v7549 = vrot.slane %v7110, 1
        %v7550 = vsel %vm2210, %v7545, %v7549
        %v7551 = vrot.slane %v7111, 1
        %v7552 = vrot.slane %v7113, 1
        %v7553 = vsel %vm2210, %v7551, %v7552
        %v7554 = vrot.slane %v7112, 1
        %v7555 = vrot.slane %v7114, 1
        %v7556 = vsel %vm2210, %v7554, %v7555
        %v7557 = vrot.slane %v7115, 1
        %v7558 = vsel %vm2210, %v7552, %v7557
        %v7559 = vrot.slane %v7116, 1
        %v7560 = vsel %vm2210, %v7555, %v7559
        %v7561 = vrot.slane %v7117, 1
        %v7562 = vrot.slane %v7119, 1
        %v7563 = vsel %vm2210, %v7561, %v7562
        %v7564 = vrot.slane %v7118, 1
        %v7565 = vrot.slane %v7120, 1
        %v7566 = vsel %vm2210, %v7564, %v7565
        %v7567 = vrot.slane %v7121, 1
        %v7568 = vsel %vm2210, %v7562, %v7567
        %v7569 = vrot.slane %v7122, 1
        %v7570 = vsel %vm2210, %v7565, %v7569
        %v7571 = vrot.slane %v7123, 1
        %v7572 = vrot.slane %v7125, 1
        %v7573 = vsel %vm2210, %v7571, %v7572
        %v7574 = vrot.slane %v7124, 1
        %v7575 = vrot.slane %v7126, 1
        %v7576 = vsel %vm2210, %v7574, %v7575
        %v7577 = vrot.slane %v7127, 1
        %v7578 = vsel %vm2210, %v7572, %v7577
        %v7579 = vrot.slane %v7128, 1
        %v7580 = vsel %vm2210, %v7575, %v7579
        %v7581 = vrot.slane %v7129, 1
        %v7582 = vrot.slane %v7131, 1
        %v7583 = vsel %vm2210, %v7581, %v7582
        %v7584 = vrot.slane %v7130, 1
        %v7585 = vrot.slane %v7132, 1
        %v7586 = vsel %vm2210, %v7584, %v7585
        %v7587 = vrot.slane %v7133, 1
        %v7588 = vsel %vm2210, %v7582, %v7587
        %v7589 = vrot.slane %v7134, 1
        %v7590 = vsel %vm2210, %v7585, %v7589
        %v7591 = vrot.slane %v7135, 1
        %v7592 = vrot.slane %v7137, 1
        %v7593 = vsel %vm2210, %v7591, %v7592
        %v7594 = vrot.slane %v7136, 1
        %v7595 = vrot.slane %v7138, 1
        %v7596 = vsel %vm2210, %v7594, %v7595
        %v7597 = vrot.slane %v7139, 1
        %v7598 = vsel %vm2210, %v7592, %v7597
        %v7599 = vrot.slane %v7140, 1
        %v7600 = vsel %vm2210, %v7595, %v7599
        %v7601 = vrot.slane %v7141, 1
        %v7602 = vrot.slane %v7143, 1
        %v7603 = vsel %vm2210, %v7601, %v7602
        %v7604 = vrot.slane %v7142, 1
        %v7605 = vrot.slane %v7144, 1
        %v7606 = vsel %vm2210, %v7604, %v7605
        %v7607 = vrot.slane %v7145, 1
        %v7608 = vsel %vm2210, %v7602, %v7607
        %v7609 = vrot.slane %v7146, 1
        %v7610 = vsel %vm2210, %v7605, %v7609
        %v7611 = vrot.slane %v7147, 1
        %v7612 = vrot.slane %v7149, 1
        %v7613 = vsel %vm2210, %v7611, %v7612
        %v7614 = vrot.slane %v7148, 1
        %v7615 = vrot.slane %v7150, 1
        %v7616 = vsel %vm2210, %v7614, %v7615
        %v7617 = vrot.slane %v7151, 1
        %v7618 = vsel %vm2210, %v7612, %v7617
        %v7619 = vrot.slane %v7152, 1
        %v7620 = vsel %vm2210, %v7615, %v7619
        %v7621 = vrot.slane %v7153, 1
        %v7622 = vrot.slane %v7155, 1
        %v7623 = vsel %vm2210, %v7621, %v7622
        %v7624 = vrot.slane %v7154, 1
        %v7625 = vrot.slane %v7156, 1
        %v7626 = vsel %vm2210, %v7624, %v7625
        %v7627 = vrot.slane %v7157, 1
        %v7628 = vsel %vm2210, %v7622, %v7627
        %v7629 = vrot.slane %v7158, 1
        %v7630 = vsel %vm2210, %v7625, %v7629
        %v7631 = vrot.slane %v7159, 1
        %v7632 = vrot.slane %v7161, 1
        %v7633 = vsel %vm2210, %v7631, %v7632
        %v7634 = vrot.slane %v7160, 1
        %v7635 = vrot.slane %v7162, 1
        %v7636 = vsel %vm2210, %v7634, %v7635
        %v7637 = vrot.slane %v7163, 1
        %v7638 = vsel %vm2210, %v7632, %v7637
        %v7639 = vrot.slane %v7164, 1
        %v7640 = vsel %vm2210, %v7635, %v7639
        %v7641 = vrot.slane %v7165, 1
        %v7642 = vrot.slane %v7167, 1
        %v7643 = vsel %vm2210, %v7641, %v7642
        %v7644 = vrot.slane %v7166, 1
        %v7645 = vrot.slane %v7168, 1
        %v7646 = vsel %vm2210, %v7644, %v7645
        %v7647 = vrot.slane %v7169, 1
        %v7648 = vsel %vm2210, %v7642, %v7647
        %v7649 = vrot.slane %v7170, 1
        %v7650 = vsel %vm2210, %v7645, %v7649
        %v7651 = vrot.slane %v7171, 1
        %v7652 = vrot.slane %v7173, 1
        %v7653 = vsel %vm2210, %v7651, %v7652
        %v7654 = vrot.slane %v7172, 1
        %v7655 = vrot.slane %v7174, 1
        %v7656 = vsel %vm2210, %v7654, %v7655
        %v7657 = vrot.slane %v7175, 1
        %v7658 = vsel %vm2210, %v7652, %v7657
        %v7659 = vrot.slane %v7176, 1
        %v7660 = vsel %vm2210, %v7655, %v7659
        %v7661 = vrot.slane %v7177, 1
        %v7662 = vrot.slane %v7179, 1
        %v7663 = vsel %vm2210, %v7661, %v7662
        %v7664 = vrot.slane %v7178, 1
        %v7665 = vrot.slane %v7180, 1
        %v7666 = vsel %vm2210, %v7664, %v7665
        %v7667 = vrot.slane %v7181, 1
        %v7668 = vsel %vm2210, %v7662, %v7667
        %v7669 = vrot.slane %v7182, 1
        %v7670 = vsel %vm2210, %v7665, %v7669
        %v7671 = vrot.slane %v7183, 1
        %v7672 = vrot.slane %v7185, 1
        %v7673 = vsel %vm2210, %v7671, %v7672
        %v7674 = vrot.slane %v7184, 1
        %v7675 = vrot.slane %v7186, 1
        %v7676 = vsel %vm2210, %v7674, %v7675
        %v7677 = vrot.slane %v7187, 1
        %v7678 = vsel %vm2210, %v7672, %v7677
        %v7679 = vrot.slane %v7188, 1
        %v7680 = vsel %vm2210, %v7675, %v7679
        %v7681 = vrot.slane %v7189, 1
        %v7682 = vrot.slane %v7191, 1
        %v7683 = vsel %vm2210, %v7681, %v7682
        %v7684 = vrot.slane %v7190, 1
        %v7685 = vrot.slane %v7192, 1
        %v7686 = vsel %vm2210, %v7684, %v7685
        %v7687 = vrot.slane %v7193, 1
        %v7688 = vsel %vm2210, %v7682, %v7687
        %v7689 = vrot.slane %v7194, 1
        %v7690 = vsel %vm2210, %v7685, %v7689
        %v7691 = vrot.slane %v7195, 1
        %v7692 = vrot.slane %v7197, 1
        %v7693 = vsel %vm2210, %v7691, %v7692
        %v7694 = vrot.slane %v7196, 1
        %v7695 = vrot.slane %v7198, 1
        %v7696 = vsel %vm2210, %v7694, %v7695
        %v7697 = vrot.slane %v7199, 1
        %v7698 = vsel %vm2210, %v7692, %v7697
        %v7699 = vrot.slane %v7200, 1
        %v7700 = vsel %vm2210, %v7695, %v7699
        %v7701 = vrot.slane %v7201, 1
        %v7702 = vrot.slane %v7203, 1
        %v7703 = vsel %vm2210, %v7701, %v7702
        %v7704 = vrot.slane %v7202, 1
        %v7705 = vrot.slane %v7204, 1
        %v7706 = vsel %vm2210, %v7704, %v7705
        %v7707 = vrot.slane %v7205, 1
        %v7708 = vsel %vm2210, %v7702, %v7707
        %v7709 = vrot.slane %v7206, 1
        %v7710 = vsel %vm2210, %v7705, %v7709
        %v7711 = vrot.slane %v7207, 1
        %v7712 = vrot.slane %v7209, 1
        %v7713 = vsel %vm2210, %v7711, %v7712
        %v7714 = vrot.slane %v7208, 1
        %v7715 = vrot.slane %v7210, 1
        %v7716 = vsel %vm2210, %v7714, %v7715
        %v7717 = vrot.slane %v7211, 1
        %v7718 = vsel %vm2210, %v7712, %v7717
        %v7719 = vrot.slane %v7212, 1
        %v7720 = vsel %vm2210, %v7715, %v7719
        %v7721 = vrot.slane %v7213, 1
        %v7722 = vrot.slane %v7215, 1
        %v7723 = vsel %vm2210, %v7721, %v7722
        %v7724 = vrot.slane %v7214, 1
        %v7725 = vrot.slane %v7216, 1
        %v7726 = vsel %vm2210, %v7724, %v7725
        %v7727 = vrot.slane %v7217, 1
        %v7728 = vsel %vm2210, %v7722, %v7727
        %v7729 = vrot.slane %v7218, 1
        %v7730 = vsel %vm2210, %v7725, %v7729
        %v7859 = vadd.f32 %v6758, %v7413
        %v7860 = vadd.f32 %v6759, %v7416
        %v7861 = vadd.f32 %v6760, %v7418
        %v7862 = vadd.f32 %v6761, %v7420
        %v7863 = vadd.f32 %v6762, %v7423
        %v7864 = vadd.f32 %v6763, %v7426
        %v7865 = vadd.f32 %v6764, %v7428
        %v7866 = vadd.f32 %v6765, %v7430
        %v7867 = vadd.f32 %v6766, %v7433
        %v7868 = vadd.f32 %v6767, %v7436
        %v7869 = vadd.f32 %v6768, %v7438
        %v7870 = vadd.f32 %v6769, %v7440
        %v7871 = vadd.f32 %v6770, %v7443
        %v7872 = vadd.f32 %v6771, %v7446
        %v7873 = vadd.f32 %v6772, %v7448
        %v7874 = vadd.f32 %v6773, %v7450
        %v7875 = vadd.f32 %v6774, %v7453
        %v7876 = vadd.f32 %v6775, %v7456
        %v7877 = vadd.f32 %v6776, %v7458
        %v7878 = vadd.f32 %v6777, %v7460
        %v7879 = vadd.f32 %v6778, %v7463
        %v7880 = vadd.f32 %v6779, %v7466
        %v7881 = vadd.f32 %v6780, %v7468
        %v7882 = vadd.f32 %v6781, %v7470
        %v7883 = vadd.f32 %v6782, %v7473
        %v7884 = vadd.f32 %v6783, %v7476
        %v7885 = vadd.f32 %v6784, %v7478
        %v7886 = vadd.f32 %v6785, %v7480
        %v7887 = vadd.f32 %v6786, %v7483
        %v7888 = vadd.f32 %v6787, %v7486
        %v7889 = vadd.f32 %v6788, %v7488
        %v7890 = vadd.f32 %v6789, %v7490
        %v7891 = vadd.f32 %v6790, %v7493
        %v7892 = vadd.f32 %v6791, %v7496
        %v7893 = vadd.f32 %v6792, %v7498
        %v7894 = vadd.f32 %v6793, %v7500
        %v7895 = vadd.f32 %v6794, %v7503
        %v7896 = vadd.f32 %v6795, %v7506
        %v7897 = vadd.f32 %v6796, %v7508
        %v7898 = vadd.f32 %v6797, %v7510
        %v7899 = vadd.f32 %v6798, %v7513
        %v7900 = vadd.f32 %v6799, %v7516
        %v7901 = vadd.f32 %v6800, %v7518
        %v7902 = vadd.f32 %v6801, %v7520
        %v7903 = vadd.f32 %v6802, %v7523
        %v7904 = vadd.f32 %v6803, %v7526
        %v7905 = vadd.f32 %v6804, %v7528
        %v7906 = vadd.f32 %v6805, %v7530
        %v7907 = vadd.f32 %v6806, %v7533
        %v7908 = vadd.f32 %v6807, %v7536
        %v7909 = vadd.f32 %v6808, %v7538
        %v7910 = vadd.f32 %v6809, %v7540
        %v7911 = vadd.f32 %v6810, %v7543
        %v7912 = vadd.f32 %v6811, %v7546
        %v7913 = vadd.f32 %v6812, %v7548
        %v7914 = vadd.f32 %v6813, %v7550
        %v7915 = vadd.f32 %v6814, %v7553
        %v7916 = vadd.f32 %v6815, %v7556
        %v7917 = vadd.f32 %v6816, %v7558
        %v7918 = vadd.f32 %v6817, %v7560
        %v7919 = vadd.f32 %v6818, %v7563
        %v7920 = vadd.f32 %v6819, %v7566
        %v7921 = vadd.f32 %v6820, %v7568
        %v7922 = vadd.f32 %v6821, %v7570
        %v7923 = vadd.f32 %v6822, %v7573
        %v7924 = vadd.f32 %v6823, %v7576
        %v7925 = vadd.f32 %v6824, %v7578
        %v7926 = vadd.f32 %v6825, %v7580
        %v7927 = vadd.f32 %v6826, %v7583
        %v7928 = vadd.f32 %v6827, %v7586
        %v7929 = vadd.f32 %v6828, %v7588
        %v7930 = vadd.f32 %v6829, %v7590
        %v7931 = vadd.f32 %v6830, %v7593
        %v7932 = vadd.f32 %v6831, %v7596
        %v7933 = vadd.f32 %v6832, %v7598
        %v7934 = vadd.f32 %v6833, %v7600
        %v7935 = vadd.f32 %v6834, %v7603
        %v7936 = vadd.f32 %v6835, %v7606
        %v7937 = vadd.f32 %v6836, %v7608
        %v7938 = vadd.f32 %v6837, %v7610
        %v7939 = vadd.f32 %v6838, %v7613
        %v7940 = vadd.f32 %v6839, %v7616
        %v7941 = vadd.f32 %v6840, %v7618
        %v7942 = vadd.f32 %v6841, %v7620
        %v7943 = vadd.f32 %v6842, %v7623
        %v7944 = vadd.f32 %v6843, %v7626
        %v7945 = vadd.f32 %v6844, %v7628
        %v7946 = vadd.f32 %v6845, %v7630
        %v7947 = vadd.f32 %v6846, %v7633
        %v7948 = vadd.f32 %v6847, %v7636
        %v7949 = vadd.f32 %v6848, %v7638
        %v7950 = vadd.f32 %v6849, %v7640
        %v7951 = vadd.f32 %v6850, %v7643
        %v7952 = vadd.f32 %v6851, %v7646
        %v7953 = vadd.f32 %v6852, %v7648
        %v7954 = vadd.f32 %v6853, %v7650
        %v7955 = vadd.f32 %v6854, %v7653
        %v7956 = vadd.f32 %v6855, %v7656
        %v7957 = vadd.f32 %v6856, %v7658
        %v7958 = vadd.f32 %v6857, %v7660
        %v7959 = vadd.f32 %v6858, %v7663
        %v7960 = vadd.f32 %v6859, %v7666
        %v7961 = vadd.f32 %v6860, %v7668
        %v7962 = vadd.f32 %v6861, %v7670
        %v7963 = vadd.f32 %v6862, %v7673
        %v7964 = vadd.f32 %v6863, %v7676
        %v7965 = vadd.f32 %v6864, %v7678
        %v7966 = vadd.f32 %v6865, %v7680
        %v7967 = vadd.f32 %v6866, %v7683
        %v7968 = vadd.f32 %v6867, %v7686
        %v7969 = vadd.f32 %v6868, %v7688
        %v7970 = vadd.f32 %v6869, %v7690
        %v7971 = vadd.f32 %v6870, %v7693
        %v7972 = vadd.f32 %v6871, %v7696
        %v7973 = vadd.f32 %v6872, %v7698
        %v7974 = vadd.f32 %v6873, %v7700
        %v7975 = vadd.f32 %v6874, %v7703
        %v7976 = vadd.f32 %v6875, %v7706
        %v7977 = vadd.f32 %v6876, %v7708
        %v7978 = vadd.f32 %v6877, %v7710
        %v7979 = vadd.f32 %v6878, %v7713
        %v7980 = vadd.f32 %v6879, %v7716
        %v7981 = vadd.f32 %v6880, %v7718
        %v7982 = vadd.f32 %v6881, %v7720
        %v7983 = vadd.f32 %v6882, %v7723
        %v7984 = vadd.f32 %v6883, %v7726
        %v7985 = vadd.f32 %v6884, %v7728
        %v7986 = vadd.f32 %v6885, %v7730
        %s7987 = scalar_lea.vmem %s330, 16
        %v7988 = vld [vmem:[%s7987] ss:$8 sm:$0x3]
        %v7989 = vld [vmem:[%s6490] sm:$0xfc]
        %v7990 = vld [vmem:[%s6490 + $0x8] sm:$0xfc]
        %v7991 = vld [vmem:[%s6490 + $0x20] sm:$0x3]
        %v7992 = vld [vmem:[%s6490 + $0x28] sm:$0x3]
        %v7993 = vld [vmem:[%s6490 + $0x30] sm:$0xfc]
        %v7994 = vld [vmem:[%s6490 + $0x38] sm:$0xfc]
        %v7995 = vld [vmem:[%s6490 + $0x50] sm:$0x3]
        %v7996 = vld [vmem:[%s6490 + $0x58] sm:$0x3]
        %v7997 = vld [vmem:[%s6490 + $0x60] sm:$0xfc]
        %v7998 = vld [vmem:[%s6490 + $0x68] sm:$0xfc]
        %v7999 = vld [vmem:[%s6490 + $0x80] sm:$0x3]
        %v8000 = vld [vmem:[%s6490 + $0x88] sm:$0x3]
        %v8001 = vld [vmem:[%s6490 + $0x90] sm:$0xfc]
        %v8002 = vld [vmem:[%s6490 + $0x98] sm:$0xfc]
        %v8003 = vld [vmem:[%s6490 + $0xb0] sm:$0x3]
        %v8004 = vld [vmem:[%s6490 + $0xb8] sm:$0x3]
        %v8005 = vld [vmem:[%s6490 + $0xc0] sm:$0xfc]
        %v8006 = vld [vmem:[%s6490 + $0xc8] sm:$0xfc]
        %v8007 = vld [vmem:[%s6490 + $0xe0] sm:$0x3]
        %v8008 = vld [vmem:[%s6490 + $0xe8] sm:$0x3]
        %v8009 = vld [vmem:[%s6490 + $0xf0] sm:$0xfc]
        %v8010 = vld [vmem:[%s6490 + $0xf8] sm:$0xfc]
        %v8011 = vld [vmem:[%s6490 + $0x110] sm:$0x3]
        %v8012 = vld [vmem:[%s6490 + $0x118] sm:$0x3]
        %v8013 = vld [vmem:[%s6490 + $0x120] sm:$0xfc]
        %v8014 = vld [vmem:[%s6490 + $0x128] sm:$0xfc]
        %v8015 = vld [vmem:[%s6490 + $0x140] sm:$0x3]
        %v8016 = vld [vmem:[%s6490 + $0x148] sm:$0x3]
        %v8017 = vld [vmem:[%s6490 + $0x150] sm:$0xfc]
        %v8018 = vld [vmem:[%s6490 + $0x158] sm:$0xfc]
        %v8019 = vld [vmem:[%s6490 + $0x170] sm:$0x3]
        %v8020 = vld [vmem:[%s6490 + $0x178] sm:$0x3]
        %v8021 = vld [vmem:[%s6490 + $0x180] sm:$0xfc]
        %v8022 = vld [vmem:[%s6490 + $0x188] sm:$0xfc]
        %v8023 = vld [vmem:[%s6490 + $0x1a0] sm:$0x3]
        %v8024 = vld [vmem:[%s6490 + $0x1a8] sm:$0x3]
        %v8025 = vld [vmem:[%s6490 + $0x1b0] sm:$0xfc]
        %v8026 = vld [vmem:[%s6490 + $0x1b8] sm:$0xfc]
        %v8027 = vld [vmem:[%s6490 + $0x1d0] sm:$0x3]
        %v8028 = vld [vmem:[%s6490 + $0x1d8] sm:$0x3]
        %v8029 = vld [vmem:[%s6490 + $0x1e0] sm:$0xfc]
        %v8030 = vld [vmem:[%s6490 + $0x1e8] sm:$0xfc]
        %v8031 = vld [vmem:[%s6490 + $0x200] sm:$0x3]
        %v8032 = vld [vmem:[%s6490 + $0x208] sm:$0x3]
        %v8033 = vld [vmem:[%s6490 + $0x210] sm:$0xfc]
        %v8034 = vld [vmem:[%s6490 + $0x218] sm:$0xfc]
        %v8035 = vld [vmem:[%s6490 + $0x230] sm:$0x3]
        %v8036 = vld [vmem:[%s6490 + $0x238] sm:$0x3]
        %v8037 = vld [vmem:[%s6490 + $0x240] sm:$0xfc]
        %v8038 = vld [vmem:[%s6490 + $0x248] sm:$0xfc]
        %v8039 = vld [vmem:[%s6490 + $0x260] sm:$0x3]
        %v8040 = vld [vmem:[%s6490 + $0x268] sm:$0x3]
        %v8041 = vld [vmem:[%s6490 + $0x270] sm:$0xfc]
        %v8042 = vld [vmem:[%s6490 + $0x278] sm:$0xfc]
        %v8043 = vld [vmem:[%s6490 + $0x290] sm:$0x3]
        %v8044 = vld [vmem:[%s6490 + $0x298] sm:$0x3]
        %v8045 = vld [vmem:[%s6490 + $0x2a0] sm:$0xfc]
        %v8046 = vld [vmem:[%s6490 + $0x2a8] sm:$0xfc]
        %v8047 = vld [vmem:[%s6490 + $0x2c0] sm:$0x3]
        %v8048 = vld [vmem:[%s6490 + $0x2c8] sm:$0x3]
        %v8049 = vld [vmem:[%s6490 + $0x2d0] sm:$0xfc]
        %v8050 = vld [vmem:[%s6490 + $0x2d8] sm:$0xfc]
        %v8051 = vld [vmem:[%s6490 + $0x2f0] sm:$0x3]
        %v8052 = vld [vmem:[%s6490 + $0x2f8] sm:$0x3]
        %v8053 = vld [vmem:[%s6490 + $0x360] sm:$0xfc]
        %v8054 = vld [vmem:[%s6490 + $0x368] sm:$0xfc]
        %v8055 = vld [vmem:[%s6490 + $0x380] sm:$0x3]
        %v8056 = vld [vmem:[%s6490 + $0x388] sm:$0x3]
        %v8057 = vld [vmem:[%s6490 + $0x390] sm:$0xfc]
        %v8058 = vld [vmem:[%s6490 + $0x398] sm:$0xfc]
        %v8059 = vld [vmem:[%s6490 + $0x3b0] sm:$0x3]
        %v8060 = vld [vmem:[%s6490 + $0x3b8] sm:$0x3]
        %v8061 = vld [vmem:[%s6490 + $0x3c0] sm:$0xfc]
        %v8062 = vld [vmem:[%s6490 + $0x3c8] sm:$0xfc]
        %v8063 = vld [vmem:[%s6490 + $0x3e0] sm:$0x3]
        %v8064 = vld [vmem:[%s6490 + $0x3e8] sm:$0x3]
        %v8065 = vld [vmem:[%s6490 + $0x3f0] sm:$0xfc]
        %v8066 = vld [vmem:[%s6490 + $0x3f8] sm:$0xfc]
        %v8067 = vld [vmem:[%s6490 + $0x410] sm:$0x3]
        %v8068 = vld [vmem:[%s6490 + $0x418] sm:$0x3]
        %v8069 = vld [vmem:[%s6490 + $0x420] sm:$0xfc]
        %v8070 = vld [vmem:[%s6490 + $0x428] sm:$0xfc]
        %v8071 = vld [vmem:[%s6490 + $0x440] sm:$0x3]
        %v8072 = vld [vmem:[%s6490 + $0x448] sm:$0x3]
        %v8073 = vld [vmem:[%s6490 + $0x450] sm:$0xfc]
        %v8074 = vld [vmem:[%s6490 + $0x458] sm:$0xfc]
        %v8075 = vld [vmem:[%s6490 + $0x470] sm:$0x3]
        %v8076 = vld [vmem:[%s6490 + $0x478] sm:$0x3]
        %v8077 = vld [vmem:[%s6490 + $0x480] sm:$0xfc]
        %v8078 = vld [vmem:[%s6490 + $0x488] sm:$0xfc]
        %v8079 = vld [vmem:[%s6490 + $0x4a0] sm:$0x3]
        %v8080 = vld [vmem:[%s6490 + $0x4a8] sm:$0x3]
        %v8081 = vld [vmem:[%s6490 + $0x4b0] sm:$0xfc]
        %v8082 = vld [vmem:[%s6490 + $0x4b8] sm:$0xfc]
        %v8083 = vld [vmem:[%s6490 + $0x4d0] sm:$0x3]
        %v8084 = vld [vmem:[%s6490 + $0x4d8] sm:$0x3]
        %v8085 = vld [vmem:[%s6490 + $0x4e0] sm:$0xfc]
        %v8086 = vld [vmem:[%s6490 + $0x4e8] sm:$0xfc]
        %v8087 = vld [vmem:[%s6490 + $0x500] sm:$0x3]
        %v8088 = vld [vmem:[%s6490 + $0x508] sm:$0x3]
        %v8089 = vld [vmem:[%s6490 + $0x510] sm:$0xfc]
        %v8090 = vld [vmem:[%s6490 + $0x518] sm:$0xfc]
        %v8091 = vld [vmem:[%s6490 + $0x530] sm:$0x3]
        %v8092 = vld [vmem:[%s6490 + $0x538] sm:$0x3]
        %v8093 = vld [vmem:[%s6490 + $0x540] sm:$0xfc]
        %v8094 = vld [vmem:[%s6490 + $0x548] sm:$0xfc]
        %v8095 = vld [vmem:[%s6490 + $0x560] sm:$0x3]
        %v8096 = vld [vmem:[%s6490 + $0x568] sm:$0x3]
        %v8097 = vld [vmem:[%s6490 + $0x570] sm:$0xfc]
        %v8098 = vld [vmem:[%s6490 + $0x578] sm:$0xfc]
        %v8099 = vld [vmem:[%s6490 + $0x590] sm:$0x3]
        %v8100 = vld [vmem:[%s6490 + $0x598] sm:$0x3]
        %v8101 = vld [vmem:[%s6490 + $0x5a0] sm:$0xfc]
        %v8102 = vld [vmem:[%s6490 + $0x5a8] sm:$0xfc]
        %v8103 = vld [vmem:[%s6490 + $0x5c0] sm:$0x3]
        %v8104 = vld [vmem:[%s6490 + $0x5c8] sm:$0x3]
        %v8105 = vld [vmem:[%s6490 + $0x5d0] sm:$0xfc]
        %v8106 = vld [vmem:[%s6490 + $0x5d8] sm:$0xfc]
        %v8107 = vld [vmem:[%s6490 + $0x5f0] sm:$0x3]
        %v8108 = vld [vmem:[%s6490 + $0x5f8] sm:$0x3]
        %v8109 = vld [vmem:[%s6490 + $0x600] sm:$0xfc]
        %v8110 = vld [vmem:[%s6490 + $0x608] sm:$0xfc]
        %v8111 = vld [vmem:[%s6490 + $0x620] sm:$0x3]
        %v8112 = vld [vmem:[%s6490 + $0x628] sm:$0x3]
        %v8113 = vld [vmem:[%s6490 + $0x630] sm:$0xfc]
        %v8114 = vld [vmem:[%s6490 + $0x638] sm:$0xfc]
        %v8115 = vld [vmem:[%s6490 + $0x650] sm:$0x3]
        %v8116 = vld [vmem:[%s6490 + $0x658] sm:$0x3]
        %v8118 = vlaneseq
        %v8119 = vshrl.u32 %v8118, 7
        %v8120 = vsub.s32 0, %v8119
        %v8121 = vrot.slane %v7988, %v8120
        %v8122 = vlaneseq
        %v8123 = vshrl.u32 %v8122, 7
        %v8124 = vsub.s32 1, %v8123
        %v8125 = vrot.slane %v7988, %v8124
        %v8128 = vmul.f32 %v7989, %v8121
        %v8129 = vmul.f32 %v7990, %v8125
        %v8130 = vmul.f32 %v6493, %v8121
        %v8131 = vmul.f32 %v6494, %v8125
        %v8132 = vmul.f32 %v7991, %v8121
        %v8133 = vmul.f32 %v7992, %v8125
        %v8134 = vmul.f32 %v7993, %v8121
        %v8135 = vmul.f32 %v7994, %v8125
        %v8136 = vmul.f32 %v6497, %v8121
        %v8137 = vmul.f32 %v6498, %v8125
        %v8138 = vmul.f32 %v7995, %v8121
        %v8139 = vmul.f32 %v7996, %v8125
        %v8140 = vmul.f32 %v7997, %v8121
        %v8141 = vmul.f32 %v7998, %v8125
        %v8142 = vmul.f32 %v6501, %v8121
        %v8143 = vmul.f32 %v6502, %v8125
        %v8144 = vmul.f32 %v7999, %v8121
        %v8145 = vmul.f32 %v8000, %v8125
        %v8146 = vmul.f32 %v8001, %v8121
        %v8147 = vmul.f32 %v8002, %v8125
        %v8148 = vmul.f32 %v6505, %v8121
        %v8149 = vmul.f32 %v6506, %v8125
        %v8150 = vmul.f32 %v8003, %v8121
        %v8151 = vmul.f32 %v8004, %v8125
        %v8152 = vmul.f32 %v8005, %v8121
        %v8153 = vmul.f32 %v8006, %v8125
        %v8154 = vmul.f32 %v6509, %v8121
        %v8155 = vmul.f32 %v6510, %v8125
        %v8156 = vmul.f32 %v8007, %v8121
        %v8157 = vmul.f32 %v8008, %v8125
        %v8158 = vmul.f32 %v8009, %v8121
        %v8159 = vmul.f32 %v8010, %v8125
        %v8160 = vmul.f32 %v6513, %v8121
        %v8161 = vmul.f32 %v6514, %v8125
        %v8162 = vmul.f32 %v8011, %v8121
        %v8163 = vmul.f32 %v8012, %v8125
        %v8164 = vmul.f32 %v8013, %v8121
        %v8165 = vmul.f32 %v8014, %v8125
        %v8166 = vmul.f32 %v6517, %v8121
        %v8167 = vmul.f32 %v6518, %v8125
        %v8168 = vmul.f32 %v8015, %v8121
        %v8169 = vmul.f32 %v8016, %v8125
        %v8170 = vmul.f32 %v8017, %v8121
        %v8171 = vmul.f32 %v8018, %v8125
        %v8172 = vmul.f32 %v6521, %v8121
        %v8173 = vmul.f32 %v6522, %v8125
        %v8174 = vmul.f32 %v8019, %v8121
        %v8175 = vmul.f32 %v8020, %v8125
        %v8176 = vmul.f32 %v8021, %v8121
        %v8177 = vmul.f32 %v8022, %v8125
        %v8178 = vmul.f32 %v6525, %v8121
        %v8179 = vmul.f32 %v6526, %v8125
        %v8180 = vmul.f32 %v8023, %v8121
        %v8181 = vmul.f32 %v8024, %v8125
        %v8182 = vmul.f32 %v8025, %v8121
        %v8183 = vmul.f32 %v8026, %v8125
        %v8184 = vmul.f32 %v6529, %v8121
        %v8185 = vmul.f32 %v6530, %v8125
        %v8186 = vmul.f32 %v8027, %v8121
        %v8187 = vmul.f32 %v8028, %v8125
        %v8188 = vmul.f32 %v8029, %v8121
        %v8189 = vmul.f32 %v8030, %v8125
        %v8190 = vmul.f32 %v6533, %v8121
        %v8191 = vmul.f32 %v6534, %v8125
        %v8192 = vmul.f32 %v8031, %v8121
        %v8193 = vmul.f32 %v8032, %v8125
        %v8194 = vmul.f32 %v8033, %v8121
        %v8195 = vmul.f32 %v8034, %v8125
        %v8196 = vmul.f32 %v6537, %v8121
        %v8197 = vmul.f32 %v6538, %v8125
        %v8198 = vmul.f32 %v8035, %v8121
        %v8199 = vmul.f32 %v8036, %v8125
        %v8200 = vmul.f32 %v8037, %v8121
        %v8201 = vmul.f32 %v8038, %v8125
        %v8202 = vmul.f32 %v6541, %v8121
        %v8203 = vmul.f32 %v6542, %v8125
        %v8204 = vmul.f32 %v8039, %v8121
        %v8205 = vmul.f32 %v8040, %v8125
        %v8206 = vmul.f32 %v8041, %v8121
        %v8207 = vmul.f32 %v8042, %v8125
        %v8208 = vmul.f32 %v6545, %v8121
        %v8209 = vmul.f32 %v6546, %v8125
        %v8210 = vmul.f32 %v8043, %v8121
        %v8211 = vmul.f32 %v8044, %v8125
        %v8212 = vmul.f32 %v8045, %v8121
        %v8213 = vmul.f32 %v8046, %v8125
        %v8214 = vmul.f32 %v6549, %v8121
        %v8215 = vmul.f32 %v6550, %v8125
        %v8216 = vmul.f32 %v8047, %v8121
        %v8217 = vmul.f32 %v8048, %v8125
        %v8218 = vmul.f32 %v8049, %v8121
        %v8219 = vmul.f32 %v8050, %v8125
        %v8220 = vmul.f32 %v6553, %v8121
        %v8221 = vmul.f32 %v6554, %v8125
        %v8222 = vmul.f32 %v8051, %v8121
        %v8223 = vmul.f32 %v8052, %v8125
        %v8224 = vmul.f32 %v8053, %v8121
        %v8225 = vmul.f32 %v8054, %v8125
        %v8226 = vmul.f32 %v6557, %v8121
        %v8227 = vmul.f32 %v6558, %v8125
        %v8228 = vmul.f32 %v8055, %v8121
        %v8229 = vmul.f32 %v8056, %v8125
        %v8230 = vmul.f32 %v8057, %v8121
        %v8231 = vmul.f32 %v8058, %v8125
        %v8232 = vmul.f32 %v6561, %v8121
        %v8233 = vmul.f32 %v6562, %v8125
        %v8234 = vmul.f32 %v8059, %v8121
        %v8235 = vmul.f32 %v8060, %v8125
        %v8236 = vmul.f32 %v8061, %v8121
        %v8237 = vmul.f32 %v8062, %v8125
        %v8238 = vmul.f32 %v6565, %v8121
        %v8239 = vmul.f32 %v6566, %v8125
        %v8240 = vmul.f32 %v8063, %v8121
        %v8241 = vmul.f32 %v8064, %v8125
        %v8242 = vmul.f32 %v8065, %v8121
        %v8243 = vmul.f32 %v8066, %v8125
        %v8244 = vmul.f32 %v6569, %v8121
        %v8245 = vmul.f32 %v6570, %v8125
        %v8246 = vmul.f32 %v8067, %v8121
        %v8247 = vmul.f32 %v8068, %v8125
        %v8248 = vmul.f32 %v8069, %v8121
        %v8249 = vmul.f32 %v8070, %v8125
        %v8250 = vmul.f32 %v6573, %v8121
        %v8251 = vmul.f32 %v6574, %v8125
        %v8252 = vmul.f32 %v8071, %v8121
        %v8253 = vmul.f32 %v8072, %v8125
        %v8254 = vmul.f32 %v8073, %v8121
        %v8255 = vmul.f32 %v8074, %v8125
        %v8256 = vmul.f32 %v6577, %v8121
        %v8257 = vmul.f32 %v6578, %v8125
        %v8258 = vmul.f32 %v8075, %v8121
        %v8259 = vmul.f32 %v8076, %v8125
        %v8260 = vmul.f32 %v8077, %v8121
        %v8261 = vmul.f32 %v8078, %v8125
        %v8262 = vmul.f32 %v6581, %v8121
        %v8263 = vmul.f32 %v6582, %v8125
        %v8264 = vmul.f32 %v8079, %v8121
        %v8265 = vmul.f32 %v8080, %v8125
        %v8266 = vmul.f32 %v8081, %v8121
        %v8267 = vmul.f32 %v8082, %v8125
        %v8268 = vmul.f32 %v6585, %v8121
        %v8269 = vmul.f32 %v6586, %v8125
        %v8270 = vmul.f32 %v8083, %v8121
        %v8271 = vmul.f32 %v8084, %v8125
        %v8272 = vmul.f32 %v8085, %v8121
        %v8273 = vmul.f32 %v8086, %v8125
        %v8274 = vmul.f32 %v6589, %v8121
        %v8275 = vmul.f32 %v6590, %v8125
        %v8276 = vmul.f32 %v8087, %v8121
        %v8277 = vmul.f32 %v8088, %v8125
        %v8278 = vmul.f32 %v8089, %v8121
        %v8279 = vmul.f32 %v8090, %v8125
        %v8280 = vmul.f32 %v6593, %v8121
        %v8281 = vmul.f32 %v6594, %v8125
        %v8282 = vmul.f32 %v8091, %v8121
        %v8283 = vmul.f32 %v8092, %v8125
        %v8284 = vmul.f32 %v8093, %v8121
        %v8285 = vmul.f32 %v8094, %v8125
        %v8286 = vmul.f32 %v6597, %v8121
        %v8287 = vmul.f32 %v6598, %v8125
        %v8288 = vmul.f32 %v8095, %v8121
        %v8289 = vmul.f32 %v8096, %v8125
        %v8290 = vmul.f32 %v8097, %v8121
        %v8291 = vmul.f32 %v8098, %v8125
        %v8292 = vmul.f32 %v6601, %v8121
        %v8293 = vmul.f32 %v6602, %v8125
        %v8294 = vmul.f32 %v8099, %v8121
        %v8295 = vmul.f32 %v8100, %v8125
        %v8296 = vmul.f32 %v8101, %v8121
        %v8297 = vmul.f32 %v8102, %v8125
        %v8298 = vmul.f32 %v6605, %v8121
        %v8299 = vmul.f32 %v6606, %v8125
        %v8300 = vmul.f32 %v8103, %v8121
        %v8301 = vmul.f32 %v8104, %v8125
        %v8302 = vmul.f32 %v8105, %v8121
        %v8303 = vmul.f32 %v8106, %v8125
        %v8304 = vmul.f32 %v6609, %v8121
        %v8305 = vmul.f32 %v6610, %v8125
        %v8306 = vmul.f32 %v8107, %v8121
        %v8307 = vmul.f32 %v8108, %v8125
        %v8308 = vmul.f32 %v8109, %v8121
        %v8309 = vmul.f32 %v8110, %v8125
        %v8310 = vmul.f32 %v6613, %v8121
        %v8311 = vmul.f32 %v6614, %v8125
        %v8312 = vmul.f32 %v8111, %v8121
        %v8313 = vmul.f32 %v8112, %v8125
        %v8314 = vmul.f32 %v8113, %v8121
        %v8315 = vmul.f32 %v8114, %v8125
        %v8316 = vmul.f32 %v6617, %v8121
        %v8317 = vmul.f32 %v6618, %v8125
        %v8318 = vmul.f32 %v8115, %v8121
        %v8319 = vmul.f32 %v8116, %v8125
        %v8512 = vrot.slane %v8128, 2
        %v8513 = vrot.slane %v8130, 2
        %v8514 = vsel %vm3312, %v8512, %v8513
        %v8515 = vrot.slane %v8129, 2
        %v8516 = vrot.slane %v8131, 2
        %v8517 = vsel %vm3312, %v8515, %v8516
        %v8518 = vrot.slane %v8132, 2
        %v8519 = vsel %vm3312, %v8513, %v8518
        %v8520 = vrot.slane %v8133, 2
        %v8521 = vsel %vm3312, %v8516, %v8520
        %v8522 = vrot.slane %v8134, 2
        %v8523 = vrot.slane %v8136, 2
        %v8524 = vsel %vm3312, %v8522, %v8523
        %v8525 = vrot.slane %v8135, 2
        %v8526 = vrot.slane %v8137, 2
        %v8527 = vsel %vm3312, %v8525, %v8526
        %v8528 = vrot.slane %v8138, 2
        %v8529 = vsel %vm3312, %v8523, %v8528
        %v8530 = vrot.slane %v8139, 2
        %v8531 = vsel %vm3312, %v8526, %v8530
        %v8532 = vrot.slane %v8140, 2
        %v8533 = vrot.slane %v8142, 2
        %v8534 = vsel %vm3312, %v8532, %v8533
        %v8535 = vrot.slane %v8141, 2
        %v8536 = vrot.slane %v8143, 2
        %v8537 = vsel %vm3312, %v8535, %v8536
        %v8538 = vrot.slane %v8144, 2
        %v8539 = vsel %vm3312, %v8533, %v8538
        %v8540 = vrot.slane %v8145, 2
        %v8541 = vsel %vm3312, %v8536, %v8540
        %v8542 = vrot.slane %v8146, 2
        %v8543 = vrot.slane %v8148, 2
        %v8544 = vsel %vm3312, %v8542, %v8543
        %v8545 = vrot.slane %v8147, 2
        %v8546 = vrot.slane %v8149, 2
        %v8547 = vsel %vm3312, %v8545, %v8546
        %v8548 = vrot.slane %v8150, 2
        %v8549 = vsel %vm3312, %v8543, %v8548
        %v8550 = vrot.slane %v8151, 2
        %v8551 = vsel %vm3312, %v8546, %v8550
        %v8552 = vrot.slane %v8152, 2
        %v8553 = vrot.slane %v8154, 2
        %v8554 = vsel %vm3312, %v8552, %v8553
        %v8555 = vrot.slane %v8153, 2
        %v8556 = vrot.slane %v8155, 2
        %v8557 = vsel %vm3312, %v8555, %v8556
        %v8558 = vrot.slane %v8156, 2
        %v8559 = vsel %vm3312, %v8553, %v8558
        %v8560 = vrot.slane %v8157, 2
        %v8561 = vsel %vm3312, %v8556, %v8560
        %v8562 = vrot.slane %v8158, 2
        %v8563 = vrot.slane %v8160, 2
        %v8564 = vsel %vm3312, %v8562, %v8563
        %v8565 = vrot.slane %v8159, 2
        %v8566 = vrot.slane %v8161, 2
        %v8567 = vsel %vm3312, %v8565, %v8566
        %v8568 = vrot.slane %v8162, 2
        %v8569 = vsel %vm3312, %v8563, %v8568
        %v8570 = vrot.slane %v8163, 2
        %v8571 = vsel %vm3312, %v8566, %v8570
        %v8572 = vrot.slane %v8164, 2
        %v8573 = vrot.slane %v8166, 2
        %v8574 = vsel %vm3312, %v8572, %v8573
        %v8575 = vrot.slane %v8165, 2
        %v8576 = vrot.slane %v8167, 2
        %v8577 = vsel %vm3312, %v8575, %v8576
        %v8578 = vrot.slane %v8168, 2
        %v8579 = vsel %vm3312, %v8573, %v8578
        %v8580 = vrot.slane %v8169, 2
        %v8581 = vsel %vm3312, %v8576, %v8580
        %v8582 = vrot.slane %v8170, 2
        %v8583 = vrot.slane %v8172, 2
        %v8584 = vsel %vm3312, %v8582, %v8583
        %v8585 = vrot.slane %v8171, 2
        %v8586 = vrot.slane %v8173, 2
        %v8587 = vsel %vm3312, %v8585, %v8586
        %v8588 = vrot.slane %v8174, 2
        %v8589 = vsel %vm3312, %v8583, %v8588
        %v8590 = vrot.slane %v8175, 2
        %v8591 = vsel %vm3312, %v8586, %v8590
        %v8592 = vrot.slane %v8176, 2
        %v8593 = vrot.slane %v8178, 2
        %v8594 = vsel %vm3312, %v8592, %v8593
        %v8595 = vrot.slane %v8177, 2
        %v8596 = vrot.slane %v8179, 2
        %v8597 = vsel %vm3312, %v8595, %v8596
        %v8598 = vrot.slane %v8180, 2
        %v8599 = vsel %vm3312, %v8593, %v8598
        %v8600 = vrot.slane %v8181, 2
        %v8601 = vsel %vm3312, %v8596, %v8600
        %v8602 = vrot.slane %v8182, 2
        %v8603 = vrot.slane %v8184, 2
        %v8604 = vsel %vm3312, %v8602, %v8603
        %v8605 = vrot.slane %v8183, 2
        %v8606 = vrot.slane %v8185, 2
        %v8607 = vsel %vm3312, %v8605, %v8606
        %v8608 = vrot.slane %v8186, 2
        %v8609 = vsel %vm3312, %v8603, %v8608
        %v8610 = vrot.slane %v8187, 2
        %v8611 = vsel %vm3312, %v8606, %v8610
        %v8612 = vrot.slane %v8188, 2
        %v8613 = vrot.slane %v8190, 2
        %v8614 = vsel %vm3312, %v8612, %v8613
        %v8615 = vrot.slane %v8189, 2
        %v8616 = vrot.slane %v8191, 2
        %v8617 = vsel %vm3312, %v8615, %v8616
        %v8618 = vrot.slane %v8192, 2
        %v8619 = vsel %vm3312, %v8613, %v8618
        %v8620 = vrot.slane %v8193, 2
        %v8621 = vsel %vm3312, %v8616, %v8620
        %v8622 = vrot.slane %v8194, 2
        %v8623 = vrot.slane %v8196, 2
        %v8624 = vsel %vm3312, %v8622, %v8623
        %v8625 = vrot.slane %v8195, 2
        %v8626 = vrot.slane %v8197, 2
        %v8627 = vsel %vm3312, %v8625, %v8626
        %v8628 = vrot.slane %v8198, 2
        %v8629 = vsel %vm3312, %v8623, %v8628
        %v8630 = vrot.slane %v8199, 2
        %v8631 = vsel %vm3312, %v8626, %v8630
        %v8632 = vrot.slane %v8200, 2
        %v8633 = vrot.slane %v8202, 2
        %v8634 = vsel %vm3312, %v8632, %v8633
        %v8635 = vrot.slane %v8201, 2
        %v8636 = vrot.slane %v8203, 2
        %v8637 = vsel %vm3312, %v8635, %v8636
        %v8638 = vrot.slane %v8204, 2
        %v8639 = vsel %vm3312, %v8633, %v8638
        %v8640 = vrot.slane %v8205, 2
        %v8641 = vsel %vm3312, %v8636, %v8640
        %v8642 = vrot.slane %v8206, 2
        %v8643 = vrot.slane %v8208, 2
        %v8644 = vsel %vm3312, %v8642, %v8643
        %v8645 = vrot.slane %v8207, 2
        %v8646 = vrot.slane %v8209, 2
        %v8647 = vsel %vm3312, %v8645, %v8646
        %v8648 = vrot.slane %v8210, 2
        %v8649 = vsel %vm3312, %v8643, %v8648
        %v8650 = vrot.slane %v8211, 2
        %v8651 = vsel %vm3312, %v8646, %v8650
        %v8652 = vrot.slane %v8212, 2
        %v8653 = vrot.slane %v8214, 2
        %v8654 = vsel %vm3312, %v8652, %v8653
        %v8655 = vrot.slane %v8213, 2
        %v8656 = vrot.slane %v8215, 2
        %v8657 = vsel %vm3312, %v8655, %v8656
        %v8658 = vrot.slane %v8216, 2
        %v8659 = vsel %vm3312, %v8653, %v8658
        %v8660 = vrot.slane %v8217, 2
        %v8661 = vsel %vm3312, %v8656, %v8660
        %v8662 = vrot.slane %v8218, 2
        %v8663 = vrot.slane %v8220, 2
        %v8664 = vsel %vm3312, %v8662, %v8663
        %v8665 = vrot.slane %v8219, 2
        %v8666 = vrot.slane %v8221, 2
        %v8667 = vsel %vm3312, %v8665, %v8666
        %v8668 = vrot.slane %v8222, 2
        %v8669 = vsel %vm3312, %v8663, %v8668
        %v8670 = vrot.slane %v8223, 2
        %v8671 = vsel %vm3312, %v8666, %v8670
        %v8672 = vrot.slane %v8224, 2
        %v8673 = vrot.slane %v8226, 2
        %v8674 = vsel %vm3312, %v8672, %v8673
        %v8675 = vrot.slane %v8225, 2
        %v8676 = vrot.slane %v8227, 2
        %v8677 = vsel %vm3312, %v8675, %v8676
        %v8678 = vrot.slane %v8228, 2
        %v8679 = vsel %vm3312, %v8673, %v8678
        %v8680 = vrot.slane %v8229, 2
        %v8681 = vsel %vm3312, %v8676, %v8680
        %v8682 = vrot.slane %v8230, 2
        %v8683 = vrot.slane %v8232, 2
        %v8684 = vsel %vm3312, %v8682, %v8683
        %v8685 = vrot.slane %v8231, 2
        %v8686 = vrot.slane %v8233, 2
        %v8687 = vsel %vm3312, %v8685, %v8686
        %v8688 = vrot.slane %v8234, 2
        %v8689 = vsel %vm3312, %v8683, %v8688
        %v8690 = vrot.slane %v8235, 2
        %v8691 = vsel %vm3312, %v8686, %v8690
        %v8692 = vrot.slane %v8236, 2
        %v8693 = vrot.slane %v8238, 2
        %v8694 = vsel %vm3312, %v8692, %v8693
        %v8695 = vrot.slane %v8237, 2
        %v8696 = vrot.slane %v8239, 2
        %v8697 = vsel %vm3312, %v8695, %v8696
        %v8698 = vrot.slane %v8240, 2
        %v8699 = vsel %vm3312, %v8693, %v8698
        %v8700 = vrot.slane %v8241, 2
        %v8701 = vsel %vm3312, %v8696, %v8700
        %v8702 = vrot.slane %v8242, 2
        %v8703 = vrot.slane %v8244, 2
        %v8704 = vsel %vm3312, %v8702, %v8703
        %v8705 = vrot.slane %v8243, 2
        %v8706 = vrot.slane %v8245, 2
        %v8707 = vsel %vm3312, %v8705, %v8706
        %v8708 = vrot.slane %v8246, 2
        %v8709 = vsel %vm3312, %v8703, %v8708
        %v8710 = vrot.slane %v8247, 2
        %v8711 = vsel %vm3312, %v8706, %v8710
        %v8712 = vrot.slane %v8248, 2
        %v8713 = vrot.slane %v8250, 2
        %v8714 = vsel %vm3312, %v8712, %v8713
        %v8715 = vrot.slane %v8249, 2
        %v8716 = vrot.slane %v8251, 2
        %v8717 = vsel %vm3312, %v8715, %v8716
        %v8718 = vrot.slane %v8252, 2
        %v8719 = vsel %vm3312, %v8713, %v8718
        %v8720 = vrot.slane %v8253, 2
        %v8721 = vsel %vm3312, %v8716, %v8720
        %v8722 = vrot.slane %v8254, 2
        %v8723 = vrot.slane %v8256, 2
        %v8724 = vsel %vm3312, %v8722, %v8723
        %v8725 = vrot.slane %v8255, 2
        %v8726 = vrot.slane %v8257, 2
        %v8727 = vsel %vm3312, %v8725, %v8726
        %v8728 = vrot.slane %v8258, 2
        %v8729 = vsel %vm3312, %v8723, %v8728
        %v8730 = vrot.slane %v8259, 2
        %v8731 = vsel %vm3312, %v8726, %v8730
        %v8732 = vrot.slane %v8260, 2
        %v8733 = vrot.slane %v8262, 2
        %v8734 = vsel %vm3312, %v8732, %v8733
        %v8735 = vrot.slane %v8261, 2
        %v8736 = vrot.slane %v8263, 2
        %v8737 = vsel %vm3312, %v8735, %v8736
        %v8738 = vrot.slane %v8264, 2
        %v8739 = vsel %vm3312, %v8733, %v8738
        %v8740 = vrot.slane %v8265, 2
        %v8741 = vsel %vm3312, %v8736, %v8740
        %v8742 = vrot.slane %v8266, 2
        %v8743 = vrot.slane %v8268, 2
        %v8744 = vsel %vm3312, %v8742, %v8743
        %v8745 = vrot.slane %v8267, 2
        %v8746 = vrot.slane %v8269, 2
        %v8747 = vsel %vm3312, %v8745, %v8746
        %v8748 = vrot.slane %v8270, 2
        %v8749 = vsel %vm3312, %v8743, %v8748
        %v8750 = vrot.slane %v8271, 2
        %v8751 = vsel %vm3312, %v8746, %v8750
        %v8752 = vrot.slane %v8272, 2
        %v8753 = vrot.slane %v8274, 2
        %v8754 = vsel %vm3312, %v8752, %v8753
        %v8755 = vrot.slane %v8273, 2
        %v8756 = vrot.slane %v8275, 2
        %v8757 = vsel %vm3312, %v8755, %v8756
        %v8758 = vrot.slane %v8276, 2
        %v8759 = vsel %vm3312, %v8753, %v8758
        %v8760 = vrot.slane %v8277, 2
        %v8761 = vsel %vm3312, %v8756, %v8760
        %v8762 = vrot.slane %v8278, 2
        %v8763 = vrot.slane %v8280, 2
        %v8764 = vsel %vm3312, %v8762, %v8763
        %v8765 = vrot.slane %v8279, 2
        %v8766 = vrot.slane %v8281, 2
        %v8767 = vsel %vm3312, %v8765, %v8766
        %v8768 = vrot.slane %v8282, 2
        %v8769 = vsel %vm3312, %v8763, %v8768
        %v8770 = vrot.slane %v8283, 2
        %v8771 = vsel %vm3312, %v8766, %v8770
        %v8772 = vrot.slane %v8284, 2
        %v8773 = vrot.slane %v8286, 2
        %v8774 = vsel %vm3312, %v8772, %v8773
        %v8775 = vrot.slane %v8285, 2
        %v8776 = vrot.slane %v8287, 2
        %v8777 = vsel %vm3312, %v8775, %v8776
        %v8778 = vrot.slane %v8288, 2
        %v8779 = vsel %vm3312, %v8773, %v8778
        %v8780 = vrot.slane %v8289, 2
        %v8781 = vsel %vm3312, %v8776, %v8780
        %v8782 = vrot.slane %v8290, 2
        %v8783 = vrot.slane %v8292, 2
        %v8784 = vsel %vm3312, %v8782, %v8783
        %v8785 = vrot.slane %v8291, 2
        %v8786 = vrot.slane %v8293, 2
        %v8787 = vsel %vm3312, %v8785, %v8786
        %v8788 = vrot.slane %v8294, 2
        %v8789 = vsel %vm3312, %v8783, %v8788
        %v8790 = vrot.slane %v8295, 2
        %v8791 = vsel %vm3312, %v8786, %v8790
        %v8792 = vrot.slane %v8296, 2
        %v8793 = vrot.slane %v8298, 2
        %v8794 = vsel %vm3312, %v8792, %v8793
        %v8795 = vrot.slane %v8297, 2
        %v8796 = vrot.slane %v8299, 2
        %v8797 = vsel %vm3312, %v8795, %v8796
        %v8798 = vrot.slane %v8300, 2
        %v8799 = vsel %vm3312, %v8793, %v8798
        %v8800 = vrot.slane %v8301, 2
        %v8801 = vsel %vm3312, %v8796, %v8800
        %v8802 = vrot.slane %v8302, 2
        %v8803 = vrot.slane %v8304, 2
        %v8804 = vsel %vm3312, %v8802, %v8803
        %v8805 = vrot.slane %v8303, 2
        %v8806 = vrot.slane %v8305, 2
        %v8807 = vsel %vm3312, %v8805, %v8806
        %v8808 = vrot.slane %v8306, 2
        %v8809 = vsel %vm3312, %v8803, %v8808
        %v8810 = vrot.slane %v8307, 2
        %v8811 = vsel %vm3312, %v8806, %v8810
        %v8812 = vrot.slane %v8308, 2
        %v8813 = vrot.slane %v8310, 2
        %v8814 = vsel %vm3312, %v8812, %v8813
        %v8815 = vrot.slane %v8309, 2
        %v8816 = vrot.slane %v8311, 2
        %v8817 = vsel %vm3312, %v8815, %v8816
        %v8818 = vrot.slane %v8312, 2
        %v8819 = vsel %vm3312, %v8813, %v8818
        %v8820 = vrot.slane %v8313, 2
        %v8821 = vsel %vm3312, %v8816, %v8820
        %v8822 = vrot.slane %v8314, 2
        %v8823 = vrot.slane %v8316, 2
        %v8824 = vsel %vm3312, %v8822, %v8823
        %v8825 = vrot.slane %v8315, 2
        %v8826 = vrot.slane %v8317, 2
        %v8827 = vsel %vm3312, %v8825, %v8826
        %v8828 = vrot.slane %v8318, 2
        %v8829 = vsel %vm3312, %v8823, %v8828
        %v8830 = vrot.slane %v8319, 2
        %v8831 = vsel %vm3312, %v8826, %v8830
        %v8960 = vadd.f32 %v7859, %v8514
        %v8961 = vadd.f32 %v7860, %v8517
        %v8962 = vadd.f32 %v7861, %v8519
        %v8963 = vadd.f32 %v7862, %v8521
        %v8964 = vadd.f32 %v7863, %v8524
        %v8965 = vadd.f32 %v7864, %v8527
        %v8966 = vadd.f32 %v7865, %v8529
        %v8967 = vadd.f32 %v7866, %v8531
        %v8968 = vadd.f32 %v7867, %v8534
        %v8969 = vadd.f32 %v7868, %v8537
        %v8970 = vadd.f32 %v7869, %v8539
        %v8971 = vadd.f32 %v7870, %v8541
        %v8972 = vadd.f32 %v7871, %v8544
        %v8973 = vadd.f32 %v7872, %v8547
        %v8974 = vadd.f32 %v7873, %v8549
        %v8975 = vadd.f32 %v7874, %v8551
        %v8976 = vadd.f32 %v7875, %v8554
        %v8977 = vadd.f32 %v7876, %v8557
        %v8978 = vadd.f32 %v7877, %v8559
        %v8979 = vadd.f32 %v7878, %v8561
        %v8980 = vadd.f32 %v7879, %v8564
        %v8981 = vadd.f32 %v7880, %v8567
        %v8982 = vadd.f32 %v7881, %v8569
        %v8983 = vadd.f32 %v7882, %v8571
        %v8984 = vadd.f32 %v7883, %v8574
        %v8985 = vadd.f32 %v7884, %v8577
        %v8986 = vadd.f32 %v7885, %v8579
        %v8987 = vadd.f32 %v7886, %v8581
        %v8988 = vadd.f32 %v7887, %v8584
        %v8989 = vadd.f32 %v7888, %v8587
        %v8990 = vadd.f32 %v7889, %v8589
        %v8991 = vadd.f32 %v7890, %v8591
        %v8992 = vadd.f32 %v7891, %v8594
        %v8993 = vadd.f32 %v7892, %v8597
        %v8994 = vadd.f32 %v7893, %v8599
        %v8995 = vadd.f32 %v7894, %v8601
        %v8996 = vadd.f32 %v7895, %v8604
        %v8997 = vadd.f32 %v7896, %v8607
        %v8998 = vadd.f32 %v7897, %v8609
        %v8999 = vadd.f32 %v7898, %v8611
        %v9000 = vadd.f32 %v7899, %v8614
        %v9001 = vadd.f32 %v7900, %v8617
        %v9002 = vadd.f32 %v7901, %v8619
        %v9003 = vadd.f32 %v7902, %v8621
        %v9004 = vadd.f32 %v7903, %v8624
        %v9005 = vadd.f32 %v7904, %v8627
        %v9006 = vadd.f32 %v7905, %v8629
        %v9007 = vadd.f32 %v7906, %v8631
        %v9008 = vadd.f32 %v7907, %v8634
        %v9009 = vadd.f32 %v7908, %v8637
        %v9010 = vadd.f32 %v7909, %v8639
        %v9011 = vadd.f32 %v7910, %v8641
        %v9012 = vadd.f32 %v7911, %v8644
        %v9013 = vadd.f32 %v7912, %v8647
        %v9014 = vadd.f32 %v7913, %v8649
        %v9015 = vadd.f32 %v7914, %v8651
        %v9016 = vadd.f32 %v7915, %v8654
        %v9017 = vadd.f32 %v7916, %v8657
        %v9018 = vadd.f32 %v7917, %v8659
        %v9019 = vadd.f32 %v7918, %v8661
        %v9020 = vadd.f32 %v7919, %v8664
        %v9021 = vadd.f32 %v7920, %v8667
        %v9022 = vadd.f32 %v7921, %v8669
        %v9023 = vadd.f32 %v7922, %v8671
        %v9024 = vadd.f32 %v7923, %v8674
        %v9025 = vadd.f32 %v7924, %v8677
        %v9026 = vadd.f32 %v7925, %v8679
        %v9027 = vadd.f32 %v7926, %v8681
        %v9028 = vadd.f32 %v7927, %v8684
        %v9029 = vadd.f32 %v7928, %v8687
        %v9030 = vadd.f32 %v7929, %v8689
        %v9031 = vadd.f32 %v7930, %v8691
        %v9032 = vadd.f32 %v7931, %v8694
        %v9033 = vadd.f32 %v7932, %v8697
        %v9034 = vadd.f32 %v7933, %v8699
        %v9035 = vadd.f32 %v7934, %v8701
        %v9036 = vadd.f32 %v7935, %v8704
        %v9037 = vadd.f32 %v7936, %v8707
        %v9038 = vadd.f32 %v7937, %v8709
        %v9039 = vadd.f32 %v7938, %v8711
        %v9040 = vadd.f32 %v7939, %v8714
        %v9041 = vadd.f32 %v7940, %v8717
        %v9042 = vadd.f32 %v7941, %v8719
        %v9043 = vadd.f32 %v7942, %v8721
        %v9044 = vadd.f32 %v7943, %v8724
        %v9045 = vadd.f32 %v7944, %v8727
        %v9046 = vadd.f32 %v7945, %v8729
        %v9047 = vadd.f32 %v7946, %v8731
        %v9048 = vadd.f32 %v7947, %v8734
        %v9049 = vadd.f32 %v7948, %v8737
        %v9050 = vadd.f32 %v7949, %v8739
        %v9051 = vadd.f32 %v7950, %v8741
        %v9052 = vadd.f32 %v7951, %v8744
        %v9053 = vadd.f32 %v7952, %v8747
        %v9054 = vadd.f32 %v7953, %v8749
        %v9055 = vadd.f32 %v7954, %v8751
        %v9056 = vadd.f32 %v7955, %v8754
        %v9057 = vadd.f32 %v7956, %v8757
        %v9058 = vadd.f32 %v7957, %v8759
        %v9059 = vadd.f32 %v7958, %v8761
        %v9060 = vadd.f32 %v7959, %v8764
        %v9061 = vadd.f32 %v7960, %v8767
        %v9062 = vadd.f32 %v7961, %v8769
        %v9063 = vadd.f32 %v7962, %v8771
        %v9064 = vadd.f32 %v7963, %v8774
        %v9065 = vadd.f32 %v7964, %v8777
        %v9066 = vadd.f32 %v7965, %v8779
        %v9067 = vadd.f32 %v7966, %v8781
        %v9068 = vadd.f32 %v7967, %v8784
        %v9069 = vadd.f32 %v7968, %v8787
        %v9070 = vadd.f32 %v7969, %v8789
        %v9071 = vadd.f32 %v7970, %v8791
        %v9072 = vadd.f32 %v7971, %v8794
        %v9073 = vadd.f32 %v7972, %v8797
        %v9074 = vadd.f32 %v7973, %v8799
        %v9075 = vadd.f32 %v7974, %v8801
        %v9076 = vadd.f32 %v7975, %v8804
        %v9077 = vadd.f32 %v7976, %v8807
        %v9078 = vadd.f32 %v7977, %v8809
        %v9079 = vadd.f32 %v7978, %v8811
        %v9080 = vadd.f32 %v7979, %v8814
        %v9081 = vadd.f32 %v7980, %v8817
        %v9082 = vadd.f32 %v7981, %v8819
        %v9083 = vadd.f32 %v7982, %v8821
        %v9084 = vadd.f32 %v7983, %v8824
        %v9085 = vadd.f32 %v7984, %v8827
        %v9086 = vadd.f32 %v7985, %v8829
        %v9087 = vadd.f32 %v7986, %v8831
        %v9088 = vld [vmem:[%s334] sm:$0x3]
        %v9090 = vlaneseq
        %v9091 = vshrl.u32 %v9090, 7
        %v9092 = vsub.s32 0, %v9091
        %v9093 = vrot.slane %v9088, %v9092
        %v9094 = vlaneseq
        %v9095 = vshrl.u32 %v9094, 7
        %v9096 = vsub.s32 1, %v9095
        %v9097 = vrot.slane %v9088, %v9096
        %v9100 = vadd.f32 %v8960, %v9093
        %v9101 = vadd.f32 %v8961, %v9097
        %v9102 = vadd.f32 %v8962, %v9093
        %v9103 = vadd.f32 %v8963, %v9097
        %v9104 = vadd.f32 %v8964, %v9093
        %v9105 = vadd.f32 %v8965, %v9097
        %v9106 = vadd.f32 %v8966, %v9093
        %v9107 = vadd.f32 %v8967, %v9097
        %v9108 = vadd.f32 %v8968, %v9093
        %v9109 = vadd.f32 %v8969, %v9097
        %v9110 = vadd.f32 %v8970, %v9093
        %v9111 = vadd.f32 %v8971, %v9097
        %v9112 = vadd.f32 %v8972, %v9093
        %v9113 = vadd.f32 %v8973, %v9097
        %v9114 = vadd.f32 %v8974, %v9093
        %v9115 = vadd.f32 %v8975, %v9097
        %v9116 = vadd.f32 %v8976, %v9093
        %v9117 = vadd.f32 %v8977, %v9097
        %v9118 = vadd.f32 %v8978, %v9093
        %v9119 = vadd.f32 %v8979, %v9097
        %v9120 = vadd.f32 %v8980, %v9093
        %v9121 = vadd.f32 %v8981, %v9097
        %v9122 = vadd.f32 %v8982, %v9093
        %v9123 = vadd.f32 %v8983, %v9097
        %v9124 = vadd.f32 %v8984, %v9093
        %v9125 = vadd.f32 %v8985, %v9097
        %v9126 = vadd.f32 %v8986, %v9093
        %v9127 = vadd.f32 %v8987, %v9097
        %v9128 = vadd.f32 %v8988, %v9093
        %v9129 = vadd.f32 %v8989, %v9097
        %v9130 = vadd.f32 %v8990, %v9093
        %v9131 = vadd.f32 %v8991, %v9097
        %v9132 = vadd.f32 %v8992, %v9093
        %v9133 = vadd.f32 %v8993, %v9097
        %v9134 = vadd.f32 %v8994, %v9093
        %v9135 = vadd.f32 %v8995, %v9097
        %v9136 = vadd.f32 %v8996, %v9093
        %v9137 = vadd.f32 %v8997, %v9097
        %v9138 = vadd.f32 %v8998, %v9093
        %v9139 = vadd.f32 %v8999, %v9097
        %v9140 = vadd.f32 %v9000, %v9093
        %v9141 = vadd.f32 %v9001, %v9097
        %v9142 = vadd.f32 %v9002, %v9093
        %v9143 = vadd.f32 %v9003, %v9097
        %v9144 = vadd.f32 %v9004, %v9093
        %v9145 = vadd.f32 %v9005, %v9097
        %v9146 = vadd.f32 %v9006, %v9093
        %v9147 = vadd.f32 %v9007, %v9097
        %v9148 = vadd.f32 %v9008, %v9093
        %v9149 = vadd.f32 %v9009, %v9097
        %v9150 = vadd.f32 %v9010, %v9093
        %v9151 = vadd.f32 %v9011, %v9097
        %v9152 = vadd.f32 %v9012, %v9093
        %v9153 = vadd.f32 %v9013, %v9097
        %v9154 = vadd.f32 %v9014, %v9093
        %v9155 = vadd.f32 %v9015, %v9097
        %v9156 = vadd.f32 %v9016, %v9093
        %v9157 = vadd.f32 %v9017, %v9097
        %v9158 = vadd.f32 %v9018, %v9093
        %v9159 = vadd.f32 %v9019, %v9097
        %v9160 = vadd.f32 %v9020, %v9093
        %v9161 = vadd.f32 %v9021, %v9097
        %v9162 = vadd.f32 %v9022, %v9093
        %v9163 = vadd.f32 %v9023, %v9097
        %v9164 = vadd.f32 %v9024, %v9093
        %v9165 = vadd.f32 %v9025, %v9097
        %v9166 = vadd.f32 %v9026, %v9093
        %v9167 = vadd.f32 %v9027, %v9097
        %v9168 = vadd.f32 %v9028, %v9093
        %v9169 = vadd.f32 %v9029, %v9097
        %v9170 = vadd.f32 %v9030, %v9093
        %v9171 = vadd.f32 %v9031, %v9097
        %v9172 = vadd.f32 %v9032, %v9093
        %v9173 = vadd.f32 %v9033, %v9097
        %v9174 = vadd.f32 %v9034, %v9093
        %v9175 = vadd.f32 %v9035, %v9097
        %v9176 = vadd.f32 %v9036, %v9093
        %v9177 = vadd.f32 %v9037, %v9097
        %v9178 = vadd.f32 %v9038, %v9093
        %v9179 = vadd.f32 %v9039, %v9097
        %v9180 = vadd.f32 %v9040, %v9093
        %v9181 = vadd.f32 %v9041, %v9097
        %v9182 = vadd.f32 %v9042, %v9093
        %v9183 = vadd.f32 %v9043, %v9097
        %v9184 = vadd.f32 %v9044, %v9093
        %v9185 = vadd.f32 %v9045, %v9097
        %v9186 = vadd.f32 %v9046, %v9093
        %v9187 = vadd.f32 %v9047, %v9097
        %v9188 = vadd.f32 %v9048, %v9093
        %v9189 = vadd.f32 %v9049, %v9097
        %v9190 = vadd.f32 %v9050, %v9093
        %v9191 = vadd.f32 %v9051, %v9097
        %v9192 = vadd.f32 %v9052, %v9093
        %v9193 = vadd.f32 %v9053, %v9097
        %v9194 = vadd.f32 %v9054, %v9093
        %v9195 = vadd.f32 %v9055, %v9097
        %v9196 = vadd.f32 %v9056, %v9093
        %v9197 = vadd.f32 %v9057, %v9097
        %v9198 = vadd.f32 %v9058, %v9093
        %v9199 = vadd.f32 %v9059, %v9097
        %v9200 = vadd.f32 %v9060, %v9093
        %v9201 = vadd.f32 %v9061, %v9097
        %v9202 = vadd.f32 %v9062, %v9093
        %v9203 = vadd.f32 %v9063, %v9097
        %v9204 = vadd.f32 %v9064, %v9093
        %v9205 = vadd.f32 %v9065, %v9097
        %v9206 = vadd.f32 %v9066, %v9093
        %v9207 = vadd.f32 %v9067, %v9097
        %v9208 = vadd.f32 %v9068, %v9093
        %v9209 = vadd.f32 %v9069, %v9097
        %v9210 = vadd.f32 %v9070, %v9093
        %v9211 = vadd.f32 %v9071, %v9097
        %v9212 = vadd.f32 %v9072, %v9093
        %v9213 = vadd.f32 %v9073, %v9097
        %v9214 = vadd.f32 %v9074, %v9093
        %v9215 = vadd.f32 %v9075, %v9097
        %v9216 = vadd.f32 %v9076, %v9093
        %v9217 = vadd.f32 %v9077, %v9097
        %v9218 = vadd.f32 %v9078, %v9093
        %v9219 = vadd.f32 %v9079, %v9097
        %v9220 = vadd.f32 %v9080, %v9093
        %v9221 = vadd.f32 %v9081, %v9097
        %v9222 = vadd.f32 %v9082, %v9093
        %v9223 = vadd.f32 %v9083, %v9097
        %v9224 = vadd.f32 %v9084, %v9093
        %v9225 = vadd.f32 %v9085, %v9097
        %v9226 = vadd.f32 %v9086, %v9093
        %v9227 = vadd.f32 %v9087, %v9097
        %v9228 = vmax.f32 %v9100, 0.0
        %v9229 = vmax.f32 %v9101, 0.0
        %v9230 = vmax.f32 %v9102, 0.0
        %v9231 = vmax.f32 %v9103, 0.0
        %v9232 = vmax.f32 %v9104, 0.0
        %v9233 = vmax.f32 %v9105, 0.0
        %v9234 = vmax.f32 %v9106, 0.0
        %v9235 = vmax.f32 %v9107, 0.0
        %v9236 = vmax.f32 %v9108, 0.0
        %v9237 = vmax.f32 %v9109, 0.0
        %v9238 = vmax.f32 %v9110, 0.0
        %v9239 = vmax.f32 %v9111, 0.0
        %v9240 = vmax.f32 %v9112, 0.0
        %v9241 = vmax.f32 %v9113, 0.0
        %v9242 = vmax.f32 %v9114, 0.0
        %v9243 = vmax.f32 %v9115, 0.0
        %v9244 = vmax.f32 %v9116, 0.0
        %v9245 = vmax.f32 %v9117, 0.0
        %v9246 = vmax.f32 %v9118, 0.0
        %v9247 = vmax.f32 %v9119, 0.0
        %v9248 = vmax.f32 %v9120, 0.0
        %v9249 = vmax.f32 %v9121, 0.0
        %v9250 = vmax.f32 %v9122, 0.0
        %v9251 = vmax.f32 %v9123, 0.0
        %v9252 = vmax.f32 %v9124, 0.0
        %v9253 = vmax.f32 %v9125, 0.0
        %v9254 = vmax.f32 %v9126, 0.0
        %v9255 = vmax.f32 %v9127, 0.0
        %v9256 = vmax.f32 %v9128, 0.0
        %v9257 = vmax.f32 %v9129, 0.0
        %v9258 = vmax.f32 %v9130, 0.0
        %v9259 = vmax.f32 %v9131, 0.0
        %v9260 = vmax.f32 %v9132, 0.0
        %v9261 = vmax.f32 %v9133, 0.0
        %v9262 = vmax.f32 %v9134, 0.0
        %v9263 = vmax.f32 %v9135, 0.0
        %v9264 = vmax.f32 %v9136, 0.0
        %v9265 = vmax.f32 %v9137, 0.0
        %v9266 = vmax.f32 %v9138, 0.0
        %v9267 = vmax.f32 %v9139, 0.0
        %v9268 = vmax.f32 %v9140, 0.0
        %v9269 = vmax.f32 %v9141, 0.0
        %v9270 = vmax.f32 %v9142, 0.0
        %v9271 = vmax.f32 %v9143, 0.0
        %v9272 = vmax.f32 %v9144, 0.0
        %v9273 = vmax.f32 %v9145, 0.0
        %v9274 = vmax.f32 %v9146, 0.0
        %v9275 = vmax.f32 %v9147, 0.0
        %v9276 = vmax.f32 %v9148, 0.0
        %v9277 = vmax.f32 %v9149, 0.0
        %v9278 = vmax.f32 %v9150, 0.0
        %v9279 = vmax.f32 %v9151, 0.0
        %v9280 = vmax.f32 %v9152, 0.0
        %v9281 = vmax.f32 %v9153, 0.0
        %v9282 = vmax.f32 %v9154, 0.0
        %v9283 = vmax.f32 %v9155, 0.0
        %v9284 = vmax.f32 %v9156, 0.0
        %v9285 = vmax.f32 %v9157, 0.0
        %v9286 = vmax.f32 %v9158, 0.0
        %v9287 = vmax.f32 %v9159, 0.0
        %v9288 = vmax.f32 %v9160, 0.0
        %v9289 = vmax.f32 %v9161, 0.0
        %v9290 = vmax.f32 %v9162, 0.0
        %v9291 = vmax.f32 %v9163, 0.0
        %v9292 = vmax.f32 %v9164, 0.0
        %v9293 = vmax.f32 %v9165, 0.0
        %v9294 = vmax.f32 %v9166, 0.0
        %v9295 = vmax.f32 %v9167, 0.0
        %v9296 = vmax.f32 %v9168, 0.0
        %v9297 = vmax.f32 %v9169, 0.0
        %v9298 = vmax.f32 %v9170, 0.0
        %v9299 = vmax.f32 %v9171, 0.0
        %v9300 = vmax.f32 %v9172, 0.0
        %v9301 = vmax.f32 %v9173, 0.0
        %v9302 = vmax.f32 %v9174, 0.0
        %v9303 = vmax.f32 %v9175, 0.0
        %v9304 = vmax.f32 %v9176, 0.0
        %v9305 = vmax.f32 %v9177, 0.0
        %v9306 = vmax.f32 %v9178, 0.0
        %v9307 = vmax.f32 %v9179, 0.0
        %v9308 = vmax.f32 %v9180, 0.0
        %v9309 = vmax.f32 %v9181, 0.0
        %v9310 = vmax.f32 %v9182, 0.0
        %v9311 = vmax.f32 %v9183, 0.0
        %v9312 = vmax.f32 %v9184, 0.0
        %v9313 = vmax.f32 %v9185, 0.0
        %v9314 = vmax.f32 %v9186, 0.0
        %v9315 = vmax.f32 %v9187, 0.0
        %v9316 = vmax.f32 %v9188, 0.0
        %v9317 = vmax.f32 %v9189, 0.0
        %v9318 = vmax.f32 %v9190, 0.0
        %v9319 = vmax.f32 %v9191, 0.0
        %v9320 = vmax.f32 %v9192, 0.0
        %v9321 = vmax.f32 %v9193, 0.0
        %v9322 = vmax.f32 %v9194, 0.0
        %v9323 = vmax.f32 %v9195, 0.0
        %v9324 = vmax.f32 %v9196, 0.0
        %v9325 = vmax.f32 %v9197, 0.0
        %v9326 = vmax.f32 %v9198, 0.0
        %v9327 = vmax.f32 %v9199, 0.0
        %v9328 = vmax.f32 %v9200, 0.0
        %v9329 = vmax.f32 %v9201, 0.0
        %v9330 = vmax.f32 %v9202, 0.0
        %v9331 = vmax.f32 %v9203, 0.0
        %v9332 = vmax.f32 %v9204, 0.0
        %v9333 = vmax.f32 %v9205, 0.0
        %v9334 = vmax.f32 %v9206, 0.0
        %v9335 = vmax.f32 %v9207, 0.0
        %v9336 = vmax.f32 %v9208, 0.0
        %v9337 = vmax.f32 %v9209, 0.0
        %v9338 = vmax.f32 %v9210, 0.0
        %v9339 = vmax.f32 %v9211, 0.0
        %v9340 = vmax.f32 %v9212, 0.0
        %v9341 = vmax.f32 %v9213, 0.0
        %v9342 = vmax.f32 %v9214, 0.0
        %v9343 = vmax.f32 %v9215, 0.0
        %v9344 = vmax.f32 %v9216, 0.0
        %v9345 = vmax.f32 %v9217, 0.0
        %v9346 = vmax.f32 %v9218, 0.0
        %v9347 = vmax.f32 %v9219, 0.0
        %v9348 = vmax.f32 %v9220, 0.0
        %v9349 = vmax.f32 %v9221, 0.0
        %v9350 = vmax.f32 %v9222, 0.0
        %v9351 = vmax.f32 %v9223, 0.0
        %v9352 = vmax.f32 %v9224, 0.0
        %v9353 = vmax.f32 %v9225, 0.0
        %v9354 = vmax.f32 %v9226, 0.0
        %v9355 = vmax.f32 %v9227, 0.0
        %v9356 = vpack.c.bf16 %v9230, %v9228
        %v9357 = vpack.c.bf16 %v9231, %v9229
        %v9358 = vpack.c.bf16 %v9234, %v9232
        %v9359 = vpack.c.bf16 %v9235, %v9233
        %v9360 = vpack.c.bf16 %v9238, %v9236
        %v9361 = vpack.c.bf16 %v9239, %v9237
        %v9362 = vpack.c.bf16 %v9242, %v9240
        %v9363 = vpack.c.bf16 %v9243, %v9241
        %v9364 = vpack.c.bf16 %v9246, %v9244
        %v9365 = vpack.c.bf16 %v9247, %v9245
        %v9366 = vpack.c.bf16 %v9250, %v9248
        %v9367 = vpack.c.bf16 %v9251, %v9249
        %v9368 = vpack.c.bf16 %v9254, %v9252
        %v9369 = vpack.c.bf16 %v9255, %v9253
        %v9370 = vpack.c.bf16 %v9258, %v9256
        %v9371 = vpack.c.bf16 %v9259, %v9257
        %v9372 = vpack.c.bf16 %v9262, %v9260
        %v9373 = vpack.c.bf16 %v9263, %v9261
        %v9374 = vpack.c.bf16 %v9266, %v9264
        %v9375 = vpack.c.bf16 %v9267, %v9265
        %v9376 = vpack.c.bf16 %v9270, %v9268
        %v9377 = vpack.c.bf16 %v9271, %v9269
        %v9378 = vpack.c.bf16 %v9274, %v9272
        %v9379 = vpack.c.bf16 %v9275, %v9273
        %v9380 = vpack.c.bf16 %v9278, %v9276
        %v9381 = vpack.c.bf16 %v9279, %v9277
        %v9382 = vpack.c.bf16 %v9282, %v9280
        %v9383 = vpack.c.bf16 %v9283, %v9281
        %v9384 = vpack.c.bf16 %v9286, %v9284
        %v9385 = vpack.c.bf16 %v9287, %v9285
        %v9386 = vpack.c.bf16 %v9290, %v9288
        %v9387 = vpack.c.bf16 %v9291, %v9289
        %v9388 = vpack.c.bf16 %v9294, %v9292
        %v9389 = vpack.c.bf16 %v9295, %v9293
        %v9390 = vpack.c.bf16 %v9298, %v9296
        %v9391 = vpack.c.bf16 %v9299, %v9297
        %v9392 = vpack.c.bf16 %v9302, %v9300
        %v9393 = vpack.c.bf16 %v9303, %v9301
        %v9394 = vpack.c.bf16 %v9306, %v9304
        %v9395 = vpack.c.bf16 %v9307, %v9305
        %v9396 = vpack.c.bf16 %v9310, %v9308
        %v9397 = vpack.c.bf16 %v9311, %v9309
        %v9398 = vpack.c.bf16 %v9314, %v9312
        %v9399 = vpack.c.bf16 %v9315, %v9313
        %v9400 = vpack.c.bf16 %v9318, %v9316
        %v9401 = vpack.c.bf16 %v9319, %v9317
        %v9402 = vpack.c.bf16 %v9322, %v9320
        %v9403 = vpack.c.bf16 %v9323, %v9321
        %v9404 = vpack.c.bf16 %v9326, %v9324
        %v9405 = vpack.c.bf16 %v9327, %v9325
        %v9406 = vpack.c.bf16 %v9330, %v9328
        %v9407 = vpack.c.bf16 %v9331, %v9329
        %v9408 = vpack.c.bf16 %v9334, %v9332
        %v9409 = vpack.c.bf16 %v9335, %v9333
        %v9410 = vpack.c.bf16 %v9338, %v9336
        %v9411 = vpack.c.bf16 %v9339, %v9337
        %v9412 = vpack.c.bf16 %v9342, %v9340
        %v9413 = vpack.c.bf16 %v9343, %v9341
        %v9414 = vpack.c.bf16 %v9346, %v9344
        %v9415 = vpack.c.bf16 %v9347, %v9345
        %v9416 = vpack.c.bf16 %v9350, %v9348
        %v9417 = vpack.c.bf16 %v9351, %v9349
        %v9418 = vpack.c.bf16 %v9354, %v9352
        %v9419 = vpack.c.bf16 %v9355, %v9353
        %v9420 = vld [vmem:[%s280] sm:$0xff]
        %v9421 = vld [vmem:[%s280 + $0x8] sm:$0xff]
        %v9422 = vld [vmem:[%s280 + $0x10] sm:$0xff]
        %v9423 = vld [vmem:[%s280 + $0x18] sm:$0xff]
        %v9424 = vld [vmem:[%s280 + $0x20] sm:$0xff]
        %v9425 = vld [vmem:[%s280 + $0x28] sm:$0xff]
        %v9426 = vld [vmem:[%s280 + $0x30] sm:$0xff]
        %v9427 = vld [vmem:[%s280 + $0x38] sm:$0xff]
        %v9428 = vld [vmem:[%s280 + $0x40] sm:$0xff]
        %v9429 = vld [vmem:[%s280 + $0x48] sm:$0xff]
        %v9430 = vld [vmem:[%s280 + $0x50] sm:$0xff]
        %v9431 = vld [vmem:[%s280 + $0x58] sm:$0xff]
        %v9432 = vld [vmem:[%s280 + $0x60] sm:$0xff]
        %v9433 = vld [vmem:[%s280 + $0x68] sm:$0xff]
        %v9434 = vld [vmem:[%s280 + $0x70] sm:$0xff]
        %v9435 = vld [vmem:[%s280 + $0x78] sm:$0xff]
        %v9436 = vld [vmem:[%s280 + $0x80] sm:$0xff]
        %v9437 = vld [vmem:[%s280 + $0x88] sm:$0xff]
        %v9438 = vld [vmem:[%s280 + $0x90] sm:$0xff]
        %v9439 = vld [vmem:[%s280 + $0x98] sm:$0xff]
        %v9440 = vld [vmem:[%s280 + $0xa0] sm:$0xff]
        %v9441 = vld [vmem:[%s280 + $0xa8] sm:$0xff]
        %v9442 = vld [vmem:[%s280 + $0xb0] sm:$0xff]
        %v9443 = vld [vmem:[%s280 + $0xb8] sm:$0xff]
        %v9444 = vld [vmem:[%s280 + $0xc0] sm:$0xff]
        %v9445 = vld [vmem:[%s280 + $0xc8] sm:$0xff]
        %v9446 = vld [vmem:[%s280 + $0xd0] sm:$0xff]
        %v9447 = vld [vmem:[%s280 + $0xd8] sm:$0xff]
        %v9448 = vld [vmem:[%s280 + $0xe0] sm:$0xff]
        %v9449 = vld [vmem:[%s280 + $0xe8] sm:$0xff]
        %v9450 = vld [vmem:[%s280 + $0xf0] sm:$0xff]
        %v9451 = vld [vmem:[%s280 + $0xf8] sm:$0xff]
        %v9452 = vld [vmem:[%s338] sm:$0x3]
        %v9454 = vlaneseq
        %v9455 = vshrl.u32 %v9454, 7
        %v9456 = vsub.s32 0, %v9455
        %v9457 = vrot.slane %v9452, %v9456
        %v9458 = vlaneseq
        %v9459 = vshrl.u32 %v9458, 7
        %v9460 = vsub.s32 1, %v9459
        %v9461 = vrot.slane %v9452, %v9460
        %v9496 = vunpack.c.l.b16 %v9420
        %v9497 = vunpack.c.h.b16 %v9420
        %v9498 = vunpack.c.l.b16 %v9421
        %v9499 = vunpack.c.h.b16 %v9421
        %v9500 = vunpack.c.l.b16 %v9422
        %v9501 = vunpack.c.h.b16 %v9422
        %v9502 = vunpack.c.l.b16 %v9423
        %v9503 = vunpack.c.h.b16 %v9423
        %v9504 = vunpack.c.l.b16 %v9424
        %v9505 = vunpack.c.h.b16 %v9424
        %v9506 = vunpack.c.l.b16 %v9425
        %v9507 = vunpack.c.h.b16 %v9425
        %v9508 = vunpack.c.l.b16 %v9426
        %v9509 = vunpack.c.h.b16 %v9426
        %v9510 = vunpack.c.l.b16 %v9427
        %v9511 = vunpack.c.h.b16 %v9427
        %v9512 = vunpack.c.l.b16 %v9428
        %v9513 = vunpack.c.h.b16 %v9428
        %v9514 = vunpack.c.l.b16 %v9429
        %v9515 = vunpack.c.h.b16 %v9429
        %v9516 = vunpack.c.l.b16 %v9430
        %v9517 = vunpack.c.h.b16 %v9430
        %v9518 = vunpack.c.l.b16 %v9431
        %v9519 = vunpack.c.h.b16 %v9431
        %v9520 = vunpack.c.l.b16 %v9432
        %v9521 = vunpack.c.h.b16 %v9432
        %v9522 = vunpack.c.l.b16 %v9433
        %v9523 = vunpack.c.h.b16 %v9433
        %v9524 = vunpack.c.l.b16 %v9434
        %v9525 = vunpack.c.h.b16 %v9434
        %v9526 = vunpack.c.l.b16 %v9435
        %v9527 = vunpack.c.h.b16 %v9435
        %v9528 = vunpack.c.l.b16 %v9436
        %v9529 = vunpack.c.h.b16 %v9436
        %v9530 = vunpack.c.l.b16 %v9437
        %v9531 = vunpack.c.h.b16 %v9437
        %v9532 = vunpack.c.l.b16 %v9438
        %v9533 = vunpack.c.h.b16 %v9438
        %v9534 = vunpack.c.l.b16 %v9439
        %v9535 = vunpack.c.h.b16 %v9439
        %v9536 = vunpack.c.l.b16 %v9440
        %v9537 = vunpack.c.h.b16 %v9440
        %v9538 = vunpack.c.l.b16 %v9441
        %v9539 = vunpack.c.h.b16 %v9441
        %v9540 = vunpack.c.l.b16 %v9442
        %v9541 = vunpack.c.h.b16 %v9442
        %v9542 = vunpack.c.l.b16 %v9443
        %v9543 = vunpack.c.h.b16 %v9443
        %v9544 = vunpack.c.l.b16 %v9444
        %v9545 = vunpack.c.h.b16 %v9444
        %v9546 = vunpack.c.l.b16 %v9445
        %v9547 = vunpack.c.h.b16 %v9445
        %v9548 = vunpack.c.l.b16 %v9446
        %v9549 = vunpack.c.h.b16 %v9446
        %v9550 = vunpack.c.l.b16 %v9447
        %v9551 = vunpack.c.h.b16 %v9447
        %v9552 = vunpack.c.l.b16 %v9448
        %v9553 = vunpack.c.h.b16 %v9448
        %v9554 = vunpack.c.l.b16 %v9449
        %v9555 = vunpack.c.h.b16 %v9449
        %v9556 = vunpack.c.l.b16 %v9450
        %v9557 = vunpack.c.h.b16 %v9450
        %v9558 = vunpack.c.l.b16 %v9451
        %v9559 = vunpack.c.h.b16 %v9451
        %v9560 = vpack.c.b16 %v9498, %v9496
        %v9561 = vpack.c.b16 %v9499, %v9497
        %v9562 = vpack.c.b16 %v9502, %v9500
        %v9563 = vpack.c.b16 %v9503, %v9501
        %v9564 = vpack.c.b16 %v9506, %v9504
        %v9565 = vpack.c.b16 %v9507, %v9505
        %v9566 = vpack.c.b16 %v9510, %v9508
        %v9567 = vpack.c.b16 %v9511, %v9509
        %v9568 = vpack.c.b16 %v9514, %v9512
        %v9569 = vpack.c.b16 %v9515, %v9513
        %v9570 = vpack.c.b16 %v9518, %v9516
        %v9571 = vpack.c.b16 %v9519, %v9517
        %v9572 = vpack.c.b16 %v9522, %v9520
        %v9573 = vpack.c.b16 %v9523, %v9521
        %v9574 = vpack.c.b16 %v9526, %v9524
        %v9575 = vpack.c.b16 %v9527, %v9525
        %v9576 = vpack.c.b16 %v9530, %v9528
        %v9577 = vpack.c.b16 %v9531, %v9529
        %v9578 = vpack.c.b16 %v9534, %v9532
        %v9579 = vpack.c.b16 %v9535, %v9533
        %v9580 = vpack.c.b16 %v9538, %v9536
        %v9581 = vpack.c.b16 %v9539, %v9537
        %v9582 = vpack.c.b16 %v9542, %v9540
        %v9583 = vpack.c.b16 %v9543, %v9541
        %v9584 = vpack.c.b16 %v9546, %v9544
        %v9585 = vpack.c.b16 %v9547, %v9545
        %v9586 = vpack.c.b16 %v9550, %v9548
        %v9587 = vpack.c.b16 %v9551, %v9549
        %v9588 = vpack.c.b16 %v9554, %v9552
        %v9589 = vpack.c.b16 %v9555, %v9553
        %v9590 = vpack.c.b16 %v9558, %v9556
        %v9591 = vpack.c.b16 %v9559, %v9557
        %9624 = vmatprep.subr.bf16.mxu0 %v9561
        %9625 = vmatpush1.bf16.msra.mxu0 %v9560
        %9626 = vmatprep.subr.bf16.mxu0 %v9563
        %9627 = vmatpush1.bf16.msra.mxu0 %v9562
        %9628 = vmatprep.subr.bf16.mxu0 %v9565
        %9629 = vmatpush1.bf16.msra.mxu0 %v9564
        %9630 = vmatprep.subr.bf16.mxu0 %v9567
        %9631 = vmatpush1.bf16.msra.mxu0 %v9566
        %9632 = vmatprep.subr.bf16.mxu0 %v9569
        %9633 = vmatpush1.bf16.msra.mxu0 %v9568
        %9634 = vmatprep.subr.bf16.mxu0 %v9571
        %9635 = vmatpush1.bf16.msra.mxu0 %v9570
        %9636 = vmatprep.subr.bf16.mxu0 %v9573
        %9637 = vmatpush1.bf16.msra.mxu0 %v9572
        %9638 = vmatprep.subr.bf16.mxu0 %v9575
        %9639 = vmatpush1.bf16.msra.mxu0 %v9574
        %9640 = vmatprep.subr.bf16.mxu0 %v9577
        %9641 = vmatpush1.bf16.msra.mxu0 %v9576
        %9642 = vmatprep.subr.bf16.mxu0 %v9579
        %9643 = vmatpush1.bf16.msra.mxu0 %v9578
        %9644 = vmatprep.subr.bf16.mxu0 %v9581
        %9645 = vmatpush1.bf16.msra.mxu0 %v9580
        %9646 = vmatprep.subr.bf16.mxu0 %v9583
        %9647 = vmatpush1.bf16.msra.mxu0 %v9582
        %9648 = vmatprep.subr.bf16.mxu0 %v9585
        %9649 = vmatpush1.bf16.msra.mxu0 %v9584
        %9650 = vmatprep.subr.bf16.mxu0 %v9587
        %9651 = vmatpush1.bf16.msra.mxu0 %v9586
        %9652 = vmatprep.subr.bf16.mxu0 %v9589
        %9653 = vmatpush1.bf16.msra.mxu0 %v9588
        %9654 = vmatprep.subr.bf16.mxu0 %v9591
        %9655 = vmatpush1.bf16.msra.mxu0 %v9590
        %9656 = vmatprep.mubr.bf16.mxu0 %v9357
        %9657 = vmatmul.mubr.bf16.gmra.mrb[0].mxu0 %v9356
        %v9658 = vpop.f32.mrb[0].mxu0
        %v9659 = vadd.f32 %v9457, %v9658
        %v9660 = vpop.f32.mrb[0].mxu0
        %v9661 = vadd.f32 %v9461, %v9660
        %v9662 = vpop.f32.mrb[0].mxu0
        %v9663 = vadd.f32 %v9457, %v9662
        %v9664 = vpop.f32.mrb[0].mxu0
        %v9665 = vadd.f32 %v9461, %v9664
        %9666 = vmatprep.mubr.bf16.mxu0 %v9359
        %9667 = vmatmul.mubr.bf16.gmra.mrb[0].mxu0 %v9358
        %v9668 = vpop.f32.mrb[0].mxu0
        %v9669 = vadd.f32 %v9457, %v9668
        %v9670 = vpop.f32.mrb[0].mxu0
        %v9671 = vadd.f32 %v9461, %v9670
        %v9672 = vpop.f32.mrb[0].mxu0
        %v9673 = vadd.f32 %v9457, %v9672
        %v9674 = vpop.f32.mrb[0].mxu0
        %v9675 = vadd.f32 %v9461, %v9674
        %9676 = vmatprep.mubr.bf16.mxu0 %v9361
        %9677 = vmatmul.mubr.bf16.gmra.mrb[0].mxu0 %v9360
        %v9678 = vpop.f32.mrb[0].mxu0
        %v9679 = vadd.f32 %v9457, %v9678
        %v9680 = vpop.f32.mrb[0].mxu0
        %v9681 = vadd.f32 %v9461, %v9680
        %v9682 = vpop.f32.mrb[0].mxu0
        %v9683 = vadd.f32 %v9457, %v9682
        %v9684 = vpop.f32.mrb[0].mxu0
        %v9685 = vadd.f32 %v9461, %v9684
        %9686 = vmatprep.mubr.bf16.mxu0 %v9363
        %9687 = vmatmul.mubr.bf16.gmra.mrb[0].mxu0 %v9362
        %v9688 = vpop.f32.mrb[0].mxu0
        %v9689 = vadd.f32 %v9457, %v9688
        %v9690 = vpop.f32.mrb[0].mxu0
        %v9691 = vadd.f32 %v9461, %v9690
        %v9692 = vpop.f32.mrb[0].mxu0
        %v9693 = vadd.f32 %v9457, %v9692
        %v9694 = vpop.f32.mrb[0].mxu0
        %v9695 = vadd.f32 %v9461, %v9694
        %9696 = vmatprep.mubr.bf16.mxu0 %v9365
        %9697 = vmatmul.mubr.bf16.gmra.mrb[0].mxu0 %v9364
        %v9698 = vpop.f32.mrb[0].mxu0
        %v9699 = vadd.f32 %v9457, %v9698
        %v9700 = vpop.f32.mrb[0].mxu0
        %v9701 = vadd.f32 %v9461, %v9700
        %v9702 = vpop.f32.mrb[0].mxu0
        %v9703 = vadd.f32 %v9457, %v9702
        %v9704 = vpop.f32.mrb[0].mxu0
        %v9705 = vadd.f32 %v9461, %v9704
        %9706 = vmatprep.mubr.bf16.mxu0 %v9367
        %9707 = vmatmul.mubr.bf16.gmra.mrb[0].mxu0 %v9366
        %v9708 = vpop.f32.mrb[0].mxu0
        %v9709 = vadd.f32 %v9457, %v9708
        %v9710 = vpop.f32.mrb[0].mxu0
        %v9711 = vadd.f32 %v9461, %v9710
        %v9712 = vpop.f32.mrb[0].mxu0
        %v9713 = vadd.f32 %v9457, %v9712
        %v9714 = vpop.f32.mrb[0].mxu0
        %v9715 = vadd.f32 %v9461, %v9714
        %9716 = vmatprep.mubr.bf16.mxu0 %v9369
        %9717 = vmatmul.mubr.bf16.gmra.mrb[0].mxu0 %v9368
        %v9718 = vpop.f32.mrb[0].mxu0
        %v9719 = vadd.f32 %v9457, %v9718
        %v9720 = vpop.f32.mrb[0].mxu0
        %v9721 = vadd.f32 %v9461, %v9720
        %v9722 = vpop.f32.mrb[0].mxu0
        %v9723 = vadd.f32 %v9457, %v9722
        %v9724 = vpop.f32.mrb[0].mxu0
        %v9725 = vadd.f32 %v9461, %v9724
        %9726 = vmatprep.mubr.bf16.mxu0 %v9371
        %9727 = vmatmul.mubr.bf16.gmra.mrb[0].mxu0 %v9370
        %v9728 = vpop.f32.mrb[0].mxu0
        %v9729 = vadd.f32 %v9457, %v9728
        %v9730 = vpop.f32.mrb[0].mxu0
        %v9731 = vadd.f32 %v9461, %v9730
        %v9732 = vpop.f32.mrb[0].mxu0
        %v9733 = vadd.f32 %v9457, %v9732
        %v9734 = vpop.f32.mrb[0].mxu0
        %v9735 = vadd.f32 %v9461, %v9734
        %9736 = vmatprep.mubr.bf16.mxu0 %v9373
        %9737 = vmatmul.mubr.bf16.gmra.mrb[0].mxu0 %v9372
        %v9738 = vpop.f32.mrb[0].mxu0
        %v9739 = vadd.f32 %v9457, %v9738
        %v9740 = vpop.f32.mrb[0].mxu0
        %v9741 = vadd.f32 %v9461, %v9740
        %v9742 = vpop.f32.mrb[0].mxu0
        %v9743 = vadd.f32 %v9457, %v9742
        %v9744 = vpop.f32.mrb[0].mxu0
        %v9745 = vadd.f32 %v9461, %v9744
        %9746 = vmatprep.mubr.bf16.mxu0 %v9375
        %9747 = vmatmul.mubr.bf16.gmra.mrb[0].mxu0 %v9374
        %v9748 = vpop.f32.mrb[0].mxu0
        %v9749 = vadd.f32 %v9457, %v9748
        %v9750 = vpop.f32.mrb[0].mxu0
        %v9751 = vadd.f32 %v9461, %v9750
        %v9752 = vpop.f32.mrb[0].mxu0
        %v9753 = vadd.f32 %v9457, %v9752
        %v9754 = vpop.f32.mrb[0].mxu0
        %v9755 = vadd.f32 %v9461, %v9754
        %9756 = vmatprep.mubr.bf16.mxu0 %v9377
        %9757 = vmatmul.mubr.bf16.gmra.mrb[0].mxu0 %v9376
        %v9758 = vpop.f32.mrb[0].mxu0
        %v9759 = vadd.f32 %v9457, %v9758
        %v9760 = vpop.f32.mrb[0].mxu0
        %v9761 = vadd.f32 %v9461, %v9760
        %v9762 = vpop.f32.mrb[0].mxu0
        %v9763 = vadd.f32 %v9457, %v9762
        %v9764 = vpop.f32.mrb[0].mxu0
        %v9765 = vadd.f32 %v9461, %v9764
        %9766 = vmatprep.mubr.bf16.mxu0 %v9379
        %9767 = vmatmul.mubr.bf16.gmra.mrb[0].mxu0 %v9378
        %v9768 = vpop.f32.mrb[0].mxu0
        %v9769 = vadd.f32 %v9457, %v9768
        %v9770 = vpop.f32.mrb[0].mxu0
        %v9771 = vadd.f32 %v9461, %v9770
        %v9772 = vpop.f32.mrb[0].mxu0
        %v9773 = vadd.f32 %v9457, %v9772
        %v9774 = vpop.f32.mrb[0].mxu0
        %v9775 = vadd.f32 %v9461, %v9774
        %9776 = vmatprep.mubr.bf16.mxu0 %v9381
        %9777 = vmatmul.mubr.bf16.gmra.mrb[0].mxu0 %v9380
        %v9778 = vpop.f32.mrb[0].mxu0
        %v9779 = vadd.f32 %v9457, %v9778
        %v9780 = vpop.f32.mrb[0].mxu0
        %v9781 = vadd.f32 %v9461, %v9780
        %v9782 = vpop.f32.mrb[0].mxu0
        %v9783 = vadd.f32 %v9457, %v9782
        %v9784 = vpop.f32.mrb[0].mxu0
        %v9785 = vadd.f32 %v9461, %v9784
        %9786 = vmatprep.mubr.bf16.mxu0 %v9383
        %9787 = vmatmul.mubr.bf16.gmra.mrb[0].mxu0 %v9382
        %v9788 = vpop.f32.mrb[0].mxu0
        %v9789 = vadd.f32 %v9457, %v9788
        %v9790 = vpop.f32.mrb[0].mxu0
        %v9791 = vadd.f32 %v9461, %v9790
        %v9792 = vpop.f32.mrb[0].mxu0
        %v9793 = vadd.f32 %v9457, %v9792
        %v9794 = vpop.f32.mrb[0].mxu0
        %v9795 = vadd.f32 %v9461, %v9794
        %9796 = vmatprep.mubr.bf16.mxu0 %v9385
        %9797 = vmatmul.mubr.bf16.gmra.mrb[0].mxu0 %v9384
        %v9798 = vpop.f32.mrb[0].mxu0
        %v9799 = vadd.f32 %v9457, %v9798
        %v9800 = vpop.f32.mrb[0].mxu0
        %v9801 = vadd.f32 %v9461, %v9800
        %v9802 = vpop.f32.mrb[0].mxu0
        %v9803 = vadd.f32 %v9457, %v9802
        %v9804 = vpop.f32.mrb[0].mxu0
        %v9805 = vadd.f32 %v9461, %v9804
        %9806 = vmatprep.mubr.bf16.mxu0 %v9387
        %9807 = vmatmul.mubr.bf16.gmra.mrb[0].mxu0 %v9386
        %v9808 = vpop.f32.mrb[0].mxu0
        %v9809 = vadd.f32 %v9457, %v9808
        %v9810 = vpop.f32.mrb[0].mxu0
        %v9811 = vadd.f32 %v9461, %v9810
        %v9812 = vpop.f32.mrb[0].mxu0
        %v9813 = vadd.f32 %v9457, %v9812
        %v9814 = vpop.f32.mrb[0].mxu0
        %v9815 = vadd.f32 %v9461, %v9814
        %9816 = vmatprep.mubr.bf16.mxu0 %v9389
        %9817 = vmatmul.mubr.bf16.gmra.mrb[0].mxu0 %v9388
        %v9818 = vpop.f32.mrb[0].mxu0
        %v9819 = vadd.f32 %v9457, %v9818
        %v9820 = vpop.f32.mrb[0].mxu0
        %v9821 = vadd.f32 %v9461, %v9820
        %v9822 = vpop.f32.mrb[0].mxu0
        %v9823 = vadd.f32 %v9457, %v9822
        %v9824 = vpop.f32.mrb[0].mxu0
        %v9825 = vadd.f32 %v9461, %v9824
        %9826 = vmatprep.mubr.bf16.mxu0 %v9391
        %9827 = vmatmul.mubr.bf16.gmra.mrb[0].mxu0 %v9390
        %v9828 = vpop.f32.mrb[0].mxu0
        %v9829 = vadd.f32 %v9457, %v9828
        %v9830 = vpop.f32.mrb[0].mxu0
        %v9831 = vadd.f32 %v9461, %v9830
        %v9832 = vpop.f32.mrb[0].mxu0
        %v9833 = vadd.f32 %v9457, %v9832
        %v9834 = vpop.f32.mrb[0].mxu0
        %v9835 = vadd.f32 %v9461, %v9834
        %9836 = vmatprep.mubr.bf16.mxu0 %v9393
        %9837 = vmatmul.mubr.bf16.gmra.mrb[0].mxu0 %v9392
        %v9838 = vpop.f32.mrb[0].mxu0
        %v9839 = vadd.f32 %v9457, %v9838
        %v9840 = vpop.f32.mrb[0].mxu0
        %v9841 = vadd.f32 %v9461, %v9840
        %v9842 = vpop.f32.mrb[0].mxu0
        %v9843 = vadd.f32 %v9457, %v9842
        %v9844 = vpop.f32.mrb[0].mxu0
        %v9845 = vadd.f32 %v9461, %v9844
        %9846 = vmatprep.mubr.bf16.mxu0 %v9395
        %9847 = vmatmul.mubr.bf16.gmra.mrb[0].mxu0 %v9394
        %v9848 = vpop.f32.mrb[0].mxu0
        %v9849 = vadd.f32 %v9457, %v9848
        %v9850 = vpop.f32.mrb[0].mxu0
        %v9851 = vadd.f32 %v9461, %v9850
        %v9852 = vpop.f32.mrb[0].mxu0
        %v9853 = vadd.f32 %v9457, %v9852
        %v9854 = vpop.f32.mrb[0].mxu0
        %v9855 = vadd.f32 %v9461, %v9854
        %9856 = vmatprep.mubr.bf16.mxu0 %v9397
        %9857 = vmatmul.mubr.bf16.gmra.mrb[0].mxu0 %v9396
        %v9858 = vpop.f32.mrb[0].mxu0
        %v9859 = vadd.f32 %v9457, %v9858
        %v9860 = vpop.f32.mrb[0].mxu0
        %v9861 = vadd.f32 %v9461, %v9860
        %v9862 = vpop.f32.mrb[0].mxu0
        %v9863 = vadd.f32 %v9457, %v9862
        %v9864 = vpop.f32.mrb[0].mxu0
        %v9865 = vadd.f32 %v9461, %v9864
        %9866 = vmatprep.mubr.bf16.mxu0 %v9399
        %9867 = vmatmul.mubr.bf16.gmra.mrb[0].mxu0 %v9398
        %v9868 = vpop.f32.mrb[0].mxu0
        %v9869 = vadd.f32 %v9457, %v9868
        %v9870 = vpop.f32.mrb[0].mxu0
        %v9871 = vadd.f32 %v9461, %v9870
        %v9872 = vpop.f32.mrb[0].mxu0
        %v9873 = vadd.f32 %v9457, %v9872
        %v9874 = vpop.f32.mrb[0].mxu0
        %v9875 = vadd.f32 %v9461, %v9874
        %9876 = vmatprep.mubr.bf16.mxu0 %v9401
        %9877 = vmatmul.mubr.bf16.gmra.mrb[0].mxu0 %v9400
        %v9878 = vpop.f32.mrb[0].mxu0
        %v9879 = vadd.f32 %v9457, %v9878
        %v9880 = vpop.f32.mrb[0].mxu0
        %v9881 = vadd.f32 %v9461, %v9880
        %v9882 = vpop.f32.mrb[0].mxu0
        %v9883 = vadd.f32 %v9457, %v9882
        %v9884 = vpop.f32.mrb[0].mxu0
        %v9885 = vadd.f32 %v9461, %v9884
        %9886 = vmatprep.mubr.bf16.mxu0 %v9403
        %9887 = vmatmul.mubr.bf16.gmra.mrb[0].mxu0 %v9402
        %v9888 = vpop.f32.mrb[0].mxu0
        %v9889 = vadd.f32 %v9457, %v9888
        %v9890 = vpop.f32.mrb[0].mxu0
        %v9891 = vadd.f32 %v9461, %v9890
        %v9892 = vpop.f32.mrb[0].mxu0
        %v9893 = vadd.f32 %v9457, %v9892
        %v9894 = vpop.f32.mrb[0].mxu0
        %v9895 = vadd.f32 %v9461, %v9894
        %9896 = vmatprep.mubr.bf16.mxu0 %v9405
        %9897 = vmatmul.mubr.bf16.gmra.mrb[0].mxu0 %v9404
        %v9898 = vpop.f32.mrb[0].mxu0
        %v9899 = vadd.f32 %v9457, %v9898
        %v9900 = vpop.f32.mrb[0].mxu0
        %v9901 = vadd.f32 %v9461, %v9900
        %v9902 = vpop.f32.mrb[0].mxu0
        %v9903 = vadd.f32 %v9457, %v9902
        %v9904 = vpop.f32.mrb[0].mxu0
        %v9905 = vadd.f32 %v9461, %v9904
        %9906 = vmatprep.mubr.bf16.mxu0 %v9407
        %9907 = vmatmul.mubr.bf16.gmra.mrb[0].mxu0 %v9406
        %v9908 = vpop.f32.mrb[0].mxu0
        %v9909 = vadd.f32 %v9457, %v9908
        %v9910 = vpop.f32.mrb[0].mxu0
        %v9911 = vadd.f32 %v9461, %v9910
        %v9912 = vpop.f32.mrb[0].mxu0
        %v9913 = vadd.f32 %v9457, %v9912
        %v9914 = vpop.f32.mrb[0].mxu0
        %v9915 = vadd.f32 %v9461, %v9914
        %9916 = vmatprep.mubr.bf16.mxu0 %v9409
        %9917 = vmatmul.mubr.bf16.gmra.mrb[0].mxu0 %v9408
        %v9918 = vpop.f32.mrb[0].mxu0
        %v9919 = vadd.f32 %v9457, %v9918
        %v9920 = vpop.f32.mrb[0].mxu0
        %v9921 = vadd.f32 %v9461, %v9920
        %v9922 = vpop.f32.mrb[0].mxu0
        %v9923 = vadd.f32 %v9457, %v9922
        %v9924 = vpop.f32.mrb[0].mxu0
        %v9925 = vadd.f32 %v9461, %v9924
        %9926 = vmatprep.mubr.bf16.mxu0 %v9411
        %9927 = vmatmul.mubr.bf16.gmra.mrb[0].mxu0 %v9410
        %v9928 = vpop.f32.mrb[0].mxu0
        %v9929 = vadd.f32 %v9457, %v9928
        %v9930 = vpop.f32.mrb[0].mxu0
        %v9931 = vadd.f32 %v9461, %v9930
        %v9932 = vpop.f32.mrb[0].mxu0
        %v9933 = vadd.f32 %v9457, %v9932
        %v9934 = vpop.f32.mrb[0].mxu0
        %v9935 = vadd.f32 %v9461, %v9934
        %9936 = vmatprep.mubr.bf16.mxu0 %v9413
        %9937 = vmatmul.mubr.bf16.gmra.mrb[0].mxu0 %v9412
        %v9938 = vpop.f32.mrb[0].mxu0
        %v9939 = vadd.f32 %v9457, %v9938
        %v9940 = vpop.f32.mrb[0].mxu0
        %v9941 = vadd.f32 %v9461, %v9940
        %v9942 = vpop.f32.mrb[0].mxu0
        %v9943 = vadd.f32 %v9457, %v9942
        %v9944 = vpop.f32.mrb[0].mxu0
        %v9945 = vadd.f32 %v9461, %v9944
        %9946 = vmatprep.mubr.bf16.mxu0 %v9415
        %9947 = vmatmul.mubr.bf16.gmra.mrb[0].mxu0 %v9414
        %v9948 = vpop.f32.mrb[0].mxu0
        %v9949 = vadd.f32 %v9457, %v9948
        %v9950 = vpop.f32.mrb[0].mxu0
        %v9951 = vadd.f32 %v9461, %v9950
        %v9952 = vpop.f32.mrb[0].mxu0
        %v9953 = vadd.f32 %v9457, %v9952
        %v9954 = vpop.f32.mrb[0].mxu0
        %v9955 = vadd.f32 %v9461, %v9954
        %9956 = vmatprep.mubr.bf16.mxu0 %v9417
        %9957 = vmatmul.mubr.bf16.gmra.mrb[0].mxu0 %v9416
        %v9958 = vpop.f32.mrb[0].mxu0
        %v9959 = vadd.f32 %v9457, %v9958
        %v9960 = vpop.f32.mrb[0].mxu0
        %v9961 = vadd.f32 %v9461, %v9960
        %v9962 = vpop.f32.mrb[0].mxu0
        %v9963 = vadd.f32 %v9457, %v9962
        %v9964 = vpop.f32.mrb[0].mxu0
        %v9965 = vadd.f32 %v9461, %v9964
        %9966 = vmatprep.mubr.bf16.mxu0 %v9419
        %9967 = vmatmul.mubr.bf16.gmra.mrb[0].mxu0 %v9418
        %v9968 = vpop.f32.mrb[0].mxu0
        %v9969 = vadd.f32 %v9457, %v9968
        %v9970 = vpop.f32.mrb[0].mxu0
        %v9971 = vadd.f32 %v9461, %v9970
        %v9972 = vpop.f32.mrb[0].mxu0
        %v9973 = vadd.f32 %v9457, %v9972
        %v9974 = vpop.f32.mrb[0].mxu0
        %v9975 = vadd.f32 %v9461, %v9974
        %9976 = vdwg.mxu0
        %v9977 = vmax.f32 %v9659, 0.0
        %v9978 = vmax.f32 %v9661, 0.0
        %v9979 = vmax.f32 %v9663, 0.0
        %v9980 = vmax.f32 %v9665, 0.0
        %v9981 = vmax.f32 %v9669, 0.0
        %v9982 = vmax.f32 %v9671, 0.0
        %v9983 = vmax.f32 %v9673, 0.0
        %v9984 = vmax.f32 %v9675, 0.0
        %v9985 = vmax.f32 %v9679, 0.0
        %v9986 = vmax.f32 %v9681, 0.0
        %v9987 = vmax.f32 %v9683, 0.0
        %v9988 = vmax.f32 %v9685, 0.0
        %v9989 = vmax.f32 %v9689, 0.0
        %v9990 = vmax.f32 %v9691, 0.0
        %v9991 = vmax.f32 %v9693, 0.0
        %v9992 = vmax.f32 %v9695, 0.0
        %v9993 = vmax.f32 %v9699, 0.0
        %v9994 = vmax.f32 %v9701, 0.0
        %v9995 = vmax.f32 %v9703, 0.0
        %v9996 = vmax.f32 %v9705, 0.0
        %v9997 = vmax.f32 %v9709, 0.0
        %v9998 = vmax.f32 %v9711, 0.0
        %v9999 = vmax.f32 %v9713, 0.0
        %v10000 = vmax.f32 %v9715, 0.0
        %v10001 = vmax.f32 %v9719, 0.0
        %v10002 = vmax.f32 %v9721, 0.0
        %v10003 = vmax.f32 %v9723, 0.0
        %v10004 = vmax.f32 %v9725, 0.0
        %v10005 = vmax.f32 %v9729, 0.0
        %v10006 = vmax.f32 %v9731, 0.0
        %v10007 = vmax.f32 %v9733, 0.0
        %v10008 = vmax.f32 %v9735, 0.0
        %v10009 = vmax.f32 %v9739, 0.0
        %v10010 = vmax.f32 %v9741, 0.0
        %v10011 = vmax.f32 %v9743, 0.0
        %v10012 = vmax.f32 %v9745, 0.0
        %v10013 = vmax.f32 %v9749, 0.0
        %v10014 = vmax.f32 %v9751, 0.0
        %v10015 = vmax.f32 %v9753, 0.0
        %v10016 = vmax.f32 %v9755, 0.0
        %v10017 = vmax.f32 %v9759, 0.0
        %v10018 = vmax.f32 %v9761, 0.0
        %v10019 = vmax.f32 %v9763, 0.0
        %v10020 = vmax.f32 %v9765, 0.0
        %v10021 = vmax.f32 %v9769, 0.0
        %v10022 = vmax.f32 %v9771, 0.0
        %v10023 = vmax.f32 %v9773, 0.0
        %v10024 = vmax.f32 %v9775, 0.0
        %v10025 = vmax.f32 %v9779, 0.0
        %v10026 = vmax.f32 %v9781, 0.0
        %v10027 = vmax.f32 %v9783, 0.0
        %v10028 = vmax.f32 %v9785, 0.0
        %v10029 = vmax.f32 %v9789, 0.0
        %v10030 = vmax.f32 %v9791, 0.0
        %v10031 = vmax.f32 %v9793, 0.0
        %v10032 = vmax.f32 %v9795, 0.0
        %v10033 = vmax.f32 %v9799, 0.0
        %v10034 = vmax.f32 %v9801, 0.0
        %v10035 = vmax.f32 %v9803, 0.0
        %v10036 = vmax.f32 %v9805, 0.0
        %v10037 = vmax.f32 %v9809, 0.0
        %v10038 = vmax.f32 %v9811, 0.0
        %v10039 = vmax.f32 %v9813, 0.0
        %v10040 = vmax.f32 %v9815, 0.0
        %v10041 = vmax.f32 %v9819, 0.0
        %v10042 = vmax.f32 %v9821, 0.0
        %v10043 = vmax.f32 %v9823, 0.0
        %v10044 = vmax.f32 %v9825, 0.0
        %v10045 = vmax.f32 %v9829, 0.0
        %v10046 = vmax.f32 %v9831, 0.0
        %v10047 = vmax.f32 %v9833, 0.0
        %v10048 = vmax.f32 %v9835, 0.0
        %v10049 = vmax.f32 %v9839, 0.0
        %v10050 = vmax.f32 %v9841, 0.0
        %v10051 = vmax.f32 %v9843, 0.0
        %v10052 = vmax.f32 %v9845, 0.0
        %v10053 = vmax.f32 %v9849, 0.0
        %v10054 = vmax.f32 %v9851, 0.0
        %v10055 = vmax.f32 %v9853, 0.0
        %v10056 = vmax.f32 %v9855, 0.0
        %v10057 = vmax.f32 %v9859, 0.0
        %v10058 = vmax.f32 %v9861, 0.0
        %v10059 = vmax.f32 %v9863, 0.0
        %v10060 = vmax.f32 %v9865, 0.0
        %v10061 = vmax.f32 %v9869, 0.0
        %v10062 = vmax.f32 %v9871, 0.0
        %v10063 = vmax.f32 %v9873, 0.0
        %v10064 = vmax.f32 %v9875, 0.0
        %v10065 = vmax.f32 %v9879, 0.0
        %v10066 = vmax.f32 %v9881, 0.0
        %v10067 = vmax.f32 %v9883, 0.0
        %v10068 = vmax.f32 %v9885, 0.0
        %v10069 = vmax.f32 %v9889, 0.0
        %v10070 = vmax.f32 %v9891, 0.0
        %v10071 = vmax.f32 %v9893, 0.0
        %v10072 = vmax.f32 %v9895, 0.0
        %v10073 = vmax.f32 %v9899, 0.0
        %v10074 = vmax.f32 %v9901, 0.0
        %v10075 = vmax.f32 %v9903, 0.0
        %v10076 = vmax.f32 %v9905, 0.0
        %v10077 = vmax.f32 %v9909, 0.0
        %v10078 = vmax.f32 %v9911, 0.0
        %v10079 = vmax.f32 %v9913, 0.0
        %v10080 = vmax.f32 %v9915, 0.0
        %v10081 = vmax.f32 %v9919, 0.0
        %v10082 = vmax.f32 %v9921, 0.0
        %v10083 = vmax.f32 %v9923, 0.0
        %v10084 = vmax.f32 %v9925, 0.0
        %v10085 = vmax.f32 %v9929, 0.0
        %v10086 = vmax.f32 %v9931, 0.0
        %v10087 = vmax.f32 %v9933, 0.0
        %v10088 = vmax.f32 %v9935, 0.0
        %v10089 = vmax.f32 %v9939, 0.0
        %v10090 = vmax.f32 %v9941, 0.0
        %v10091 = vmax.f32 %v9943, 0.0
        %v10092 = vmax.f32 %v9945, 0.0
        %v10093 = vmax.f32 %v9949, 0.0
        %v10094 = vmax.f32 %v9951, 0.0
        %v10095 = vmax.f32 %v9953, 0.0
        %v10096 = vmax.f32 %v9955, 0.0
        %v10097 = vmax.f32 %v9959, 0.0
        %v10098 = vmax.f32 %v9961, 0.0
        %v10099 = vmax.f32 %v9963, 0.0
        %v10100 = vmax.f32 %v9965, 0.0
        %v10101 = vmax.f32 %v9969, 0.0
        %v10102 = vmax.f32 %v9971, 0.0
        %v10103 = vmax.f32 %v9973, 0.0
        %v10104 = vmax.f32 %v9975, 0.0
        %v10105 = vadd.f32 %v9977, %v9979
        %v10106 = vadd.f32 %v10105, %v9981
        %v10107 = vadd.f32 %v10106, %v9983
        %v10108 = vadd.f32 %v10107, %v9985
        %v10109 = vadd.f32 %v10108, %v9987
        %v10110 = vadd.f32 %v10109, %v9989
        %v10111 = vadd.f32 %v10110, %v9991
        %v10112 = vadd.f32 %v10111, %v9993
        %v10113 = vadd.f32 %v10112, %v9995
        %v10114 = vadd.f32 %v10113, %v9997
        %v10115 = vadd.f32 %v10114, %v9999
        %v10116 = vadd.f32 %v10115, %v10001
        %v10117 = vadd.f32 %v10116, %v10003
        %v10118 = vadd.f32 %v10117, %v10005
        %v10119 = vadd.f32 %v10118, %v10007
        %v10120 = vadd.f32 %v10119, %v10009
        %v10121 = vadd.f32 %v10120, %v10011
        %v10122 = vadd.f32 %v10121, %v10013
        %v10123 = vadd.f32 %v10122, %v10015
        %v10124 = vadd.f32 %v10123, %v10017
        %v10125 = vadd.f32 %v10124, %v10019
        %v10126 = vadd.f32 %v10125, %v10021
        %v10127 = vadd.f32 %v10126, %v10023
        %v10128 = vadd.f32 %v10127, %v10025
        %v10129 = vadd.f32 %v10128, %v10027
        %v10130 = vadd.f32 %v10129, %v10029
        %v10131 = vadd.f32 %v10130, %v10031
        %v10132 = vadd.f32 %v10131, %v10033
        %v10133 = vadd.f32 %v10132, %v10035
        %v10134 = vadd.f32 %v10133, %v10037
        %v10135 = vadd.f32 %v10134, %v10039
        %v10136 = vrot.slane %v10135, 4
        %v10137 = vadd.f32 %v10135, %v10136
        %v10138 = vrot.slane %v10137, 2
        %v10139 = vadd.f32 %v10137, %v10138
        %v10140 = vrot.slane %v10139, 1
        %v10141 = vadd.f32 %v10139, %v10140
        %v10142 = vadd.f32 %v9978, %v9980
        %v10143 = vadd.f32 %v10142, %v9982
        %v10144 = vadd.f32 %v10143, %v9984
        %v10145 = vadd.f32 %v10144, %v9986
        %v10146 = vadd.f32 %v10145, %v9988
        %v10147 = vadd.f32 %v10146, %v9990
        %v10148 = vadd.f32 %v10147, %v9992
        %v10149 = vadd.f32 %v10148, %v9994
        %v10150 = vadd.f32 %v10149, %v9996
        %v10151 = vadd.f32 %v10150, %v9998
        %v10152 = vadd.f32 %v10151, %v10000
        %v10153 = vadd.f32 %v10152, %v10002
        %v10154 = vadd.f32 %v10153, %v10004
        %v10155 = vadd.f32 %v10154, %v10006
        %v10156 = vadd.f32 %v10155, %v10008
        %v10157 = vadd.f32 %v10156, %v10010
        %v10158 = vadd.f32 %v10157, %v10012
        %v10159 = vadd.f32 %v10158, %v10014
        %v10160 = vadd.f32 %v10159, %v10016
        %v10161 = vadd.f32 %v10160, %v10018
        %v10162 = vadd.f32 %v10161, %v10020
        %v10163 = vadd.f32 %v10162, %v10022
        %v10164 = vadd.f32 %v10163, %v10024
        %v10165 = vadd.f32 %v10164, %v10026
        %v10166 = vadd.f32 %v10165, %v10028
        %v10167 = vadd.f32 %v10166, %v10030
        %v10168 = vadd.f32 %v10167, %v10032
        %v10169 = vadd.f32 %v10168, %v10034
        %v10170 = vadd.f32 %v10169, %v10036
        %v10171 = vadd.f32 %v10170, %v10038
        %v10172 = vadd.f32 %v10171, %v10040
        %v10173 = vrot.slane %v10172, 4
        %v10174 = vadd.f32 %v10172, %v10173
        %v10175 = vrot.slane %v10174, 2
        %v10176 = vadd.f32 %v10174, %v10175
        %v10177 = vrot.slane %v10176, 1
        %v10178 = vadd.f32 %v10176, %v10177
        %v10179 = vadd.f32 %v10041, %v10043
        %v10180 = vadd.f32 %v10179, %v10045
        %v10181 = vadd.f32 %v10180, %v10047
        %v10182 = vadd.f32 %v10181, %v10049
        %v10183 = vadd.f32 %v10182, %v10051
        %v10184 = vadd.f32 %v10183, %v10053
        %v10185 = vadd.f32 %v10184, %v10055
        %v10186 = vadd.f32 %v10185, %v10057
        %v10187 = vadd.f32 %v10186, %v10059
        %v10188 = vadd.f32 %v10187, %v10061
        %v10189 = vadd.f32 %v10188, %v10063
        %v10190 = vadd.f32 %v10189, %v10065
        %v10191 = vadd.f32 %v10190, %v10067
        %v10192 = vadd.f32 %v10191, %v10069
        %v10193 = vadd.f32 %v10192, %v10071
        %v10194 = vadd.f32 %v10193, %v10073
        %v10195 = vadd.f32 %v10194, %v10075
        %v10196 = vadd.f32 %v10195, %v10077
        %v10197 = vadd.f32 %v10196, %v10079
        %v10198 = vadd.f32 %v10197, %v10081
        %v10199 = vadd.f32 %v10198, %v10083
        %v10200 = vadd.f32 %v10199, %v10085
        %v10201 = vadd.f32 %v10200, %v10087
        %v10202 = vadd.f32 %v10201, %v10089
        %v10203 = vadd.f32 %v10202, %v10091
        %v10204 = vadd.f32 %v10203, %v10093
        %v10205 = vadd.f32 %v10204, %v10095
        %v10206 = vadd.f32 %v10205, %v10097
        %v10207 = vadd.f32 %v10206, %v10099
        %v10208 = vadd.f32 %v10207, %v10101
        %v10209 = vadd.f32 %v10208, %v10103
        %v10210 = vrot.slane %v10209, 4
        %v10211 = vadd.f32 %v10209, %v10210
        %v10212 = vrot.slane %v10211, 2
        %v10213 = vadd.f32 %v10211, %v10212
        %v10214 = vrot.slane %v10213, 1
        %v10215 = vadd.f32 %v10213, %v10214
        %v10216 = vadd.f32 %v10042, %v10044
        %v10217 = vadd.f32 %v10216, %v10046
        %v10218 = vadd.f32 %v10217, %v10048
        %v10219 = vadd.f32 %v10218, %v10050
        %v10220 = vadd.f32 %v10219, %v10052
        %v10221 = vadd.f32 %v10220, %v10054
        %v10222 = vadd.f32 %v10221, %v10056
        %v10223 = vadd.f32 %v10222, %v10058
        %v10224 = vadd.f32 %v10223, %v10060
        %v10225 = vadd.f32 %v10224, %v10062
        %v10226 = vadd.f32 %v10225, %v10064
        %v10227 = vadd.f32 %v10226, %v10066
        %v10228 = vadd.f32 %v10227, %v10068
        %v10229 = vadd.f32 %v10228, %v10070
        %v10230 = vadd.f32 %v10229, %v10072
        %v10231 = vadd.f32 %v10230, %v10074
        %v10232 = vadd.f32 %v10231, %v10076
        %v10233 = vadd.f32 %v10232, %v10078
        %v10234 = vadd.f32 %v10233, %v10080
        %v10235 = vadd.f32 %v10234, %v10082
        %v10236 = vadd.f32 %v10235, %v10084
        %v10237 = vadd.f32 %v10236, %v10086
        %v10238 = vadd.f32 %v10237, %v10088
        %v10239 = vadd.f32 %v10238, %v10090
        %v10240 = vadd.f32 %v10239, %v10092
        %v10241 = vadd.f32 %v10240, %v10094
        %v10242 = vadd.f32 %v10241, %v10096
        %v10243 = vadd.f32 %v10242, %v10098
        %v10244 = vadd.f32 %v10243, %v10100
        %v10245 = vadd.f32 %v10244, %v10102
        %v10246 = vadd.f32 %v10245, %v10104
        %v10247 = vrot.slane %v10246, 4
        %v10248 = vadd.f32 %v10246, %v10247
        %v10249 = vrot.slane %v10248, 2
        %v10250 = vadd.f32 %v10248, %v10249
        %v10251 = vrot.slane %v10250, 1
        %v10252 = vadd.f32 %v10250, %v10251
        %v10253 = vrcp.pop 256.0
        %v10254 = vmul.f32 %v10141, %v10253
        %v10255 = vmul.f32 %v10178, %v10253
        %v10256 = vmul.f32 %v10215, %v10253
        %v10257 = vmul.f32 %v10252, %v10253
        %v10262 = vcombine.low %v10254, %v10255
        %v10264 = vunpack.c.l.s4 1983009808
        %v10265 = vunpack.c.0.s8 %v10264
        %v10266 = vlaneseq
        %v10267 = vshrl.u32 %v10266, 7
        %v10268 = vsub.s32 %v10265, %v10267
        %v10269 = vrot.slane %v10262, %v10268
        %v10270 = vcombine.low %v10256, %v10257
        %v10272 = vunpack.c.l.s4 1983009808
        %v10273 = vunpack.c.0.s8 %v10272
        %v10274 = vlaneseq
        %v10275 = vshrl.u32 %v10274, 7
        %v10276 = vsub.s32 %v10273, %v10275
        %v10277 = vrot.slane %v10270, %v10276
        %vm10278 = vcmask 1044484
        %v10279 = vsel %vm10278, %v10269, %v10269
        %vm10280 = vcmask 1046534
        %v10281 = vsel %vm10280, %v10269, %v10279
        %v10282 = vrot.slane %v10277, 7
        %vm10283 = vcmask 1041409
        %v10284 = vsel %vm10283, %v10282, %v10281
        %vm10285 = vcmask 1043459
        %v10286 = vsel %vm10285, %v10282, %v10284
        %vm10287 = vcmask 1045509
        %v10288 = vsel %vm10287, %v10282, %v10286
        %vm10289 = vcmask 1047559
        %v10290 = vsel %vm10289, %v10282, %v10288
        %10292 = vst [vmem:[%s324] sm:$0xf] %v10290
        %s10293 = sand.u32 %s163, 1
        %s10294 = scalar_lea.sflag [#allocation5], %s10293
        %s10295 = sand.u32 %s163, 1
        %s10296 = smul.addr %s10295, 4
        %s10297 = scalar_lea.vmem [#allocation8], %s10296
        // Predicated region
        $region49: #{tpu_custom_call.1} parent=39 // pred_check
          %p10298 = pneg %p173
        $region50: #{tpu_custom_call.1} parent=39 // pred_check_branch
          %10300 = sbr.rel (%p10298) target = $region52
        $region51: #{tpu_custom_call.1} parent=39 // pred_region
          %s10302 = ssub.s32 64, 64
          %10303 = vsyncadd %s10294, %s10302
          %s10304 = smul.addr %s25, 2
          %s10305 = smul.addr %s10304, 32
          %s10306 = scalar_lea.hbm %s5, %s10305
          %s10308 = sshll.u32 %s10297, 4
          %s10309 = int_to_ptr.vmem [resolvable:$true] %s10308
          %10311 = dma.vmem_to_hbm [thread:$0]  %s10309, 64, %s10306, %s10294
        $region52: #{tpu_custom_call.1} parent=39 // pred_fallthru
          _
      $region40: #{tpu_custom_call.1} parent=5 // pred_fallthru
        _
      %p10312 = scmp.le.s32.totalorder 2, %s20
      // Predicated region
      $region53: #{tpu_custom_call.1} parent=5 // pred_check
        %p10313 = pneg %p10312
      $region54: #{tpu_custom_call.1} parent=5 // pred_check_branch
        %10315 = sbr.rel (%p10313) target = $region56
      $region55: #{tpu_custom_call.1} parent=5 // pred_region
        %s10316 = ssub.s32 %s20, 2
        // Predicated region
        $region57: #{tpu_custom_call.1} parent=55 // pred_check
          %p10317 = pneg %p179
        $region58: #{tpu_custom_call.1} parent=55 // pred_check_branch
          %10319 = sbr.rel (%p10317) target = $region60
        $region59: #{tpu_custom_call.1} parent=55 // pred_region
          %s10320 = sand.u32 %s164, 1
          %s10321 = scalar_lea.sflag [#allocation5], %s10320
          %s10322 = sand.u32 %s164, 1
          %s10323 = smul.addr %s10322, 4
          %s10324 = scalar_lea.vmem [#allocation8], %s10323
          %10325 = dma.done %s10321, 64
        $region60: #{tpu_custom_call.1} parent=55 // pred_fallthru
          _
      $region56: #{tpu_custom_call.1} parent=5 // pred_fallthru
        _
    $region6: #{tpu_custom_call.1} parent=1 // loop_footer
      %s24 = sadd.s32 1, %s20
    $region7: #{tpu_custom_call.1} parent=1 // loop_footer_branch
      %19 = sbr.rel target = $region3
    $region8: #{tpu_custom_call.1} parent=1 // loop_exit
      _
    %10326 = vsyncpa [#allocation4], 1
    %s10327 = scalar_lea.sflag [#allocation4], 1
    %10328 = vsyncpa %s10327, 1
    %10329 = vsyncpa [#allocation7], 1
    %s10330 = scalar_lea.sflag [#allocation7], 1
    %10331 = vsyncpa %s10330, 1
    %10332 = vsyncpa [#allocation5], 1
    %s10333 = scalar_lea.sflag [#allocation5], 1
    %10334 = vsyncpa %s10333, 1

</llo_original>
